<compile_context>
chip_gen: v7x
topology: tpu7x:2x2x1
jax: 0.10.0
libtpu: 0.0.40
codegen_flags: <defaults>
</compile_context>

<pallas_src>
import math

import jax
import jax.numpy as jnp
from jax.experimental import pallas as pl
from jax.experimental.pallas import tpu as pltpu

NF_IN = 2
NF_HID = 16
NUM_LAYERS = 9            # 1 input layer + (NUM_LAYERS - 1) = 8 middle layers
NF_OUT = 3
NF_HID_IN = NF_HID * 2    # composite activation doubles channel count
NUM_MID = NUM_LAYERS - 1

TILE_MAX_DEFAULT = 8192   # pixels per grid step (lane dimension)
TILE_MAX_V5E = 4096       # v5e: single vst slot -> keep spill-store pressure lower

DOT_PRECISION = jax.lax.Precision.HIGHEST
USE_FAST_ATAN = True      # hand-rolled atan (EUP reciprocal + minimax poly)

# Minimax polynomial for atan(x) on [0, 1]:  atan(x) ~= x * P(x^2),  |err| ~ 1e-5.
_ATAN_COEF = (0.99997726, -0.33262347, 0.19354346,
              -0.11643287, 0.05265332, -0.01172120)
_HALF_PI = math.pi / 2.0


def _atan(z):
    """VALU-lean arctan: approx EUP reciprocal range reduction + poly + 2 selects."""
    if not USE_FAST_ATAN:
        return jnp.arctan(z)
    az = jnp.abs(z)
    inv = pl.reciprocal(az, approx=True)      # EUP slot; inf at az==0 is masked below
    big = az > 1.0
    x = jnp.where(big, inv, az)               # x in [0, 1]
    x2 = x * x
    p = _ATAN_COEF[-1]
    for c in _ATAN_COEF[-2::-1]:
        p = p * x2 + c
    r = p * x                                 # atan(x) on [0, 1]
    r = jnp.where(big, _HALF_PI - r, r)       # atan(|z|) on [0, inf)
    return jnp.where(z < 0.0, -r, r)          # restore sign


def cppn_kernel(x_ref, w0_ref, b0_ref, wcat_ref, bm_ref, wocat_ref, bo_ref, o_ref):
    # x_ref: (NF_IN, TILE) pixel coordinates, channel-major (pixels on lanes).
    z = jnp.dot(w0_ref[...], x_ref[...], preferred_element_type=jnp.float32,
                precision=DOT_PRECISION) + b0_ref[...]
    a = _atan(z)                                              # (16, TILE)

    # 8 hidden layers, statically unrolled (weights stacked along axis 0).
    # Composite-activation constants are pre-folded into wcat/bm, and the two
    # dots (vs a and vs a*a) are fused into a single K=32 dot.
    for i in range(NUM_MID):
        aa = jnp.concatenate([a, a * a], axis=0)              # (32, TILE) sublane concat
        z = jnp.dot(wcat_ref[i], aa, preferred_element_type=jnp.float32,
                    precision=DOT_PRECISION) + bm_ref[i]
        a = _atan(z)                                          # (16, TILE)

    aa = jnp.concatenate([a, a * a], axis=0)
    out = jnp.dot(wocat_ref[...], aa, preferred_element_type=jnp.float32,
                  precision=DOT_PRECISION) + bo_ref[...]
    o_ref[...] = jax.nn.sigmoid(out)                          # (NF_OUT, TILE)


def init_params(key):
    """Match ConvLayer init: weight ~ N(0, sqrt(1/nf_in)), bias ~ U(-0.5, 0.5).

    Weights are stored channel-major (C_out, C_in) = torch conv weight[:, :, 0, 0].
    The unbiased composite activation cat([atan(x)/0.67, (atan(x)^2-0.45)/0.396])
    is folded into the *following* layer:
        W @ [a/0.67; (a*a-0.45)/0.396] + b
      = [W[:, :16]/0.67 | W[:, 16:]/0.396] @ [a; a*a]
        + (b - 0.45/0.396 * sum(W[:, 16:], axis=-1))
    so each hidden/output layer is a single K=32 dot in the kernel.
    """
    k = jax.random.split(key, 6)
    w0 = jax.random.normal(k[0], (NF_HID, NF_IN), jnp.float32) * math.sqrt(1.0 / NF_IN)
    b0 = jax.random.uniform(k[1], (NF_HID, 1), jnp.float32, -0.5, 0.5)
    wm = jax.random.normal(k[2], (NUM_MID, NF_HID, NF_HID_IN), jnp.float32) * math.sqrt(
        1.0 / NF_HID_IN)
    bm = jax.random.uniform(k[3], (NUM_MID, NF_HID), jnp.float32, -0.5, 0.5)
    wo = jax.random.normal(k[4], (NF_OUT, NF_HID_IN), jnp.float32) * math.sqrt(
        1.0 / NF_HID_IN)
    bo = jax.random.uniform(k[5], (NF_OUT,), jnp.float32, -0.5, 0.5)

    c2 = 0.45 / 0.396
    # Fused weights: columns 0..15 multiply atan(z), columns 16..31 multiply atan(z)^2.
    wcat = jnp.concatenate([wm[:, :, :NF_HID] / 0.67,
                            wm[:, :, NF_HID:] / 0.396], axis=-1)        # (NUM_MID, 16, 32)
    bmf = (bm - c2 * wm[:, :, NF_HID:].sum(axis=-1))[..., None]         # (NUM_MID, 16, 1)
    wocat = jnp.concatenate([wo[:, :NF_HID] / 0.67,
                             wo[:, NF_HID:] / 0.396], axis=-1)          # (3, 32)
    bof = (bo - c2 * wo[:, NF_HID:].sum(axis=-1))[:, None]              # (3, 1)
    return w0, b0, wcat, bmf, wocat, bof


def _default_tile_max():
    # Best-effort per-generation cap; falls back to the large tile.
    try:
        kind = jax.devices()[0].device_kind.lower()
        if "v5 lite" in kind or "v5e" in kind or "v5lite" in kind:
            return TILE_MAX_V5E
    except Exception:
        pass
    return TILE_MAX_DEFAULT


def _pick_tile(n, hw, tile_max):
    """Largest lane tile (multiple of 128, <= tile_max) with >= 2 total grid steps."""
    tile = tile_max if hw >= tile_max else ((hw + 127) // 128) * 128
    hw_pad = ((hw + tile - 1) // tile) * tile
    # Guarantee >= 2 grid steps so both v7x TensorCores get work (harmless elsewhere).
    if n * (hw_pad // tile) < 2 and tile > 128:
        tile = ((tile // 2 + 127) // 128) * 128
        hw_pad = ((hw + tile - 1) // tile) * tile
    return tile, hw_pad


def cppn_forward(coords_nchw, params, *, tile_max=None):
    """coords_nchw: (N, 2, H, W) float32 -> (N, 3, H, W) float32."""
    w0, b0, wcat, bm, wocat, bo = params
    n, c, h, w = coords_nchw.shape
    assert c == NF_IN

    hw = h * w
    if tile_max is None:
        tile_max = _default_tile_max()
    tile, hw_pad = _pick_tile(n, hw, tile_max)

    x = coords_nchw.reshape(n, c, hw)          # free reshape, already channel-major
    if hw_pad != hw:
        x = jnp.pad(x, ((0, 0), (0, 0), (0, hw_pad - hw)))

    grid = (n, hw_pad // tile)
    total_px = n * hw_pad
    weight_bytes = 4 * int(w0.size + b0.size + wcat.size + bm.size + wocat.size + bo.size)
    cost = pl.CostEstimate(
        flops=11_000 * total_px,                              # ~8.5k matmul + ~2.5k VPU / px
        transcendentals=(NUM_LAYERS * NF_HID + NF_OUT) * total_px,
        bytes_accessed=(NF_IN + NF_OUT) * 4 * total_px + weight_bytes,
    )

    out = pl.pallas_call(
        cppn_kernel,
        out_shape=jax.ShapeDtypeStruct((n, NF_OUT, hw_pad), jnp.float32),
        grid_spec=pltpu.PrefetchScalarGridSpec(
            num_scalar_prefetch=0,
            grid=grid,
            in_specs=[
                pl.BlockSpec((pl.Squeezed(), NF_IN, tile), lambda b, i: (b, 0, i)),
                pl.BlockSpec((NF_HID, NF_IN), lambda b, i: (0, 0)),
                pl.BlockSpec((NF_HID, 1), lambda b, i: (0, 0)),
                pl.BlockSpec((NUM_MID, NF_HID, NF_HID_IN), lambda b, i: (0, 0, 0)),
                pl.BlockSpec((NUM_MID, NF_HID, 1), lambda b, i: (0, 0, 0)),
                pl.BlockSpec((NF_OUT, NF_HID_IN), lambda b, i: (0, 0)),
                pl.BlockSpec((NF_OUT, 1), lambda b, i: (0, 0)),
            ],
            out_specs=pl.BlockSpec((pl.Squeezed(), NF_OUT, tile),
                                   lambda b, i: (b, 0, i)),
        ),
        compiler_params=pltpu.CompilerParams(
            dimension_semantics=("parallel", "parallel"),
            vmem_limit_bytes=32 * 1024 * 1024),
        cost_estimate=cost,
    )(x, w0, b0, wcat, bm, wocat, bo)

    if hw_pad != hw:
        out = out[:, :, :hw]                   # drop pixel padding
    return out.reshape(n, NF_OUT, h, w)        # free reshape back to NCHW


def cppn_reference(coords_nchw, params):
    """Pure-JAX reference (exact arctan) using the same folded/fused parameters."""
    w0, b0, wcat, bm, wocat, bo = params
    n, c, h, w = coords_nchw.shape
    x = coords_nchw.reshape(n, c, h * w)
    z = jnp.einsum('oc,ncp->nop', w0, x, precision=DOT_PRECISION) + b0
    a = jnp.arctan(z)
    for i in range(NUM_MID):
        aa = jnp.concatenate([a, a * a], axis=1)
        z = jnp.einsum('oc,ncp->nop', wcat[i], aa, precision=DOT_PRECISION) + bm[i]
        a = jnp.arctan(z)
    aa = jnp.concatenate([a, a * a], axis=1)
    out = jnp.einsum('oc,ncp->nop', wocat, aa, precision=DOT_PRECISION) + bo
    return jax.nn.sigmoid(out).reshape(n, NF_OUT, h, w)


if __name__ == "__main__":
    key = jax.random.PRNGKey(0)
    k_param, _ = jax.random.split(key)

    params = init_params(k_param)

    # Small deterministic coordinate grid input: (N=2, C=2, H=16, W=16)
    N, H, W = 2, 16, 16
    ys = jnp.linspace(-1.0, 1.0, H)
    xs = jnp.linspace(-1.0, 1.0, W)
    gy, gx = jnp.meshgrid(ys, xs, indexing="ij")
    coords = jnp.stack([gy, gx], axis=0)[None].astype(jnp.float32)   # (1, 2, H, W)
    coords = jnp.concatenate([coords, -coords], axis=0)              # (2, 2, H, W)

    out = jax.block_until_ready(cppn_forward(coords, params))
    assert out.shape == (N, NF_OUT, H, W), out.shape
    assert bool(jnp.all(jnp.isfinite(out)))

    # Loose sanity check vs the exact-arctan reference (fast-atan path deviates
    # by ~1e-4..1e-3 after 9 layers; tolerance is intentionally generous).
    ref = cppn_reference(coords, params)
    max_diff = float(jnp.max(jnp.abs(out - ref)))
    assert max_diff < 0.25, max_diff

    print("KERNEL_OK")
</pallas_src>

<mosaic_0001>
module attributes {stable_mosaic.version = 11 : i64} {
  func.func @cppn_kernel(%arg0: i32, %arg1: i32, %arg2: memref<1x2x256xf32, #tpu.memory_space<vmem>>, %arg3: memref<16x2xf32, #tpu.memory_space<vmem>>, %arg4: memref<16x1xf32, #tpu.memory_space<vmem>>, %arg5: memref<8x16x32xf32, #tpu.memory_space<vmem>>, %arg6: memref<8x16x1xf32, #tpu.memory_space<vmem>>, %arg7: memref<3x32xf32, #tpu.memory_space<vmem>>, %arg8: memref<3x1xf32, #tpu.memory_space<vmem>>, %arg9: memref<1x3x256xf32, #tpu.memory_space<vmem>>) attributes {dimension_semantics = [#tpu.dimension_semantics<parallel>, #tpu.dimension_semantics<parallel>], iteration_bounds = array<i64: 2, 1>, scalar_prefetch = 0 : i64, scratch_operands = 0 : i64, tpu.core_type = #tpu.core_type<tc>, window_params = [{transform_indices = @transform_0, window_bounds = array<i64: 1, 2, 256>}, {pipeline_mode = #tpu.pipeline_mode<synchronous>, transform_indices = @transform_1, window_bounds = array<i64: 16, 2>}, {pipeline_mode = #tpu.pipeline_mode<synchronous>, transform_indices = @transform_2, window_bounds = array<i64: 16, 1>}, {pipeline_mode = #tpu.pipeline_mode<synchronous>, transform_indices = @transform_3, window_bounds = array<i64: 8, 16, 32>}, {pipeline_mode = #tpu.pipeline_mode<synchronous>, transform_indices = @transform_4, window_bounds = array<i64: 8, 16, 1>}, {pipeline_mode = #tpu.pipeline_mode<synchronous>, transform_indices = @transform_5, window_bounds = array<i64: 3, 32>}, {pipeline_mode = #tpu.pipeline_mode<synchronous>, transform_indices = @transform_6, window_bounds = array<i64: 3, 1>}, {transform_indices = @transform_7, window_bounds = array<i64: 1, 3, 256>}]} {
    %c0 = arith.constant 0 : index
    %c0_0 = arith.constant 0 : index
    %0 = vector.load %arg3[%c0, %c0_0] : memref<16x2xf32, #tpu.memory_space<vmem>>, vector<16x2xf32>
    %c0_1 = arith.constant 0 : index
    %c0_2 = arith.constant 0 : index
    %c0_3 = arith.constant 0 : index
    %1 = vector.load %arg2[%c0_1, %c0_2, %c0_3] : memref<1x2x256xf32, #tpu.memory_space<vmem>>, vector<1x2x256xf32>
    %2 = vector.shape_cast %1 : vector<1x2x256xf32> to vector<2x256xf32>
    %cst = arith.constant dense<0.000000e+00> : vector<16x256xf32>
    %3 = tpu.matmul %0, %2, %cst {dimension_numbers = #tpu.dot_dimension_numbers<[1], [0], [0], [1], [0, 0, 1, 1], [], []>, precision = #tpu.contract_precision<fp32>} : vector<16x2xf32>, vector<2x256xf32>, vector<16x256xf32> -> vector<16x256xf32>
    %c0_4 = arith.constant 0 : index
    %c0_5 = arith.constant 0 : index
    %4 = vector.load %arg4[%c0_4, %c0_5] : memref<16x1xf32, #tpu.memory_space<vmem>>, vector<16x1xf32>
    %5 = vector.broadcast %4 : vector<16x1xf32> to vector<16x256xf32>
    %6 = arith.addf %3, %5 : vector<16x256xf32>
    %7 = math.absf %6 : vector<16x256xf32>
    %8 = tpu.reciprocal %7 {approx = true} : vector<16x256xf32> -> vector<16x256xf32>
    %cst_6 = arith.constant 1.000000e+00 : f32
    %9 = vector.broadcast %cst_6 : f32 to vector<16x256xf32>
    %10 = arith.cmpf ogt, %7, %9 : vector<16x256xf32>
    %11 = arith.select %10, %8, %7 : vector<16x256xi1>, vector<16x256xf32>
    %12 = arith.mulf %11, %11 : vector<16x256xf32>
    %cst_7 = arith.constant -1.172120e-02 : f32
    %13 = vector.broadcast %cst_7 : f32 to vector<16x256xf32>
    %14 = arith.mulf %13, %12 : vector<16x256xf32>
    %cst_8 = arith.constant 0.0526533201 : f32
    %15 = vector.broadcast %cst_8 : f32 to vector<16x256xf32>
    %16 = arith.addf %14, %15 : vector<16x256xf32>
    %17 = arith.mulf %16, %12 : vector<16x256xf32>
    %cst_9 = arith.constant -0.116432868 : f32
    %18 = vector.broadcast %cst_9 : f32 to vector<16x256xf32>
    %19 = arith.addf %17, %18 : vector<16x256xf32>
    %20 = arith.mulf %19, %12 : vector<16x256xf32>
    %cst_10 = arith.constant 0.193543464 : f32
    %21 = vector.broadcast %cst_10 : f32 to vector<16x256xf32>
    %22 = arith.addf %20, %21 : vector<16x256xf32>
    %23 = arith.mulf %22, %12 : vector<16x256xf32>
    %cst_11 = arith.constant -0.332623482 : f32
    %24 = vector.broadcast %cst_11 : f32 to vector<16x256xf32>
    %25 = arith.addf %23, %24 : vector<16x256xf32>
    %26 = arith.mulf %25, %12 : vector<16x256xf32>
    %cst_12 = arith.constant 0.999977231 : f32
    %27 = vector.broadcast %cst_12 : f32 to vector<16x256xf32>
    %28 = arith.addf %26, %27 : vector<16x256xf32>
    %29 = arith.mulf %28, %11 : vector<16x256xf32>
    %cst_13 = arith.constant 1.57079637 : f32
    %30 = vector.broadcast %cst_13 : f32 to vector<16x256xf32>
    %31 = arith.subf %30, %29 : vector<16x256xf32>
    %32 = arith.select %10, %31, %29 : vector<16x256xi1>, vector<16x256xf32>
    %cst_14 = arith.constant 0.000000e+00 : f32
    %33 = vector.broadcast %cst_14 : f32 to vector<16x256xf32>
    %34 = arith.cmpf olt, %6, %33 : vector<16x256xf32>
    %cst_15 = arith.constant 0.000000e+00 : f32
    %35 = vector.broadcast %cst_15 : f32 to vector<16x256xf32>
    %36 = arith.subf %35, %32 : vector<16x256xf32>
    %37 = arith.select %34, %36, %32 : vector<16x256xi1>, vector<16x256xf32>
    %38 = arith.mulf %37, %37 : vector<16x256xf32>
    %39 = tpu.concatenate %37, %38 in 0 : vector<16x256xf32>, vector<16x256xf32> -> vector<32x256xf32>
    %c0_16 = arith.constant 0 : index
    %c0_17 = arith.constant 0 : index
    %c0_18 = arith.constant 0 : index
    %40 = vector.load %arg5[%c0_16, %c0_17, %c0_18] : memref<8x16x32xf32, #tpu.memory_space<vmem>>, vector<1x16x32xf32>
    %41 = vector.shape_cast %40 : vector<1x16x32xf32> to vector<16x32xf32>
    %cst_19 = arith.constant dense<0.000000e+00> : vector<16x256xf32>
    %42 = tpu.matmul %41, %39, %cst_19 {dimension_numbers = #tpu.dot_dimension_numbers<[1], [0], [0], [1], [0, 0, 1, 1], [], []>, precision = #tpu.contract_precision<fp32>} : vector<16x32xf32>, vector<32x256xf32>, vector<16x256xf32> -> vector<16x256xf32>
    %c0_20 = arith.constant 0 : index
    %c0_21 = arith.constant 0 : index
    %c0_22 = arith.constant 0 : index
    %43 = vector.load %arg6[%c0_20, %c0_21, %c0_22] : memref<8x16x1xf32, #tpu.memory_space<vmem>>, vector<1x16x1xf32>
    %44 = vector.shape_cast %43 : vector<1x16x1xf32> to vector<16x1xf32>
    %45 = vector.broadcast %44 : vector<16x1xf32> to vector<16x256xf32>
    %46 = arith.addf %42, %45 : vector<16x256xf32>
    %47 = math.absf %46 : vector<16x256xf32>
    %48 = tpu.reciprocal %47 {approx = true} : vector<16x256xf32> -> vector<16x256xf32>
    %cst_23 = arith.constant 1.000000e+00 : f32
    %49 = vector.broadcast %cst_23 : f32 to vector<16x256xf32>
    %50 = arith.cmpf ogt, %47, %49 : vector<16x256xf32>
    %51 = arith.select %50, %48, %47 : vector<16x256xi1>, vector<16x256xf32>
    %52 = arith.mulf %51, %51 : vector<16x256xf32>
    %cst_24 = arith.constant -1.172120e-02 : f32
    %53 = vector.broadcast %cst_24 : f32 to vector<16x256xf32>
    %54 = arith.mulf %53, %52 : vector<16x256xf32>
    %cst_25 = arith.constant 0.0526533201 : f32
    %55 = vector.broadcast %cst_25 : f32 to vector<16x256xf32>
    %56 = arith.addf %54, %55 : vector<16x256xf32>
    %57 = arith.mulf %56, %52 : vector<16x256xf32>
    %cst_26 = arith.constant -0.116432868 : f32
    %58 = vector.broadcast %cst_26 : f32 to vector<16x256xf32>
    %59 = arith.addf %57, %58 : vector<16x256xf32>
    %60 = arith.mulf %59, %52 : vector<16x256xf32>
    %cst_27 = arith.constant 0.193543464 : f32
    %61 = vector.broadcast %cst_27 : f32 to vector<16x256xf32>
    %62 = arith.addf %60, %61 : vector<16x256xf32>
    %63 = arith.mulf %62, %52 : vector<16x256xf32>
    %cst_28 = arith.constant -0.332623482 : f32
    %64 = vector.broadcast %cst_28 : f32 to vector<16x256xf32>
    %65 = arith.addf %63, %64 : vector<16x256xf32>
    %66 = arith.mulf %65, %52 : vector<16x256xf32>
    %cst_29 = arith.constant 0.999977231 : f32
    %67 = vector.broadcast %cst_29 : f32 to vector<16x256xf32>
    %68 = arith.addf %66, %67 : vector<16x256xf32>
    %69 = arith.mulf %68, %51 : vector<16x256xf32>
    %cst_30 = arith.constant 1.57079637 : f32
    %70 = vector.broadcast %cst_30 : f32 to vector<16x256xf32>
    %71 = arith.subf %70, %69 : vector<16x256xf32>
    %72 = arith.select %50, %71, %69 : vector<16x256xi1>, vector<16x256xf32>
    %cst_31 = arith.constant 0.000000e+00 : f32
    %73 = vector.broadcast %cst_31 : f32 to vector<16x256xf32>
    %74 = arith.cmpf olt, %46, %73 : vector<16x256xf32>
    %cst_32 = arith.constant 0.000000e+00 : f32
    %75 = vector.broadcast %cst_32 : f32 to vector<16x256xf32>
    %76 = arith.subf %75, %72 : vector<16x256xf32>
    %77 = arith.select %74, %76, %72 : vector<16x256xi1>, vector<16x256xf32>
    %78 = arith.mulf %77, %77 : vector<16x256xf32>
    %79 = tpu.concatenate %77, %78 in 0 : vector<16x256xf32>, vector<16x256xf32> -> vector<32x256xf32>
    %c1 = arith.constant 1 : index
    %c0_33 = arith.constant 0 : index
    %c0_34 = arith.constant 0 : index
    %80 = vector.load %arg5[%c1, %c0_33, %c0_34] : memref<8x16x32xf32, #tpu.memory_space<vmem>>, vector<1x16x32xf32>
    %81 = vector.shape_cast %80 : vector<1x16x32xf32> to vector<16x32xf32>
    %cst_35 = arith.constant dense<0.000000e+00> : vector<16x256xf32>
    %82 = tpu.matmul %81, %79, %cst_35 {dimension_numbers = #tpu.dot_dimension_numbers<[1], [0], [0], [1], [0, 0, 1, 1], [], []>, precision = #tpu.contract_precision<fp32>} : vector<16x32xf32>, vector<32x256xf32>, vector<16x256xf32> -> vector<16x256xf32>
    %c1_36 = arith.constant 1 : index
    %c0_37 = arith.constant 0 : index
    %c0_38 = arith.constant 0 : index
    %83 = vector.load %arg6[%c1_36, %c0_37, %c0_38] : memref<8x16x1xf32, #tpu.memory_space<vmem>>, vector<1x16x1xf32>
    %84 = vector.shape_cast %83 : vector<1x16x1xf32> to vector<16x1xf32>
    %85 = vector.broadcast %84 : vector<16x1xf32> to vector<16x256xf32>
    %86 = arith.addf %82, %85 : vector<16x256xf32>
    %87 = math.absf %86 : vector<16x256xf32>
    %88 = tpu.reciprocal %87 {approx = true} : vector<16x256xf32> -> vector<16x256xf32>
    %cst_39 = arith.constant 1.000000e+00 : f32
    %89 = vector.broadcast %cst_39 : f32 to vector<16x256xf32>
    %90 = arith.cmpf ogt, %87, %89 : vector<16x256xf32>
    %91 = arith.select %90, %88, %87 : vector<16x256xi1>, vector<16x256xf32>
    %92 = arith.mulf %91, %91 : vector<16x256xf32>
    %cst_40 = arith.constant -1.172120e-02 : f32
    %93 = vector.broadcast %cst_40 : f32 to vector<16x256xf32>
    %94 = arith.mulf %93, %92 : vector<16x256xf32>
    %cst_41 = arith.constant 0.0526533201 : f32
    %95 = vector.broadcast %cst_41 : f32 to vector<16x256xf32>
    %96 = arith.addf %94, %95 : vector<16x256xf32>
    %97 = arith.mulf %96, %92 : vector<16x256xf32>
    %cst_42 = arith.constant -0.116432868 : f32
    %98 = vector.broadcast %cst_42 : f32 to vector<16x256xf32>
    %99 = arith.addf %97, %98 : vector<16x256xf32>
    %100 = arith.mulf %99, %92 : vector<16x256xf32>
    %cst_43 = arith.constant 0.193543464 : f32
    %101 = vector.broadcast %cst_43 : f32 to vector<16x256xf32>
    %102 = arith.addf %100, %101 : vector<16x256xf32>
    %103 = arith.mulf %102, %92 : vector<16x256xf32>
    %cst_44 = arith.constant -0.332623482 : f32
    %104 = vector.broadcast %cst_44 : f32 to vector<16x256xf32>
    %105 = arith.addf %103, %104 : vector<16x256xf32>
    %106 = arith.mulf %105, %92 : vector<16x256xf32>
    %cst_45 = arith.constant 0.999977231 : f32
    %107 = vector.broadcast %cst_45 : f32 to vector<16x256xf32>
    %108 = arith.addf %106, %107 : vector<16x256xf32>
    %109 = arith.mulf %108, %91 : vector<16x256xf32>
    %cst_46 = arith.constant 1.57079637 : f32
    %110 = vector.broadcast %cst_46 : f32 to vector<16x256xf32>
    %111 = arith.subf %110, %109 : vector<16x256xf32>
    %112 = arith.select %90, %111, %109 : vector<16x256xi1>, vector<16x256xf32>
    %cst_47 = arith.constant 0.000000e+00 : f32
    %113 = vector.broadcast %cst_47 : f32 to vector<16x256xf32>
    %114 = arith.cmpf olt, %86, %113 : vector<16x256xf32>
    %cst_48 = arith.constant 0.000000e+00 : f32
    %115 = vector.broadcast %cst_48 : f32 to vector<16x256xf32>
    %116 = arith.subf %115, %112 : vector<16x256xf32>
    %117 = arith.select %114, %116, %112 : vector<16x256xi1>, vector<16x256xf32>
    %118 = arith.mulf %117, %117 : vector<16x256xf32>
    %119 = tpu.concatenate %117, %118 in 0 : vector<16x256xf32>, vector<16x256xf32> -> vector<32x256xf32>
    %c2 = arith.constant 2 : index
    %c0_49 = arith.constant 0 : index
    %c0_50 = arith.constant 0 : index
    %120 = vector.load %arg5[%c2, %c0_49, %c0_50] : memref<8x16x32xf32, #tpu.memory_space<vmem>>, vector<1x16x32xf32>
    %121 = vector.shape_cast %120 : vector<1x16x32xf32> to vector<16x32xf32>
    %cst_51 = arith.constant dense<0.000000e+00> : vector<16x256xf32>
    %122 = tpu.matmul %121, %119, %cst_51 {dimension_numbers = #tpu.dot_dimension_numbers<[1], [0], [0], [1], [0, 0, 1, 1], [], []>, precision = #tpu.contract_precision<fp32>} : vector<16x32xf32>, vector<32x256xf32>, vector<16x256xf32> -> vector<16x256xf32>
    %c2_52 = arith.constant 2 : index
    %c0_53 = arith.constant 0 : index
    %c0_54 = arith.constant 0 : index
    %123 = vector.load %arg6[%c2_52, %c0_53, %c0_54] : memref<8x16x1xf32, #tpu.memory_space<vmem>>, vector<1x16x1xf32>
    %124 = vector.shape_cast %123 : vector<1x16x1xf32> to vector<16x1xf32>
    %125 = vector.broadcast %124 : vector<16x1xf32> to vector<16x256xf32>
    %126 = arith.addf %122, %125 : vector<16x256xf32>
    %127 = math.absf %126 : vector<16x256xf32>
    %128 = tpu.reciprocal %127 {approx = true} : vector<16x256xf32> -> vector<16x256xf32>
    %cst_55 = arith.constant 1.000000e+00 : f32
    %129 = vector.broadcast %cst_55 : f32 to vector<16x256xf32>
    %130 = arith.cmpf ogt, %127, %129 : vector<16x256xf32>
    %131 = arith.select %130, %128, %127 : vector<16x256xi1>, vector<16x256xf32>
    %132 = arith.mulf %131, %131 : vector<16x256xf32>
    %cst_56 = arith.constant -1.172120e-02 : f32
    %133 = vector.broadcast %cst_56 : f32 to vector<16x256xf32>
    %134 = arith.mulf %133, %132 : vector<16x256xf32>
    %cst_57 = arith.constant 0.0526533201 : f32
    %135 = vector.broadcast %cst_57 : f32 to vector<16x256xf32>
    %136 = arith.addf %134, %135 : vector<16x256xf32>
    %137 = arith.mulf %136, %132 : vector<16x256xf32>
    %cst_58 = arith.constant -0.116432868 : f32
    %138 = vector.broadcast %cst_58 : f32 to vector<16x256xf32>
    %139 = arith.addf %137, %138 : vector<16x256xf32>
    %140 = arith.mulf %139, %132 : vector<16x256xf32>
    %cst_59 = arith.constant 0.193543464 : f32
    %141 = vector.broadcast %cst_59 : f32 to vector<16x256xf32>
    %142 = arith.addf %140, %141 : vector<16x256xf32>
    %143 = arith.mulf %142, %132 : vector<16x256xf32>
    %cst_60 = arith.constant -0.332623482 : f32
    %144 = vector.broadcast %cst_60 : f32 to vector<16x256xf32>
    %145 = arith.addf %143, %144 : vector<16x256xf32>
    %146 = arith.mulf %145, %132 : vector<16x256xf32>
    %cst_61 = arith.constant 0.999977231 : f32
    %147 = vector.broadcast %cst_61 : f32 to vector<16x256xf32>
    %148 = arith.addf %146, %147 : vector<16x256xf32>
    %149 = arith.mulf %148, %131 : vector<16x256xf32>
    %cst_62 = arith.constant 1.57079637 : f32
    %150 = vector.broadcast %cst_62 : f32 to vector<16x256xf32>
    %151 = arith.subf %150, %149 : vector<16x256xf32>
    %152 = arith.select %130, %151, %149 : vector<16x256xi1>, vector<16x256xf32>
    %cst_63 = arith.constant 0.000000e+00 : f32
    %153 = vector.broadcast %cst_63 : f32 to vector<16x256xf32>
    %154 = arith.cmpf olt, %126, %153 : vector<16x256xf32>
    %cst_64 = arith.constant 0.000000e+00 : f32
    %155 = vector.broadcast %cst_64 : f32 to vector<16x256xf32>
    %156 = arith.subf %155, %152 : vector<16x256xf32>
    %157 = arith.select %154, %156, %152 : vector<16x256xi1>, vector<16x256xf32>
    %158 = arith.mulf %157, %157 : vector<16x256xf32>
    %159 = tpu.concatenate %157, %158 in 0 : vector<16x256xf32>, vector<16x256xf32> -> vector<32x256xf32>
    %c3 = arith.constant 3 : index
    %c0_65 = arith.constant 0 : index
    %c0_66 = arith.constant 0 : index
    %160 = vector.load %arg5[%c3, %c0_65, %c0_66] : memref<8x16x32xf32, #tpu.memory_space<vmem>>, vector<1x16x32xf32>
    %161 = vector.shape_cast %160 : vector<1x16x32xf32> to vector<16x32xf32>
    %cst_67 = arith.constant dense<0.000000e+00> : vector<16x256xf32>
    %162 = tpu.matmul %161, %159, %cst_67 {dimension_numbers = #tpu.dot_dimension_numbers<[1], [0], [0], [1], [0, 0, 1, 1], [], []>, precision = #tpu.contract_precision<fp32>} : vector<16x32xf32>, vector<32x256xf32>, vector<16x256xf32> -> vector<16x256xf32>
    %c3_68 = arith.constant 3 : index
    %c0_69 = arith.constant 0 : index
    %c0_70 = arith.constant 0 : index
    %163 = vector.load %arg6[%c3_68, %c0_69, %c0_70] : memref<8x16x1xf32, #tpu.memory_space<vmem>>, vector<1x16x1xf32>
    %164 = vector.shape_cast %163 : vector<1x16x1xf32> to vector<16x1xf32>
    %165 = vector.broadcast %164 : vector<16x1xf32> to vector<16x256xf32>
    %166 = arith.addf %162, %165 : vector<16x256xf32>
    %167 = math.absf %166 : vector<16x256xf32>
    %168 = tpu.reciprocal %167 {approx = true} : vector<16x256xf32> -> vector<16x256xf32>
    %cst_71 = arith.constant 1.000000e+00 : f32
    %169 = vector.broadcast %cst_71 : f32 to vector<16x256xf32>
    %170 = arith.cmpf ogt, %167, %169 : vector<16x256xf32>
    %171 = arith.select %170, %168, %167 : vector<16x256xi1>, vector<16x256xf32>
    %172 = arith.mulf %171, %171 : vector<16x256xf32>
    %cst_72 = arith.constant -1.172120e-02 : f32
    %173 = vector.broadcast %cst_72 : f32 to vector<16x256xf32>
    %174 = arith.mulf %173, %172 : vector<16x256xf32>
    %cst_73 = arith.constant 0.0526533201 : f32
    %175 = vector.broadcast %cst_73 : f32 to vector<16x256xf32>
    %176 = arith.addf %174, %175 : vector<16x256xf32>
    %177 = arith.mulf %176, %172 : vector<16x256xf32>
    %cst_74 = arith.constant -0.116432868 : f32
    %178 = vector.broadcast %cst_74 : f32 to vector<16x256xf32>
    %179 = arith.addf %177, %178 : vector<16x256xf32>
    %180 = arith.mulf %179, %172 : vector<16x256xf32>
    %cst_75 = arith.constant 0.193543464 : f32
    %181 = vector.broadcast %cst_75 : f32 to vector<16x256xf32>
    %182 = arith.addf %180, %181 : vector<16x256xf32>
    %183 = arith.mulf %182, %172 : vector<16x256xf32>
    %cst_76 = arith.constant -0.332623482 : f32
    %184 = vector.broadcast %cst_76 : f32 to vector<16x256xf32>
    %185 = arith.addf %183, %184 : vector<16x256xf32>
    %186 = arith.mulf %185, %172 : vector<16x256xf32>
    %cst_77 = arith.constant 0.999977231 : f32
    %187 = vector.broadcast %cst_77 : f32 to vector<16x256xf32>
    %188 = arith.addf %186, %187 : vector<16x256xf32>
    %189 = arith.mulf %188, %171 : vector<16x256xf32>
    %cst_78 = arith.constant 1.57079637 : f32
    %190 = vector.broadcast %cst_78 : f32 to vector<16x256xf32>
    %191 = arith.subf %190, %189 : vector<16x256xf32>
    %192 = arith.select %170, %191, %189 : vector<16x256xi1>, vector<16x256xf32>
    %cst_79 = arith.constant 0.000000e+00 : f32
    %193 = vector.broadcast %cst_79 : f32 to vector<16x256xf32>
    %194 = arith.cmpf olt, %166, %193 : vector<16x256xf32>
    %cst_80 = arith.constant 0.000000e+00 : f32
    %195 = vector.broadcast %cst_80 : f32 to vector<16x256xf32>
    %196 = arith.subf %195, %192 : vector<16x256xf32>
    %197 = arith.select %194, %196, %192 : vector<16x256xi1>, vector<16x256xf32>
    %198 = arith.mulf %197, %197 : vector<16x256xf32>
    %199 = tpu.concatenate %197, %198 in 0 : vector<16x256xf32>, vector<16x256xf32> -> vector<32x256xf32>
    %c4 = arith.constant 4 : index
    %c0_81 = arith.constant 0 : index
    %c0_82 = arith.constant 0 : index
    %200 = vector.load %arg5[%c4, %c0_81, %c0_82] : memref<8x16x32xf32, #tpu.memory_space<vmem>>, vector<1x16x32xf32>
    %201 = vector.shape_cast %200 : vector<1x16x32xf32> to vector<16x32xf32>
    %cst_83 = arith.constant dense<0.000000e+00> : vector<16x256xf32>
    %202 = tpu.matmul %201, %199, %cst_83 {dimension_numbers = #tpu.dot_dimension_numbers<[1], [0], [0], [1], [0, 0, 1, 1], [], []>, precision = #tpu.contract_precision<fp32>} : vector<16x32xf32>, vector<32x256xf32>, vector<16x256xf32> -> vector<16x256xf32>
    %c4_84 = arith.constant 4 : index
    %c0_85 = arith.constant 0 : index
    %c0_86 = arith.constant 0 : index
    %203 = vector.load %arg6[%c4_84, %c0_85, %c0_86] : memref<8x16x1xf32, #tpu.memory_space<vmem>>, vector<1x16x1xf32>
    %204 = vector.shape_cast %203 : vector<1x16x1xf32> to vector<16x1xf32>
    %205 = vector.broadcast %204 : vector<16x1xf32> to vector<16x256xf32>
    %206 = arith.addf %202, %205 : vector<16x256xf32>
    %207 = math.absf %206 : vector<16x256xf32>
    %208 = tpu.reciprocal %207 {approx = true} : vector<16x256xf32> -> vector<16x256xf32>
    %cst_87 = arith.constant 1.000000e+00 : f32
    %209 = vector.broadcast %cst_87 : f32 to vector<16x256xf32>
    %210 = arith.cmpf ogt, %207, %209 : vector<16x256xf32>
    %211 = arith.select %210, %208, %207 : vector<16x256xi1>, vector<16x256xf32>
    %212 = arith.mulf %211, %211 : vector<16x256xf32>
    %cst_88 = arith.constant -1.172120e-02 : f32
    %213 = vector.broadcast %cst_88 : f32 to vector<16x256xf32>
    %214 = arith.mulf %213, %212 : vector<16x256xf32>
    %cst_89 = arith.constant 0.0526533201 : f32
    %215 = vector.broadcast %cst_89 : f32 to vector<16x256xf32>
    %216 = arith.addf %214, %215 : vector<16x256xf32>
    %217 = arith.mulf %216, %212 : vector<16x256xf32>
    %cst_90 = arith.constant -0.116432868 : f32
    %218 = vector.broadcast %cst_90 : f32 to vector<16x256xf32>
    %219 = arith.addf %217, %218 : vector<16x256xf32>
    %220 = arith.mulf %219, %212 : vector<16x256xf32>
    %cst_91 = arith.constant 0.193543464 : f32
    %221 = vector.broadcast %cst_91 : f32 to vector<16x256xf32>
    %222 = arith.addf %220, %221 : vector<16x256xf32>
    %223 = arith.mulf %222, %212 : vector<16x256xf32>
    %cst_92 = arith.constant -0.332623482 : f32
    %224 = vector.broadcast %cst_92 : f32 to vector<16x256xf32>
    %225 = arith.addf %223, %224 : vector<16x256xf32>
    %226 = arith.mulf %225, %212 : vector<16x256xf32>
    %cst_93 = arith.constant 0.999977231 : f32
    %227 = vector.broadcast %cst_93 : f32 to vector<16x256xf32>
    %228 = arith.addf %226, %227 : vector<16x256xf32>
    %229 = arith.mulf %228, %211 : vector<16x256xf32>
    %cst_94 = arith.constant 1.57079637 : f32
    %230 = vector.broadcast %cst_94 : f32 to vector<16x256xf32>
    %231 = arith.subf %230, %229 : vector<16x256xf32>
    %232 = arith.select %210, %231, %229 : vector<16x256xi1>, vector<16x256xf32>
    %cst_95 = arith.constant 0.000000e+00 : f32
    %233 = vector.broadcast %cst_95 : f32 to vector<16x256xf32>
    %234 = arith.cmpf olt, %206, %233 : vector<16x256xf32>
    %cst_96 = arith.constant 0.000000e+00 : f32
    %235 = vector.broadcast %cst_96 : f32 to vector<16x256xf32>
    %236 = arith.subf %235, %232 : vector<16x256xf32>
    %237 = arith.select %234, %236, %232 : vector<16x256xi1>, vector<16x256xf32>
    %238 = arith.mulf %237, %237 : vector<16x256xf32>
    %239 = tpu.concatenate %237, %238 in 0 : vector<16x256xf32>, vector<16x256xf32> -> vector<32x256xf32>
    %c5 = arith.constant 5 : index
    %c0_97 = arith.constant 0 : index
    %c0_98 = arith.constant 0 : index
    %240 = vector.load %arg5[%c5, %c0_97, %c0_98] : memref<8x16x32xf32, #tpu.memory_space<vmem>>, vector<1x16x32xf32>
    %241 = vector.shape_cast %240 : vector<1x16x32xf32> to vector<16x32xf32>
    %cst_99 = arith.constant dense<0.000000e+00> : vector<16x256xf32>
    %242 = tpu.matmul %241, %239, %cst_99 {dimension_numbers = #tpu.dot_dimension_numbers<[1], [0], [0], [1], [0, 0, 1, 1], [], []>, precision = #tpu.contract_precision<fp32>} : vector<16x32xf32>, vector<32x256xf32>, vector<16x256xf32> -> vector<16x256xf32>
    %c5_100 = arith.constant 5 : index
    %c0_101 = arith.constant 0 : index
    %c0_102 = arith.constant 0 : index
    %243 = vector.load %arg6[%c5_100, %c0_101, %c0_102] : memref<8x16x1xf32, #tpu.memory_space<vmem>>, vector<1x16x1xf32>
    %244 = vector.shape_cast %243 : vector<1x16x1xf32> to vector<16x1xf32>
    %245 = vector.broadcast %244 : vector<16x1xf32> to vector<16x256xf32>
    %246 = arith.addf %242, %245 : vector<16x256xf32>
    %247 = math.absf %246 : vector<16x256xf32>
    %248 = tpu.reciprocal %247 {approx = true} : vector<16x256xf32> -> vector<16x256xf32>
    %cst_103 = arith.constant 1.000000e+00 : f32
    %249 = vector.broadcast %cst_103 : f32 to vector<16x256xf32>
    %250 = arith.cmpf ogt, %247, %249 : vector<16x256xf32>
    %251 = arith.select %250, %248, %247 : vector<16x256xi1>, vector<16x256xf32>
    %252 = arith.mulf %251, %251 : vector<16x256xf32>
    %cst_104 = arith.constant -1.172120e-02 : f32
    %253 = vector.broadcast %cst_104 : f32 to vector<16x256xf32>
    %254 = arith.mulf %253, %252 : vector<16x256xf32>
    %cst_105 = arith.constant 0.0526533201 : f32
    %255 = vector.broadcast %cst_105 : f32 to vector<16x256xf32>
    %256 = arith.addf %254, %255 : vector<16x256xf32>
    %257 = arith.mulf %256, %252 : vector<16x256xf32>
    %cst_106 = arith.constant -0.116432868 : f32
    %258 = vector.broadcast %cst_106 : f32 to vector<16x256xf32>
    %259 = arith.addf %257, %258 : vector<16x256xf32>
    %260 = arith.mulf %259, %252 : vector<16x256xf32>
    %cst_107 = arith.constant 0.193543464 : f32
    %261 = vector.broadcast %cst_107 : f32 to vector<16x256xf32>
    %262 = arith.addf %260, %261 : vector<16x256xf32>
    %263 = arith.mulf %262, %252 : vector<16x256xf32>
    %cst_108 = arith.constant -0.332623482 : f32
    %264 = vector.broadcast %cst_108 : f32 to vector<16x256xf32>
    %265 = arith.addf %263, %264 : vector<16x256xf32>
    %266 = arith.mulf %265, %252 : vector<16x256xf32>
    %cst_109 = arith.constant 0.999977231 : f32
    %267 = vector.broadcast %cst_109 : f32 to vector<16x256xf32>
    %268 = arith.addf %266, %267 : vector<16x256xf32>
    %269 = arith.mulf %268, %251 : vector<16x256xf32>
    %cst_110 = arith.constant 1.57079637 : f32
    %270 = vector.broadcast %cst_110 : f32 to vector<16x256xf32>
    %271 = arith.subf %270, %269 : vector<16x256xf32>
    %272 = arith.select %250, %271, %269 : vector<16x256xi1>, vector<16x256xf32>
    %cst_111 = arith.constant 0.000000e+00 : f32
    %273 = vector.broadcast %cst_111 : f32 to vector<16x256xf32>
    %274 = arith.cmpf olt, %246, %273 : vector<16x256xf32>
    %cst_112 = arith.constant 0.000000e+00 : f32
    %275 = vector.broadcast %cst_112 : f32 to vector<16x256xf32>
    %276 = arith.subf %275, %272 : vector<16x256xf32>
    %277 = arith.select %274, %276, %272 : vector<16x256xi1>, vector<16x256xf32>
    %278 = arith.mulf %277, %277 : vector<16x256xf32>
    %279 = tpu.concatenate %277, %278 in 0 : vector<16x256xf32>, vector<16x256xf32> -> vector<32x256xf32>
    %c6 = arith.constant 6 : index
    %c0_113 = arith.constant 0 : index
    %c0_114 = arith.constant 0 : index
    %280 = vector.load %arg5[%c6, %c0_113, %c0_114] : memref<8x16x32xf32, #tpu.memory_space<vmem>>, vector<1x16x32xf32>
    %281 = vector.shape_cast %280 : vector<1x16x32xf32> to vector<16x32xf32>
    %cst_115 = arith.constant dense<0.000000e+00> : vector<16x256xf32>
    %282 = tpu.matmul %281, %279, %cst_115 {dimension_numbers = #tpu.dot_dimension_numbers<[1], [0], [0], [1], [0, 0, 1, 1], [], []>, precision = #tpu.contract_precision<fp32>} : vector<16x32xf32>, vector<32x256xf32>, vector<16x256xf32> -> vector<16x256xf32>
    %c6_116 = arith.constant 6 : index
    %c0_117 = arith.constant 0 : index
    %c0_118 = arith.constant 0 : index
    %283 = vector.load %arg6[%c6_116, %c0_117, %c0_118] : memref<8x16x1xf32, #tpu.memory_space<vmem>>, vector<1x16x1xf32>
    %284 = vector.shape_cast %283 : vector<1x16x1xf32> to vector<16x1xf32>
    %285 = vector.broadcast %284 : vector<16x1xf32> to vector<16x256xf32>
    %286 = arith.addf %282, %285 : vector<16x256xf32>
    %287 = math.absf %286 : vector<16x256xf32>
    %288 = tpu.reciprocal %287 {approx = true} : vector<16x256xf32> -> vector<16x256xf32>
    %cst_119 = arith.constant 1.000000e+00 : f32
    %289 = vector.broadcast %cst_119 : f32 to vector<16x256xf32>
    %290 = arith.cmpf ogt, %287, %289 : vector<16x256xf32>
    %291 = arith.select %290, %288, %287 : vector<16x256xi1>, vector<16x256xf32>
    %292 = arith.mulf %291, %291 : vector<16x256xf32>
    %cst_120 = arith.constant -1.172120e-02 : f32
    %293 = vector.broadcast %cst_120 : f32 to vector<16x256xf32>
    %294 = arith.mulf %293, %292 : vector<16x256xf32>
    %cst_121 = arith.constant 0.0526533201 : f32
    %295 = vector.broadcast %cst_121 : f32 to vector<16x256xf32>
    %296 = arith.addf %294, %295 : vector<16x256xf32>
    %297 = arith.mulf %296, %292 : vector<16x256xf32>
    %cst_122 = arith.constant -0.116432868 : f32
    %298 = vector.broadcast %cst_122 : f32 to vector<16x256xf32>
    %299 = arith.addf %297, %298 : vector<16x256xf32>
    %300 = arith.mulf %299, %292 : vector<16x256xf32>
    %cst_123 = arith.constant 0.193543464 : f32
    %301 = vector.broadcast %cst_123 : f32 to vector<16x256xf32>
    %302 = arith.addf %300, %301 : vector<16x256xf32>
    %303 = arith.mulf %302, %292 : vector<16x256xf32>
    %cst_124 = arith.constant -0.332623482 : f32
    %304 = vector.broadcast %cst_124 : f32 to vector<16x256xf32>
    %305 = arith.addf %303, %304 : vector<16x256xf32>
    %306 = arith.mulf %305, %292 : vector<16x256xf32>
    %cst_125 = arith.constant 0.999977231 : f32
    %307 = vector.broadcast %cst_125 : f32 to vector<16x256xf32>
    %308 = arith.addf %306, %307 : vector<16x256xf32>
    %309 = arith.mulf %308, %291 : vector<16x256xf32>
    %cst_126 = arith.constant 1.57079637 : f32
    %310 = vector.broadcast %cst_126 : f32 to vector<16x256xf32>
    %311 = arith.subf %310, %309 : vector<16x256xf32>
    %312 = arith.select %290, %311, %309 : vector<16x256xi1>, vector<16x256xf32>
    %cst_127 = arith.constant 0.000000e+00 : f32
    %313 = vector.broadcast %cst_127 : f32 to vector<16x256xf32>
    %314 = arith.cmpf olt, %286, %313 : vector<16x256xf32>
    %cst_128 = arith.constant 0.000000e+00 : f32
    %315 = vector.broadcast %cst_128 : f32 to vector<16x256xf32>
    %316 = arith.subf %315, %312 : vector<16x256xf32>
    %317 = arith.select %314, %316, %312 : vector<16x256xi1>, vector<16x256xf32>
    %318 = arith.mulf %317, %317 : vector<16x256xf32>
    %319 = tpu.concatenate %317, %318 in 0 : vector<16x256xf32>, vector<16x256xf32> -> vector<32x256xf32>
    %c7 = arith.constant 7 : index
    %c0_129 = arith.constant 0 : index
    %c0_130 = arith.constant 0 : index
    %320 = vector.load %arg5[%c7, %c0_129, %c0_130] : memref<8x16x32xf32, #tpu.memory_space<vmem>>, vector<1x16x32xf32>
    %321 = vector.shape_cast %320 : vector<1x16x32xf32> to vector<16x32xf32>
    %cst_131 = arith.constant dense<0.000000e+00> : vector<16x256xf32>
    %322 = tpu.matmul %321, %319, %cst_131 {dimension_numbers = #tpu.dot_dimension_numbers<[1], [0], [0], [1], [0, 0, 1, 1], [], []>, precision = #tpu.contract_precision<fp32>} : vector<16x32xf32>, vector<32x256xf32>, vector<16x256xf32> -> vector<16x256xf32>
    %c7_132 = arith.constant 7 : index
    %c0_133 = arith.constant 0 : index
    %c0_134 = arith.constant 0 : index
    %323 = vector.load %arg6[%c7_132, %c0_133, %c0_134] : memref<8x16x1xf32, #tpu.memory_space<vmem>>, vector<1x16x1xf32>
    %324 = vector.shape_cast %323 : vector<1x16x1xf32> to vector<16x1xf32>
    %325 = vector.broadcast %324 : vector<16x1xf32> to vector<16x256xf32>
    %326 = arith.addf %322, %325 : vector<16x256xf32>
    %327 = math.absf %326 : vector<16x256xf32>
    %328 = tpu.reciprocal %327 {approx = true} : vector<16x256xf32> -> vector<16x256xf32>
    %cst_135 = arith.constant 1.000000e+00 : f32
    %329 = vector.broadcast %cst_135 : f32 to vector<16x256xf32>
    %330 = arith.cmpf ogt, %327, %329 : vector<16x256xf32>
    %331 = arith.select %330, %328, %327 : vector<16x256xi1>, vector<16x256xf32>
    %332 = arith.mulf %331, %331 : vector<16x256xf32>
    %cst_136 = arith.constant -1.172120e-02 : f32
    %333 = vector.broadcast %cst_136 : f32 to vector<16x256xf32>
    %334 = arith.mulf %333, %332 : vector<16x256xf32>
    %cst_137 = arith.constant 0.0526533201 : f32
    %335 = vector.broadcast %cst_137 : f32 to vector<16x256xf32>
    %336 = arith.addf %334, %335 : vector<16x256xf32>
    %337 = arith.mulf %336, %332 : vector<16x256xf32>
    %cst_138 = arith.constant -0.116432868 : f32
    %338 = vector.broadcast %cst_138 : f32 to vector<16x256xf32>
    %339 = arith.addf %337, %338 : vector<16x256xf32>
    %340 = arith.mulf %339, %332 : vector<16x256xf32>
    %cst_139 = arith.constant 0.193543464 : f32
    %341 = vector.broadcast %cst_139 : f32 to vector<16x256xf32>
    %342 = arith.addf %340, %341 : vector<16x256xf32>
    %343 = arith.mulf %342, %332 : vector<16x256xf32>
    %cst_140 = arith.constant -0.332623482 : f32
    %344 = vector.broadcast %cst_140 : f32 to vector<16x256xf32>
    %345 = arith.addf %343, %344 : vector<16x256xf32>
    %346 = arith.mulf %345, %332 : vector<16x256xf32>
    %cst_141 = arith.constant 0.999977231 : f32
    %347 = vector.broadcast %cst_141 : f32 to vector<16x256xf32>
    %348 = arith.addf %346, %347 : vector<16x256xf32>
    %349 = arith.mulf %348, %331 : vector<16x256xf32>
    %cst_142 = arith.constant 1.57079637 : f32
    %350 = vector.broadcast %cst_142 : f32 to vector<16x256xf32>
    %351 = arith.subf %350, %349 : vector<16x256xf32>
    %352 = arith.select %330, %351, %349 : vector<16x256xi1>, vector<16x256xf32>
    %cst_143 = arith.constant 0.000000e+00 : f32
    %353 = vector.broadcast %cst_143 : f32 to vector<16x256xf32>
    %354 = arith.cmpf olt, %326, %353 : vector<16x256xf32>
    %cst_144 = arith.constant 0.000000e+00 : f32
    %355 = vector.broadcast %cst_144 : f32 to vector<16x256xf32>
    %356 = arith.subf %355, %352 : vector<16x256xf32>
    %357 = arith.select %354, %356, %352 : vector<16x256xi1>, vector<16x256xf32>
    %358 = arith.mulf %357, %357 : vector<16x256xf32>
    %359 = tpu.concatenate %357, %358 in 0 : vector<16x256xf32>, vector<16x256xf32> -> vector<32x256xf32>
    %c0_145 = arith.constant 0 : index
    %c0_146 = arith.constant 0 : index
    %360 = vector.load %arg7[%c0_145, %c0_146] : memref<3x32xf32, #tpu.memory_space<vmem>>, vector<3x32xf32>
    %cst_147 = arith.constant dense<0.000000e+00> : vector<3x256xf32>
    %361 = tpu.matmul %360, %359, %cst_147 {dimension_numbers = #tpu.dot_dimension_numbers<[1], [0], [0], [1], [0, 0, 1, 1], [], []>, precision = #tpu.contract_precision<fp32>} : vector<3x32xf32>, vector<32x256xf32>, vector<3x256xf32> -> vector<3x256xf32>
    %c0_148 = arith.constant 0 : index
    %c0_149 = arith.constant 0 : index
    %362 = vector.load %arg8[%c0_148, %c0_149] : memref<3x1xf32, #tpu.memory_space<vmem>>, vector<3x1xf32>
    %363 = vector.broadcast %362 : vector<3x1xf32> to vector<3x256xf32>
    %364 = arith.addf %361, %363 : vector<3x256xf32>
    %365 = arith.negf %364 : vector<3x256xf32>
    %366 = math.exp %365 : vector<3x256xf32>
    %cst_150 = arith.constant 1.000000e+00 : f32
    %367 = vector.broadcast %cst_150 : f32 to vector<3x256xf32>
    %368 = arith.addf %367, %366 : vector<3x256xf32>
    %369 = arith.divf %367, %368 : vector<3x256xf32>
    %c0_151 = arith.constant 0 : index
    %c0_152 = arith.constant 0 : index
    %c0_153 = arith.constant 0 : index
    %370 = vector.load %arg9[%c0_151, %c0_152, %c0_153] : memref<1x3x256xf32, #tpu.memory_space<vmem>>, vector<1x3x256xf32>
    %371 = vector.shape_cast %370 : vector<1x3x256xf32> to vector<3x256xf32>
    %372 = vector.shape_cast %369 : vector<3x256xf32> to vector<1x3x256xf32>
    tpu.vector_store %arg9[%c0_151, %c0_152, %c0_153], %372 {strides = array<i32>} : memref<1x3x256xf32, #tpu.memory_space<vmem>>, vector<1x3x256xf32>,
    return
  }
  func.func @transform_0(%arg0: i32, %arg1: i32) -> (i32, i32, i32) {
    %c0_i32 = arith.constant 0 : i32
    %c0_i32_0 = arith.constant 0 : i32
    return %arg0, %c0_i32, %arg1 : i32, i32, i32
  }
  func.func @transform_1(%arg0: i32, %arg1: i32) -> (i32, i32) {
    %c0_i32 = arith.constant 0 : i32
    %c0_i32_0 = arith.constant 0 : i32
    %c0_i32_1 = arith.constant 0 : i32
    return %c0_i32, %c0_i32_0 : i32, i32
  }
  func.func @transform_2(%arg0: i32, %arg1: i32) -> (i32, i32) {
    %c0_i32 = arith.constant 0 : i32
    %c0_i32_0 = arith.constant 0 : i32
    %c0_i32_1 = arith.constant 0 : i32
    return %c0_i32, %c0_i32_0 : i32, i32
  }
  func.func @transform_3(%arg0: i32, %arg1: i32) -> (i32, i32, i32) {
    %c0_i32 = arith.constant 0 : i32
    %c0_i32_0 = arith.constant 0 : i32
    %c0_i32_1 = arith.constant 0 : i32
    %c0_i32_2 = arith.constant 0 : i32
    return %c0_i32, %c0_i32_0, %c0_i32_1 : i32, i32, i32
  }
  func.func @transform_4(%arg0: i32, %arg1: i32) -> (i32, i32, i32) {
    %c0_i32 = arith.constant 0 : i32
    %c0_i32_0 = arith.constant 0 : i32
    %c0_i32_1 = arith.constant 0 : i32
    %c0_i32_2 = arith.constant 0 : i32
    return %c0_i32, %c0_i32_0, %c0_i32_1 : i32, i32, i32
  }
  func.func @transform_5(%arg0: i32, %arg1: i32) -> (i32, i32) {
    %c0_i32 = arith.constant 0 : i32
    %c0_i32_0 = arith.constant 0 : i32
    %c0_i32_1 = arith.constant 0 : i32
    return %c0_i32, %c0_i32_0 : i32, i32
  }
  func.func @transform_6(%arg0: i32, %arg1: i32) -> (i32, i32) {
    %c0_i32 = arith.constant 0 : i32
    %c0_i32_0 = arith.constant 0 : i32
    %c0_i32_1 = arith.constant 0 : i32
    return %c0_i32, %c0_i32_0 : i32, i32
  }
  func.func @transform_7(%arg0: i32, %arg1: i32) -> (i32, i32, i32) {
    %c0_i32 = arith.constant 0 : i32
    %c0_i32_0 = arith.constant 0 : i32
    return %arg0, %c0_i32, %arg1 : i32, i32, i32
  }
}

</mosaic_0001>

<llo_original>
// kernel: tpu_custom_call.1
$region0: #{tpu_custom_call.1}
  #allocation0 [shape = 'u32[]', space=smem, size = 0x4, offset = 0x4, fixed_abs, tag = 'smem constant byte address 0x4 - core index']
  #allocation1 [shape = 'u32[144,128]{1,0:T(1,128)}', space=vmem, size = 0x12000, scoped, tag = 'internal scratch']
  %s0 = inlined_call_operand.vmem [shape: f32[2,2,256], index: 0, kind: input, shape index: {}]
  %s1 = inlined_call_operand.vmem [shape: f32[16,2], index: 1, kind: input, shape index: {}]
  %s2 = inlined_call_operand.vmem [shape: f32[16,1], index: 2, kind: input, shape index: {}]
  %s3 = inlined_call_operand.vmem [shape: f32[8,16,32], index: 3, kind: input, shape index: {}]
  %s4 = inlined_call_operand.vmem [shape: f32[8,16,1], index: 4, kind: input, shape index: {}]
  %s5 = inlined_call_operand.vmem [shape: f32[3,32], index: 5, kind: input, shape index: {}]
  %s6 = inlined_call_operand.vmem [shape: f32[3,1], index: 6, kind: input, shape index: {}]
  %s7 = inlined_call_operand.vmem [shape: f32[2,3,256], index: 7, kind: output, shape index: {}]
  %s8 = sld [smem:[#allocation0]]
  $region61: #{tpu_custom_call.1} parent=0
    _
  %s10 = ssub.s32 1, %s8
  %s11 = scalar_select 0, %s10, %s8
  loop: start=0, step=1, limit=4
  $region2: #{tpu_custom_call.1} parent=0 // loop_pre_header
    _
  $region3: #{tpu_custom_call.1} parent=0 // loop_header
    %s13 = sphi 0, %s17
    %p14 = scmp.ge.s32.totalorder %s13, 4
    %s20 = sphi 0, %s32
    %s21 = sphi 0, %s28
    %s22 = sphi 0, %s20
    %s23 = sphi 0, %s21
    %s24 = sphi 0, %s22
    %s25 = sphi 0, %s23
    %s37 = sphi 0, %s39
    %s40 = sphi 0, %s37
    %s41 = sphi 0, %s40
    %s57 = sphi 0, %s41
    %s61 = sphi 0, %s61
    %s63 = sphi 0, %s61
    %s64 = sphi 0, %s63
    %s78 = sphi 0, %s64
    %s82 = sphi 0, %s82
    %s84 = sphi 0, %s82
    %s85 = sphi 0, %s84
    %s99 = sphi 0, %s85
    %s103 = sphi 0, %s103
    %s105 = sphi 0, %s103
    %s106 = sphi 0, %s105
    %s120 = sphi 0, %s106
    %s124 = sphi 0, %s124
    %s126 = sphi 0, %s124
    %s127 = sphi 0, %s126
    %s141 = sphi 0, %s127
    %s145 = sphi 0, %s145
    %s147 = sphi 0, %s145
    %s148 = sphi 0, %s147
    %s162 = sphi 0, %s148
    %s166 = sphi 0, %s166
    %s168 = sphi 0, %s166
    %s169 = sphi 0, %s168
    %s183 = sphi 0, %s169
    %s191 = sphi 0, %s193
    %s194 = sphi 0, %s191
    %s195 = sphi 0, %s194
    %s211 = sphi 0, %s195
  $region4: #{tpu_custom_call.1} parent=0 // loop_header_branch
    %16 = sbr.rel (%p14) target = $region8
  $region5: #{tpu_custom_call.1} parent=0 // loop_body
    %s18 = ssub.s32 %s13, 1
    %s19 = ssub.s32 %s13, 2
    %s26 = sadd.s32 1, %s21
    %p27 = scmp.ge.s32.totalorder %s26, 1
    %s28 = scalar_select %p27, 0, %s26
    %s29 = sadd.s32 1, %s20
    %s30 = scalar_select %p27, %s29, %s20
    %p31 = scmp.ge.s32.totalorder %s30, 2
    %s32 = scalar_select %p31, 0, %s30
    %s33 = ssub.s32 %s20, %s32
    %s34 = ssub.s32 %s21, %s28
    %s35 = sor.u32 %s33, %s34
    %p36 = scmp.eq.s32.totalorder %s35, 0
    %s38 = sadd.s32 %s37, 1
    %s39 = scalar_select %p36, %s37, %s38
    %p42 = pneg %p36
    %p43 = scmp.eq.s32.totalorder %s13, 1
    %p44 = por %p42, %p43
    %p45 = scmp.ne.s32.totalorder %s37, %s40
    %p46 = scmp.eq.s32.totalorder %s13, 0
    %p47 = por %p45, %p46
    %p48 = scmp.ne.s32.totalorder %s37, %s40
    %p49 = scmp.eq.s32.totalorder %s18, 1
    %p50 = por %p48, %p49
    %p51 = scmp.ne.s32.totalorder %s40, %s41
    %p52 = scmp.eq.s32.totalorder %s18, 0
    %p53 = por %p51, %p52
    %p54 = scmp.ne.s32.totalorder %s40, %s41
    %p55 = scmp.eq.s32.totalorder %s19, 1
    %p56 = por %p54, %p55
    %p58 = scmp.ne.s32.totalorder %s41, %s57
    %p59 = scmp.eq.s32.totalorder %s19, 0
    %p60 = por %p58, %p59
    %s62 = sadd.s32 %s61, 1
    %p65 = scmp.eq.s32.totalorder %s13, 1
    %p66 = scmp.ne.s32.totalorder %s61, %s63
    %p67 = scmp.eq.s32.totalorder %s13, 0
    %p68 = por %p66, %p67
    %p69 = scmp.ne.s32.totalorder %s61, %s63
    %p70 = scmp.eq.s32.totalorder %s18, 1
    %p71 = por %p69, %p70
    %p72 = scmp.ne.s32.totalorder %s63, %s64
    %p73 = scmp.eq.s32.totalorder %s18, 0
    %p74 = por %p72, %p73
    %p75 = scmp.ne.s32.totalorder %s63, %s64
    %p76 = scmp.eq.s32.totalorder %s19, 1
    %p77 = por %p75, %p76
    %p79 = scmp.ne.s32.totalorder %s64, %s78
    %p80 = scmp.eq.s32.totalorder %s19, 0
    %p81 = por %p79, %p80
    %s83 = sadd.s32 %s82, 1
    %p86 = scmp.eq.s32.totalorder %s13, 1
    %p87 = scmp.ne.s32.totalorder %s82, %s84
    %p88 = scmp.eq.s32.totalorder %s13, 0
    %p89 = por %p87, %p88
    %p90 = scmp.ne.s32.totalorder %s82, %s84
    %p91 = scmp.eq.s32.totalorder %s18, 1
    %p92 = por %p90, %p91
    %p93 = scmp.ne.s32.totalorder %s84, %s85
    %p94 = scmp.eq.s32.totalorder %s18, 0
    %p95 = por %p93, %p94
    %p96 = scmp.ne.s32.totalorder %s84, %s85
    %p97 = scmp.eq.s32.totalorder %s19, 1
    %p98 = por %p96, %p97
    %p100 = scmp.ne.s32.totalorder %s85, %s99
    %p101 = scmp.eq.s32.totalorder %s19, 0
    %p102 = por %p100, %p101
    %s104 = sadd.s32 %s103, 1
    %p107 = scmp.eq.s32.totalorder %s13, 1
    %p108 = scmp.ne.s32.totalorder %s103, %s105
    %p109 = scmp.eq.s32.totalorder %s13, 0
    %p110 = por %p108, %p109
    %p111 = scmp.ne.s32.totalorder %s103, %s105
    %p112 = scmp.eq.s32.totalorder %s18, 1
    %p113 = por %p111, %p112
    %p114 = scmp.ne.s32.totalorder %s105, %s106
    %p115 = scmp.eq.s32.totalorder %s18, 0
    %p116 = por %p114, %p115
    %p117 = scmp.ne.s32.totalorder %s105, %s106
    %p118 = scmp.eq.s32.totalorder %s19, 1
    %p119 = por %p117, %p118
    %p121 = scmp.ne.s32.totalorder %s106, %s120
    %p122 = scmp.eq.s32.totalorder %s19, 0
    %p123 = por %p121, %p122
    %s125 = sadd.s32 %s124, 1
    %p128 = scmp.eq.s32.totalorder %s13, 1
    %p129 = scmp.ne.s32.totalorder %s124, %s126
    %p130 = scmp.eq.s32.totalorder %s13, 0
    %p131 = por %p129, %p130
    %p132 = scmp.ne.s32.totalorder %s124, %s126
    %p133 = scmp.eq.s32.totalorder %s18, 1
    %p134 = por %p132, %p133
    %p135 = scmp.ne.s32.totalorder %s126, %s127
    %p136 = scmp.eq.s32.totalorder %s18, 0
    %p137 = por %p135, %p136
    %p138 = scmp.ne.s32.totalorder %s126, %s127
    %p139 = scmp.eq.s32.totalorder %s19, 1
    %p140 = por %p138, %p139
    %p142 = scmp.ne.s32.totalorder %s127, %s141
    %p143 = scmp.eq.s32.totalorder %s19, 0
    %p144 = por %p142, %p143
    %s146 = sadd.s32 %s145, 1
    %p149 = scmp.eq.s32.totalorder %s13, 1
    %p150 = scmp.ne.s32.totalorder %s145, %s147
    %p151 = scmp.eq.s32.totalorder %s13, 0
    %p152 = por %p150, %p151
    %p153 = scmp.ne.s32.totalorder %s145, %s147
    %p154 = scmp.eq.s32.totalorder %s18, 1
    %p155 = por %p153, %p154
    %p156 = scmp.ne.s32.totalorder %s147, %s148
    %p157 = scmp.eq.s32.totalorder %s18, 0
    %p158 = por %p156, %p157
    %p159 = scmp.ne.s32.totalorder %s147, %s148
    %p160 = scmp.eq.s32.totalorder %s19, 1
    %p161 = por %p159, %p160
    %p163 = scmp.ne.s32.totalorder %s148, %s162
    %p164 = scmp.eq.s32.totalorder %s19, 0
    %p165 = por %p163, %p164
    %s167 = sadd.s32 %s166, 1
    %p170 = scmp.eq.s32.totalorder %s13, 1
    %p171 = scmp.ne.s32.totalorder %s166, %s168
    %p172 = scmp.eq.s32.totalorder %s13, 0
    %p173 = por %p171, %p172
    %p174 = scmp.ne.s32.totalorder %s166, %s168
    %p175 = scmp.eq.s32.totalorder %s18, 1
    %p176 = por %p174, %p175
    %p177 = scmp.ne.s32.totalorder %s168, %s169
    %p178 = scmp.eq.s32.totalorder %s18, 0
    %p179 = por %p177, %p178
    %p180 = scmp.ne.s32.totalorder %s168, %s169
    %p181 = scmp.eq.s32.totalorder %s19, 1
    %p182 = por %p180, %p181
    %p184 = scmp.ne.s32.totalorder %s169, %s183
    %p185 = scmp.eq.s32.totalorder %s19, 0
    %p186 = por %p184, %p185
    %s187 = ssub.s32 %s20, %s32
    %s188 = ssub.s32 %s21, %s28
    %s189 = sor.u32 %s187, %s188
    %p190 = scmp.eq.s32.totalorder %s189, 0
    %s192 = sadd.s32 %s191, 1
    %s193 = scalar_select %p190, %s191, %s192
    %p196 = pneg %p190
    %p197 = scmp.eq.s32.totalorder %s13, 1
    %p198 = por %p196, %p197
    %p199 = scmp.ne.s32.totalorder %s191, %s194
    %p200 = scmp.eq.s32.totalorder %s13, 0
    %p201 = por %p199, %p200
    %p202 = scmp.ne.s32.totalorder %s191, %s194
    %p203 = scmp.eq.s32.totalorder %s18, 1
    %p204 = por %p202, %p203
    %p205 = scmp.ne.s32.totalorder %s194, %s195
    %p206 = scmp.eq.s32.totalorder %s18, 0
    %p207 = por %p205, %p206
    %p208 = scmp.ne.s32.totalorder %s194, %s195
    %p209 = scmp.eq.s32.totalorder %s19, 1
    %p210 = por %p208, %p209
    %p212 = scmp.ne.s32.totalorder %s195, %s211
    %p213 = scmp.eq.s32.totalorder %s19, 0
    %p214 = por %p212, %p213
    %p215 = scmp.le.s32.totalorder 1, %s13
    %p216 = scmp.lt.s32.totalorder %s13, 3
    %p217 = pnand %p215, %p216
    %p218 = pneg %p217
    // Predicated region
    $region9: #{tpu_custom_call.1} parent=5 // pred_check
      _
    $region10: #{tpu_custom_call.1} parent=5 // pred_check_branch
      %220 = sbr.rel (%p217) target = $region12
    $region11: #{tpu_custom_call.1} parent=5 // pred_region
      %s221 = ssub.s32 %s13, 1
      // Predicated region
      $region13: #{tpu_custom_call.1} parent=11 // pred_check
        %p222 = pneg %p74
      $region14: #{tpu_custom_call.1} parent=11 // pred_check_branch
        %224 = sbr.rel (%p222) target = $region16
      $region15: #{tpu_custom_call.1} parent=11 // pred_region
        _
      $region16: #{tpu_custom_call.1} parent=11 // pred_fallthru
        _
      // Predicated region
      $region17: #{tpu_custom_call.1} parent=11 // pred_check
        %p225 = pneg %p95
      $region18: #{tpu_custom_call.1} parent=11 // pred_check_branch
        %227 = sbr.rel (%p225) target = $region20
      $region19: #{tpu_custom_call.1} parent=11 // pred_region
        _
      $region20: #{tpu_custom_call.1} parent=11 // pred_fallthru
        _
      // Predicated region
      $region21: #{tpu_custom_call.1} parent=11 // pred_check
        %p228 = pneg %p116
      $region22: #{tpu_custom_call.1} parent=11 // pred_check_branch
        %230 = sbr.rel (%p228) target = $region24
      $region23: #{tpu_custom_call.1} parent=11 // pred_region
        _
      $region24: #{tpu_custom_call.1} parent=11 // pred_fallthru
        _
      // Predicated region
      $region25: #{tpu_custom_call.1} parent=11 // pred_check
        %p231 = pneg %p137
      $region26: #{tpu_custom_call.1} parent=11 // pred_check_branch
        %233 = sbr.rel (%p231) target = $region28
      $region27: #{tpu_custom_call.1} parent=11 // pred_region
        _
      $region28: #{tpu_custom_call.1} parent=11 // pred_fallthru
        _
      // Predicated region
      $region29: #{tpu_custom_call.1} parent=11 // pred_check
        %p234 = pneg %p158
      $region30: #{tpu_custom_call.1} parent=11 // pred_check_branch
        %236 = sbr.rel (%p234) target = $region32
      $region31: #{tpu_custom_call.1} parent=11 // pred_region
        _
      $region32: #{tpu_custom_call.1} parent=11 // pred_fallthru
        _
      // Predicated region
      $region33: #{tpu_custom_call.1} parent=11 // pred_check
        %p237 = pneg %p179
      $region34: #{tpu_custom_call.1} parent=11 // pred_check_branch
        %239 = sbr.rel (%p237) target = $region36
      $region35: #{tpu_custom_call.1} parent=11 // pred_region
        _
      $region36: #{tpu_custom_call.1} parent=11 // pred_fallthru
        _
    $region12: #{tpu_custom_call.1} parent=5 // pred_fallthru
      _
    %p240 = scmp.lt.s32.totalorder %s13, 2
    // Predicated region
    $region37: #{tpu_custom_call.1} parent=5 // pred_check
      %p241 = pneg %p240
    $region38: #{tpu_custom_call.1} parent=5 // pred_check_branch
      %243 = sbr.rel (%p241) target = $region40
    $region39: #{tpu_custom_call.1} parent=5 // pred_region
      // Predicated region
      $region41: #{tpu_custom_call.1} parent=39 // pred_check
        %p244 = pneg %p47
      $region42: #{tpu_custom_call.1} parent=39 // pred_check_branch
        %246 = sbr.rel (%p244) target = $region44
      $region43: #{tpu_custom_call.1} parent=39 // pred_region
        %s247 = smul.u32 2, %s21
        %p248 = scmp.lt.s32.totalorder %s20, 1
        %s249 = scalar_select %p248, %s20, 1
        %p250 = scmp.lt.s32.totalorder %s247, 1
        %s251 = scalar_select %p250, %s247, 1
        %s252 = smul.addr %s249, 2
        %s253 = sadd.s32 %s251, %s252
        %s254 = smul.addr %s253, 2
        %s255 = scalar_lea.vmem %s0, %s254
        %s256 = smul.u32 2, %s21
      $region44: #{tpu_custom_call.1} parent=39 // pred_fallthru
        _
    $region40: #{tpu_custom_call.1} parent=5 // pred_fallthru
      _
    %p257 = scmp.le.s32.totalorder 1, %s13
    %p258 = scmp.lt.s32.totalorder %s13, 3
    %p259 = pnand %p257, %p258
    %p260 = pneg %p259
    // Predicated region
    $region45: #{tpu_custom_call.1} parent=5 // pred_check
      _
    $region46: #{tpu_custom_call.1} parent=5 // pred_check_branch
      %262 = sbr.rel (%p259) target = $region48
    $region47: #{tpu_custom_call.1} parent=5 // pred_region
      %s263 = ssub.s32 %s13, 1
      %s264 = smul.u32 2, %s23
      %p265 = scmp.lt.s32.totalorder %s22, 1
      %s266 = scalar_select %p265, %s22, 1
      %p267 = scmp.lt.s32.totalorder %s264, 1
      %s268 = scalar_select %p267, %s264, 1
      %s269 = smul.addr %s266, 2
      %s270 = sadd.s32 %s268, %s269
      %s271 = smul.addr %s270, 2
      %s272 = scalar_lea.vmem %s0, %s271
      %p273 = pneg %p53
      %p274 = pneg %p50
      %p275 = pneg %p74
      %p276 = pneg %p71
      %p277 = pneg %p95
      %p278 = pneg %p92
      %p279 = pneg %p116
      %p280 = pneg %p113
      %p281 = pneg %p137
      %p282 = pneg %p134
      %p283 = pneg %p158
      %p284 = pneg %p155
      %p285 = pneg %p179
      %p286 = pneg %p176
      %p287 = pneg %p207
      %p288 = pneg %p204
      %s289 = smul.u32 2, %s23
      %p290 = scmp.lt.s32.totalorder %s22, 1
      %s291 = scalar_select %p290, %s22, 1
      %p292 = scmp.lt.s32.totalorder %s289, 1
      %s293 = scalar_select %p292, %s289, 1
      %s294 = smul.addr %s291, 2
      %s295 = sadd.s32 %s293, %s294
      %s296 = smul.addr %s295, 4
      %s297 = scalar_lea.vmem %s7, %s296
      %s298 = smul.u32 2, %s23
      %p299 = scmp.lt.s32.totalorder %s22, 1
      %s300 = scalar_select %p299, %s22, 1
      %p301 = scmp.lt.s32.totalorder %s298, 1
      %s302 = scalar_select %p301, %s298, 1
      %s303 = smul.addr %s300, 2
      %s304 = sadd.s32 %s302, %s303
      %s305 = smul.addr %s304, 2
      %s306 = scalar_lea.vmem %s0, %s305
      %s307 = smul.u32 2, %s23
      %s308 = smul.u32 2, %s23
      %p309 = scmp.lt.s32.totalorder %s22, 1
      %s310 = scalar_select %p309, %s22, 1
      %p311 = scmp.lt.s32.totalorder %s308, 1
      %s312 = scalar_select %p311, %s308, 1
      %s313 = smul.addr %s310, 2
      %s314 = sadd.s32 %s312, %s313
      %s315 = smul.addr %s314, 4
      %s316 = scalar_lea.vmem %s7, %s315
      %s317 = smul.u32 2, %s23
      %v318 = vld [vmem:[%s1] sm:$0xff]
      %v319 = vld [vmem:[%s1 + $0x8] sm:$0xff]
      %v320 = vld [vmem:[%s306] sm:$0xf]
      %v321 = vld [vmem:[%s2] sm:$0xff]
      %v322 = vld [vmem:[%s2 + $0x8] sm:$0xff]
      %324 = vset.pattern.permute.xlu0 0
      %325 = vperm.xlu0 %324, %v321
      %v326 = vpop.permute.xlu0 %325
      %329 = vset.pattern.permute.xlu0 0
      %330 = vperm.xlu0 %329, %v322
      %v331 = vpop.permute.xlu0 %330
      %v335 = vunpack.c.l.s4 1983009808
      %v336 = vunpack.c.0.s8 %v335
      %v337 = vlaneseq
      %v338 = vshrl.u32 %v337, 7
      %v339 = vsub.s32 %v336, %v338
      %v340 = vrot.slane %v320, %v339
      %v341 = vcombine.high %v340, %v340
      %vm342 = vcmask 15360
      %v344 = vsel %vm342, %v318, 0
      %v347 = vsel %vm342, %v319, 0
      %vm349 = vcmask 1041408
      %v350 = vsel %vm349, %v340, 0
      %v352 = vsel %vm349, %v341, 0
      %v354 = vand.u32 %v352, 4294901760
      %355 = vmatprep.subr.mxu0 %v354
      %v356 = vand.u32 %v350, 4294901760
      %357 = vmatpush1.msra.mxu0 %v356
      %358 = vmatprep.subr.mxu0 0.0
      %359 = vmatpush1.msra.mxu0 0.0
      %360 = vmatprep.subr.mxu0 0.0
      %361 = vmatpush1.msra.mxu0 0.0
      %362 = vmatprep.subr.mxu0 0.0
      %363 = vmatpush1.msra.mxu0 0.0
      %364 = vmatprep.subr.mxu0 0.0
      %365 = vmatpush1.msra.mxu0 0.0
      %366 = vmatprep.subr.mxu0 0.0
      %367 = vmatpush1.msra.mxu0 0.0
      %368 = vmatprep.subr.mxu0 0.0
      %369 = vmatpush1.msra.mxu0 0.0
      %370 = vmatprep.subr.mxu0 0.0
      %371 = vmatpush1.msra.mxu0 0.0
      %372 = vmatprep.subr.mxu0 0.0
      %373 = vmatpush1.msra.mxu0 0.0
      %374 = vmatprep.subr.mxu0 0.0
      %375 = vmatpush1.msra.mxu0 0.0
      %376 = vmatprep.subr.mxu0 0.0
      %377 = vmatpush1.msra.mxu0 0.0
      %378 = vmatprep.subr.mxu0 0.0
      %379 = vmatpush1.msra.mxu0 0.0
      %380 = vmatprep.subr.mxu0 0.0
      %381 = vmatpush1.msra.mxu0 0.0
      %382 = vmatprep.subr.mxu0 0.0
      %383 = vmatpush1.msra.mxu0 0.0
      %384 = vmatprep.subr.mxu0 0.0
      %385 = vmatpush1.msra.mxu0 0.0
      %386 = vmatprep.subr.mxu0 0.0
      %387 = vmatpush1.msra.mxu0 0.0
      %388 = vmatprep.subr.mxu0 0.0
      %389 = vmatpush1.msra.mxu0 0.0
      %390 = vmatprep.subr.mxu0 0.0
      %391 = vmatpush1.msra.mxu0 0.0
      %392 = vmatprep.subr.mxu0 0.0
      %393 = vmatpush1.msra.mxu0 0.0
      %394 = vmatprep.subr.mxu0 0.0
      %395 = vmatpush1.msra.mxu0 0.0
      %396 = vmatprep.subr.mxu0 0.0
      %397 = vmatpush1.msra.mxu0 0.0
      %398 = vmatprep.subr.mxu0 0.0
      %399 = vmatpush1.msra.mxu0 0.0
      %400 = vmatprep.subr.mxu0 0.0
      %401 = vmatpush1.msra.mxu0 0.0
      %402 = vmatprep.subr.mxu0 0.0
      %403 = vmatpush1.msra.mxu0 0.0
      %404 = vmatprep.subr.mxu0 0.0
      %405 = vmatpush1.msra.mxu0 0.0
      %406 = vmatprep.subr.mxu0 0.0
      %407 = vmatpush1.msra.mxu0 0.0
      %408 = vmatprep.subr.mxu0 0.0
      %409 = vmatpush1.msra.mxu0 0.0
      %410 = vmatprep.subr.mxu0 0.0
      %411 = vmatpush1.msra.mxu0 0.0
      %412 = vmatprep.subr.mxu0 0.0
      %413 = vmatpush1.msra.mxu0 0.0
      %414 = vmatprep.subr.mxu0 0.0
      %415 = vmatpush1.msra.mxu0 0.0
      %416 = vmatprep.subr.mxu0 0.0
      %417 = vmatpush1.msra.mxu0 0.0
      %418 = vmatprep.subr.mxu0 0.0
      %419 = vmatpush1.msra.mxu0 0.0
      %420 = vmatprep.mubr.f32.mxu0 0.0
      %v421 = vand.u32 %v344, 4294901760
      %v422 = vsub.f32 %v344, %v421
      %v423 = vand.u32 %v422, 4294901760
      %v424 = vsub.f32 %v422, %v423
      %v425 = vand.u32 %v424, 4294901760
      %426 = vmatmul.mubr.f32.gmra.mrb[0].mxu0 %v425
      %v427 = vpop.f32.mrb[0].mxu0
      %v428 = vadd.f32 %v326, %v427
      %v429 = vpop.f32.mrb[0].mxu0
      %v430 = vadd.f32 %v326, %v429
      %431 = vmatprep.mubr.f32.mxu0 0.0
      %v432 = vand.u32 %v347, 4294901760
      %v433 = vsub.f32 %v347, %v432
      %v434 = vand.u32 %v433, 4294901760
      %v435 = vsub.f32 %v433, %v434
      %v436 = vand.u32 %v435, 4294901760
      %437 = vmatmul.mubr.f32.gmra.mrb[0].mxu0 %v436
      %v438 = vpop.f32.mrb[0].mxu0
      %v439 = vadd.f32 %v331, %v438
      %v440 = vpop.f32.mrb[0].mxu0
      %v441 = vadd.f32 %v331, %v440
      %442 = vdwg.mxu0
      %v443 = vand.u32 %v352, 4294901760
      %v444 = vsub.f32 %v352, %v443
      %v445 = vand.u32 %v444, 4294901760
      %v446 = vsub.f32 %v444, %v445
      %v447 = vand.u32 %v446, 4294901760
      %448 = vmatprep.subr.mxu0 %v447
      %v449 = vand.u32 %v350, 4294901760
      %v450 = vsub.f32 %v350, %v449
      %v451 = vand.u32 %v450, 4294901760
      %v452 = vsub.f32 %v450, %v451
      %v453 = vand.u32 %v452, 4294901760
      %454 = vmatpush1.msra.mxu0 %v453
      %455 = vmatprep.subr.mxu0 0.0
      %456 = vmatpush1.msra.mxu0 0.0
      %457 = vmatprep.subr.mxu0 0.0
      %458 = vmatpush1.msra.mxu0 0.0
      %459 = vmatprep.subr.mxu0 0.0
      %460 = vmatpush1.msra.mxu0 0.0
      %461 = vmatprep.subr.mxu0 0.0
      %462 = vmatpush1.msra.mxu0 0.0
      %463 = vmatprep.subr.mxu0 0.0
      %464 = vmatpush1.msra.mxu0 0.0
      %465 = vmatprep.subr.mxu0 0.0
      %466 = vmatpush1.msra.mxu0 0.0
      %467 = vmatprep.subr.mxu0 0.0
      %468 = vmatpush1.msra.mxu0 0.0
      %469 = vmatprep.subr.mxu0 0.0
      %470 = vmatpush1.msra.mxu0 0.0
      %471 = vmatprep.subr.mxu0 0.0
      %472 = vmatpush1.msra.mxu0 0.0
      %473 = vmatprep.subr.mxu0 0.0
      %474 = vmatpush1.msra.mxu0 0.0
      %475 = vmatprep.subr.mxu0 0.0
      %476 = vmatpush1.msra.mxu0 0.0
      %477 = vmatprep.subr.mxu0 0.0
      %478 = vmatpush1.msra.mxu0 0.0
      %479 = vmatprep.subr.mxu0 0.0
      %480 = vmatpush1.msra.mxu0 0.0
      %481 = vmatprep.subr.mxu0 0.0
      %482 = vmatpush1.msra.mxu0 0.0
      %483 = vmatprep.subr.mxu0 0.0
      %484 = vmatpush1.msra.mxu0 0.0
      %485 = vmatprep.subr.mxu0 0.0
      %486 = vmatpush1.msra.mxu0 0.0
      %487 = vmatprep.subr.mxu0 0.0
      %488 = vmatpush1.msra.mxu0 0.0
      %489 = vmatprep.subr.mxu0 0.0
      %490 = vmatpush1.msra.mxu0 0.0
      %491 = vmatprep.subr.mxu0 0.0
      %492 = vmatpush1.msra.mxu0 0.0
      %493 = vmatprep.subr.mxu0 0.0
      %494 = vmatpush1.msra.mxu0 0.0
      %495 = vmatprep.subr.mxu0 0.0
      %496 = vmatpush1.msra.mxu0 0.0
      %497 = vmatprep.subr.mxu0 0.0
      %498 = vmatpush1.msra.mxu0 0.0
      %499 = vmatprep.subr.mxu0 0.0
      %500 = vmatpush1.msra.mxu0 0.0
      %501 = vmatprep.subr.mxu0 0.0
      %502 = vmatpush1.msra.mxu0 0.0
      %503 = vmatprep.subr.mxu0 0.0
      %504 = vmatpush1.msra.mxu0 0.0
      %505 = vmatprep.subr.mxu0 0.0
      %506 = vmatpush1.msra.mxu0 0.0
      %507 = vmatprep.subr.mxu0 0.0
      %508 = vmatpush1.msra.mxu0 0.0
      %509 = vmatprep.subr.mxu0 0.0
      %510 = vmatpush1.msra.mxu0 0.0
      %511 = vmatprep.subr.mxu0 0.0
      %512 = vmatpush1.msra.mxu0 0.0
      %513 = vmatprep.subr.mxu0 0.0
      %514 = vmatpush1.msra.mxu0 0.0
      %515 = vmatprep.subr.mxu0 0.0
      %516 = vmatpush1.msra.mxu0 0.0
      %517 = vmatprep.mubr.f32.mxu0 0.0
      %v518 = vand.u32 %v344, 4294901760
      %519 = vmatmul.mubr.f32.gmra.mrb[0].mxu0 %v518
      %v520 = vpop.f32.mrb[0].mxu0
      %v521 = vadd.f32 %v428, %v520
      %v522 = vpop.f32.mrb[0].mxu0
      %v523 = vadd.f32 %v430, %v522
      %524 = vmatprep.mubr.f32.mxu0 0.0
      %v525 = vand.u32 %v347, 4294901760
      %526 = vmatmul.mubr.f32.gmra.mrb[0].mxu0 %v525
      %v527 = vpop.f32.mrb[0].mxu0
      %v528 = vadd.f32 %v439, %v527
      %v529 = vpop.f32.mrb[0].mxu0
      %v530 = vadd.f32 %v441, %v529
      %531 = vdwg.mxu0
      %v532 = vand.u32 %v352, 4294901760
      %v533 = vsub.f32 %v352, %v532
      %534 = vmatprep.subr.mxu0 %v533
      %v535 = vand.u32 %v350, 4294901760
      %v536 = vsub.f32 %v350, %v535
      %537 = vmatpush1.msra.mxu0 %v536
      %538 = vmatprep.subr.mxu0 0.0
      %539 = vmatpush1.msra.mxu0 0.0
      %540 = vmatprep.subr.mxu0 0.0
      %541 = vmatpush1.msra.mxu0 0.0
      %542 = vmatprep.subr.mxu0 0.0
      %543 = vmatpush1.msra.mxu0 0.0
      %544 = vmatprep.subr.mxu0 0.0
      %545 = vmatpush1.msra.mxu0 0.0
      %546 = vmatprep.subr.mxu0 0.0
      %547 = vmatpush1.msra.mxu0 0.0
      %548 = vmatprep.subr.mxu0 0.0
      %549 = vmatpush1.msra.mxu0 0.0
      %550 = vmatprep.subr.mxu0 0.0
      %551 = vmatpush1.msra.mxu0 0.0
      %552 = vmatprep.subr.mxu0 0.0
      %553 = vmatpush1.msra.mxu0 0.0
      %554 = vmatprep.subr.mxu0 0.0
      %555 = vmatpush1.msra.mxu0 0.0
      %556 = vmatprep.subr.mxu0 0.0
      %557 = vmatpush1.msra.mxu0 0.0
      %558 = vmatprep.subr.mxu0 0.0
      %559 = vmatpush1.msra.mxu0 0.0
      %560 = vmatprep.subr.mxu0 0.0
      %561 = vmatpush1.msra.mxu0 0.0
      %562 = vmatprep.subr.mxu0 0.0
      %563 = vmatpush1.msra.mxu0 0.0
      %564 = vmatprep.subr.mxu0 0.0
      %565 = vmatpush1.msra.mxu0 0.0
      %566 = vmatprep.subr.mxu0 0.0
      %567 = vmatpush1.msra.mxu0 0.0
      %568 = vmatprep.subr.mxu0 0.0
      %569 = vmatpush1.msra.mxu0 0.0
      %570 = vmatprep.subr.mxu0 0.0
      %571 = vmatpush1.msra.mxu0 0.0
      %572 = vmatprep.subr.mxu0 0.0
      %573 = vmatpush1.msra.mxu0 0.0
      %574 = vmatprep.subr.mxu0 0.0
      %575 = vmatpush1.msra.mxu0 0.0
      %576 = vmatprep.subr.mxu0 0.0
      %577 = vmatpush1.msra.mxu0 0.0
      %578 = vmatprep.subr.mxu0 0.0
      %579 = vmatpush1.msra.mxu0 0.0
      %580 = vmatprep.subr.mxu0 0.0
      %581 = vmatpush1.msra.mxu0 0.0
      %582 = vmatprep.subr.mxu0 0.0
      %583 = vmatpush1.msra.mxu0 0.0
      %584 = vmatprep.subr.mxu0 0.0
      %585 = vmatpush1.msra.mxu0 0.0
      %586 = vmatprep.subr.mxu0 0.0
      %587 = vmatpush1.msra.mxu0 0.0
      %588 = vmatprep.subr.mxu0 0.0
      %589 = vmatpush1.msra.mxu0 0.0
      %590 = vmatprep.subr.mxu0 0.0
      %591 = vmatpush1.msra.mxu0 0.0
      %592 = vmatprep.subr.mxu0 0.0
      %593 = vmatpush1.msra.mxu0 0.0
      %594 = vmatprep.subr.mxu0 0.0
      %595 = vmatpush1.msra.mxu0 0.0
      %596 = vmatprep.subr.mxu0 0.0
      %597 = vmatpush1.msra.mxu0 0.0
      %598 = vmatprep.subr.mxu0 0.0
      %599 = vmatpush1.msra.mxu0 0.0
      %600 = vmatprep.mubr.f32.mxu0 0.0
      %v601 = vand.u32 %v344, 4294901760
      %v602 = vsub.f32 %v344, %v601
      %603 = vmatmul.mubr.f32.gmra.mrb[0].mxu0 %v602
      %v604 = vpop.f32.mrb[0].mxu0
      %v605 = vadd.f32 %v521, %v604
      %v606 = vpop.f32.mrb[0].mxu0
      %v607 = vadd.f32 %v523, %v606
      %608 = vmatprep.mubr.f32.mxu0 0.0
      %v609 = vand.u32 %v347, 4294901760
      %v610 = vsub.f32 %v347, %v609
      %611 = vmatmul.mubr.f32.gmra.mrb[0].mxu0 %v610
      %v612 = vpop.f32.mrb[0].mxu0
      %v613 = vadd.f32 %v528, %v612
      %v614 = vpop.f32.mrb[0].mxu0
      %v615 = vadd.f32 %v530, %v614
      %616 = vdwg.mxu0
      %v617 = vand.u32 %v352, 4294901760
      %618 = vmatprep.subr.mxu0 %v617
      %v619 = vand.u32 %v350, 4294901760
      %620 = vmatpush1.msra.mxu0 %v619
      %621 = vmatprep.subr.mxu0 0.0
      %622 = vmatpush1.msra.mxu0 0.0
      %623 = vmatprep.subr.mxu0 0.0
      %624 = vmatpush1.msra.mxu0 0.0
      %625 = vmatprep.subr.mxu0 0.0
      %626 = vmatpush1.msra.mxu0 0.0
      %627 = vmatprep.subr.mxu0 0.0
      %628 = vmatpush1.msra.mxu0 0.0
      %629 = vmatprep.subr.mxu0 0.0
      %630 = vmatpush1.msra.mxu0 0.0
      %631 = vmatprep.subr.mxu0 0.0
      %632 = vmatpush1.msra.mxu0 0.0
      %633 = vmatprep.subr.mxu0 0.0
      %634 = vmatpush1.msra.mxu0 0.0
      %635 = vmatprep.subr.mxu0 0.0
      %636 = vmatpush1.msra.mxu0 0.0
      %637 = vmatprep.subr.mxu0 0.0
      %638 = vmatpush1.msra.mxu0 0.0
      %639 = vmatprep.subr.mxu0 0.0
      %640 = vmatpush1.msra.mxu0 0.0
      %641 = vmatprep.subr.mxu0 0.0
      %642 = vmatpush1.msra.mxu0 0.0
      %643 = vmatprep.subr.mxu0 0.0
      %644 = vmatpush1.msra.mxu0 0.0
      %645 = vmatprep.subr.mxu0 0.0
      %646 = vmatpush1.msra.mxu0 0.0
      %647 = vmatprep.subr.mxu0 0.0
      %648 = vmatpush1.msra.mxu0 0.0
      %649 = vmatprep.subr.mxu0 0.0
      %650 = vmatpush1.msra.mxu0 0.0
      %651 = vmatprep.subr.mxu0 0.0
      %652 = vmatpush1.msra.mxu0 0.0
      %653 = vmatprep.subr.mxu0 0.0
      %654 = vmatpush1.msra.mxu0 0.0
      %655 = vmatprep.subr.mxu0 0.0
      %656 = vmatpush1.msra.mxu0 0.0
      %657 = vmatprep.subr.mxu0 0.0
      %658 = vmatpush1.msra.mxu0 0.0
      %659 = vmatprep.subr.mxu0 0.0
      %660 = vmatpush1.msra.mxu0 0.0
      %661 = vmatprep.subr.mxu0 0.0
      %662 = vmatpush1.msra.mxu0 0.0
      %663 = vmatprep.subr.mxu0 0.0
      %664 = vmatpush1.msra.mxu0 0.0
      %665 = vmatprep.subr.mxu0 0.0
      %666 = vmatpush1.msra.mxu0 0.0
      %667 = vmatprep.subr.mxu0 0.0
      %668 = vmatpush1.msra.mxu0 0.0
      %669 = vmatprep.subr.mxu0 0.0
      %670 = vmatpush1.msra.mxu0 0.0
      %671 = vmatprep.subr.mxu0 0.0
      %672 = vmatpush1.msra.mxu0 0.0
      %673 = vmatprep.subr.mxu0 0.0
      %674 = vmatpush1.msra.mxu0 0.0
      %675 = vmatprep.subr.mxu0 0.0
      %676 = vmatpush1.msra.mxu0 0.0
      %677 = vmatprep.subr.mxu0 0.0
      %678 = vmatpush1.msra.mxu0 0.0
      %679 = vmatprep.subr.mxu0 0.0
      %680 = vmatpush1.msra.mxu0 0.0
      %681 = vmatprep.subr.mxu0 0.0
      %682 = vmatpush1.msra.mxu0 0.0
      %683 = vmatprep.mubr.f32.mxu0 0.0
      %v684 = vand.u32 %v344, 4294901760
      %v685 = vsub.f32 %v344, %v684
      %v686 = vand.u32 %v685, 4294901760
      %687 = vmatmul.mubr.f32.gmra.mrb[0].mxu0 %v686
      %v688 = vpop.f32.mrb[0].mxu0
      %v689 = vadd.f32 %v605, %v688
      %v690 = vpop.f32.mrb[0].mxu0
      %v691 = vadd.f32 %v607, %v690
      %692 = vmatprep.mubr.f32.mxu0 0.0
      %v693 = vand.u32 %v347, 4294901760
      %v694 = vsub.f32 %v347, %v693
      %v695 = vand.u32 %v694, 4294901760
      %696 = vmatmul.mubr.f32.gmra.mrb[0].mxu0 %v695
      %v697 = vpop.f32.mrb[0].mxu0
      %v698 = vadd.f32 %v613, %v697
      %v699 = vpop.f32.mrb[0].mxu0
      %v700 = vadd.f32 %v615, %v699
      %701 = vdwg.mxu0
      %v702 = vand.u32 %v352, 4294901760
      %v703 = vsub.f32 %v352, %v702
      %v704 = vand.u32 %v703, 4294901760
      %705 = vmatprep.subr.mxu0 %v704
      %v706 = vand.u32 %v350, 4294901760
      %v707 = vsub.f32 %v350, %v706
      %v708 = vand.u32 %v707, 4294901760
      %709 = vmatpush1.msra.mxu0 %v708
      %710 = vmatprep.subr.mxu0 0.0
      %711 = vmatpush1.msra.mxu0 0.0
      %712 = vmatprep.subr.mxu0 0.0
      %713 = vmatpush1.msra.mxu0 0.0
      %714 = vmatprep.subr.mxu0 0.0
      %715 = vmatpush1.msra.mxu0 0.0
      %716 = vmatprep.subr.mxu0 0.0
      %717 = vmatpush1.msra.mxu0 0.0
      %718 = vmatprep.subr.mxu0 0.0
      %719 = vmatpush1.msra.mxu0 0.0
      %720 = vmatprep.subr.mxu0 0.0
      %721 = vmatpush1.msra.mxu0 0.0
      %722 = vmatprep.subr.mxu0 0.0
      %723 = vmatpush1.msra.mxu0 0.0
      %724 = vmatprep.subr.mxu0 0.0
      %725 = vmatpush1.msra.mxu0 0.0
      %726 = vmatprep.subr.mxu0 0.0
      %727 = vmatpush1.msra.mxu0 0.0
      %728 = vmatprep.subr.mxu0 0.0
      %729 = vmatpush1.msra.mxu0 0.0
      %730 = vmatprep.subr.mxu0 0.0
      %731 = vmatpush1.msra.mxu0 0.0
      %732 = vmatprep.subr.mxu0 0.0
      %733 = vmatpush1.msra.mxu0 0.0
      %734 = vmatprep.subr.mxu0 0.0
      %735 = vmatpush1.msra.mxu0 0.0
      %736 = vmatprep.subr.mxu0 0.0
      %737 = vmatpush1.msra.mxu0 0.0
      %738 = vmatprep.subr.mxu0 0.0
      %739 = vmatpush1.msra.mxu0 0.0
      %740 = vmatprep.subr.mxu0 0.0
      %741 = vmatpush1.msra.mxu0 0.0
      %742 = vmatprep.subr.mxu0 0.0
      %743 = vmatpush1.msra.mxu0 0.0
      %744 = vmatprep.subr.mxu0 0.0
      %745 = vmatpush1.msra.mxu0 0.0
      %746 = vmatprep.subr.mxu0 0.0
      %747 = vmatpush1.msra.mxu0 0.0
      %748 = vmatprep.subr.mxu0 0.0
      %749 = vmatpush1.msra.mxu0 0.0
      %750 = vmatprep.subr.mxu0 0.0
      %751 = vmatpush1.msra.mxu0 0.0
      %752 = vmatprep.subr.mxu0 0.0
      %753 = vmatpush1.msra.mxu0 0.0
      %754 = vmatprep.subr.mxu0 0.0
      %755 = vmatpush1.msra.mxu0 0.0
      %756 = vmatprep.subr.mxu0 0.0
      %757 = vmatpush1.msra.mxu0 0.0
      %758 = vmatprep.subr.mxu0 0.0
      %759 = vmatpush1.msra.mxu0 0.0
      %760 = vmatprep.subr.mxu0 0.0
      %761 = vmatpush1.msra.mxu0 0.0
      %762 = vmatprep.subr.mxu0 0.0
      %763 = vmatpush1.msra.mxu0 0.0
      %764 = vmatprep.subr.mxu0 0.0
      %765 = vmatpush1.msra.mxu0 0.0
      %766 = vmatprep.subr.mxu0 0.0
      %767 = vmatpush1.msra.mxu0 0.0
      %768 = vmatprep.subr.mxu0 0.0
      %769 = vmatpush1.msra.mxu0 0.0
      %770 = vmatprep.subr.mxu0 0.0
      %771 = vmatpush1.msra.mxu0 0.0
      %772 = vmatprep.mubr.f32.mxu0 0.0
      %v773 = vand.u32 %v344, 4294901760
      %774 = vmatmul.mubr.f32.gmra.mrb[0].mxu0 %v773
      %v775 = vpop.f32.mrb[0].mxu0
      %v776 = vadd.f32 %v689, %v775
      %v777 = vpop.f32.mrb[0].mxu0
      %v778 = vadd.f32 %v691, %v777
      %779 = vmatprep.mubr.f32.mxu0 0.0
      %v780 = vand.u32 %v347, 4294901760
      %781 = vmatmul.mubr.f32.gmra.mrb[0].mxu0 %v780
      %v782 = vpop.f32.mrb[0].mxu0
      %v783 = vadd.f32 %v698, %v782
      %v784 = vpop.f32.mrb[0].mxu0
      %v785 = vadd.f32 %v700, %v784
      %786 = vdwg.mxu0
      %v787 = vand.u32 %v352, 4294901760
      %788 = vmatprep.subr.mxu0 %v787
      %v789 = vand.u32 %v350, 4294901760
      %790 = vmatpush1.msra.mxu0 %v789
      %791 = vmatprep.subr.mxu0 0.0
      %792 = vmatpush1.msra.mxu0 0.0
      %793 = vmatprep.subr.mxu0 0.0
      %794 = vmatpush1.msra.mxu0 0.0
      %795 = vmatprep.subr.mxu0 0.0
      %796 = vmatpush1.msra.mxu0 0.0
      %797 = vmatprep.subr.mxu0 0.0
      %798 = vmatpush1.msra.mxu0 0.0
      %799 = vmatprep.subr.mxu0 0.0
      %800 = vmatpush1.msra.mxu0 0.0
      %801 = vmatprep.subr.mxu0 0.0
      %802 = vmatpush1.msra.mxu0 0.0
      %803 = vmatprep.subr.mxu0 0.0
      %804 = vmatpush1.msra.mxu0 0.0
      %805 = vmatprep.subr.mxu0 0.0
      %806 = vmatpush1.msra.mxu0 0.0
      %807 = vmatprep.subr.mxu0 0.0
      %808 = vmatpush1.msra.mxu0 0.0
      %809 = vmatprep.subr.mxu0 0.0
      %810 = vmatpush1.msra.mxu0 0.0
      %811 = vmatprep.subr.mxu0 0.0
      %812 = vmatpush1.msra.mxu0 0.0
      %813 = vmatprep.subr.mxu0 0.0
      %814 = vmatpush1.msra.mxu0 0.0
      %815 = vmatprep.subr.mxu0 0.0
      %816 = vmatpush1.msra.mxu0 0.0
      %817 = vmatprep.subr.mxu0 0.0
      %818 = vmatpush1.msra.mxu0 0.0
      %819 = vmatprep.subr.mxu0 0.0
      %820 = vmatpush1.msra.mxu0 0.0
      %821 = vmatprep.subr.mxu0 0.0
      %822 = vmatpush1.msra.mxu0 0.0
      %823 = vmatprep.subr.mxu0 0.0
      %824 = vmatpush1.msra.mxu0 0.0
      %825 = vmatprep.subr.mxu0 0.0
      %826 = vmatpush1.msra.mxu0 0.0
      %827 = vmatprep.subr.mxu0 0.0
      %828 = vmatpush1.msra.mxu0 0.0
      %829 = vmatprep.subr.mxu0 0.0
      %830 = vmatpush1.msra.mxu0 0.0
      %831 = vmatprep.subr.mxu0 0.0
      %832 = vmatpush1.msra.mxu0 0.0
      %833 = vmatprep.subr.mxu0 0.0
      %834 = vmatpush1.msra.mxu0 0.0
      %835 = vmatprep.subr.mxu0 0.0
      %836 = vmatpush1.msra.mxu0 0.0
      %837 = vmatprep.subr.mxu0 0.0
      %838 = vmatpush1.msra.mxu0 0.0
      %839 = vmatprep.subr.mxu0 0.0
      %840 = vmatpush1.msra.mxu0 0.0
      %841 = vmatprep.subr.mxu0 0.0
      %842 = vmatpush1.msra.mxu0 0.0
      %843 = vmatprep.subr.mxu0 0.0
      %844 = vmatpush1.msra.mxu0 0.0
      %845 = vmatprep.subr.mxu0 0.0
      %846 = vmatpush1.msra.mxu0 0.0
      %847 = vmatprep.subr.mxu0 0.0
      %848 = vmatpush1.msra.mxu0 0.0
      %849 = vmatprep.subr.mxu0 0.0
      %850 = vmatpush1.msra.mxu0 0.0
      %851 = vmatprep.subr.mxu0 0.0
      %852 = vmatpush1.msra.mxu0 0.0
      %853 = vmatprep.mubr.f32.mxu0 0.0
      %v854 = vand.u32 %v344, 4294901760
      %855 = vmatmul.mubr.f32.gmra.mrb[0].mxu0 %v854
      %v856 = vpop.f32.mrb[0].mxu0
      %v857 = vadd.f32 %v776, %v856
      %v858 = vpop.f32.mrb[0].mxu0
      %v859 = vadd.f32 %v778, %v858
      %860 = vmatprep.mubr.f32.mxu0 0.0
      %v861 = vand.u32 %v347, 4294901760
      %862 = vmatmul.mubr.f32.gmra.mrb[0].mxu0 %v861
      %v863 = vpop.f32.mrb[0].mxu0
      %v864 = vadd.f32 %v783, %v863
      %v865 = vpop.f32.mrb[0].mxu0
      %v866 = vadd.f32 %v785, %v865
      %867 = vdwg.mxu0
      %v868 = vand.u32 2147483647, %v857
      %v869 = vand.u32 2147483647, %v859
      %v870 = vand.u32 2147483647, %v864
      %v871 = vand.u32 2147483647, %v866
      %v872 = vrcp.pop %v868
      %v873 = vrcp.pop %v869
      %v874 = vrcp.pop %v870
      %v875 = vrcp.pop %v871
      %vm876 = vcmp.gt.f32.partialorder %v868, 1.0
      %vm877 = vcmp.gt.f32.partialorder %v869, 1.0
      %vm878 = vcmp.gt.f32.partialorder %v870, 1.0
      %vm879 = vcmp.gt.f32.partialorder %v871, 1.0
      %v880 = vsel %vm876, %v872, %v868
      %v881 = vsel %vm877, %v873, %v869
      %v882 = vsel %vm878, %v874, %v870
      %v883 = vsel %vm879, %v875, %v871
      %v884 = vmul.f32 %v880, %v880
      %v885 = vmul.f32 %v881, %v881
      %v886 = vmul.f32 %v882, %v882
      %v887 = vmul.f32 %v883, %v883
      %v888 = vmul.f32 %v884, -0.0117212
      %v889 = vmul.f32 %v885, -0.0117212
      %v890 = vmul.f32 %v886, -0.0117212
      %v891 = vmul.f32 %v887, -0.0117212
      %v892 = vadd.f32 %v888, 0.05265332
      %v893 = vadd.f32 %v889, 0.05265332
      %v894 = vadd.f32 %v890, 0.05265332
      %v895 = vadd.f32 %v891, 0.05265332
      %v896 = vmul.f32 %v892, %v884
      %v897 = vmul.f32 %v893, %v885
      %v898 = vmul.f32 %v894, %v886
      %v899 = vmul.f32 %v895, %v887
      %v900 = vadd.f32 %v896, -0.11643287
      %v901 = vadd.f32 %v897, -0.11643287
      %v902 = vadd.f32 %v898, -0.11643287
      %v903 = vadd.f32 %v899, -0.11643287
      %v904 = vmul.f32 %v900, %v884
      %v905 = vmul.f32 %v901, %v885
      %v906 = vmul.f32 %v902, %v886
      %v907 = vmul.f32 %v903, %v887
      %v908 = vadd.f32 %v904, 0.19354346
      %v909 = vadd.f32 %v905, 0.19354346
      %v910 = vadd.f32 %v906, 0.19354346
      %v911 = vadd.f32 %v907, 0.19354346
      %v912 = vmul.f32 %v908, %v884
      %v913 = vmul.f32 %v909, %v885
      %v914 = vmul.f32 %v910, %v886
      %v915 = vmul.f32 %v911, %v887
      %v916 = vadd.f32 %v912, -0.33262348
      %v917 = vadd.f32 %v913, -0.33262348
      %v918 = vadd.f32 %v914, -0.33262348
      %v919 = vadd.f32 %v915, -0.33262348
      %v920 = vmul.f32 %v916, %v884
      %v921 = vmul.f32 %v917, %v885
      %v922 = vmul.f32 %v918, %v886
      %v923 = vmul.f32 %v919, %v887
      %v924 = vadd.f32 %v920, 0.99997723
      %v925 = vadd.f32 %v921, 0.99997723
      %v926 = vadd.f32 %v922, 0.99997723
      %v927 = vadd.f32 %v923, 0.99997723
      %v928 = vmul.f32 %v924, %v880
      %v929 = vmul.f32 %v925, %v881
      %v930 = vmul.f32 %v926, %v882
      %v931 = vmul.f32 %v927, %v883
      %v932 = vsub.f32 1.5707964, %v928
      %v933 = vsub.f32 1.5707964, %v929
      %v934 = vsub.f32 1.5707964, %v930
      %v935 = vsub.f32 1.5707964, %v931
      %v936 = vsel %vm876, %v932, %v928
      %v937 = vsel %vm877, %v933, %v929
      %v938 = vsel %vm878, %v934, %v930
      %v939 = vsel %vm879, %v935, %v931
      %vm940 = vcmp.lt.f32.partialorder %v857, 0.0
      %vm941 = vcmp.lt.f32.partialorder %v859, 0.0
      %vm942 = vcmp.lt.f32.partialorder %v864, 0.0
      %vm943 = vcmp.lt.f32.partialorder %v866, 0.0
      %v944 = vsub.f32 0.0, %v936
      %v945 = vsub.f32 0.0, %v937
      %v946 = vsub.f32 0.0, %v938
      %v947 = vsub.f32 0.0, %v939
      %v948 = vsel %vm940, %v944, %v936
      %v949 = vsel %vm941, %v945, %v937
      %v950 = vsel %vm942, %v946, %v938
      %v951 = vsel %vm943, %v947, %v939
      %v952 = vmul.f32 %v948, %v948
      %v953 = vmul.f32 %v949, %v949
      %v954 = vmul.f32 %v950, %v950
      %v955 = vmul.f32 %v951, %v951
      %v956 = vld [vmem:[%s3] sm:$0xff]
      %v957 = vld [vmem:[%s3 + $0x8] sm:$0xff]
      %v958 = vld [vmem:[%s4] sm:$0xff]
      %v959 = vld [vmem:[%s4 + $0x8] sm:$0xff]
      %961 = vset.pattern.permute.xlu0 0
      %962 = vperm.xlu0 %961, %v958
      %v963 = vpop.permute.xlu0 %962
      %966 = vset.pattern.permute.xlu0 0
      %967 = vperm.xlu0 %966, %v959
      %v968 = vpop.permute.xlu0 %967
      %vm970 = vcmask 261120
      %v972 = vsel %vm970, %v956, 0
      %v975 = vsel %vm970, %v957, 0
      %v977 = vand.u32 %v949, 4294901760
      %978 = vmatprep.subr.mxu0 %v977
      %v979 = vand.u32 %v948, 4294901760
      %980 = vmatpush1.msra.mxu0 %v979
      %v981 = vand.u32 %v951, 4294901760
      %982 = vmatprep.subr.mxu0 %v981
      %v983 = vand.u32 %v950, 4294901760
      %984 = vmatpush1.msra.mxu0 %v983
      %v985 = vand.u32 %v953, 4294901760
      %986 = vmatprep.subr.mxu0 %v985
      %v987 = vand.u32 %v952, 4294901760
      %988 = vmatpush1.msra.mxu0 %v987
      %v989 = vand.u32 %v955, 4294901760
      %990 = vmatprep.subr.mxu0 %v989
      %v991 = vand.u32 %v954, 4294901760
      %992 = vmatpush1.msra.mxu0 %v991
      %993 = vmatprep.subr.mxu0 0.0
      %994 = vmatpush1.msra.mxu0 0.0
      %995 = vmatprep.subr.mxu0 0.0
      %996 = vmatpush1.msra.mxu0 0.0
      %997 = vmatprep.subr.mxu0 0.0
      %998 = vmatpush1.msra.mxu0 0.0
      %999 = vmatprep.subr.mxu0 0.0
      %1000 = vmatpush1.msra.mxu0 0.0
      %1001 = vmatprep.subr.mxu0 0.0
      %1002 = vmatpush1.msra.mxu0 0.0
      %1003 = vmatprep.subr.mxu0 0.0
      %1004 = vmatpush1.msra.mxu0 0.0
      %1005 = vmatprep.subr.mxu0 0.0
      %1006 = vmatpush1.msra.mxu0 0.0
      %1007 = vmatprep.subr.mxu0 0.0
      %1008 = vmatpush1.msra.mxu0 0.0
      %1009 = vmatprep.subr.mxu0 0.0
      %1010 = vmatpush1.msra.mxu0 0.0
      %1011 = vmatprep.subr.mxu0 0.0
      %1012 = vmatpush1.msra.mxu0 0.0
      %1013 = vmatprep.subr.mxu0 0.0
      %1014 = vmatpush1.msra.mxu0 0.0
      %1015 = vmatprep.subr.mxu0 0.0
      %1016 = vmatpush1.msra.mxu0 0.0
      %1017 = vmatprep.subr.mxu0 0.0
      %1018 = vmatpush1.msra.mxu0 0.0
      %1019 = vmatprep.subr.mxu0 0.0
      %1020 = vmatpush1.msra.mxu0 0.0
      %1021 = vmatprep.subr.mxu0 0.0
      %1022 = vmatpush1.msra.mxu0 0.0
      %1023 = vmatprep.subr.mxu0 0.0
      %1024 = vmatpush1.msra.mxu0 0.0
      %1025 = vmatprep.subr.mxu0 0.0
      %1026 = vmatpush1.msra.mxu0 0.0
      %1027 = vmatprep.subr.mxu0 0.0
      %1028 = vmatpush1.msra.mxu0 0.0
      %1029 = vmatprep.subr.mxu0 0.0
      %1030 = vmatpush1.msra.mxu0 0.0
      %1031 = vmatprep.subr.mxu0 0.0
      %1032 = vmatpush1.msra.mxu0 0.0
      %1033 = vmatprep.subr.mxu0 0.0
      %1034 = vmatpush1.msra.mxu0 0.0
      %1035 = vmatprep.subr.mxu0 0.0
      %1036 = vmatpush1.msra.mxu0 0.0
      %1037 = vmatprep.subr.mxu0 0.0
      %1038 = vmatpush1.msra.mxu0 0.0
      %1039 = vmatprep.subr.mxu0 0.0
      %1040 = vmatpush1.msra.mxu0 0.0
      %1041 = vmatprep.subr.mxu0 0.0
      %1042 = vmatpush1.msra.mxu0 0.0
      %1043 = vmatprep.subr.mxu0 0.0
      %1044 = vmatpush1.msra.mxu0 0.0
      %1045 = vmatprep.subr.mxu0 0.0
      %1046 = vmatpush1.msra.mxu0 0.0
      %1047 = vmatprep.subr.mxu0 0.0
      %1048 = vmatpush1.msra.mxu0 0.0
      %1049 = vmatprep.mubr.f32.mxu0 0.0
      %v1050 = vand.u32 %v972, 4294901760
      %v1051 = vsub.f32 %v972, %v1050
      %v1052 = vand.u32 %v1051, 4294901760
      %v1053 = vsub.f32 %v1051, %v1052
      %v1054 = vand.u32 %v1053, 4294901760
      %1055 = vmatmul.mubr.f32.gmra.mrb[0].mxu0 %v1054
      %v1056 = vpop.f32.mrb[0].mxu0
      %v1057 = vadd.f32 %v963, %v1056
      %v1058 = vpop.f32.mrb[0].mxu0
      %v1059 = vadd.f32 %v963, %v1058
      %1060 = vmatprep.mubr.f32.mxu0 0.0
      %v1061 = vand.u32 %v975, 4294901760
      %v1062 = vsub.f32 %v975, %v1061
      %v1063 = vand.u32 %v1062, 4294901760
      %v1064 = vsub.f32 %v1062, %v1063
      %v1065 = vand.u32 %v1064, 4294901760
      %1066 = vmatmul.mubr.f32.gmra.mrb[0].mxu0 %v1065
      %v1067 = vpop.f32.mrb[0].mxu0
      %v1068 = vadd.f32 %v968, %v1067
      %v1069 = vpop.f32.mrb[0].mxu0
      %v1070 = vadd.f32 %v968, %v1069
      %1071 = vdwg.mxu0
      %v1072 = vand.u32 %v949, 4294901760
      %v1073 = vsub.f32 %v949, %v1072
      %v1074 = vand.u32 %v1073, 4294901760
      %v1075 = vsub.f32 %v1073, %v1074
      %v1076 = vand.u32 %v1075, 4294901760
      %1077 = vmatprep.subr.mxu0 %v1076
      %v1078 = vand.u32 %v948, 4294901760
      %v1079 = vsub.f32 %v948, %v1078
      %v1080 = vand.u32 %v1079, 4294901760
      %v1081 = vsub.f32 %v1079, %v1080
      %v1082 = vand.u32 %v1081, 4294901760
      %1083 = vmatpush1.msra.mxu0 %v1082
      %v1084 = vand.u32 %v951, 4294901760
      %v1085 = vsub.f32 %v951, %v1084
      %v1086 = vand.u32 %v1085, 4294901760
      %v1087 = vsub.f32 %v1085, %v1086
      %v1088 = vand.u32 %v1087, 4294901760
      %1089 = vmatprep.subr.mxu0 %v1088
      %v1090 = vand.u32 %v950, 4294901760
      %v1091 = vsub.f32 %v950, %v1090
      %v1092 = vand.u32 %v1091, 4294901760
      %v1093 = vsub.f32 %v1091, %v1092
      %v1094 = vand.u32 %v1093, 4294901760
      %1095 = vmatpush1.msra.mxu0 %v1094
      %v1096 = vand.u32 %v953, 4294901760
      %v1097 = vsub.f32 %v953, %v1096
      %v1098 = vand.u32 %v1097, 4294901760
      %v1099 = vsub.f32 %v1097, %v1098
      %v1100 = vand.u32 %v1099, 4294901760
      %1101 = vmatprep.subr.mxu0 %v1100
      %v1102 = vand.u32 %v952, 4294901760
      %v1103 = vsub.f32 %v952, %v1102
      %v1104 = vand.u32 %v1103, 4294901760
      %v1105 = vsub.f32 %v1103, %v1104
      %v1106 = vand.u32 %v1105, 4294901760
      %1107 = vmatpush1.msra.mxu0 %v1106
      %v1108 = vand.u32 %v955, 4294901760
      %v1109 = vsub.f32 %v955, %v1108
      %v1110 = vand.u32 %v1109, 4294901760
      %v1111 = vsub.f32 %v1109, %v1110
      %v1112 = vand.u32 %v1111, 4294901760
      %1113 = vmatprep.subr.mxu0 %v1112
      %v1114 = vand.u32 %v954, 4294901760
      %v1115 = vsub.f32 %v954, %v1114
      %v1116 = vand.u32 %v1115, 4294901760
      %v1117 = vsub.f32 %v1115, %v1116
      %v1118 = vand.u32 %v1117, 4294901760
      %1119 = vmatpush1.msra.mxu0 %v1118
      %1120 = vmatprep.subr.mxu0 0.0
      %1121 = vmatpush1.msra.mxu0 0.0
      %1122 = vmatprep.subr.mxu0 0.0
      %1123 = vmatpush1.msra.mxu0 0.0
      %1124 = vmatprep.subr.mxu0 0.0
      %1125 = vmatpush1.msra.mxu0 0.0
      %1126 = vmatprep.subr.mxu0 0.0
      %1127 = vmatpush1.msra.mxu0 0.0
      %1128 = vmatprep.subr.mxu0 0.0
      %1129 = vmatpush1.msra.mxu0 0.0
      %1130 = vmatprep.subr.mxu0 0.0
      %1131 = vmatpush1.msra.mxu0 0.0
      %1132 = vmatprep.subr.mxu0 0.0
      %1133 = vmatpush1.msra.mxu0 0.0
      %1134 = vmatprep.subr.mxu0 0.0
      %1135 = vmatpush1.msra.mxu0 0.0
      %1136 = vmatprep.subr.mxu0 0.0
      %1137 = vmatpush1.msra.mxu0 0.0
      %1138 = vmatprep.subr.mxu0 0.0
      %1139 = vmatpush1.msra.mxu0 0.0
      %1140 = vmatprep.subr.mxu0 0.0
      %1141 = vmatpush1.msra.mxu0 0.0
      %1142 = vmatprep.subr.mxu0 0.0
      %1143 = vmatpush1.msra.mxu0 0.0
      %1144 = vmatprep.subr.mxu0 0.0
      %1145 = vmatpush1.msra.mxu0 0.0
      %1146 = vmatprep.subr.mxu0 0.0
      %1147 = vmatpush1.msra.mxu0 0.0
      %1148 = vmatprep.subr.mxu0 0.0
      %1149 = vmatpush1.msra.mxu0 0.0
      %1150 = vmatprep.subr.mxu0 0.0
      %1151 = vmatpush1.msra.mxu0 0.0
      %1152 = vmatprep.subr.mxu0 0.0
      %1153 = vmatpush1.msra.mxu0 0.0
      %1154 = vmatprep.subr.mxu0 0.0
      %1155 = vmatpush1.msra.mxu0 0.0
      %1156 = vmatprep.subr.mxu0 0.0
      %1157 = vmatpush1.msra.mxu0 0.0
      %1158 = vmatprep.subr.mxu0 0.0
      %1159 = vmatpush1.msra.mxu0 0.0
      %1160 = vmatprep.subr.mxu0 0.0
      %1161 = vmatpush1.msra.mxu0 0.0
      %1162 = vmatprep.subr.mxu0 0.0
      %1163 = vmatpush1.msra.mxu0 0.0
      %1164 = vmatprep.subr.mxu0 0.0
      %1165 = vmatpush1.msra.mxu0 0.0
      %1166 = vmatprep.subr.mxu0 0.0
      %1167 = vmatpush1.msra.mxu0 0.0
      %1168 = vmatprep.subr.mxu0 0.0
      %1169 = vmatpush1.msra.mxu0 0.0
      %1170 = vmatprep.subr.mxu0 0.0
      %1171 = vmatpush1.msra.mxu0 0.0
      %1172 = vmatprep.subr.mxu0 0.0
      %1173 = vmatpush1.msra.mxu0 0.0
      %1174 = vmatprep.subr.mxu0 0.0
      %1175 = vmatpush1.msra.mxu0 0.0
      %1176 = vmatprep.mubr.f32.mxu0 0.0
      %v1177 = vand.u32 %v972, 4294901760
      %1178 = vmatmul.mubr.f32.gmra.mrb[0].mxu0 %v1177
      %v1179 = vpop.f32.mrb[0].mxu0
      %v1180 = vadd.f32 %v1057, %v1179
      %v1181 = vpop.f32.mrb[0].mxu0
      %v1182 = vadd.f32 %v1059, %v1181
      %1183 = vmatprep.mubr.f32.mxu0 0.0
      %v1184 = vand.u32 %v975, 4294901760
      %1185 = vmatmul.mubr.f32.gmra.mrb[0].mxu0 %v1184
      %v1186 = vpop.f32.mrb[0].mxu0
      %v1187 = vadd.f32 %v1068, %v1186
      %v1188 = vpop.f32.mrb[0].mxu0
      %v1189 = vadd.f32 %v1070, %v1188
      %1190 = vdwg.mxu0
      %v1191 = vand.u32 %v949, 4294901760
      %v1192 = vsub.f32 %v949, %v1191
      %1193 = vmatprep.subr.mxu0 %v1192
      %v1194 = vand.u32 %v948, 4294901760
      %v1195 = vsub.f32 %v948, %v1194
      %1196 = vmatpush1.msra.mxu0 %v1195
      %v1197 = vand.u32 %v951, 4294901760
      %v1198 = vsub.f32 %v951, %v1197
      %1199 = vmatprep.subr.mxu0 %v1198
      %v1200 = vand.u32 %v950, 4294901760
      %v1201 = vsub.f32 %v950, %v1200
      %1202 = vmatpush1.msra.mxu0 %v1201
      %v1203 = vand.u32 %v953, 4294901760
      %v1204 = vsub.f32 %v953, %v1203
      %1205 = vmatprep.subr.mxu0 %v1204
      %v1206 = vand.u32 %v952, 4294901760
      %v1207 = vsub.f32 %v952, %v1206
      %1208 = vmatpush1.msra.mxu0 %v1207
      %v1209 = vand.u32 %v955, 4294901760
      %v1210 = vsub.f32 %v955, %v1209
      %1211 = vmatprep.subr.mxu0 %v1210
      %v1212 = vand.u32 %v954, 4294901760
      %v1213 = vsub.f32 %v954, %v1212
      %1214 = vmatpush1.msra.mxu0 %v1213
      %1215 = vmatprep.subr.mxu0 0.0
      %1216 = vmatpush1.msra.mxu0 0.0
      %1217 = vmatprep.subr.mxu0 0.0
      %1218 = vmatpush1.msra.mxu0 0.0
      %1219 = vmatprep.subr.mxu0 0.0
      %1220 = vmatpush1.msra.mxu0 0.0
      %1221 = vmatprep.subr.mxu0 0.0
      %1222 = vmatpush1.msra.mxu0 0.0
      %1223 = vmatprep.subr.mxu0 0.0
      %1224 = vmatpush1.msra.mxu0 0.0
      %1225 = vmatprep.subr.mxu0 0.0
      %1226 = vmatpush1.msra.mxu0 0.0
      %1227 = vmatprep.subr.mxu0 0.0
      %1228 = vmatpush1.msra.mxu0 0.0
      %1229 = vmatprep.subr.mxu0 0.0
      %1230 = vmatpush1.msra.mxu0 0.0
      %1231 = vmatprep.subr.mxu0 0.0
      %1232 = vmatpush1.msra.mxu0 0.0
      %1233 = vmatprep.subr.mxu0 0.0
      %1234 = vmatpush1.msra.mxu0 0.0
      %1235 = vmatprep.subr.mxu0 0.0
      %1236 = vmatpush1.msra.mxu0 0.0
      %1237 = vmatprep.subr.mxu0 0.0
      %1238 = vmatpush1.msra.mxu0 0.0
      %1239 = vmatprep.subr.mxu0 0.0
      %1240 = vmatpush1.msra.mxu0 0.0
      %1241 = vmatprep.subr.mxu0 0.0
      %1242 = vmatpush1.msra.mxu0 0.0
      %1243 = vmatprep.subr.mxu0 0.0
      %1244 = vmatpush1.msra.mxu0 0.0
      %1245 = vmatprep.subr.mxu0 0.0
      %1246 = vmatpush1.msra.mxu0 0.0
      %1247 = vmatprep.subr.mxu0 0.0
      %1248 = vmatpush1.msra.mxu0 0.0
      %1249 = vmatprep.subr.mxu0 0.0
      %1250 = vmatpush1.msra.mxu0 0.0
      %1251 = vmatprep.subr.mxu0 0.0
      %1252 = vmatpush1.msra.mxu0 0.0
      %1253 = vmatprep.subr.mxu0 0.0
      %1254 = vmatpush1.msra.mxu0 0.0
      %1255 = vmatprep.subr.mxu0 0.0
      %1256 = vmatpush1.msra.mxu0 0.0
      %1257 = vmatprep.subr.mxu0 0.0
      %1258 = vmatpush1.msra.mxu0 0.0
      %1259 = vmatprep.subr.mxu0 0.0
      %1260 = vmatpush1.msra.mxu0 0.0
      %1261 = vmatprep.subr.mxu0 0.0
      %1262 = vmatpush1.msra.mxu0 0.0
      %1263 = vmatprep.subr.mxu0 0.0
      %1264 = vmatpush1.msra.mxu0 0.0
      %1265 = vmatprep.subr.mxu0 0.0
      %1266 = vmatpush1.msra.mxu0 0.0
      %1267 = vmatprep.subr.mxu0 0.0
      %1268 = vmatpush1.msra.mxu0 0.0
      %1269 = vmatprep.subr.mxu0 0.0
      %1270 = vmatpush1.msra.mxu0 0.0
      %1271 = vmatprep.mubr.f32.mxu0 0.0
      %v1272 = vand.u32 %v972, 4294901760
      %v1273 = vsub.f32 %v972, %v1272
      %1274 = vmatmul.mubr.f32.gmra.mrb[0].mxu0 %v1273
      %v1275 = vpop.f32.mrb[0].mxu0
      %v1276 = vadd.f32 %v1180, %v1275
      %v1277 = vpop.f32.mrb[0].mxu0
      %v1278 = vadd.f32 %v1182, %v1277
      %1279 = vmatprep.mubr.f32.mxu0 0.0
      %v1280 = vand.u32 %v975, 4294901760
      %v1281 = vsub.f32 %v975, %v1280
      %1282 = vmatmul.mubr.f32.gmra.mrb[0].mxu0 %v1281
      %v1283 = vpop.f32.mrb[0].mxu0
      %v1284 = vadd.f32 %v1187, %v1283
      %v1285 = vpop.f32.mrb[0].mxu0
      %v1286 = vadd.f32 %v1189, %v1285
      %1287 = vdwg.mxu0
      %v1288 = vand.u32 %v949, 4294901760
      %1289 = vmatprep.subr.mxu0 %v1288
      %v1290 = vand.u32 %v948, 4294901760
      %1291 = vmatpush1.msra.mxu0 %v1290
      %v1292 = vand.u32 %v951, 4294901760
      %1293 = vmatprep.subr.mxu0 %v1292
      %v1294 = vand.u32 %v950, 4294901760
      %1295 = vmatpush1.msra.mxu0 %v1294
      %v1296 = vand.u32 %v953, 4294901760
      %1297 = vmatprep.subr.mxu0 %v1296
      %v1298 = vand.u32 %v952, 4294901760
      %1299 = vmatpush1.msra.mxu0 %v1298
      %v1300 = vand.u32 %v955, 4294901760
      %1301 = vmatprep.subr.mxu0 %v1300
      %v1302 = vand.u32 %v954, 4294901760
      %1303 = vmatpush1.msra.mxu0 %v1302
      %1304 = vmatprep.subr.mxu0 0.0
      %1305 = vmatpush1.msra.mxu0 0.0
      %1306 = vmatprep.subr.mxu0 0.0
      %1307 = vmatpush1.msra.mxu0 0.0
      %1308 = vmatprep.subr.mxu0 0.0
      %1309 = vmatpush1.msra.mxu0 0.0
      %1310 = vmatprep.subr.mxu0 0.0
      %1311 = vmatpush1.msra.mxu0 0.0
      %1312 = vmatprep.subr.mxu0 0.0
      %1313 = vmatpush1.msra.mxu0 0.0
      %1314 = vmatprep.subr.mxu0 0.0
      %1315 = vmatpush1.msra.mxu0 0.0
      %1316 = vmatprep.subr.mxu0 0.0
      %1317 = vmatpush1.msra.mxu0 0.0
      %1318 = vmatprep.subr.mxu0 0.0
      %1319 = vmatpush1.msra.mxu0 0.0
      %1320 = vmatprep.subr.mxu0 0.0
      %1321 = vmatpush1.msra.mxu0 0.0
      %1322 = vmatprep.subr.mxu0 0.0
      %1323 = vmatpush1.msra.mxu0 0.0
      %1324 = vmatprep.subr.mxu0 0.0
      %1325 = vmatpush1.msra.mxu0 0.0
      %1326 = vmatprep.subr.mxu0 0.0
      %1327 = vmatpush1.msra.mxu0 0.0
      %1328 = vmatprep.subr.mxu0 0.0
      %1329 = vmatpush1.msra.mxu0 0.0
      %1330 = vmatprep.subr.mxu0 0.0
      %1331 = vmatpush1.msra.mxu0 0.0
      %1332 = vmatprep.subr.mxu0 0.0
      %1333 = vmatpush1.msra.mxu0 0.0
      %1334 = vmatprep.subr.mxu0 0.0
      %1335 = vmatpush1.msra.mxu0 0.0
      %1336 = vmatprep.subr.mxu0 0.0
      %1337 = vmatpush1.msra.mxu0 0.0
      %1338 = vmatprep.subr.mxu0 0.0
      %1339 = vmatpush1.msra.mxu0 0.0
      %1340 = vmatprep.subr.mxu0 0.0
      %1341 = vmatpush1.msra.mxu0 0.0
      %1342 = vmatprep.subr.mxu0 0.0
      %1343 = vmatpush1.msra.mxu0 0.0
      %1344 = vmatprep.subr.mxu0 0.0
      %1345 = vmatpush1.msra.mxu0 0.0
      %1346 = vmatprep.subr.mxu0 0.0
      %1347 = vmatpush1.msra.mxu0 0.0
      %1348 = vmatprep.subr.mxu0 0.0
      %1349 = vmatpush1.msra.mxu0 0.0
      %1350 = vmatprep.subr.mxu0 0.0
      %1351 = vmatpush1.msra.mxu0 0.0
      %1352 = vmatprep.subr.mxu0 0.0
      %1353 = vmatpush1.msra.mxu0 0.0
      %1354 = vmatprep.subr.mxu0 0.0
      %1355 = vmatpush1.msra.mxu0 0.0
      %1356 = vmatprep.subr.mxu0 0.0
      %1357 = vmatpush1.msra.mxu0 0.0
      %1358 = vmatprep.subr.mxu0 0.0
      %1359 = vmatpush1.msra.mxu0 0.0
      %1360 = vmatprep.mubr.f32.mxu0 0.0
      %v1361 = vand.u32 %v972, 4294901760
      %v1362 = vsub.f32 %v972, %v1361
      %v1363 = vand.u32 %v1362, 4294901760
      %1364 = vmatmul.mubr.f32.gmra.mrb[0].mxu0 %v1363
      %v1365 = vpop.f32.mrb[0].mxu0
      %v1366 = vadd.f32 %v1276, %v1365
      %v1367 = vpop.f32.mrb[0].mxu0
      %v1368 = vadd.f32 %v1278, %v1367
      %1369 = vmatprep.mubr.f32.mxu0 0.0
      %v1370 = vand.u32 %v975, 4294901760
      %v1371 = vsub.f32 %v975, %v1370
      %v1372 = vand.u32 %v1371, 4294901760
      %1373 = vmatmul.mubr.f32.gmra.mrb[0].mxu0 %v1372
      %v1374 = vpop.f32.mrb[0].mxu0
      %v1375 = vadd.f32 %v1284, %v1374
      %v1376 = vpop.f32.mrb[0].mxu0
      %v1377 = vadd.f32 %v1286, %v1376
      %1378 = vdwg.mxu0
      %v1379 = vand.u32 %v949, 4294901760
      %v1380 = vsub.f32 %v949, %v1379
      %v1381 = vand.u32 %v1380, 4294901760
      %1382 = vmatprep.subr.mxu0 %v1381
      %v1383 = vand.u32 %v948, 4294901760
      %v1384 = vsub.f32 %v948, %v1383
      %v1385 = vand.u32 %v1384, 4294901760
      %1386 = vmatpush1.msra.mxu0 %v1385
      %v1387 = vand.u32 %v951, 4294901760
      %v1388 = vsub.f32 %v951, %v1387
      %v1389 = vand.u32 %v1388, 4294901760
      %1390 = vmatprep.subr.mxu0 %v1389
      %v1391 = vand.u32 %v950, 4294901760
      %v1392 = vsub.f32 %v950, %v1391
      %v1393 = vand.u32 %v1392, 4294901760
      %1394 = vmatpush1.msra.mxu0 %v1393
      %v1395 = vand.u32 %v953, 4294901760
      %v1396 = vsub.f32 %v953, %v1395
      %v1397 = vand.u32 %v1396, 4294901760
      %1398 = vmatprep.subr.mxu0 %v1397
      %v1399 = vand.u32 %v952, 4294901760
      %v1400 = vsub.f32 %v952, %v1399
      %v1401 = vand.u32 %v1400, 4294901760
      %1402 = vmatpush1.msra.mxu0 %v1401
      %v1403 = vand.u32 %v955, 4294901760
      %v1404 = vsub.f32 %v955, %v1403
      %v1405 = vand.u32 %v1404, 4294901760
      %1406 = vmatprep.subr.mxu0 %v1405
      %v1407 = vand.u32 %v954, 4294901760
      %v1408 = vsub.f32 %v954, %v1407
      %v1409 = vand.u32 %v1408, 4294901760
      %1410 = vmatpush1.msra.mxu0 %v1409
      %1411 = vmatprep.subr.mxu0 0.0
      %1412 = vmatpush1.msra.mxu0 0.0
      %1413 = vmatprep.subr.mxu0 0.0
      %1414 = vmatpush1.msra.mxu0 0.0
      %1415 = vmatprep.subr.mxu0 0.0
      %1416 = vmatpush1.msra.mxu0 0.0
      %1417 = vmatprep.subr.mxu0 0.0
      %1418 = vmatpush1.msra.mxu0 0.0
      %1419 = vmatprep.subr.mxu0 0.0
      %1420 = vmatpush1.msra.mxu0 0.0
      %1421 = vmatprep.subr.mxu0 0.0
      %1422 = vmatpush1.msra.mxu0 0.0
      %1423 = vmatprep.subr.mxu0 0.0
      %1424 = vmatpush1.msra.mxu0 0.0
      %1425 = vmatprep.subr.mxu0 0.0
      %1426 = vmatpush1.msra.mxu0 0.0
      %1427 = vmatprep.subr.mxu0 0.0
      %1428 = vmatpush1.msra.mxu0 0.0
      %1429 = vmatprep.subr.mxu0 0.0
      %1430 = vmatpush1.msra.mxu0 0.0
      %1431 = vmatprep.subr.mxu0 0.0
      %1432 = vmatpush1.msra.mxu0 0.0
      %1433 = vmatprep.subr.mxu0 0.0
      %1434 = vmatpush1.msra.mxu0 0.0
      %1435 = vmatprep.subr.mxu0 0.0
      %1436 = vmatpush1.msra.mxu0 0.0
      %1437 = vmatprep.subr.mxu0 0.0
      %1438 = vmatpush1.msra.mxu0 0.0
      %1439 = vmatprep.subr.mxu0 0.0
      %1440 = vmatpush1.msra.mxu0 0.0
      %1441 = vmatprep.subr.mxu0 0.0
      %1442 = vmatpush1.msra.mxu0 0.0
      %1443 = vmatprep.subr.mxu0 0.0
      %1444 = vmatpush1.msra.mxu0 0.0
      %1445 = vmatprep.subr.mxu0 0.0
      %1446 = vmatpush1.msra.mxu0 0.0
      %1447 = vmatprep.subr.mxu0 0.0
      %1448 = vmatpush1.msra.mxu0 0.0
      %1449 = vmatprep.subr.mxu0 0.0
      %1450 = vmatpush1.msra.mxu0 0.0
      %1451 = vmatprep.subr.mxu0 0.0
      %1452 = vmatpush1.msra.mxu0 0.0
      %1453 = vmatprep.subr.mxu0 0.0
      %1454 = vmatpush1.msra.mxu0 0.0
      %1455 = vmatprep.subr.mxu0 0.0
      %1456 = vmatpush1.msra.mxu0 0.0
      %1457 = vmatprep.subr.mxu0 0.0
      %1458 = vmatpush1.msra.mxu0 0.0
      %1459 = vmatprep.subr.mxu0 0.0
      %1460 = vmatpush1.msra.mxu0 0.0
      %1461 = vmatprep.subr.mxu0 0.0
      %1462 = vmatpush1.msra.mxu0 0.0
      %1463 = vmatprep.subr.mxu0 0.0
      %1464 = vmatpush1.msra.mxu0 0.0
      %1465 = vmatprep.subr.mxu0 0.0
      %1466 = vmatpush1.msra.mxu0 0.0
      %1467 = vmatprep.mubr.f32.mxu0 0.0
      %v1468 = vand.u32 %v972, 4294901760
      %1469 = vmatmul.mubr.f32.gmra.mrb[0].mxu0 %v1468
      %v1470 = vpop.f32.mrb[0].mxu0
      %v1471 = vadd.f32 %v1366, %v1470
      %v1472 = vpop.f32.mrb[0].mxu0
      %v1473 = vadd.f32 %v1368, %v1472
      %1474 = vmatprep.mubr.f32.mxu0 0.0
      %v1475 = vand.u32 %v975, 4294901760
      %1476 = vmatmul.mubr.f32.gmra.mrb[0].mxu0 %v1475
      %v1477 = vpop.f32.mrb[0].mxu0
      %v1478 = vadd.f32 %v1375, %v1477
      %v1479 = vpop.f32.mrb[0].mxu0
      %v1480 = vadd.f32 %v1377, %v1479
      %1481 = vdwg.mxu0
      %v1482 = vand.u32 %v949, 4294901760
      %1483 = vmatprep.subr.mxu0 %v1482
      %v1484 = vand.u32 %v948, 4294901760
      %1485 = vmatpush1.msra.mxu0 %v1484
      %v1486 = vand.u32 %v951, 4294901760
      %1487 = vmatprep.subr.mxu0 %v1486
      %v1488 = vand.u32 %v950, 4294901760
      %1489 = vmatpush1.msra.mxu0 %v1488
      %v1490 = vand.u32 %v953, 4294901760
      %1491 = vmatprep.subr.mxu0 %v1490
      %v1492 = vand.u32 %v952, 4294901760
      %1493 = vmatpush1.msra.mxu0 %v1492
      %v1494 = vand.u32 %v955, 4294901760
      %1495 = vmatprep.subr.mxu0 %v1494
      %v1496 = vand.u32 %v954, 4294901760
      %1497 = vmatpush1.msra.mxu0 %v1496
      %1498 = vmatprep.subr.mxu0 0.0
      %1499 = vmatpush1.msra.mxu0 0.0
      %1500 = vmatprep.subr.mxu0 0.0
      %1501 = vmatpush1.msra.mxu0 0.0
      %1502 = vmatprep.subr.mxu0 0.0
      %1503 = vmatpush1.msra.mxu0 0.0
      %1504 = vmatprep.subr.mxu0 0.0
      %1505 = vmatpush1.msra.mxu0 0.0
      %1506 = vmatprep.subr.mxu0 0.0
      %1507 = vmatpush1.msra.mxu0 0.0
      %1508 = vmatprep.subr.mxu0 0.0
      %1509 = vmatpush1.msra.mxu0 0.0
      %1510 = vmatprep.subr.mxu0 0.0
      %1511 = vmatpush1.msra.mxu0 0.0
      %1512 = vmatprep.subr.mxu0 0.0
      %1513 = vmatpush1.msra.mxu0 0.0
      %1514 = vmatprep.subr.mxu0 0.0
      %1515 = vmatpush1.msra.mxu0 0.0
      %1516 = vmatprep.subr.mxu0 0.0
      %1517 = vmatpush1.msra.mxu0 0.0
      %1518 = vmatprep.subr.mxu0 0.0
      %1519 = vmatpush1.msra.mxu0 0.0
      %1520 = vmatprep.subr.mxu0 0.0
      %1521 = vmatpush1.msra.mxu0 0.0
      %1522 = vmatprep.subr.mxu0 0.0
      %1523 = vmatpush1.msra.mxu0 0.0
      %1524 = vmatprep.subr.mxu0 0.0
      %1525 = vmatpush1.msra.mxu0 0.0
      %1526 = vmatprep.subr.mxu0 0.0
      %1527 = vmatpush1.msra.mxu0 0.0
      %1528 = vmatprep.subr.mxu0 0.0
      %1529 = vmatpush1.msra.mxu0 0.0
      %1530 = vmatprep.subr.mxu0 0.0
      %1531 = vmatpush1.msra.mxu0 0.0
      %1532 = vmatprep.subr.mxu0 0.0
      %1533 = vmatpush1.msra.mxu0 0.0
      %1534 = vmatprep.subr.mxu0 0.0
      %1535 = vmatpush1.msra.mxu0 0.0
      %1536 = vmatprep.subr.mxu0 0.0
      %1537 = vmatpush1.msra.mxu0 0.0
      %1538 = vmatprep.subr.mxu0 0.0
      %1539 = vmatpush1.msra.mxu0 0.0
      %1540 = vmatprep.subr.mxu0 0.0
      %1541 = vmatpush1.msra.mxu0 0.0
      %1542 = vmatprep.subr.mxu0 0.0
      %1543 = vmatpush1.msra.mxu0 0.0
      %1544 = vmatprep.subr.mxu0 0.0
      %1545 = vmatpush1.msra.mxu0 0.0
      %1546 = vmatprep.subr.mxu0 0.0
      %1547 = vmatpush1.msra.mxu0 0.0
      %1548 = vmatprep.subr.mxu0 0.0
      %1549 = vmatpush1.msra.mxu0 0.0
      %1550 = vmatprep.subr.mxu0 0.0
      %1551 = vmatpush1.msra.mxu0 0.0
      %1552 = vmatprep.subr.mxu0 0.0
      %1553 = vmatpush1.msra.mxu0 0.0
      %1554 = vmatprep.mubr.f32.mxu0 0.0
      %v1555 = vand.u32 %v972, 4294901760
      %1556 = vmatmul.mubr.f32.gmra.mrb[0].mxu0 %v1555
      %v1557 = vpop.f32.mrb[0].mxu0
      %v1558 = vadd.f32 %v1471, %v1557
      %v1559 = vpop.f32.mrb[0].mxu0
      %v1560 = vadd.f32 %v1473, %v1559
      %1561 = vmatprep.mubr.f32.mxu0 0.0
      %v1562 = vand.u32 %v975, 4294901760
      %1563 = vmatmul.mubr.f32.gmra.mrb[0].mxu0 %v1562
      %v1564 = vpop.f32.mrb[0].mxu0
      %v1565 = vadd.f32 %v1478, %v1564
      %v1566 = vpop.f32.mrb[0].mxu0
      %v1567 = vadd.f32 %v1480, %v1566
      %1568 = vdwg.mxu0
      %v1569 = vand.u32 2147483647, %v1558
      %v1570 = vand.u32 2147483647, %v1560
      %v1571 = vand.u32 2147483647, %v1565
      %v1572 = vand.u32 2147483647, %v1567
      %v1573 = vrcp.pop %v1569
      %v1574 = vrcp.pop %v1570
      %v1575 = vrcp.pop %v1571
      %v1576 = vrcp.pop %v1572
      %vm1577 = vcmp.gt.f32.partialorder %v1569, 1.0
      %vm1578 = vcmp.gt.f32.partialorder %v1570, 1.0
      %vm1579 = vcmp.gt.f32.partialorder %v1571, 1.0
      %vm1580 = vcmp.gt.f32.partialorder %v1572, 1.0
      %v1581 = vsel %vm1577, %v1573, %v1569
      %v1582 = vsel %vm1578, %v1574, %v1570
      %v1583 = vsel %vm1579, %v1575, %v1571
      %v1584 = vsel %vm1580, %v1576, %v1572
      %v1585 = vmul.f32 %v1581, %v1581
      %v1586 = vmul.f32 %v1582, %v1582
      %v1587 = vmul.f32 %v1583, %v1583
      %v1588 = vmul.f32 %v1584, %v1584
      %v1589 = vmul.f32 %v1585, -0.0117212
      %v1590 = vmul.f32 %v1586, -0.0117212
      %v1591 = vmul.f32 %v1587, -0.0117212
      %v1592 = vmul.f32 %v1588, -0.0117212
      %v1593 = vadd.f32 %v1589, 0.05265332
      %v1594 = vadd.f32 %v1590, 0.05265332
      %v1595 = vadd.f32 %v1591, 0.05265332
      %v1596 = vadd.f32 %v1592, 0.05265332
      %v1597 = vmul.f32 %v1593, %v1585
      %v1598 = vmul.f32 %v1594, %v1586
      %v1599 = vmul.f32 %v1595, %v1587
      %v1600 = vmul.f32 %v1596, %v1588
      %v1601 = vadd.f32 %v1597, -0.11643287
      %v1602 = vadd.f32 %v1598, -0.11643287
      %v1603 = vadd.f32 %v1599, -0.11643287
      %v1604 = vadd.f32 %v1600, -0.11643287
      %v1605 = vmul.f32 %v1601, %v1585
      %v1606 = vmul.f32 %v1602, %v1586
      %v1607 = vmul.f32 %v1603, %v1587
      %v1608 = vmul.f32 %v1604, %v1588
      %v1609 = vadd.f32 %v1605, 0.19354346
      %v1610 = vadd.f32 %v1606, 0.19354346
      %v1611 = vadd.f32 %v1607, 0.19354346
      %v1612 = vadd.f32 %v1608, 0.19354346
      %v1613 = vmul.f32 %v1609, %v1585
      %v1614 = vmul.f32 %v1610, %v1586
      %v1615 = vmul.f32 %v1611, %v1587
      %v1616 = vmul.f32 %v1612, %v1588
      %v1617 = vadd.f32 %v1613, -0.33262348
      %v1618 = vadd.f32 %v1614, -0.33262348
      %v1619 = vadd.f32 %v1615, -0.33262348
      %v1620 = vadd.f32 %v1616, -0.33262348
      %v1621 = vmul.f32 %v1617, %v1585
      %v1622 = vmul.f32 %v1618, %v1586
      %v1623 = vmul.f32 %v1619, %v1587
      %v1624 = vmul.f32 %v1620, %v1588
      %v1625 = vadd.f32 %v1621, 0.99997723
      %v1626 = vadd.f32 %v1622, 0.99997723
      %v1627 = vadd.f32 %v1623, 0.99997723
      %v1628 = vadd.f32 %v1624, 0.99997723
      %v1629 = vmul.f32 %v1625, %v1581
      %v1630 = vmul.f32 %v1626, %v1582
      %v1631 = vmul.f32 %v1627, %v1583
      %v1632 = vmul.f32 %v1628, %v1584
      %v1633 = vsub.f32 1.5707964, %v1629
      %v1634 = vsub.f32 1.5707964, %v1630
      %v1635 = vsub.f32 1.5707964, %v1631
      %v1636 = vsub.f32 1.5707964, %v1632
      %v1637 = vsel %vm1577, %v1633, %v1629
      %v1638 = vsel %vm1578, %v1634, %v1630
      %v1639 = vsel %vm1579, %v1635, %v1631
      %v1640 = vsel %vm1580, %v1636, %v1632
      %vm1641 = vcmp.lt.f32.partialorder %v1558, 0.0
      %vm1642 = vcmp.lt.f32.partialorder %v1560, 0.0
      %vm1643 = vcmp.lt.f32.partialorder %v1565, 0.0
      %vm1644 = vcmp.lt.f32.partialorder %v1567, 0.0
      %v1645 = vsub.f32 0.0, %v1637
      %v1646 = vsub.f32 0.0, %v1638
      %v1647 = vsub.f32 0.0, %v1639
      %v1648 = vsub.f32 0.0, %v1640
      %v1649 = vsel %vm1641, %v1645, %v1637
      %v1650 = vsel %vm1642, %v1646, %v1638
      %v1651 = vsel %vm1643, %v1647, %v1639
      %v1652 = vsel %vm1644, %v1648, %v1640
      %v1653 = vmul.f32 %v1649, %v1649
      %v1654 = vmul.f32 %v1650, %v1650
      %v1655 = vmul.f32 %v1651, %v1651
      %v1656 = vmul.f32 %v1652, %v1652
      %s1657 = scalar_lea.vmem %s3, 16
      %v1658 = vld [vmem:[%s1657] sm:$0xff]
      %v1659 = vld [vmem:[%s1657 + $0x8] sm:$0xff]
      %s1660 = scalar_lea.vmem %s4, 16
      %v1661 = vld [vmem:[%s1660] sm:$0xff]
      %v1662 = vld [vmem:[%s1660 + $0x8] sm:$0xff]
      %1664 = vset.pattern.permute.xlu0 0
      %1665 = vperm.xlu0 %1664, %v1661
      %v1666 = vpop.permute.xlu0 %1665
      %1669 = vset.pattern.permute.xlu0 0
      %1670 = vperm.xlu0 %1669, %v1662
      %v1671 = vpop.permute.xlu0 %1670
      %v1674 = vsel %vm970, %v1658, 0
      %v1677 = vsel %vm970, %v1659, 0
      %v1679 = vand.u32 %v1650, 4294901760
      %1680 = vmatprep.subr.mxu0 %v1679
      %v1681 = vand.u32 %v1649, 4294901760
      %1682 = vmatpush1.msra.mxu0 %v1681
      %v1683 = vand.u32 %v1652, 4294901760
      %1684 = vmatprep.subr.mxu0 %v1683
      %v1685 = vand.u32 %v1651, 4294901760
      %1686 = vmatpush1.msra.mxu0 %v1685
      %v1687 = vand.u32 %v1654, 4294901760
      %1688 = vmatprep.subr.mxu0 %v1687
      %v1689 = vand.u32 %v1653, 4294901760
      %1690 = vmatpush1.msra.mxu0 %v1689
      %v1691 = vand.u32 %v1656, 4294901760
      %1692 = vmatprep.subr.mxu0 %v1691
      %v1693 = vand.u32 %v1655, 4294901760
      %1694 = vmatpush1.msra.mxu0 %v1693
      %1695 = vmatprep.subr.mxu0 0.0
      %1696 = vmatpush1.msra.mxu0 0.0
      %1697 = vmatprep.subr.mxu0 0.0
      %1698 = vmatpush1.msra.mxu0 0.0
      %1699 = vmatprep.subr.mxu0 0.0
      %1700 = vmatpush1.msra.mxu0 0.0
      %1701 = vmatprep.subr.mxu0 0.0
      %1702 = vmatpush1.msra.mxu0 0.0
      %1703 = vmatprep.subr.mxu0 0.0
      %1704 = vmatpush1.msra.mxu0 0.0
      %1705 = vmatprep.subr.mxu0 0.0
      %1706 = vmatpush1.msra.mxu0 0.0
      %1707 = vmatprep.subr.mxu0 0.0
      %1708 = vmatpush1.msra.mxu0 0.0
      %1709 = vmatprep.subr.mxu0 0.0
      %1710 = vmatpush1.msra.mxu0 0.0
      %1711 = vmatprep.subr.mxu0 0.0
      %1712 = vmatpush1.msra.mxu0 0.0
      %1713 = vmatprep.subr.mxu0 0.0
      %1714 = vmatpush1.msra.mxu0 0.0
      %1715 = vmatprep.subr.mxu0 0.0
      %1716 = vmatpush1.msra.mxu0 0.0
      %1717 = vmatprep.subr.mxu0 0.0
      %1718 = vmatpush1.msra.mxu0 0.0
      %1719 = vmatprep.subr.mxu0 0.0
      %1720 = vmatpush1.msra.mxu0 0.0
      %1721 = vmatprep.subr.mxu0 0.0
      %1722 = vmatpush1.msra.mxu0 0.0
      %1723 = vmatprep.subr.mxu0 0.0
      %1724 = vmatpush1.msra.mxu0 0.0
      %1725 = vmatprep.subr.mxu0 0.0
      %1726 = vmatpush1.msra.mxu0 0.0
      %1727 = vmatprep.subr.mxu0 0.0
      %1728 = vmatpush1.msra.mxu0 0.0
      %1729 = vmatprep.subr.mxu0 0.0
      %1730 = vmatpush1.msra.mxu0 0.0
      %1731 = vmatprep.subr.mxu0 0.0
      %1732 = vmatpush1.msra.mxu0 0.0
      %1733 = vmatprep.subr.mxu0 0.0
      %1734 = vmatpush1.msra.mxu0 0.0
      %1735 = vmatprep.subr.mxu0 0.0
      %1736 = vmatpush1.msra.mxu0 0.0
      %1737 = vmatprep.subr.mxu0 0.0
      %1738 = vmatpush1.msra.mxu0 0.0
      %1739 = vmatprep.subr.mxu0 0.0
      %1740 = vmatpush1.msra.mxu0 0.0
      %1741 = vmatprep.subr.mxu0 0.0
      %1742 = vmatpush1.msra.mxu0 0.0
      %1743 = vmatprep.subr.mxu0 0.0
      %1744 = vmatpush1.msra.mxu0 0.0
      %1745 = vmatprep.subr.mxu0 0.0
      %1746 = vmatpush1.msra.mxu0 0.0
      %1747 = vmatprep.subr.mxu0 0.0
      %1748 = vmatpush1.msra.mxu0 0.0
      %1749 = vmatprep.subr.mxu0 0.0
      %1750 = vmatpush1.msra.mxu0 0.0
      %1751 = vmatprep.mubr.f32.mxu0 0.0
      %v1752 = vand.u32 %v1674, 4294901760
      %v1753 = vsub.f32 %v1674, %v1752
      %v1754 = vand.u32 %v1753, 4294901760
      %v1755 = vsub.f32 %v1753, %v1754
      %v1756 = vand.u32 %v1755, 4294901760
      %1757 = vmatmul.mubr.f32.gmra.mrb[0].mxu0 %v1756
      %v1758 = vpop.f32.mrb[0].mxu0
      %v1759 = vadd.f32 %v1666, %v1758
      %v1760 = vpop.f32.mrb[0].mxu0
      %v1761 = vadd.f32 %v1666, %v1760
      %1762 = vmatprep.mubr.f32.mxu0 0.0
      %v1763 = vand.u32 %v1677, 4294901760
      %v1764 = vsub.f32 %v1677, %v1763
      %v1765 = vand.u32 %v1764, 4294901760
      %v1766 = vsub.f32 %v1764, %v1765
      %v1767 = vand.u32 %v1766, 4294901760
      %1768 = vmatmul.mubr.f32.gmra.mrb[0].mxu0 %v1767
      %v1769 = vpop.f32.mrb[0].mxu0
      %v1770 = vadd.f32 %v1671, %v1769
      %v1771 = vpop.f32.mrb[0].mxu0
      %v1772 = vadd.f32 %v1671, %v1771
      %1773 = vdwg.mxu0
      %v1774 = vand.u32 %v1650, 4294901760
      %v1775 = vsub.f32 %v1650, %v1774
      %v1776 = vand.u32 %v1775, 4294901760
      %v1777 = vsub.f32 %v1775, %v1776
      %v1778 = vand.u32 %v1777, 4294901760
      %1779 = vmatprep.subr.mxu0 %v1778
      %v1780 = vand.u32 %v1649, 4294901760
      %v1781 = vsub.f32 %v1649, %v1780
      %v1782 = vand.u32 %v1781, 4294901760
      %v1783 = vsub.f32 %v1781, %v1782
      %v1784 = vand.u32 %v1783, 4294901760
      %1785 = vmatpush1.msra.mxu0 %v1784
      %v1786 = vand.u32 %v1652, 4294901760
      %v1787 = vsub.f32 %v1652, %v1786
      %v1788 = vand.u32 %v1787, 4294901760
      %v1789 = vsub.f32 %v1787, %v1788
      %v1790 = vand.u32 %v1789, 4294901760
      %1791 = vmatprep.subr.mxu0 %v1790
      %v1792 = vand.u32 %v1651, 4294901760
      %v1793 = vsub.f32 %v1651, %v1792
      %v1794 = vand.u32 %v1793, 4294901760
      %v1795 = vsub.f32 %v1793, %v1794
      %v1796 = vand.u32 %v1795, 4294901760
      %1797 = vmatpush1.msra.mxu0 %v1796
      %v1798 = vand.u32 %v1654, 4294901760
      %v1799 = vsub.f32 %v1654, %v1798
      %v1800 = vand.u32 %v1799, 4294901760
      %v1801 = vsub.f32 %v1799, %v1800
      %v1802 = vand.u32 %v1801, 4294901760
      %1803 = vmatprep.subr.mxu0 %v1802
      %v1804 = vand.u32 %v1653, 4294901760
      %v1805 = vsub.f32 %v1653, %v1804
      %v1806 = vand.u32 %v1805, 4294901760
      %v1807 = vsub.f32 %v1805, %v1806
      %v1808 = vand.u32 %v1807, 4294901760
      %1809 = vmatpush1.msra.mxu0 %v1808
      %v1810 = vand.u32 %v1656, 4294901760
      %v1811 = vsub.f32 %v1656, %v1810
      %v1812 = vand.u32 %v1811, 4294901760
      %v1813 = vsub.f32 %v1811, %v1812
      %v1814 = vand.u32 %v1813, 4294901760
      %1815 = vmatprep.subr.mxu0 %v1814
      %v1816 = vand.u32 %v1655, 4294901760
      %v1817 = vsub.f32 %v1655, %v1816
      %v1818 = vand.u32 %v1817, 4294901760
      %v1819 = vsub.f32 %v1817, %v1818
      %v1820 = vand.u32 %v1819, 4294901760
      %1821 = vmatpush1.msra.mxu0 %v1820
      %1822 = vmatprep.subr.mxu0 0.0
      %1823 = vmatpush1.msra.mxu0 0.0
      %1824 = vmatprep.subr.mxu0 0.0
      %1825 = vmatpush1.msra.mxu0 0.0
      %1826 = vmatprep.subr.mxu0 0.0
      %1827 = vmatpush1.msra.mxu0 0.0
      %1828 = vmatprep.subr.mxu0 0.0
      %1829 = vmatpush1.msra.mxu0 0.0
      %1830 = vmatprep.subr.mxu0 0.0
      %1831 = vmatpush1.msra.mxu0 0.0
      %1832 = vmatprep.subr.mxu0 0.0
      %1833 = vmatpush1.msra.mxu0 0.0
      %1834 = vmatprep.subr.mxu0 0.0
      %1835 = vmatpush1.msra.mxu0 0.0
      %1836 = vmatprep.subr.mxu0 0.0
      %1837 = vmatpush1.msra.mxu0 0.0
      %1838 = vmatprep.subr.mxu0 0.0
      %1839 = vmatpush1.msra.mxu0 0.0
      %1840 = vmatprep.subr.mxu0 0.0
      %1841 = vmatpush1.msra.mxu0 0.0
      %1842 = vmatprep.subr.mxu0 0.0
      %1843 = vmatpush1.msra.mxu0 0.0
      %1844 = vmatprep.subr.mxu0 0.0
      %1845 = vmatpush1.msra.mxu0 0.0
      %1846 = vmatprep.subr.mxu0 0.0
      %1847 = vmatpush1.msra.mxu0 0.0
      %1848 = vmatprep.subr.mxu0 0.0
      %1849 = vmatpush1.msra.mxu0 0.0
      %1850 = vmatprep.subr.mxu0 0.0
      %1851 = vmatpush1.msra.mxu0 0.0
      %1852 = vmatprep.subr.mxu0 0.0
      %1853 = vmatpush1.msra.mxu0 0.0
      %1854 = vmatprep.subr.mxu0 0.0
      %1855 = vmatpush1.msra.mxu0 0.0
      %1856 = vmatprep.subr.mxu0 0.0
      %1857 = vmatpush1.msra.mxu0 0.0
      %1858 = vmatprep.subr.mxu0 0.0
      %1859 = vmatpush1.msra.mxu0 0.0
      %1860 = vmatprep.subr.mxu0 0.0
      %1861 = vmatpush1.msra.mxu0 0.0
      %1862 = vmatprep.subr.mxu0 0.0
      %1863 = vmatpush1.msra.mxu0 0.0
      %1864 = vmatprep.subr.mxu0 0.0
      %1865 = vmatpush1.msra.mxu0 0.0
      %1866 = vmatprep.subr.mxu0 0.0
      %1867 = vmatpush1.msra.mxu0 0.0
      %1868 = vmatprep.subr.mxu0 0.0
      %1869 = vmatpush1.msra.mxu0 0.0
      %1870 = vmatprep.subr.mxu0 0.0
      %1871 = vmatpush1.msra.mxu0 0.0
      %1872 = vmatprep.subr.mxu0 0.0
      %1873 = vmatpush1.msra.mxu0 0.0
      %1874 = vmatprep.subr.mxu0 0.0
      %1875 = vmatpush1.msra.mxu0 0.0
      %1876 = vmatprep.subr.mxu0 0.0
      %1877 = vmatpush1.msra.mxu0 0.0
      %1878 = vmatprep.mubr.f32.mxu0 0.0
      %v1879 = vand.u32 %v1674, 4294901760
      %1880 = vmatmul.mubr.f32.gmra.mrb[0].mxu0 %v1879
      %v1881 = vpop.f32.mrb[0].mxu0
      %v1882 = vadd.f32 %v1759, %v1881
      %v1883 = vpop.f32.mrb[0].mxu0
      %v1884 = vadd.f32 %v1761, %v1883
      %1885 = vmatprep.mubr.f32.mxu0 0.0
      %v1886 = vand.u32 %v1677, 4294901760
      %1887 = vmatmul.mubr.f32.gmra.mrb[0].mxu0 %v1886
      %v1888 = vpop.f32.mrb[0].mxu0
      %v1889 = vadd.f32 %v1770, %v1888
      %v1890 = vpop.f32.mrb[0].mxu0
      %v1891 = vadd.f32 %v1772, %v1890
      %1892 = vdwg.mxu0
      %v1893 = vand.u32 %v1650, 4294901760
      %v1894 = vsub.f32 %v1650, %v1893
      %1895 = vmatprep.subr.mxu0 %v1894
      %v1896 = vand.u32 %v1649, 4294901760
      %v1897 = vsub.f32 %v1649, %v1896
      %1898 = vmatpush1.msra.mxu0 %v1897
      %v1899 = vand.u32 %v1652, 4294901760
      %v1900 = vsub.f32 %v1652, %v1899
      %1901 = vmatprep.subr.mxu0 %v1900
      %v1902 = vand.u32 %v1651, 4294901760
      %v1903 = vsub.f32 %v1651, %v1902
      %1904 = vmatpush1.msra.mxu0 %v1903
      %v1905 = vand.u32 %v1654, 4294901760
      %v1906 = vsub.f32 %v1654, %v1905
      %1907 = vmatprep.subr.mxu0 %v1906
      %v1908 = vand.u32 %v1653, 4294901760
      %v1909 = vsub.f32 %v1653, %v1908
      %1910 = vmatpush1.msra.mxu0 %v1909
      %v1911 = vand.u32 %v1656, 4294901760
      %v1912 = vsub.f32 %v1656, %v1911
      %1913 = vmatprep.subr.mxu0 %v1912
      %v1914 = vand.u32 %v1655, 4294901760
      %v1915 = vsub.f32 %v1655, %v1914
      %1916 = vmatpush1.msra.mxu0 %v1915
      %1917 = vmatprep.subr.mxu0 0.0
      %1918 = vmatpush1.msra.mxu0 0.0
      %1919 = vmatprep.subr.mxu0 0.0
      %1920 = vmatpush1.msra.mxu0 0.0
      %1921 = vmatprep.subr.mxu0 0.0
      %1922 = vmatpush1.msra.mxu0 0.0
      %1923 = vmatprep.subr.mxu0 0.0
      %1924 = vmatpush1.msra.mxu0 0.0
      %1925 = vmatprep.subr.mxu0 0.0
      %1926 = vmatpush1.msra.mxu0 0.0
      %1927 = vmatprep.subr.mxu0 0.0
      %1928 = vmatpush1.msra.mxu0 0.0
      %1929 = vmatprep.subr.mxu0 0.0
      %1930 = vmatpush1.msra.mxu0 0.0
      %1931 = vmatprep.subr.mxu0 0.0
      %1932 = vmatpush1.msra.mxu0 0.0
      %1933 = vmatprep.subr.mxu0 0.0
      %1934 = vmatpush1.msra.mxu0 0.0
      %1935 = vmatprep.subr.mxu0 0.0
      %1936 = vmatpush1.msra.mxu0 0.0
      %1937 = vmatprep.subr.mxu0 0.0
      %1938 = vmatpush1.msra.mxu0 0.0
      %1939 = vmatprep.subr.mxu0 0.0
      %1940 = vmatpush1.msra.mxu0 0.0
      %1941 = vmatprep.subr.mxu0 0.0
      %1942 = vmatpush1.msra.mxu0 0.0
      %1943 = vmatprep.subr.mxu0 0.0
      %1944 = vmatpush1.msra.mxu0 0.0
      %1945 = vmatprep.subr.mxu0 0.0
      %1946 = vmatpush1.msra.mxu0 0.0
      %1947 = vmatprep.subr.mxu0 0.0
      %1948 = vmatpush1.msra.mxu0 0.0
      %1949 = vmatprep.subr.mxu0 0.0
      %1950 = vmatpush1.msra.mxu0 0.0
      %1951 = vmatprep.subr.mxu0 0.0
      %1952 = vmatpush1.msra.mxu0 0.0
      %1953 = vmatprep.subr.mxu0 0.0
      %1954 = vmatpush1.msra.mxu0 0.0
      %1955 = vmatprep.subr.mxu0 0.0
      %1956 = vmatpush1.msra.mxu0 0.0
      %1957 = vmatprep.subr.mxu0 0.0
      %1958 = vmatpush1.msra.mxu0 0.0
      %1959 = vmatprep.subr.mxu0 0.0
      %1960 = vmatpush1.msra.mxu0 0.0
      %1961 = vmatprep.subr.mxu0 0.0
      %1962 = vmatpush1.msra.mxu0 0.0
      %1963 = vmatprep.subr.mxu0 0.0
      %1964 = vmatpush1.msra.mxu0 0.0
      %1965 = vmatprep.subr.mxu0 0.0
      %1966 = vmatpush1.msra.mxu0 0.0
      %1967 = vmatprep.subr.mxu0 0.0
      %1968 = vmatpush1.msra.mxu0 0.0
      %1969 = vmatprep.subr.mxu0 0.0
      %1970 = vmatpush1.msra.mxu0 0.0
      %1971 = vmatprep.subr.mxu0 0.0
      %1972 = vmatpush1.msra.mxu0 0.0
      %1973 = vmatprep.mubr.f32.mxu0 0.0
      %v1974 = vand.u32 %v1674, 4294901760
      %v1975 = vsub.f32 %v1674, %v1974
      %1976 = vmatmul.mubr.f32.gmra.mrb[0].mxu0 %v1975
      %v1977 = vpop.f32.mrb[0].mxu0
      %v1978 = vadd.f32 %v1882, %v1977
      %v1979 = vpop.f32.mrb[0].mxu0
      %v1980 = vadd.f32 %v1884, %v1979
      %1981 = vmatprep.mubr.f32.mxu0 0.0
      %v1982 = vand.u32 %v1677, 4294901760
      %v1983 = vsub.f32 %v1677, %v1982
      %1984 = vmatmul.mubr.f32.gmra.mrb[0].mxu0 %v1983
      %v1985 = vpop.f32.mrb[0].mxu0
      %v1986 = vadd.f32 %v1889, %v1985
      %v1987 = vpop.f32.mrb[0].mxu0
      %v1988 = vadd.f32 %v1891, %v1987
      %1989 = vdwg.mxu0
      %v1990 = vand.u32 %v1650, 4294901760
      %1991 = vmatprep.subr.mxu0 %v1990
      %v1992 = vand.u32 %v1649, 4294901760
      %1993 = vmatpush1.msra.mxu0 %v1992
      %v1994 = vand.u32 %v1652, 4294901760
      %1995 = vmatprep.subr.mxu0 %v1994
      %v1996 = vand.u32 %v1651, 4294901760
      %1997 = vmatpush1.msra.mxu0 %v1996
      %v1998 = vand.u32 %v1654, 4294901760
      %1999 = vmatprep.subr.mxu0 %v1998
      %v2000 = vand.u32 %v1653, 4294901760
      %2001 = vmatpush1.msra.mxu0 %v2000
      %v2002 = vand.u32 %v1656, 4294901760
      %2003 = vmatprep.subr.mxu0 %v2002
      %v2004 = vand.u32 %v1655, 4294901760
      %2005 = vmatpush1.msra.mxu0 %v2004
      %2006 = vmatprep.subr.mxu0 0.0
      %2007 = vmatpush1.msra.mxu0 0.0
      %2008 = vmatprep.subr.mxu0 0.0
      %2009 = vmatpush1.msra.mxu0 0.0
      %2010 = vmatprep.subr.mxu0 0.0
      %2011 = vmatpush1.msra.mxu0 0.0
      %2012 = vmatprep.subr.mxu0 0.0
      %2013 = vmatpush1.msra.mxu0 0.0
      %2014 = vmatprep.subr.mxu0 0.0
      %2015 = vmatpush1.msra.mxu0 0.0
      %2016 = vmatprep.subr.mxu0 0.0
      %2017 = vmatpush1.msra.mxu0 0.0
      %2018 = vmatprep.subr.mxu0 0.0
      %2019 = vmatpush1.msra.mxu0 0.0
      %2020 = vmatprep.subr.mxu0 0.0
      %2021 = vmatpush1.msra.mxu0 0.0
      %2022 = vmatprep.subr.mxu0 0.0
      %2023 = vmatpush1.msra.mxu0 0.0
      %2024 = vmatprep.subr.mxu0 0.0
      %2025 = vmatpush1.msra.mxu0 0.0
      %2026 = vmatprep.subr.mxu0 0.0
      %2027 = vmatpush1.msra.mxu0 0.0
      %2028 = vmatprep.subr.mxu0 0.0
      %2029 = vmatpush1.msra.mxu0 0.0
      %2030 = vmatprep.subr.mxu0 0.0
      %2031 = vmatpush1.msra.mxu0 0.0
      %2032 = vmatprep.subr.mxu0 0.0
      %2033 = vmatpush1.msra.mxu0 0.0
      %2034 = vmatprep.subr.mxu0 0.0
      %2035 = vmatpush1.msra.mxu0 0.0
      %2036 = vmatprep.subr.mxu0 0.0
      %2037 = vmatpush1.msra.mxu0 0.0
      %2038 = vmatprep.subr.mxu0 0.0
      %2039 = vmatpush1.msra.mxu0 0.0
      %2040 = vmatprep.subr.mxu0 0.0
      %2041 = vmatpush1.msra.mxu0 0.0
      %2042 = vmatprep.subr.mxu0 0.0
      %2043 = vmatpush1.msra.mxu0 0.0
      %2044 = vmatprep.subr.mxu0 0.0
      %2045 = vmatpush1.msra.mxu0 0.0
      %2046 = vmatprep.subr.mxu0 0.0
      %2047 = vmatpush1.msra.mxu0 0.0
      %2048 = vmatprep.subr.mxu0 0.0
      %2049 = vmatpush1.msra.mxu0 0.0
      %2050 = vmatprep.subr.mxu0 0.0
      %2051 = vmatpush1.msra.mxu0 0.0
      %2052 = vmatprep.subr.mxu0 0.0
      %2053 = vmatpush1.msra.mxu0 0.0
      %2054 = vmatprep.subr.mxu0 0.0
      %2055 = vmatpush1.msra.mxu0 0.0
      %2056 = vmatprep.subr.mxu0 0.0
      %2057 = vmatpush1.msra.mxu0 0.0
      %2058 = vmatprep.subr.mxu0 0.0
      %2059 = vmatpush1.msra.mxu0 0.0
      %2060 = vmatprep.subr.mxu0 0.0
      %2061 = vmatpush1.msra.mxu0 0.0
      %2062 = vmatprep.mubr.f32.mxu0 0.0
      %v2063 = vand.u32 %v1674, 4294901760
      %v2064 = vsub.f32 %v1674, %v2063
      %v2065 = vand.u32 %v2064, 4294901760
      %2066 = vmatmul.mubr.f32.gmra.mrb[0].mxu0 %v2065
      %v2067 = vpop.f32.mrb[0].mxu0
      %v2068 = vadd.f32 %v1978, %v2067
      %v2069 = vpop.f32.mrb[0].mxu0
      %v2070 = vadd.f32 %v1980, %v2069
      %2071 = vmatprep.mubr.f32.mxu0 0.0
      %v2072 = vand.u32 %v1677, 4294901760
      %v2073 = vsub.f32 %v1677, %v2072
      %v2074 = vand.u32 %v2073, 4294901760
      %2075 = vmatmul.mubr.f32.gmra.mrb[0].mxu0 %v2074
      %v2076 = vpop.f32.mrb[0].mxu0
      %v2077 = vadd.f32 %v1986, %v2076
      %v2078 = vpop.f32.mrb[0].mxu0
      %v2079 = vadd.f32 %v1988, %v2078
      %2080 = vdwg.mxu0
      %v2081 = vand.u32 %v1650, 4294901760
      %v2082 = vsub.f32 %v1650, %v2081
      %v2083 = vand.u32 %v2082, 4294901760
      %2084 = vmatprep.subr.mxu0 %v2083
      %v2085 = vand.u32 %v1649, 4294901760
      %v2086 = vsub.f32 %v1649, %v2085
      %v2087 = vand.u32 %v2086, 4294901760
      %2088 = vmatpush1.msra.mxu0 %v2087
      %v2089 = vand.u32 %v1652, 4294901760
      %v2090 = vsub.f32 %v1652, %v2089
      %v2091 = vand.u32 %v2090, 4294901760
      %2092 = vmatprep.subr.mxu0 %v2091
      %v2093 = vand.u32 %v1651, 4294901760
      %v2094 = vsub.f32 %v1651, %v2093
      %v2095 = vand.u32 %v2094, 4294901760
      %2096 = vmatpush1.msra.mxu0 %v2095
      %v2097 = vand.u32 %v1654, 4294901760
      %v2098 = vsub.f32 %v1654, %v2097
      %v2099 = vand.u32 %v2098, 4294901760
      %2100 = vmatprep.subr.mxu0 %v2099
      %v2101 = vand.u32 %v1653, 4294901760
      %v2102 = vsub.f32 %v1653, %v2101
      %v2103 = vand.u32 %v2102, 4294901760
      %2104 = vmatpush1.msra.mxu0 %v2103
      %v2105 = vand.u32 %v1656, 4294901760
      %v2106 = vsub.f32 %v1656, %v2105
      %v2107 = vand.u32 %v2106, 4294901760
      %2108 = vmatprep.subr.mxu0 %v2107
      %v2109 = vand.u32 %v1655, 4294901760
      %v2110 = vsub.f32 %v1655, %v2109
      %v2111 = vand.u32 %v2110, 4294901760
      %2112 = vmatpush1.msra.mxu0 %v2111
      %2113 = vmatprep.subr.mxu0 0.0
      %2114 = vmatpush1.msra.mxu0 0.0
      %2115 = vmatprep.subr.mxu0 0.0
      %2116 = vmatpush1.msra.mxu0 0.0
      %2117 = vmatprep.subr.mxu0 0.0
      %2118 = vmatpush1.msra.mxu0 0.0
      %2119 = vmatprep.subr.mxu0 0.0
      %2120 = vmatpush1.msra.mxu0 0.0
      %2121 = vmatprep.subr.mxu0 0.0
      %2122 = vmatpush1.msra.mxu0 0.0
      %2123 = vmatprep.subr.mxu0 0.0
      %2124 = vmatpush1.msra.mxu0 0.0
      %2125 = vmatprep.subr.mxu0 0.0
      %2126 = vmatpush1.msra.mxu0 0.0
      %2127 = vmatprep.subr.mxu0 0.0
      %2128 = vmatpush1.msra.mxu0 0.0
      %2129 = vmatprep.subr.mxu0 0.0
      %2130 = vmatpush1.msra.mxu0 0.0
      %2131 = vmatprep.subr.mxu0 0.0
      %2132 = vmatpush1.msra.mxu0 0.0
      %2133 = vmatprep.subr.mxu0 0.0
      %2134 = vmatpush1.msra.mxu0 0.0
      %2135 = vmatprep.subr.mxu0 0.0
      %2136 = vmatpush1.msra.mxu0 0.0
      %2137 = vmatprep.subr.mxu0 0.0
      %2138 = vmatpush1.msra.mxu0 0.0
      %2139 = vmatprep.subr.mxu0 0.0
      %2140 = vmatpush1.msra.mxu0 0.0
      %2141 = vmatprep.subr.mxu0 0.0
      %2142 = vmatpush1.msra.mxu0 0.0
      %2143 = vmatprep.subr.mxu0 0.0
      %2144 = vmatpush1.msra.mxu0 0.0
      %2145 = vmatprep.subr.mxu0 0.0
      %2146 = vmatpush1.msra.mxu0 0.0
      %2147 = vmatprep.subr.mxu0 0.0
      %2148 = vmatpush1.msra.mxu0 0.0
      %2149 = vmatprep.subr.mxu0 0.0
      %2150 = vmatpush1.msra.mxu0 0.0
      %2151 = vmatprep.subr.mxu0 0.0
      %2152 = vmatpush1.msra.mxu0 0.0
      %2153 = vmatprep.subr.mxu0 0.0
      %2154 = vmatpush1.msra.mxu0 0.0
      %2155 = vmatprep.subr.mxu0 0.0
      %2156 = vmatpush1.msra.mxu0 0.0
      %2157 = vmatprep.subr.mxu0 0.0
      %2158 = vmatpush1.msra.mxu0 0.0
      %2159 = vmatprep.subr.mxu0 0.0
      %2160 = vmatpush1.msra.mxu0 0.0
      %2161 = vmatprep.subr.mxu0 0.0
      %2162 = vmatpush1.msra.mxu0 0.0
      %2163 = vmatprep.subr.mxu0 0.0
      %2164 = vmatpush1.msra.mxu0 0.0
      %2165 = vmatprep.subr.mxu0 0.0
      %2166 = vmatpush1.msra.mxu0 0.0
      %2167 = vmatprep.subr.mxu0 0.0
      %2168 = vmatpush1.msra.mxu0 0.0
      %2169 = vmatprep.mubr.f32.mxu0 0.0
      %v2170 = vand.u32 %v1674, 4294901760
      %2171 = vmatmul.mubr.f32.gmra.mrb[0].mxu0 %v2170
      %v2172 = vpop.f32.mrb[0].mxu0
      %v2173 = vadd.f32 %v2068, %v2172
      %v2174 = vpop.f32.mrb[0].mxu0
      %v2175 = vadd.f32 %v2070, %v2174
      %2176 = vmatprep.mubr.f32.mxu0 0.0
      %v2177 = vand.u32 %v1677, 4294901760
      %2178 = vmatmul.mubr.f32.gmra.mrb[0].mxu0 %v2177
      %v2179 = vpop.f32.mrb[0].mxu0
      %v2180 = vadd.f32 %v2077, %v2179
      %v2181 = vpop.f32.mrb[0].mxu0
      %v2182 = vadd.f32 %v2079, %v2181
      %2183 = vdwg.mxu0
      %v2184 = vand.u32 %v1650, 4294901760
      %2185 = vmatprep.subr.mxu0 %v2184
      %v2186 = vand.u32 %v1649, 4294901760
      %2187 = vmatpush1.msra.mxu0 %v2186
      %v2188 = vand.u32 %v1652, 4294901760
      %2189 = vmatprep.subr.mxu0 %v2188
      %v2190 = vand.u32 %v1651, 4294901760
      %2191 = vmatpush1.msra.mxu0 %v2190
      %v2192 = vand.u32 %v1654, 4294901760
      %2193 = vmatprep.subr.mxu0 %v2192
      %v2194 = vand.u32 %v1653, 4294901760
      %2195 = vmatpush1.msra.mxu0 %v2194
      %v2196 = vand.u32 %v1656, 4294901760
      %2197 = vmatprep.subr.mxu0 %v2196
      %v2198 = vand.u32 %v1655, 4294901760
      %2199 = vmatpush1.msra.mxu0 %v2198
      %2200 = vmatprep.subr.mxu0 0.0
      %2201 = vmatpush1.msra.mxu0 0.0
      %2202 = vmatprep.subr.mxu0 0.0
      %2203 = vmatpush1.msra.mxu0 0.0
      %2204 = vmatprep.subr.mxu0 0.0
      %2205 = vmatpush1.msra.mxu0 0.0
      %2206 = vmatprep.subr.mxu0 0.0
      %2207 = vmatpush1.msra.mxu0 0.0
      %2208 = vmatprep.subr.mxu0 0.0
      %2209 = vmatpush1.msra.mxu0 0.0
      %2210 = vmatprep.subr.mxu0 0.0
      %2211 = vmatpush1.msra.mxu0 0.0
      %2212 = vmatprep.subr.mxu0 0.0
      %2213 = vmatpush1.msra.mxu0 0.0
      %2214 = vmatprep.subr.mxu0 0.0
      %2215 = vmatpush1.msra.mxu0 0.0
      %2216 = vmatprep.subr.mxu0 0.0
      %2217 = vmatpush1.msra.mxu0 0.0
      %2218 = vmatprep.subr.mxu0 0.0
      %2219 = vmatpush1.msra.mxu0 0.0
      %2220 = vmatprep.subr.mxu0 0.0
      %2221 = vmatpush1.msra.mxu0 0.0
      %2222 = vmatprep.subr.mxu0 0.0
      %2223 = vmatpush1.msra.mxu0 0.0
      %2224 = vmatprep.subr.mxu0 0.0
      %2225 = vmatpush1.msra.mxu0 0.0
      %2226 = vmatprep.subr.mxu0 0.0
      %2227 = vmatpush1.msra.mxu0 0.0
      %2228 = vmatprep.subr.mxu0 0.0
      %2229 = vmatpush1.msra.mxu0 0.0
      %2230 = vmatprep.subr.mxu0 0.0
      %2231 = vmatpush1.msra.mxu0 0.0
      %2232 = vmatprep.subr.mxu0 0.0
      %2233 = vmatpush1.msra.mxu0 0.0
      %2234 = vmatprep.subr.mxu0 0.0
      %2235 = vmatpush1.msra.mxu0 0.0
      %2236 = vmatprep.subr.mxu0 0.0
      %2237 = vmatpush1.msra.mxu0 0.0
      %2238 = vmatprep.subr.mxu0 0.0
      %2239 = vmatpush1.msra.mxu0 0.0
      %2240 = vmatprep.subr.mxu0 0.0
      %2241 = vmatpush1.msra.mxu0 0.0
      %2242 = vmatprep.subr.mxu0 0.0
      %2243 = vmatpush1.msra.mxu0 0.0
      %2244 = vmatprep.subr.mxu0 0.0
      %2245 = vmatpush1.msra.mxu0 0.0
      %2246 = vmatprep.subr.mxu0 0.0
      %2247 = vmatpush1.msra.mxu0 0.0
      %2248 = vmatprep.subr.mxu0 0.0
      %2249 = vmatpush1.msra.mxu0 0.0
      %2250 = vmatprep.subr.mxu0 0.0
      %2251 = vmatpush1.msra.mxu0 0.0
      %2252 = vmatprep.subr.mxu0 0.0
      %2253 = vmatpush1.msra.mxu0 0.0
      %2254 = vmatprep.subr.mxu0 0.0
      %2255 = vmatpush1.msra.mxu0 0.0
      %2256 = vmatprep.mubr.f32.mxu0 0.0
      %v2257 = vand.u32 %v1674, 4294901760
      %2258 = vmatmul.mubr.f32.gmra.mrb[0].mxu0 %v2257
      %v2259 = vpop.f32.mrb[0].mxu0
      %v2260 = vadd.f32 %v2173, %v2259
      %v2261 = vpop.f32.mrb[0].mxu0
      %v2262 = vadd.f32 %v2175, %v2261
      %2263 = vmatprep.mubr.f32.mxu0 0.0
      %v2264 = vand.u32 %v1677, 4294901760
      %2265 = vmatmul.mubr.f32.gmra.mrb[0].mxu0 %v2264
      %v2266 = vpop.f32.mrb[0].mxu0
      %v2267 = vadd.f32 %v2180, %v2266
      %v2268 = vpop.f32.mrb[0].mxu0
      %v2269 = vadd.f32 %v2182, %v2268
      %2270 = vdwg.mxu0
      %v2271 = vand.u32 2147483647, %v2260
      %v2272 = vand.u32 2147483647, %v2262
      %v2273 = vand.u32 2147483647, %v2267
      %v2274 = vand.u32 2147483647, %v2269
      %v2275 = vrcp.pop %v2271
      %v2276 = vrcp.pop %v2272
      %v2277 = vrcp.pop %v2273
      %v2278 = vrcp.pop %v2274
      %vm2279 = vcmp.gt.f32.partialorder %v2271, 1.0
      %vm2280 = vcmp.gt.f32.partialorder %v2272, 1.0
      %vm2281 = vcmp.gt.f32.partialorder %v2273, 1.0
      %vm2282 = vcmp.gt.f32.partialorder %v2274, 1.0
      %v2283 = vsel %vm2279, %v2275, %v2271
      %v2284 = vsel %vm2280, %v2276, %v2272
      %v2285 = vsel %vm2281, %v2277, %v2273
      %v2286 = vsel %vm2282, %v2278, %v2274
      %v2287 = vmul.f32 %v2283, %v2283
      %v2288 = vmul.f32 %v2284, %v2284
      %v2289 = vmul.f32 %v2285, %v2285
      %v2290 = vmul.f32 %v2286, %v2286
      %v2291 = vmul.f32 %v2287, -0.0117212
      %v2292 = vmul.f32 %v2288, -0.0117212
      %v2293 = vmul.f32 %v2289, -0.0117212
      %v2294 = vmul.f32 %v2290, -0.0117212
      %v2295 = vadd.f32 %v2291, 0.05265332
      %v2296 = vadd.f32 %v2292, 0.05265332
      %v2297 = vadd.f32 %v2293, 0.05265332
      %v2298 = vadd.f32 %v2294, 0.05265332
      %v2299 = vmul.f32 %v2295, %v2287
      %v2300 = vmul.f32 %v2296, %v2288
      %v2301 = vmul.f32 %v2297, %v2289
      %v2302 = vmul.f32 %v2298, %v2290
      %v2303 = vadd.f32 %v2299, -0.11643287
      %v2304 = vadd.f32 %v2300, -0.11643287
      %v2305 = vadd.f32 %v2301, -0.11643287
      %v2306 = vadd.f32 %v2302, -0.11643287
      %v2307 = vmul.f32 %v2303, %v2287
      %v2308 = vmul.f32 %v2304, %v2288
      %v2309 = vmul.f32 %v2305, %v2289
      %v2310 = vmul.f32 %v2306, %v2290
      %v2311 = vadd.f32 %v2307, 0.19354346
      %v2312 = vadd.f32 %v2308, 0.19354346
      %v2313 = vadd.f32 %v2309, 0.19354346
      %v2314 = vadd.f32 %v2310, 0.19354346
      %v2315 = vmul.f32 %v2311, %v2287
      %v2316 = vmul.f32 %v2312, %v2288
      %v2317 = vmul.f32 %v2313, %v2289
      %v2318 = vmul.f32 %v2314, %v2290
      %v2319 = vadd.f32 %v2315, -0.33262348
      %v2320 = vadd.f32 %v2316, -0.33262348
      %v2321 = vadd.f32 %v2317, -0.33262348
      %v2322 = vadd.f32 %v2318, -0.33262348
      %v2323 = vmul.f32 %v2319, %v2287
      %v2324 = vmul.f32 %v2320, %v2288
      %v2325 = vmul.f32 %v2321, %v2289
      %v2326 = vmul.f32 %v2322, %v2290
      %v2327 = vadd.f32 %v2323, 0.99997723
      %v2328 = vadd.f32 %v2324, 0.99997723
      %v2329 = vadd.f32 %v2325, 0.99997723
      %v2330 = vadd.f32 %v2326, 0.99997723
      %v2331 = vmul.f32 %v2327, %v2283
      %v2332 = vmul.f32 %v2328, %v2284
      %v2333 = vmul.f32 %v2329, %v2285
      %v2334 = vmul.f32 %v2330, %v2286
      %v2335 = vsub.f32 1.5707964, %v2331
      %v2336 = vsub.f32 1.5707964, %v2332
      %v2337 = vsub.f32 1.5707964, %v2333
      %v2338 = vsub.f32 1.5707964, %v2334
      %v2339 = vsel %vm2279, %v2335, %v2331
      %v2340 = vsel %vm2280, %v2336, %v2332
      %v2341 = vsel %vm2281, %v2337, %v2333
      %v2342 = vsel %vm2282, %v2338, %v2334
      %vm2343 = vcmp.lt.f32.partialorder %v2260, 0.0
      %vm2344 = vcmp.lt.f32.partialorder %v2262, 0.0
      %vm2345 = vcmp.lt.f32.partialorder %v2267, 0.0
      %vm2346 = vcmp.lt.f32.partialorder %v2269, 0.0
      %v2347 = vsub.f32 0.0, %v2339
      %v2348 = vsub.f32 0.0, %v2340
      %v2349 = vsub.f32 0.0, %v2341
      %v2350 = vsub.f32 0.0, %v2342
      %v2351 = vsel %vm2343, %v2347, %v2339
      %v2352 = vsel %vm2344, %v2348, %v2340
      %v2353 = vsel %vm2345, %v2349, %v2341
      %v2354 = vsel %vm2346, %v2350, %v2342
      %v2355 = vmul.f32 %v2351, %v2351
      %v2356 = vmul.f32 %v2352, %v2352
      %v2357 = vmul.f32 %v2353, %v2353
      %v2358 = vmul.f32 %v2354, %v2354
      %s2359 = scalar_lea.vmem %s3, 32
      %v2360 = vld [vmem:[%s2359] sm:$0xff]
      %v2361 = vld [vmem:[%s2359 + $0x8] sm:$0xff]
      %s2362 = scalar_lea.vmem %s4, 32
      %v2363 = vld [vmem:[%s2362] sm:$0xff]
      %v2364 = vld [vmem:[%s2362 + $0x8] sm:$0xff]
      %2366 = vset.pattern.permute.xlu0 0
      %2367 = vperm.xlu0 %2366, %v2363
      %v2368 = vpop.permute.xlu0 %2367
      %2371 = vset.pattern.permute.xlu0 0
      %2372 = vperm.xlu0 %2371, %v2364
      %v2373 = vpop.permute.xlu0 %2372
      %v2376 = vsel %vm970, %v2360, 0
      %v2379 = vsel %vm970, %v2361, 0
      %v2381 = vand.u32 %v2352, 4294901760
      %2382 = vmatprep.subr.mxu0 %v2381
      %v2383 = vand.u32 %v2351, 4294901760
      %2384 = vmatpush1.msra.mxu0 %v2383
      %v2385 = vand.u32 %v2354, 4294901760
      %2386 = vmatprep.subr.mxu0 %v2385
      %v2387 = vand.u32 %v2353, 4294901760
      %2388 = vmatpush1.msra.mxu0 %v2387
      %v2389 = vand.u32 %v2356, 4294901760
      %2390 = vmatprep.subr.mxu0 %v2389
      %v2391 = vand.u32 %v2355, 4294901760
      %2392 = vmatpush1.msra.mxu0 %v2391
      %v2393 = vand.u32 %v2358, 4294901760
      %2394 = vmatprep.subr.mxu0 %v2393
      %v2395 = vand.u32 %v2357, 4294901760
      %2396 = vmatpush1.msra.mxu0 %v2395
      %2397 = vmatprep.subr.mxu0 0.0
      %2398 = vmatpush1.msra.mxu0 0.0
      %2399 = vmatprep.subr.mxu0 0.0
      %2400 = vmatpush1.msra.mxu0 0.0
      %2401 = vmatprep.subr.mxu0 0.0
      %2402 = vmatpush1.msra.mxu0 0.0
      %2403 = vmatprep.subr.mxu0 0.0
      %2404 = vmatpush1.msra.mxu0 0.0
      %2405 = vmatprep.subr.mxu0 0.0
      %2406 = vmatpush1.msra.mxu0 0.0
      %2407 = vmatprep.subr.mxu0 0.0
      %2408 = vmatpush1.msra.mxu0 0.0
      %2409 = vmatprep.subr.mxu0 0.0
      %2410 = vmatpush1.msra.mxu0 0.0
      %2411 = vmatprep.subr.mxu0 0.0
      %2412 = vmatpush1.msra.mxu0 0.0
      %2413 = vmatprep.subr.mxu0 0.0
      %2414 = vmatpush1.msra.mxu0 0.0
      %2415 = vmatprep.subr.mxu0 0.0
      %2416 = vmatpush1.msra.mxu0 0.0
      %2417 = vmatprep.subr.mxu0 0.0
      %2418 = vmatpush1.msra.mxu0 0.0
      %2419 = vmatprep.subr.mxu0 0.0
      %2420 = vmatpush1.msra.mxu0 0.0
      %2421 = vmatprep.subr.mxu0 0.0
      %2422 = vmatpush1.msra.mxu0 0.0
      %2423 = vmatprep.subr.mxu0 0.0
      %2424 = vmatpush1.msra.mxu0 0.0
      %2425 = vmatprep.subr.mxu0 0.0
      %2426 = vmatpush1.msra.mxu0 0.0
      %2427 = vmatprep.subr.mxu0 0.0
      %2428 = vmatpush1.msra.mxu0 0.0
      %2429 = vmatprep.subr.mxu0 0.0
      %2430 = vmatpush1.msra.mxu0 0.0
      %2431 = vmatprep.subr.mxu0 0.0
      %2432 = vmatpush1.msra.mxu0 0.0
      %2433 = vmatprep.subr.mxu0 0.0
      %2434 = vmatpush1.msra.mxu0 0.0
      %2435 = vmatprep.subr.mxu0 0.0
      %2436 = vmatpush1.msra.mxu0 0.0
      %2437 = vmatprep.subr.mxu0 0.0
      %2438 = vmatpush1.msra.mxu0 0.0
      %2439 = vmatprep.subr.mxu0 0.0
      %2440 = vmatpush1.msra.mxu0 0.0
      %2441 = vmatprep.subr.mxu0 0.0
      %2442 = vmatpush1.msra.mxu0 0.0
      %2443 = vmatprep.subr.mxu0 0.0
      %2444 = vmatpush1.msra.mxu0 0.0
      %2445 = vmatprep.subr.mxu0 0.0
      %2446 = vmatpush1.msra.mxu0 0.0
      %2447 = vmatprep.subr.mxu0 0.0
      %2448 = vmatpush1.msra.mxu0 0.0
      %2449 = vmatprep.subr.mxu0 0.0
      %2450 = vmatpush1.msra.mxu0 0.0
      %2451 = vmatprep.subr.mxu0 0.0
      %2452 = vmatpush1.msra.mxu0 0.0
      %2453 = vmatprep.mubr.f32.mxu0 0.0
      %v2454 = vand.u32 %v2376, 4294901760
      %v2455 = vsub.f32 %v2376, %v2454
      %v2456 = vand.u32 %v2455, 4294901760
      %v2457 = vsub.f32 %v2455, %v2456
      %v2458 = vand.u32 %v2457, 4294901760
      %2459 = vmatmul.mubr.f32.gmra.mrb[0].mxu0 %v2458
      %v2460 = vpop.f32.mrb[0].mxu0
      %v2461 = vadd.f32 %v2368, %v2460
      %v2462 = vpop.f32.mrb[0].mxu0
      %v2463 = vadd.f32 %v2368, %v2462
      %2464 = vmatprep.mubr.f32.mxu0 0.0
      %v2465 = vand.u32 %v2379, 4294901760
      %v2466 = vsub.f32 %v2379, %v2465
      %v2467 = vand.u32 %v2466, 4294901760
      %v2468 = vsub.f32 %v2466, %v2467
      %v2469 = vand.u32 %v2468, 4294901760
      %2470 = vmatmul.mubr.f32.gmra.mrb[0].mxu0 %v2469
      %v2471 = vpop.f32.mrb[0].mxu0
      %v2472 = vadd.f32 %v2373, %v2471
      %v2473 = vpop.f32.mrb[0].mxu0
      %v2474 = vadd.f32 %v2373, %v2473
      %2475 = vdwg.mxu0
      %v2476 = vand.u32 %v2352, 4294901760
      %v2477 = vsub.f32 %v2352, %v2476
      %v2478 = vand.u32 %v2477, 4294901760
      %v2479 = vsub.f32 %v2477, %v2478
      %v2480 = vand.u32 %v2479, 4294901760
      %2481 = vmatprep.subr.mxu0 %v2480
      %v2482 = vand.u32 %v2351, 4294901760
      %v2483 = vsub.f32 %v2351, %v2482
      %v2484 = vand.u32 %v2483, 4294901760
      %v2485 = vsub.f32 %v2483, %v2484
      %v2486 = vand.u32 %v2485, 4294901760
      %2487 = vmatpush1.msra.mxu0 %v2486
      %v2488 = vand.u32 %v2354, 4294901760
      %v2489 = vsub.f32 %v2354, %v2488
      %v2490 = vand.u32 %v2489, 4294901760
      %v2491 = vsub.f32 %v2489, %v2490
      %v2492 = vand.u32 %v2491, 4294901760
      %2493 = vmatprep.subr.mxu0 %v2492
      %v2494 = vand.u32 %v2353, 4294901760
      %v2495 = vsub.f32 %v2353, %v2494
      %v2496 = vand.u32 %v2495, 4294901760
      %v2497 = vsub.f32 %v2495, %v2496
      %v2498 = vand.u32 %v2497, 4294901760
      %2499 = vmatpush1.msra.mxu0 %v2498
      %v2500 = vand.u32 %v2356, 4294901760
      %v2501 = vsub.f32 %v2356, %v2500
      %v2502 = vand.u32 %v2501, 4294901760
      %v2503 = vsub.f32 %v2501, %v2502
      %v2504 = vand.u32 %v2503, 4294901760
      %2505 = vmatprep.subr.mxu0 %v2504
      %v2506 = vand.u32 %v2355, 4294901760
      %v2507 = vsub.f32 %v2355, %v2506
      %v2508 = vand.u32 %v2507, 4294901760
      %v2509 = vsub.f32 %v2507, %v2508
      %v2510 = vand.u32 %v2509, 4294901760
      %2511 = vmatpush1.msra.mxu0 %v2510
      %v2512 = vand.u32 %v2358, 4294901760
      %v2513 = vsub.f32 %v2358, %v2512
      %v2514 = vand.u32 %v2513, 4294901760
      %v2515 = vsub.f32 %v2513, %v2514
      %v2516 = vand.u32 %v2515, 4294901760
      %2517 = vmatprep.subr.mxu0 %v2516
      %v2518 = vand.u32 %v2357, 4294901760
      %v2519 = vsub.f32 %v2357, %v2518
      %v2520 = vand.u32 %v2519, 4294901760
      %v2521 = vsub.f32 %v2519, %v2520
      %v2522 = vand.u32 %v2521, 4294901760
      %2523 = vmatpush1.msra.mxu0 %v2522
      %2524 = vmatprep.subr.mxu0 0.0
      %2525 = vmatpush1.msra.mxu0 0.0
      %2526 = vmatprep.subr.mxu0 0.0
      %2527 = vmatpush1.msra.mxu0 0.0
      %2528 = vmatprep.subr.mxu0 0.0
      %2529 = vmatpush1.msra.mxu0 0.0
      %2530 = vmatprep.subr.mxu0 0.0
      %2531 = vmatpush1.msra.mxu0 0.0
      %2532 = vmatprep.subr.mxu0 0.0
      %2533 = vmatpush1.msra.mxu0 0.0
      %2534 = vmatprep.subr.mxu0 0.0
      %2535 = vmatpush1.msra.mxu0 0.0
      %2536 = vmatprep.subr.mxu0 0.0
      %2537 = vmatpush1.msra.mxu0 0.0
      %2538 = vmatprep.subr.mxu0 0.0
      %2539 = vmatpush1.msra.mxu0 0.0
      %2540 = vmatprep.subr.mxu0 0.0
      %2541 = vmatpush1.msra.mxu0 0.0
      %2542 = vmatprep.subr.mxu0 0.0
      %2543 = vmatpush1.msra.mxu0 0.0
      %2544 = vmatprep.subr.mxu0 0.0
      %2545 = vmatpush1.msra.mxu0 0.0
      %2546 = vmatprep.subr.mxu0 0.0
      %2547 = vmatpush1.msra.mxu0 0.0
      %2548 = vmatprep.subr.mxu0 0.0
      %2549 = vmatpush1.msra.mxu0 0.0
      %2550 = vmatprep.subr.mxu0 0.0
      %2551 = vmatpush1.msra.mxu0 0.0
      %2552 = vmatprep.subr.mxu0 0.0
      %2553 = vmatpush1.msra.mxu0 0.0
      %2554 = vmatprep.subr.mxu0 0.0
      %2555 = vmatpush1.msra.mxu0 0.0
      %2556 = vmatprep.subr.mxu0 0.0
      %2557 = vmatpush1.msra.mxu0 0.0
      %2558 = vmatprep.subr.mxu0 0.0
      %2559 = vmatpush1.msra.mxu0 0.0
      %2560 = vmatprep.subr.mxu0 0.0
      %2561 = vmatpush1.msra.mxu0 0.0
      %2562 = vmatprep.subr.mxu0 0.0
      %2563 = vmatpush1.msra.mxu0 0.0
      %2564 = vmatprep.subr.mxu0 0.0
      %2565 = vmatpush1.msra.mxu0 0.0
      %2566 = vmatprep.subr.mxu0 0.0
      %2567 = vmatpush1.msra.mxu0 0.0
      %2568 = vmatprep.subr.mxu0 0.0
      %2569 = vmatpush1.msra.mxu0 0.0
      %2570 = vmatprep.subr.mxu0 0.0
      %2571 = vmatpush1.msra.mxu0 0.0
      %2572 = vmatprep.subr.mxu0 0.0
      %2573 = vmatpush1.msra.mxu0 0.0
      %2574 = vmatprep.subr.mxu0 0.0
      %2575 = vmatpush1.msra.mxu0 0.0
      %2576 = vmatprep.subr.mxu0 0.0
      %2577 = vmatpush1.msra.mxu0 0.0
      %2578 = vmatprep.subr.mxu0 0.0
      %2579 = vmatpush1.msra.mxu0 0.0
      %2580 = vmatprep.mubr.f32.mxu0 0.0
      %v2581 = vand.u32 %v2376, 4294901760
      %2582 = vmatmul.mubr.f32.gmra.mrb[0].mxu0 %v2581
      %v2583 = vpop.f32.mrb[0].mxu0
      %v2584 = vadd.f32 %v2461, %v2583
      %v2585 = vpop.f32.mrb[0].mxu0
      %v2586 = vadd.f32 %v2463, %v2585
      %2587 = vmatprep.mubr.f32.mxu0 0.0
      %v2588 = vand.u32 %v2379, 4294901760
      %2589 = vmatmul.mubr.f32.gmra.mrb[0].mxu0 %v2588
      %v2590 = vpop.f32.mrb[0].mxu0
      %v2591 = vadd.f32 %v2472, %v2590
      %v2592 = vpop.f32.mrb[0].mxu0
      %v2593 = vadd.f32 %v2474, %v2592
      %2594 = vdwg.mxu0
      %v2595 = vand.u32 %v2352, 4294901760
      %v2596 = vsub.f32 %v2352, %v2595
      %2597 = vmatprep.subr.mxu0 %v2596
      %v2598 = vand.u32 %v2351, 4294901760
      %v2599 = vsub.f32 %v2351, %v2598
      %2600 = vmatpush1.msra.mxu0 %v2599
      %v2601 = vand.u32 %v2354, 4294901760
      %v2602 = vsub.f32 %v2354, %v2601
      %2603 = vmatprep.subr.mxu0 %v2602
      %v2604 = vand.u32 %v2353, 4294901760
      %v2605 = vsub.f32 %v2353, %v2604
      %2606 = vmatpush1.msra.mxu0 %v2605
      %v2607 = vand.u32 %v2356, 4294901760
      %v2608 = vsub.f32 %v2356, %v2607
      %2609 = vmatprep.subr.mxu0 %v2608
      %v2610 = vand.u32 %v2355, 4294901760
      %v2611 = vsub.f32 %v2355, %v2610
      %2612 = vmatpush1.msra.mxu0 %v2611
      %v2613 = vand.u32 %v2358, 4294901760
      %v2614 = vsub.f32 %v2358, %v2613
      %2615 = vmatprep.subr.mxu0 %v2614
      %v2616 = vand.u32 %v2357, 4294901760
      %v2617 = vsub.f32 %v2357, %v2616
      %2618 = vmatpush1.msra.mxu0 %v2617
      %2619 = vmatprep.subr.mxu0 0.0
      %2620 = vmatpush1.msra.mxu0 0.0
      %2621 = vmatprep.subr.mxu0 0.0
      %2622 = vmatpush1.msra.mxu0 0.0
      %2623 = vmatprep.subr.mxu0 0.0
      %2624 = vmatpush1.msra.mxu0 0.0
      %2625 = vmatprep.subr.mxu0 0.0
      %2626 = vmatpush1.msra.mxu0 0.0
      %2627 = vmatprep.subr.mxu0 0.0
      %2628 = vmatpush1.msra.mxu0 0.0
      %2629 = vmatprep.subr.mxu0 0.0
      %2630 = vmatpush1.msra.mxu0 0.0
      %2631 = vmatprep.subr.mxu0 0.0
      %2632 = vmatpush1.msra.mxu0 0.0
      %2633 = vmatprep.subr.mxu0 0.0
      %2634 = vmatpush1.msra.mxu0 0.0
      %2635 = vmatprep.subr.mxu0 0.0
      %2636 = vmatpush1.msra.mxu0 0.0
      %2637 = vmatprep.subr.mxu0 0.0
      %2638 = vmatpush1.msra.mxu0 0.0
      %2639 = vmatprep.subr.mxu0 0.0
      %2640 = vmatpush1.msra.mxu0 0.0
      %2641 = vmatprep.subr.mxu0 0.0
      %2642 = vmatpush1.msra.mxu0 0.0
      %2643 = vmatprep.subr.mxu0 0.0
      %2644 = vmatpush1.msra.mxu0 0.0
      %2645 = vmatprep.subr.mxu0 0.0
      %2646 = vmatpush1.msra.mxu0 0.0
      %2647 = vmatprep.subr.mxu0 0.0
      %2648 = vmatpush1.msra.mxu0 0.0
      %2649 = vmatprep.subr.mxu0 0.0
      %2650 = vmatpush1.msra.mxu0 0.0
      %2651 = vmatprep.subr.mxu0 0.0
      %2652 = vmatpush1.msra.mxu0 0.0
      %2653 = vmatprep.subr.mxu0 0.0
      %2654 = vmatpush1.msra.mxu0 0.0
      %2655 = vmatprep.subr.mxu0 0.0
      %2656 = vmatpush1.msra.mxu0 0.0
      %2657 = vmatprep.subr.mxu0 0.0
      %2658 = vmatpush1.msra.mxu0 0.0
      %2659 = vmatprep.subr.mxu0 0.0
      %2660 = vmatpush1.msra.mxu0 0.0
      %2661 = vmatprep.subr.mxu0 0.0
      %2662 = vmatpush1.msra.mxu0 0.0
      %2663 = vmatprep.subr.mxu0 0.0
      %2664 = vmatpush1.msra.mxu0 0.0
      %2665 = vmatprep.subr.mxu0 0.0
      %2666 = vmatpush1.msra.mxu0 0.0
      %2667 = vmatprep.subr.mxu0 0.0
      %2668 = vmatpush1.msra.mxu0 0.0
      %2669 = vmatprep.subr.mxu0 0.0
      %2670 = vmatpush1.msra.mxu0 0.0
      %2671 = vmatprep.subr.mxu0 0.0
      %2672 = vmatpush1.msra.mxu0 0.0
      %2673 = vmatprep.subr.mxu0 0.0
      %2674 = vmatpush1.msra.mxu0 0.0
      %2675 = vmatprep.mubr.f32.mxu0 0.0
      %v2676 = vand.u32 %v2376, 4294901760
      %v2677 = vsub.f32 %v2376, %v2676
      %2678 = vmatmul.mubr.f32.gmra.mrb[0].mxu0 %v2677
      %v2679 = vpop.f32.mrb[0].mxu0
      %v2680 = vadd.f32 %v2584, %v2679
      %v2681 = vpop.f32.mrb[0].mxu0
      %v2682 = vadd.f32 %v2586, %v2681
      %2683 = vmatprep.mubr.f32.mxu0 0.0
      %v2684 = vand.u32 %v2379, 4294901760
      %v2685 = vsub.f32 %v2379, %v2684
      %2686 = vmatmul.mubr.f32.gmra.mrb[0].mxu0 %v2685
      %v2687 = vpop.f32.mrb[0].mxu0
      %v2688 = vadd.f32 %v2591, %v2687
      %v2689 = vpop.f32.mrb[0].mxu0
      %v2690 = vadd.f32 %v2593, %v2689
      %2691 = vdwg.mxu0
      %v2692 = vand.u32 %v2352, 4294901760
      %2693 = vmatprep.subr.mxu0 %v2692
      %v2694 = vand.u32 %v2351, 4294901760
      %2695 = vmatpush1.msra.mxu0 %v2694
      %v2696 = vand.u32 %v2354, 4294901760
      %2697 = vmatprep.subr.mxu0 %v2696
      %v2698 = vand.u32 %v2353, 4294901760
      %2699 = vmatpush1.msra.mxu0 %v2698
      %v2700 = vand.u32 %v2356, 4294901760
      %2701 = vmatprep.subr.mxu0 %v2700
      %v2702 = vand.u32 %v2355, 4294901760
      %2703 = vmatpush1.msra.mxu0 %v2702
      %v2704 = vand.u32 %v2358, 4294901760
      %2705 = vmatprep.subr.mxu0 %v2704
      %v2706 = vand.u32 %v2357, 4294901760
      %2707 = vmatpush1.msra.mxu0 %v2706
      %2708 = vmatprep.subr.mxu0 0.0
      %2709 = vmatpush1.msra.mxu0 0.0
      %2710 = vmatprep.subr.mxu0 0.0
      %2711 = vmatpush1.msra.mxu0 0.0
      %2712 = vmatprep.subr.mxu0 0.0
      %2713 = vmatpush1.msra.mxu0 0.0
      %2714 = vmatprep.subr.mxu0 0.0
      %2715 = vmatpush1.msra.mxu0 0.0
      %2716 = vmatprep.subr.mxu0 0.0
      %2717 = vmatpush1.msra.mxu0 0.0
      %2718 = vmatprep.subr.mxu0 0.0
      %2719 = vmatpush1.msra.mxu0 0.0
      %2720 = vmatprep.subr.mxu0 0.0
      %2721 = vmatpush1.msra.mxu0 0.0
      %2722 = vmatprep.subr.mxu0 0.0
      %2723 = vmatpush1.msra.mxu0 0.0
      %2724 = vmatprep.subr.mxu0 0.0
      %2725 = vmatpush1.msra.mxu0 0.0
      %2726 = vmatprep.subr.mxu0 0.0
      %2727 = vmatpush1.msra.mxu0 0.0
      %2728 = vmatprep.subr.mxu0 0.0
      %2729 = vmatpush1.msra.mxu0 0.0
      %2730 = vmatprep.subr.mxu0 0.0
      %2731 = vmatpush1.msra.mxu0 0.0
      %2732 = vmatprep.subr.mxu0 0.0
      %2733 = vmatpush1.msra.mxu0 0.0
      %2734 = vmatprep.subr.mxu0 0.0
      %2735 = vmatpush1.msra.mxu0 0.0
      %2736 = vmatprep.subr.mxu0 0.0
      %2737 = vmatpush1.msra.mxu0 0.0
      %2738 = vmatprep.subr.mxu0 0.0
      %2739 = vmatpush1.msra.mxu0 0.0
      %2740 = vmatprep.subr.mxu0 0.0
      %2741 = vmatpush1.msra.mxu0 0.0
      %2742 = vmatprep.subr.mxu0 0.0
      %2743 = vmatpush1.msra.mxu0 0.0
      %2744 = vmatprep.subr.mxu0 0.0
      %2745 = vmatpush1.msra.mxu0 0.0
      %2746 = vmatprep.subr.mxu0 0.0
      %2747 = vmatpush1.msra.mxu0 0.0
      %2748 = vmatprep.subr.mxu0 0.0
      %2749 = vmatpush1.msra.mxu0 0.0
      %2750 = vmatprep.subr.mxu0 0.0
      %2751 = vmatpush1.msra.mxu0 0.0
      %2752 = vmatprep.subr.mxu0 0.0
      %2753 = vmatpush1.msra.mxu0 0.0
      %2754 = vmatprep.subr.mxu0 0.0
      %2755 = vmatpush1.msra.mxu0 0.0
      %2756 = vmatprep.subr.mxu0 0.0
      %2757 = vmatpush1.msra.mxu0 0.0
      %2758 = vmatprep.subr.mxu0 0.0
      %2759 = vmatpush1.msra.mxu0 0.0
      %2760 = vmatprep.subr.mxu0 0.0
      %2761 = vmatpush1.msra.mxu0 0.0
      %2762 = vmatprep.subr.mxu0 0.0
      %2763 = vmatpush1.msra.mxu0 0.0
      %2764 = vmatprep.mubr.f32.mxu0 0.0
      %v2765 = vand.u32 %v2376, 4294901760
      %v2766 = vsub.f32 %v2376, %v2765
      %v2767 = vand.u32 %v2766, 4294901760
      %2768 = vmatmul.mubr.f32.gmra.mrb[0].mxu0 %v2767
      %v2769 = vpop.f32.mrb[0].mxu0
      %v2770 = vadd.f32 %v2680, %v2769
      %v2771 = vpop.f32.mrb[0].mxu0
      %v2772 = vadd.f32 %v2682, %v2771
      %2773 = vmatprep.mubr.f32.mxu0 0.0
      %v2774 = vand.u32 %v2379, 4294901760
      %v2775 = vsub.f32 %v2379, %v2774
      %v2776 = vand.u32 %v2775, 4294901760
      %2777 = vmatmul.mubr.f32.gmra.mrb[0].mxu0 %v2776
      %v2778 = vpop.f32.mrb[0].mxu0
      %v2779 = vadd.f32 %v2688, %v2778
      %v2780 = vpop.f32.mrb[0].mxu0
      %v2781 = vadd.f32 %v2690, %v2780
      %2782 = vdwg.mxu0
      %v2783 = vand.u32 %v2352, 4294901760
      %v2784 = vsub.f32 %v2352, %v2783
      %v2785 = vand.u32 %v2784, 4294901760
      %2786 = vmatprep.subr.mxu0 %v2785
      %v2787 = vand.u32 %v2351, 4294901760
      %v2788 = vsub.f32 %v2351, %v2787
      %v2789 = vand.u32 %v2788, 4294901760
      %2790 = vmatpush1.msra.mxu0 %v2789
      %v2791 = vand.u32 %v2354, 4294901760
      %v2792 = vsub.f32 %v2354, %v2791
      %v2793 = vand.u32 %v2792, 4294901760
      %2794 = vmatprep.subr.mxu0 %v2793
      %v2795 = vand.u32 %v2353, 4294901760
      %v2796 = vsub.f32 %v2353, %v2795
      %v2797 = vand.u32 %v2796, 4294901760
      %2798 = vmatpush1.msra.mxu0 %v2797
      %v2799 = vand.u32 %v2356, 4294901760
      %v2800 = vsub.f32 %v2356, %v2799
      %v2801 = vand.u32 %v2800, 4294901760
      %2802 = vmatprep.subr.mxu0 %v2801
      %v2803 = vand.u32 %v2355, 4294901760
      %v2804 = vsub.f32 %v2355, %v2803
      %v2805 = vand.u32 %v2804, 4294901760
      %2806 = vmatpush1.msra.mxu0 %v2805
      %v2807 = vand.u32 %v2358, 4294901760
      %v2808 = vsub.f32 %v2358, %v2807
      %v2809 = vand.u32 %v2808, 4294901760
      %2810 = vmatprep.subr.mxu0 %v2809
      %v2811 = vand.u32 %v2357, 4294901760
      %v2812 = vsub.f32 %v2357, %v2811
      %v2813 = vand.u32 %v2812, 4294901760
      %2814 = vmatpush1.msra.mxu0 %v2813
      %2815 = vmatprep.subr.mxu0 0.0
      %2816 = vmatpush1.msra.mxu0 0.0
      %2817 = vmatprep.subr.mxu0 0.0
      %2818 = vmatpush1.msra.mxu0 0.0
      %2819 = vmatprep.subr.mxu0 0.0
      %2820 = vmatpush1.msra.mxu0 0.0
      %2821 = vmatprep.subr.mxu0 0.0
      %2822 = vmatpush1.msra.mxu0 0.0
      %2823 = vmatprep.subr.mxu0 0.0
      %2824 = vmatpush1.msra.mxu0 0.0
      %2825 = vmatprep.subr.mxu0 0.0
      %2826 = vmatpush1.msra.mxu0 0.0
      %2827 = vmatprep.subr.mxu0 0.0
      %2828 = vmatpush1.msra.mxu0 0.0
      %2829 = vmatprep.subr.mxu0 0.0
      %2830 = vmatpush1.msra.mxu0 0.0
      %2831 = vmatprep.subr.mxu0 0.0
      %2832 = vmatpush1.msra.mxu0 0.0
      %2833 = vmatprep.subr.mxu0 0.0
      %2834 = vmatpush1.msra.mxu0 0.0
      %2835 = vmatprep.subr.mxu0 0.0
      %2836 = vmatpush1.msra.mxu0 0.0
      %2837 = vmatprep.subr.mxu0 0.0
      %2838 = vmatpush1.msra.mxu0 0.0
      %2839 = vmatprep.subr.mxu0 0.0
      %2840 = vmatpush1.msra.mxu0 0.0
      %2841 = vmatprep.subr.mxu0 0.0
      %2842 = vmatpush1.msra.mxu0 0.0
      %2843 = vmatprep.subr.mxu0 0.0
      %2844 = vmatpush1.msra.mxu0 0.0
      %2845 = vmatprep.subr.mxu0 0.0
      %2846 = vmatpush1.msra.mxu0 0.0
      %2847 = vmatprep.subr.mxu0 0.0
      %2848 = vmatpush1.msra.mxu0 0.0
      %2849 = vmatprep.subr.mxu0 0.0
      %2850 = vmatpush1.msra.mxu0 0.0
      %2851 = vmatprep.subr.mxu0 0.0
      %2852 = vmatpush1.msra.mxu0 0.0
      %2853 = vmatprep.subr.mxu0 0.0
      %2854 = vmatpush1.msra.mxu0 0.0
      %2855 = vmatprep.subr.mxu0 0.0
      %2856 = vmatpush1.msra.mxu0 0.0
      %2857 = vmatprep.subr.mxu0 0.0
      %2858 = vmatpush1.msra.mxu0 0.0
      %2859 = vmatprep.subr.mxu0 0.0
      %2860 = vmatpush1.msra.mxu0 0.0
      %2861 = vmatprep.subr.mxu0 0.0
      %2862 = vmatpush1.msra.mxu0 0.0
      %2863 = vmatprep.subr.mxu0 0.0
      %2864 = vmatpush1.msra.mxu0 0.0
      %2865 = vmatprep.subr.mxu0 0.0
      %2866 = vmatpush1.msra.mxu0 0.0
      %2867 = vmatprep.subr.mxu0 0.0
      %2868 = vmatpush1.msra.mxu0 0.0
      %2869 = vmatprep.subr.mxu0 0.0
      %2870 = vmatpush1.msra.mxu0 0.0
      %2871 = vmatprep.mubr.f32.mxu0 0.0
      %v2872 = vand.u32 %v2376, 4294901760
      %2873 = vmatmul.mubr.f32.gmra.mrb[0].mxu0 %v2872
      %v2874 = vpop.f32.mrb[0].mxu0
      %v2875 = vadd.f32 %v2770, %v2874
      %v2876 = vpop.f32.mrb[0].mxu0
      %v2877 = vadd.f32 %v2772, %v2876
      %2878 = vmatprep.mubr.f32.mxu0 0.0
      %v2879 = vand.u32 %v2379, 4294901760
      %2880 = vmatmul.mubr.f32.gmra.mrb[0].mxu0 %v2879
      %v2881 = vpop.f32.mrb[0].mxu0
      %v2882 = vadd.f32 %v2779, %v2881
      %v2883 = vpop.f32.mrb[0].mxu0
      %v2884 = vadd.f32 %v2781, %v2883
      %2885 = vdwg.mxu0
      %v2886 = vand.u32 %v2352, 4294901760
      %2887 = vmatprep.subr.mxu0 %v2886
      %v2888 = vand.u32 %v2351, 4294901760
      %2889 = vmatpush1.msra.mxu0 %v2888
      %v2890 = vand.u32 %v2354, 4294901760
      %2891 = vmatprep.subr.mxu0 %v2890
      %v2892 = vand.u32 %v2353, 4294901760
      %2893 = vmatpush1.msra.mxu0 %v2892
      %v2894 = vand.u32 %v2356, 4294901760
      %2895 = vmatprep.subr.mxu0 %v2894
      %v2896 = vand.u32 %v2355, 4294901760
      %2897 = vmatpush1.msra.mxu0 %v2896
      %v2898 = vand.u32 %v2358, 4294901760
      %2899 = vmatprep.subr.mxu0 %v2898
      %v2900 = vand.u32 %v2357, 4294901760
      %2901 = vmatpush1.msra.mxu0 %v2900
      %2902 = vmatprep.subr.mxu0 0.0
      %2903 = vmatpush1.msra.mxu0 0.0
      %2904 = vmatprep.subr.mxu0 0.0
      %2905 = vmatpush1.msra.mxu0 0.0
      %2906 = vmatprep.subr.mxu0 0.0
      %2907 = vmatpush1.msra.mxu0 0.0
      %2908 = vmatprep.subr.mxu0 0.0
      %2909 = vmatpush1.msra.mxu0 0.0
      %2910 = vmatprep.subr.mxu0 0.0
      %2911 = vmatpush1.msra.mxu0 0.0
      %2912 = vmatprep.subr.mxu0 0.0
      %2913 = vmatpush1.msra.mxu0 0.0
      %2914 = vmatprep.subr.mxu0 0.0
      %2915 = vmatpush1.msra.mxu0 0.0
      %2916 = vmatprep.subr.mxu0 0.0
      %2917 = vmatpush1.msra.mxu0 0.0
      %2918 = vmatprep.subr.mxu0 0.0
      %2919 = vmatpush1.msra.mxu0 0.0
      %2920 = vmatprep.subr.mxu0 0.0
      %2921 = vmatpush1.msra.mxu0 0.0
      %2922 = vmatprep.subr.mxu0 0.0
      %2923 = vmatpush1.msra.mxu0 0.0
      %2924 = vmatprep.subr.mxu0 0.0
      %2925 = vmatpush1.msra.mxu0 0.0
      %2926 = vmatprep.subr.mxu0 0.0
      %2927 = vmatpush1.msra.mxu0 0.0
      %2928 = vmatprep.subr.mxu0 0.0
      %2929 = vmatpush1.msra.mxu0 0.0
      %2930 = vmatprep.subr.mxu0 0.0
      %2931 = vmatpush1.msra.mxu0 0.0
      %2932 = vmatprep.subr.mxu0 0.0
      %2933 = vmatpush1.msra.mxu0 0.0
      %2934 = vmatprep.subr.mxu0 0.0
      %2935 = vmatpush1.msra.mxu0 0.0
      %2936 = vmatprep.subr.mxu0 0.0
      %2937 = vmatpush1.msra.mxu0 0.0
      %2938 = vmatprep.subr.mxu0 0.0
      %2939 = vmatpush1.msra.mxu0 0.0
      %2940 = vmatprep.subr.mxu0 0.0
      %2941 = vmatpush1.msra.mxu0 0.0
      %2942 = vmatprep.subr.mxu0 0.0
      %2943 = vmatpush1.msra.mxu0 0.0
      %2944 = vmatprep.subr.mxu0 0.0
      %2945 = vmatpush1.msra.mxu0 0.0
      %2946 = vmatprep.subr.mxu0 0.0
      %2947 = vmatpush1.msra.mxu0 0.0
      %2948 = vmatprep.subr.mxu0 0.0
      %2949 = vmatpush1.msra.mxu0 0.0
      %2950 = vmatprep.subr.mxu0 0.0
      %2951 = vmatpush1.msra.mxu0 0.0
      %2952 = vmatprep.subr.mxu0 0.0
      %2953 = vmatpush1.msra.mxu0 0.0
      %2954 = vmatprep.subr.mxu0 0.0
      %2955 = vmatpush1.msra.mxu0 0.0
      %2956 = vmatprep.subr.mxu0 0.0
      %2957 = vmatpush1.msra.mxu0 0.0
      %2958 = vmatprep.mubr.f32.mxu0 0.0
      %v2959 = vand.u32 %v2376, 4294901760
      %2960 = vmatmul.mubr.f32.gmra.mrb[0].mxu0 %v2959
      %v2961 = vpop.f32.mrb[0].mxu0
      %v2962 = vadd.f32 %v2875, %v2961
      %v2963 = vpop.f32.mrb[0].mxu0
      %v2964 = vadd.f32 %v2877, %v2963
      %2965 = vmatprep.mubr.f32.mxu0 0.0
      %v2966 = vand.u32 %v2379, 4294901760
      %2967 = vmatmul.mubr.f32.gmra.mrb[0].mxu0 %v2966
      %v2968 = vpop.f32.mrb[0].mxu0
      %v2969 = vadd.f32 %v2882, %v2968
      %v2970 = vpop.f32.mrb[0].mxu0
      %v2971 = vadd.f32 %v2884, %v2970
      %2972 = vdwg.mxu0
      %v2973 = vand.u32 2147483647, %v2962
      %v2974 = vand.u32 2147483647, %v2964
      %v2975 = vand.u32 2147483647, %v2969
      %v2976 = vand.u32 2147483647, %v2971
      %v2977 = vrcp.pop %v2973
      %v2978 = vrcp.pop %v2974
      %v2979 = vrcp.pop %v2975
      %v2980 = vrcp.pop %v2976
      %vm2981 = vcmp.gt.f32.partialorder %v2973, 1.0
      %vm2982 = vcmp.gt.f32.partialorder %v2974, 1.0
      %vm2983 = vcmp.gt.f32.partialorder %v2975, 1.0
      %vm2984 = vcmp.gt.f32.partialorder %v2976, 1.0
      %v2985 = vsel %vm2981, %v2977, %v2973
      %v2986 = vsel %vm2982, %v2978, %v2974
      %v2987 = vsel %vm2983, %v2979, %v2975
      %v2988 = vsel %vm2984, %v2980, %v2976
      %v2989 = vmul.f32 %v2985, %v2985
      %v2990 = vmul.f32 %v2986, %v2986
      %v2991 = vmul.f32 %v2987, %v2987
      %v2992 = vmul.f32 %v2988, %v2988
      %v2993 = vmul.f32 %v2989, -0.0117212
      %v2994 = vmul.f32 %v2990, -0.0117212
      %v2995 = vmul.f32 %v2991, -0.0117212
      %v2996 = vmul.f32 %v2992, -0.0117212
      %v2997 = vadd.f32 %v2993, 0.05265332
      %v2998 = vadd.f32 %v2994, 0.05265332
      %v2999 = vadd.f32 %v2995, 0.05265332
      %v3000 = vadd.f32 %v2996, 0.05265332
      %v3001 = vmul.f32 %v2997, %v2989
      %v3002 = vmul.f32 %v2998, %v2990
      %v3003 = vmul.f32 %v2999, %v2991
      %v3004 = vmul.f32 %v3000, %v2992
      %v3005 = vadd.f32 %v3001, -0.11643287
      %v3006 = vadd.f32 %v3002, -0.11643287
      %v3007 = vadd.f32 %v3003, -0.11643287
      %v3008 = vadd.f32 %v3004, -0.11643287
      %v3009 = vmul.f32 %v3005, %v2989
      %v3010 = vmul.f32 %v3006, %v2990
      %v3011 = vmul.f32 %v3007, %v2991
      %v3012 = vmul.f32 %v3008, %v2992
      %v3013 = vadd.f32 %v3009, 0.19354346
      %v3014 = vadd.f32 %v3010, 0.19354346
      %v3015 = vadd.f32 %v3011, 0.19354346
      %v3016 = vadd.f32 %v3012, 0.19354346
      %v3017 = vmul.f32 %v3013, %v2989
      %v3018 = vmul.f32 %v3014, %v2990
      %v3019 = vmul.f32 %v3015, %v2991
      %v3020 = vmul.f32 %v3016, %v2992
      %v3021 = vadd.f32 %v3017, -0.33262348
      %v3022 = vadd.f32 %v3018, -0.33262348
      %v3023 = vadd.f32 %v3019, -0.33262348
      %v3024 = vadd.f32 %v3020, -0.33262348
      %v3025 = vmul.f32 %v3021, %v2989
      %v3026 = vmul.f32 %v3022, %v2990
      %v3027 = vmul.f32 %v3023, %v2991
      %v3028 = vmul.f32 %v3024, %v2992
      %v3029 = vadd.f32 %v3025, 0.99997723
      %v3030 = vadd.f32 %v3026, 0.99997723
      %v3031 = vadd.f32 %v3027, 0.99997723
      %v3032 = vadd.f32 %v3028, 0.99997723
      %v3033 = vmul.f32 %v3029, %v2985
      %v3034 = vmul.f32 %v3030, %v2986
      %v3035 = vmul.f32 %v3031, %v2987
      %v3036 = vmul.f32 %v3032, %v2988
      %v3037 = vsub.f32 1.5707964, %v3033
      %v3038 = vsub.f32 1.5707964, %v3034
      %v3039 = vsub.f32 1.5707964, %v3035
      %v3040 = vsub.f32 1.5707964, %v3036
      %v3041 = vsel %vm2981, %v3037, %v3033
      %v3042 = vsel %vm2982, %v3038, %v3034
      %v3043 = vsel %vm2983, %v3039, %v3035
      %v3044 = vsel %vm2984, %v3040, %v3036
      %vm3045 = vcmp.lt.f32.partialorder %v2962, 0.0
      %vm3046 = vcmp.lt.f32.partialorder %v2964, 0.0
      %vm3047 = vcmp.lt.f32.partialorder %v2969, 0.0
      %vm3048 = vcmp.lt.f32.partialorder %v2971, 0.0
      %v3049 = vsub.f32 0.0, %v3041
      %v3050 = vsub.f32 0.0, %v3042
      %v3051 = vsub.f32 0.0, %v3043
      %v3052 = vsub.f32 0.0, %v3044
      %v3053 = vsel %vm3045, %v3049, %v3041
      %v3054 = vsel %vm3046, %v3050, %v3042
      %v3055 = vsel %vm3047, %v3051, %v3043
      %v3056 = vsel %vm3048, %v3052, %v3044
      %v3057 = vmul.f32 %v3053, %v3053
      %v3058 = vmul.f32 %v3054, %v3054
      %v3059 = vmul.f32 %v3055, %v3055
      %v3060 = vmul.f32 %v3056, %v3056
      %s3061 = scalar_lea.vmem %s3, 48
      %v3062 = vld [vmem:[%s3061] sm:$0xff]
      %v3063 = vld [vmem:[%s3061 + $0x8] sm:$0xff]
      %s3064 = scalar_lea.vmem %s4, 48
      %v3065 = vld [vmem:[%s3064] sm:$0xff]
      %v3066 = vld [vmem:[%s3064 + $0x8] sm:$0xff]
      %3068 = vset.pattern.permute.xlu0 0
      %3069 = vperm.xlu0 %3068, %v3065
      %v3070 = vpop.permute.xlu0 %3069
      %3073 = vset.pattern.permute.xlu0 0
      %3074 = vperm.xlu0 %3073, %v3066
      %v3075 = vpop.permute.xlu0 %3074
      %v3078 = vsel %vm970, %v3062, 0
      %v3081 = vsel %vm970, %v3063, 0
      %v3083 = vand.u32 %v3054, 4294901760
      %3084 = vmatprep.subr.mxu0 %v3083
      %v3085 = vand.u32 %v3053, 4294901760
      %3086 = vmatpush1.msra.mxu0 %v3085
      %v3087 = vand.u32 %v3056, 4294901760
      %3088 = vmatprep.subr.mxu0 %v3087
      %v3089 = vand.u32 %v3055, 4294901760
      %3090 = vmatpush1.msra.mxu0 %v3089
      %v3091 = vand.u32 %v3058, 4294901760
      %3092 = vmatprep.subr.mxu0 %v3091
      %v3093 = vand.u32 %v3057, 4294901760
      %3094 = vmatpush1.msra.mxu0 %v3093
      %v3095 = vand.u32 %v3060, 4294901760
      %3096 = vmatprep.subr.mxu0 %v3095
      %v3097 = vand.u32 %v3059, 4294901760
      %3098 = vmatpush1.msra.mxu0 %v3097
      %3099 = vmatprep.subr.mxu0 0.0
      %3100 = vmatpush1.msra.mxu0 0.0
      %3101 = vmatprep.subr.mxu0 0.0
      %3102 = vmatpush1.msra.mxu0 0.0
      %3103 = vmatprep.subr.mxu0 0.0
      %3104 = vmatpush1.msra.mxu0 0.0
      %3105 = vmatprep.subr.mxu0 0.0
      %3106 = vmatpush1.msra.mxu0 0.0
      %3107 = vmatprep.subr.mxu0 0.0
      %3108 = vmatpush1.msra.mxu0 0.0
      %3109 = vmatprep.subr.mxu0 0.0
      %3110 = vmatpush1.msra.mxu0 0.0
      %3111 = vmatprep.subr.mxu0 0.0
      %3112 = vmatpush1.msra.mxu0 0.0
      %3113 = vmatprep.subr.mxu0 0.0
      %3114 = vmatpush1.msra.mxu0 0.0
      %3115 = vmatprep.subr.mxu0 0.0
      %3116 = vmatpush1.msra.mxu0 0.0
      %3117 = vmatprep.subr.mxu0 0.0
      %3118 = vmatpush1.msra.mxu0 0.0
      %3119 = vmatprep.subr.mxu0 0.0
      %3120 = vmatpush1.msra.mxu0 0.0
      %3121 = vmatprep.subr.mxu0 0.0
      %3122 = vmatpush1.msra.mxu0 0.0
      %3123 = vmatprep.subr.mxu0 0.0
      %3124 = vmatpush1.msra.mxu0 0.0
      %3125 = vmatprep.subr.mxu0 0.0
      %3126 = vmatpush1.msra.mxu0 0.0
      %3127 = vmatprep.subr.mxu0 0.0
      %3128 = vmatpush1.msra.mxu0 0.0
      %3129 = vmatprep.subr.mxu0 0.0
      %3130 = vmatpush1.msra.mxu0 0.0
      %3131 = vmatprep.subr.mxu0 0.0
      %3132 = vmatpush1.msra.mxu0 0.0
      %3133 = vmatprep.subr.mxu0 0.0
      %3134 = vmatpush1.msra.mxu0 0.0
      %3135 = vmatprep.subr.mxu0 0.0
      %3136 = vmatpush1.msra.mxu0 0.0
      %3137 = vmatprep.subr.mxu0 0.0
      %3138 = vmatpush1.msra.mxu0 0.0
      %3139 = vmatprep.subr.mxu0 0.0
      %3140 = vmatpush1.msra.mxu0 0.0
      %3141 = vmatprep.subr.mxu0 0.0
      %3142 = vmatpush1.msra.mxu0 0.0
      %3143 = vmatprep.subr.mxu0 0.0
      %3144 = vmatpush1.msra.mxu0 0.0
      %3145 = vmatprep.subr.mxu0 0.0
      %3146 = vmatpush1.msra.mxu0 0.0
      %3147 = vmatprep.subr.mxu0 0.0
      %3148 = vmatpush1.msra.mxu0 0.0
      %3149 = vmatprep.subr.mxu0 0.0
      %3150 = vmatpush1.msra.mxu0 0.0
      %3151 = vmatprep.subr.mxu0 0.0
      %3152 = vmatpush1.msra.mxu0 0.0
      %3153 = vmatprep.subr.mxu0 0.0
      %3154 = vmatpush1.msra.mxu0 0.0
      %3155 = vmatprep.mubr.f32.mxu0 0.0
      %v3156 = vand.u32 %v3078, 4294901760
      %v3157 = vsub.f32 %v3078, %v3156
      %v3158 = vand.u32 %v3157, 4294901760
      %v3159 = vsub.f32 %v3157, %v3158
      %v3160 = vand.u32 %v3159, 4294901760
      %3161 = vmatmul.mubr.f32.gmra.mrb[0].mxu0 %v3160
      %v3162 = vpop.f32.mrb[0].mxu0
      %v3163 = vadd.f32 %v3070, %v3162
      %v3164 = vpop.f32.mrb[0].mxu0
      %v3165 = vadd.f32 %v3070, %v3164
      %3166 = vmatprep.mubr.f32.mxu0 0.0
      %v3167 = vand.u32 %v3081, 4294901760
      %v3168 = vsub.f32 %v3081, %v3167
      %v3169 = vand.u32 %v3168, 4294901760
      %v3170 = vsub.f32 %v3168, %v3169
      %v3171 = vand.u32 %v3170, 4294901760
      %3172 = vmatmul.mubr.f32.gmra.mrb[0].mxu0 %v3171
      %v3173 = vpop.f32.mrb[0].mxu0
      %v3174 = vadd.f32 %v3075, %v3173
      %v3175 = vpop.f32.mrb[0].mxu0
      %v3176 = vadd.f32 %v3075, %v3175
      %3177 = vdwg.mxu0
      %v3178 = vand.u32 %v3054, 4294901760
      %v3179 = vsub.f32 %v3054, %v3178
      %v3180 = vand.u32 %v3179, 4294901760
      %v3181 = vsub.f32 %v3179, %v3180
      %v3182 = vand.u32 %v3181, 4294901760
      %3183 = vmatprep.subr.mxu0 %v3182
      %v3184 = vand.u32 %v3053, 4294901760
      %v3185 = vsub.f32 %v3053, %v3184
      %v3186 = vand.u32 %v3185, 4294901760
      %v3187 = vsub.f32 %v3185, %v3186
      %v3188 = vand.u32 %v3187, 4294901760
      %3189 = vmatpush1.msra.mxu0 %v3188
      %v3190 = vand.u32 %v3056, 4294901760
      %v3191 = vsub.f32 %v3056, %v3190
      %v3192 = vand.u32 %v3191, 4294901760
      %v3193 = vsub.f32 %v3191, %v3192
      %v3194 = vand.u32 %v3193, 4294901760
      %3195 = vmatprep.subr.mxu0 %v3194
      %v3196 = vand.u32 %v3055, 4294901760
      %v3197 = vsub.f32 %v3055, %v3196
      %v3198 = vand.u32 %v3197, 4294901760
      %v3199 = vsub.f32 %v3197, %v3198
      %v3200 = vand.u32 %v3199, 4294901760
      %3201 = vmatpush1.msra.mxu0 %v3200
      %v3202 = vand.u32 %v3058, 4294901760
      %v3203 = vsub.f32 %v3058, %v3202
      %v3204 = vand.u32 %v3203, 4294901760
      %v3205 = vsub.f32 %v3203, %v3204
      %v3206 = vand.u32 %v3205, 4294901760
      %3207 = vmatprep.subr.mxu0 %v3206
      %v3208 = vand.u32 %v3057, 4294901760
      %v3209 = vsub.f32 %v3057, %v3208
      %v3210 = vand.u32 %v3209, 4294901760
      %v3211 = vsub.f32 %v3209, %v3210
      %v3212 = vand.u32 %v3211, 4294901760
      %3213 = vmatpush1.msra.mxu0 %v3212
      %v3214 = vand.u32 %v3060, 4294901760
      %v3215 = vsub.f32 %v3060, %v3214
      %v3216 = vand.u32 %v3215, 4294901760
      %v3217 = vsub.f32 %v3215, %v3216
      %v3218 = vand.u32 %v3217, 4294901760
      %3219 = vmatprep.subr.mxu0 %v3218
      %v3220 = vand.u32 %v3059, 4294901760
      %v3221 = vsub.f32 %v3059, %v3220
      %v3222 = vand.u32 %v3221, 4294901760
      %v3223 = vsub.f32 %v3221, %v3222
      %v3224 = vand.u32 %v3223, 4294901760
      %3225 = vmatpush1.msra.mxu0 %v3224
      %3226 = vmatprep.subr.mxu0 0.0
      %3227 = vmatpush1.msra.mxu0 0.0
      %3228 = vmatprep.subr.mxu0 0.0
      %3229 = vmatpush1.msra.mxu0 0.0
      %3230 = vmatprep.subr.mxu0 0.0
      %3231 = vmatpush1.msra.mxu0 0.0
      %3232 = vmatprep.subr.mxu0 0.0
      %3233 = vmatpush1.msra.mxu0 0.0
      %3234 = vmatprep.subr.mxu0 0.0
      %3235 = vmatpush1.msra.mxu0 0.0
      %3236 = vmatprep.subr.mxu0 0.0
      %3237 = vmatpush1.msra.mxu0 0.0
      %3238 = vmatprep.subr.mxu0 0.0
      %3239 = vmatpush1.msra.mxu0 0.0
      %3240 = vmatprep.subr.mxu0 0.0
      %3241 = vmatpush1.msra.mxu0 0.0
      %3242 = vmatprep.subr.mxu0 0.0
      %3243 = vmatpush1.msra.mxu0 0.0
      %3244 = vmatprep.subr.mxu0 0.0
      %3245 = vmatpush1.msra.mxu0 0.0
      %3246 = vmatprep.subr.mxu0 0.0
      %3247 = vmatpush1.msra.mxu0 0.0
      %3248 = vmatprep.subr.mxu0 0.0
      %3249 = vmatpush1.msra.mxu0 0.0
      %3250 = vmatprep.subr.mxu0 0.0
      %3251 = vmatpush1.msra.mxu0 0.0
      %3252 = vmatprep.subr.mxu0 0.0
      %3253 = vmatpush1.msra.mxu0 0.0
      %3254 = vmatprep.subr.mxu0 0.0
      %3255 = vmatpush1.msra.mxu0 0.0
      %3256 = vmatprep.subr.mxu0 0.0
      %3257 = vmatpush1.msra.mxu0 0.0
      %3258 = vmatprep.subr.mxu0 0.0
      %3259 = vmatpush1.msra.mxu0 0.0
      %3260 = vmatprep.subr.mxu0 0.0
      %3261 = vmatpush1.msra.mxu0 0.0
      %3262 = vmatprep.subr.mxu0 0.0
      %3263 = vmatpush1.msra.mxu0 0.0
      %3264 = vmatprep.subr.mxu0 0.0
      %3265 = vmatpush1.msra.mxu0 0.0
      %3266 = vmatprep.subr.mxu0 0.0
      %3267 = vmatpush1.msra.mxu0 0.0
      %3268 = vmatprep.subr.mxu0 0.0
      %3269 = vmatpush1.msra.mxu0 0.0
      %3270 = vmatprep.subr.mxu0 0.0
      %3271 = vmatpush1.msra.mxu0 0.0
      %3272 = vmatprep.subr.mxu0 0.0
      %3273 = vmatpush1.msra.mxu0 0.0
      %3274 = vmatprep.subr.mxu0 0.0
      %3275 = vmatpush1.msra.mxu0 0.0
      %3276 = vmatprep.subr.mxu0 0.0
      %3277 = vmatpush1.msra.mxu0 0.0
      %3278 = vmatprep.subr.mxu0 0.0
      %3279 = vmatpush1.msra.mxu0 0.0
      %3280 = vmatprep.subr.mxu0 0.0
      %3281 = vmatpush1.msra.mxu0 0.0
      %3282 = vmatprep.mubr.f32.mxu0 0.0
      %v3283 = vand.u32 %v3078, 4294901760
      %3284 = vmatmul.mubr.f32.gmra.mrb[0].mxu0 %v3283
      %v3285 = vpop.f32.mrb[0].mxu0
      %v3286 = vadd.f32 %v3163, %v3285
      %v3287 = vpop.f32.mrb[0].mxu0
      %v3288 = vadd.f32 %v3165, %v3287
      %3289 = vmatprep.mubr.f32.mxu0 0.0
      %v3290 = vand.u32 %v3081, 4294901760
      %3291 = vmatmul.mubr.f32.gmra.mrb[0].mxu0 %v3290
      %v3292 = vpop.f32.mrb[0].mxu0
      %v3293 = vadd.f32 %v3174, %v3292
      %v3294 = vpop.f32.mrb[0].mxu0
      %v3295 = vadd.f32 %v3176, %v3294
      %3296 = vdwg.mxu0
      %v3297 = vand.u32 %v3054, 4294901760
      %v3298 = vsub.f32 %v3054, %v3297
      %3299 = vmatprep.subr.mxu0 %v3298
      %v3300 = vand.u32 %v3053, 4294901760
      %v3301 = vsub.f32 %v3053, %v3300
      %3302 = vmatpush1.msra.mxu0 %v3301
      %v3303 = vand.u32 %v3056, 4294901760
      %v3304 = vsub.f32 %v3056, %v3303
      %3305 = vmatprep.subr.mxu0 %v3304
      %v3306 = vand.u32 %v3055, 4294901760
      %v3307 = vsub.f32 %v3055, %v3306
      %3308 = vmatpush1.msra.mxu0 %v3307
      %v3309 = vand.u32 %v3058, 4294901760
      %v3310 = vsub.f32 %v3058, %v3309
      %3311 = vmatprep.subr.mxu0 %v3310
      %v3312 = vand.u32 %v3057, 4294901760
      %v3313 = vsub.f32 %v3057, %v3312
      %3314 = vmatpush1.msra.mxu0 %v3313
      %v3315 = vand.u32 %v3060, 4294901760
      %v3316 = vsub.f32 %v3060, %v3315
      %3317 = vmatprep.subr.mxu0 %v3316
      %v3318 = vand.u32 %v3059, 4294901760
      %v3319 = vsub.f32 %v3059, %v3318
      %3320 = vmatpush1.msra.mxu0 %v3319
      %3321 = vmatprep.subr.mxu0 0.0
      %3322 = vmatpush1.msra.mxu0 0.0
      %3323 = vmatprep.subr.mxu0 0.0
      %3324 = vmatpush1.msra.mxu0 0.0
      %3325 = vmatprep.subr.mxu0 0.0
      %3326 = vmatpush1.msra.mxu0 0.0
      %3327 = vmatprep.subr.mxu0 0.0
      %3328 = vmatpush1.msra.mxu0 0.0
      %3329 = vmatprep.subr.mxu0 0.0
      %3330 = vmatpush1.msra.mxu0 0.0
      %3331 = vmatprep.subr.mxu0 0.0
      %3332 = vmatpush1.msra.mxu0 0.0
      %3333 = vmatprep.subr.mxu0 0.0
      %3334 = vmatpush1.msra.mxu0 0.0
      %3335 = vmatprep.subr.mxu0 0.0
      %3336 = vmatpush1.msra.mxu0 0.0
      %3337 = vmatprep.subr.mxu0 0.0
      %3338 = vmatpush1.msra.mxu0 0.0
      %3339 = vmatprep.subr.mxu0 0.0
      %3340 = vmatpush1.msra.mxu0 0.0
      %3341 = vmatprep.subr.mxu0 0.0
      %3342 = vmatpush1.msra.mxu0 0.0
      %3343 = vmatprep.subr.mxu0 0.0
      %3344 = vmatpush1.msra.mxu0 0.0
      %3345 = vmatprep.subr.mxu0 0.0
      %3346 = vmatpush1.msra.mxu0 0.0
      %3347 = vmatprep.subr.mxu0 0.0
      %3348 = vmatpush1.msra.mxu0 0.0
      %3349 = vmatprep.subr.mxu0 0.0
      %3350 = vmatpush1.msra.mxu0 0.0
      %3351 = vmatprep.subr.mxu0 0.0
      %3352 = vmatpush1.msra.mxu0 0.0
      %3353 = vmatprep.subr.mxu0 0.0
      %3354 = vmatpush1.msra.mxu0 0.0
      %3355 = vmatprep.subr.mxu0 0.0
      %3356 = vmatpush1.msra.mxu0 0.0
      %3357 = vmatprep.subr.mxu0 0.0
      %3358 = vmatpush1.msra.mxu0 0.0
      %3359 = vmatprep.subr.mxu0 0.0
      %3360 = vmatpush1.msra.mxu0 0.0
      %3361 = vmatprep.subr.mxu0 0.0
      %3362 = vmatpush1.msra.mxu0 0.0
      %3363 = vmatprep.subr.mxu0 0.0
      %3364 = vmatpush1.msra.mxu0 0.0
      %3365 = vmatprep.subr.mxu0 0.0
      %3366 = vmatpush1.msra.mxu0 0.0
      %3367 = vmatprep.subr.mxu0 0.0
      %3368 = vmatpush1.msra.mxu0 0.0
      %3369 = vmatprep.subr.mxu0 0.0
      %3370 = vmatpush1.msra.mxu0 0.0
      %3371 = vmatprep.subr.mxu0 0.0
      %3372 = vmatpush1.msra.mxu0 0.0
      %3373 = vmatprep.subr.mxu0 0.0
      %3374 = vmatpush1.msra.mxu0 0.0
      %3375 = vmatprep.subr.mxu0 0.0
      %3376 = vmatpush1.msra.mxu0 0.0
      %3377 = vmatprep.mubr.f32.mxu0 0.0
      %v3378 = vand.u32 %v3078, 4294901760
      %v3379 = vsub.f32 %v3078, %v3378
      %3380 = vmatmul.mubr.f32.gmra.mrb[0].mxu0 %v3379
      %v3381 = vpop.f32.mrb[0].mxu0
      %v3382 = vadd.f32 %v3286, %v3381
      %v3383 = vpop.f32.mrb[0].mxu0
      %v3384 = vadd.f32 %v3288, %v3383
      %3385 = vmatprep.mubr.f32.mxu0 0.0
      %v3386 = vand.u32 %v3081, 4294901760
      %v3387 = vsub.f32 %v3081, %v3386
      %3388 = vmatmul.mubr.f32.gmra.mrb[0].mxu0 %v3387
      %v3389 = vpop.f32.mrb[0].mxu0
      %v3390 = vadd.f32 %v3293, %v3389
      %v3391 = vpop.f32.mrb[0].mxu0
      %v3392 = vadd.f32 %v3295, %v3391
      %3393 = vdwg.mxu0
      %v3394 = vand.u32 %v3054, 4294901760
      %3395 = vmatprep.subr.mxu0 %v3394
      %v3396 = vand.u32 %v3053, 4294901760
      %3397 = vmatpush1.msra.mxu0 %v3396
      %v3398 = vand.u32 %v3056, 4294901760
      %3399 = vmatprep.subr.mxu0 %v3398
      %v3400 = vand.u32 %v3055, 4294901760
      %3401 = vmatpush1.msra.mxu0 %v3400
      %v3402 = vand.u32 %v3058, 4294901760
      %3403 = vmatprep.subr.mxu0 %v3402
      %v3404 = vand.u32 %v3057, 4294901760
      %3405 = vmatpush1.msra.mxu0 %v3404
      %v3406 = vand.u32 %v3060, 4294901760
      %3407 = vmatprep.subr.mxu0 %v3406
      %v3408 = vand.u32 %v3059, 4294901760
      %3409 = vmatpush1.msra.mxu0 %v3408
      %3410 = vmatprep.subr.mxu0 0.0
      %3411 = vmatpush1.msra.mxu0 0.0
      %3412 = vmatprep.subr.mxu0 0.0
      %3413 = vmatpush1.msra.mxu0 0.0
      %3414 = vmatprep.subr.mxu0 0.0
      %3415 = vmatpush1.msra.mxu0 0.0
      %3416 = vmatprep.subr.mxu0 0.0
      %3417 = vmatpush1.msra.mxu0 0.0
      %3418 = vmatprep.subr.mxu0 0.0
      %3419 = vmatpush1.msra.mxu0 0.0
      %3420 = vmatprep.subr.mxu0 0.0
      %3421 = vmatpush1.msra.mxu0 0.0
      %3422 = vmatprep.subr.mxu0 0.0
      %3423 = vmatpush1.msra.mxu0 0.0
      %3424 = vmatprep.subr.mxu0 0.0
      %3425 = vmatpush1.msra.mxu0 0.0
      %3426 = vmatprep.subr.mxu0 0.0
      %3427 = vmatpush1.msra.mxu0 0.0
      %3428 = vmatprep.subr.mxu0 0.0
      %3429 = vmatpush1.msra.mxu0 0.0
      %3430 = vmatprep.subr.mxu0 0.0
      %3431 = vmatpush1.msra.mxu0 0.0
      %3432 = vmatprep.subr.mxu0 0.0
      %3433 = vmatpush1.msra.mxu0 0.0
      %3434 = vmatprep.subr.mxu0 0.0
      %3435 = vmatpush1.msra.mxu0 0.0
      %3436 = vmatprep.subr.mxu0 0.0
      %3437 = vmatpush1.msra.mxu0 0.0
      %3438 = vmatprep.subr.mxu0 0.0
      %3439 = vmatpush1.msra.mxu0 0.0
      %3440 = vmatprep.subr.mxu0 0.0
      %3441 = vmatpush1.msra.mxu0 0.0
      %3442 = vmatprep.subr.mxu0 0.0
      %3443 = vmatpush1.msra.mxu0 0.0
      %3444 = vmatprep.subr.mxu0 0.0
      %3445 = vmatpush1.msra.mxu0 0.0
      %3446 = vmatprep.subr.mxu0 0.0
      %3447 = vmatpush1.msra.mxu0 0.0
      %3448 = vmatprep.subr.mxu0 0.0
      %3449 = vmatpush1.msra.mxu0 0.0
      %3450 = vmatprep.subr.mxu0 0.0
      %3451 = vmatpush1.msra.mxu0 0.0
      %3452 = vmatprep.subr.mxu0 0.0
      %3453 = vmatpush1.msra.mxu0 0.0
      %3454 = vmatprep.subr.mxu0 0.0
      %3455 = vmatpush1.msra.mxu0 0.0
      %3456 = vmatprep.subr.mxu0 0.0
      %3457 = vmatpush1.msra.mxu0 0.0
      %3458 = vmatprep.subr.mxu0 0.0
      %3459 = vmatpush1.msra.mxu0 0.0
      %3460 = vmatprep.subr.mxu0 0.0
      %3461 = vmatpush1.msra.mxu0 0.0
      %3462 = vmatprep.subr.mxu0 0.0
      %3463 = vmatpush1.msra.mxu0 0.0
      %3464 = vmatprep.subr.mxu0 0.0
      %3465 = vmatpush1.msra.mxu0 0.0
      %3466 = vmatprep.mubr.f32.mxu0 0.0
      %v3467 = vand.u32 %v3078, 4294901760
      %v3468 = vsub.f32 %v3078, %v3467
      %v3469 = vand.u32 %v3468, 4294901760
      %3470 = vmatmul.mubr.f32.gmra.mrb[0].mxu0 %v3469
      %v3471 = vpop.f32.mrb[0].mxu0
      %v3472 = vadd.f32 %v3382, %v3471
      %v3473 = vpop.f32.mrb[0].mxu0
      %v3474 = vadd.f32 %v3384, %v3473
      %3475 = vmatprep.mubr.f32.mxu0 0.0
      %v3476 = vand.u32 %v3081, 4294901760
      %v3477 = vsub.f32 %v3081, %v3476
      %v3478 = vand.u32 %v3477, 4294901760
      %3479 = vmatmul.mubr.f32.gmra.mrb[0].mxu0 %v3478
      %v3480 = vpop.f32.mrb[0].mxu0
      %v3481 = vadd.f32 %v3390, %v3480
      %v3482 = vpop.f32.mrb[0].mxu0
      %v3483 = vadd.f32 %v3392, %v3482
      %3484 = vdwg.mxu0
      %v3485 = vand.u32 %v3054, 4294901760
      %v3486 = vsub.f32 %v3054, %v3485
      %v3487 = vand.u32 %v3486, 4294901760
      %3488 = vmatprep.subr.mxu0 %v3487
      %v3489 = vand.u32 %v3053, 4294901760
      %v3490 = vsub.f32 %v3053, %v3489
      %v3491 = vand.u32 %v3490, 4294901760
      %3492 = vmatpush1.msra.mxu0 %v3491
      %v3493 = vand.u32 %v3056, 4294901760
      %v3494 = vsub.f32 %v3056, %v3493
      %v3495 = vand.u32 %v3494, 4294901760
      %3496 = vmatprep.subr.mxu0 %v3495
      %v3497 = vand.u32 %v3055, 4294901760
      %v3498 = vsub.f32 %v3055, %v3497
      %v3499 = vand.u32 %v3498, 4294901760
      %3500 = vmatpush1.msra.mxu0 %v3499
      %v3501 = vand.u32 %v3058, 4294901760
      %v3502 = vsub.f32 %v3058, %v3501
      %v3503 = vand.u32 %v3502, 4294901760
      %3504 = vmatprep.subr.mxu0 %v3503
      %v3505 = vand.u32 %v3057, 4294901760
      %v3506 = vsub.f32 %v3057, %v3505
      %v3507 = vand.u32 %v3506, 4294901760
      %3508 = vmatpush1.msra.mxu0 %v3507
      %v3509 = vand.u32 %v3060, 4294901760
      %v3510 = vsub.f32 %v3060, %v3509
      %v3511 = vand.u32 %v3510, 4294901760
      %3512 = vmatprep.subr.mxu0 %v3511
      %v3513 = vand.u32 %v3059, 4294901760
      %v3514 = vsub.f32 %v3059, %v3513
      %v3515 = vand.u32 %v3514, 4294901760
      %3516 = vmatpush1.msra.mxu0 %v3515
      %3517 = vmatprep.subr.mxu0 0.0
      %3518 = vmatpush1.msra.mxu0 0.0
      %3519 = vmatprep.subr.mxu0 0.0
      %3520 = vmatpush1.msra.mxu0 0.0
      %3521 = vmatprep.subr.mxu0 0.0
      %3522 = vmatpush1.msra.mxu0 0.0
      %3523 = vmatprep.subr.mxu0 0.0
      %3524 = vmatpush1.msra.mxu0 0.0
      %3525 = vmatprep.subr.mxu0 0.0
      %3526 = vmatpush1.msra.mxu0 0.0
      %3527 = vmatprep.subr.mxu0 0.0
      %3528 = vmatpush1.msra.mxu0 0.0
      %3529 = vmatprep.subr.mxu0 0.0
      %3530 = vmatpush1.msra.mxu0 0.0
      %3531 = vmatprep.subr.mxu0 0.0
      %3532 = vmatpush1.msra.mxu0 0.0
      %3533 = vmatprep.subr.mxu0 0.0
      %3534 = vmatpush1.msra.mxu0 0.0
      %3535 = vmatprep.subr.mxu0 0.0
      %3536 = vmatpush1.msra.mxu0 0.0
      %3537 = vmatprep.subr.mxu0 0.0
      %3538 = vmatpush1.msra.mxu0 0.0
      %3539 = vmatprep.subr.mxu0 0.0
      %3540 = vmatpush1.msra.mxu0 0.0
      %3541 = vmatprep.subr.mxu0 0.0
      %3542 = vmatpush1.msra.mxu0 0.0
      %3543 = vmatprep.subr.mxu0 0.0
      %3544 = vmatpush1.msra.mxu0 0.0
      %3545 = vmatprep.subr.mxu0 0.0
      %3546 = vmatpush1.msra.mxu0 0.0
      %3547 = vmatprep.subr.mxu0 0.0
      %3548 = vmatpush1.msra.mxu0 0.0
      %3549 = vmatprep.subr.mxu0 0.0
      %3550 = vmatpush1.msra.mxu0 0.0
      %3551 = vmatprep.subr.mxu0 0.0
      %3552 = vmatpush1.msra.mxu0 0.0
      %3553 = vmatprep.subr.mxu0 0.0
      %3554 = vmatpush1.msra.mxu0 0.0
      %3555 = vmatprep.subr.mxu0 0.0
      %3556 = vmatpush1.msra.mxu0 0.0
      %3557 = vmatprep.subr.mxu0 0.0
      %3558 = vmatpush1.msra.mxu0 0.0
      %3559 = vmatprep.subr.mxu0 0.0
      %3560 = vmatpush1.msra.mxu0 0.0
      %3561 = vmatprep.subr.mxu0 0.0
      %3562 = vmatpush1.msra.mxu0 0.0
      %3563 = vmatprep.subr.mxu0 0.0
      %3564 = vmatpush1.msra.mxu0 0.0
      %3565 = vmatprep.subr.mxu0 0.0
      %3566 = vmatpush1.msra.mxu0 0.0
      %3567 = vmatprep.subr.mxu0 0.0
      %3568 = vmatpush1.msra.mxu0 0.0
      %3569 = vmatprep.subr.mxu0 0.0
      %3570 = vmatpush1.msra.mxu0 0.0
      %3571 = vmatprep.subr.mxu0 0.0
      %3572 = vmatpush1.msra.mxu0 0.0
      %3573 = vmatprep.mubr.f32.mxu0 0.0
      %v3574 = vand.u32 %v3078, 4294901760
      %3575 = vmatmul.mubr.f32.gmra.mrb[0].mxu0 %v3574
      %v3576 = vpop.f32.mrb[0].mxu0
      %v3577 = vadd.f32 %v3472, %v3576
      %v3578 = vpop.f32.mrb[0].mxu0
      %v3579 = vadd.f32 %v3474, %v3578
      %3580 = vmatprep.mubr.f32.mxu0 0.0
      %v3581 = vand.u32 %v3081, 4294901760
      %3582 = vmatmul.mubr.f32.gmra.mrb[0].mxu0 %v3581
      %v3583 = vpop.f32.mrb[0].mxu0
      %v3584 = vadd.f32 %v3481, %v3583
      %v3585 = vpop.f32.mrb[0].mxu0
      %v3586 = vadd.f32 %v3483, %v3585
      %3587 = vdwg.mxu0
      %v3588 = vand.u32 %v3054, 4294901760
      %3589 = vmatprep.subr.mxu0 %v3588
      %v3590 = vand.u32 %v3053, 4294901760
      %3591 = vmatpush1.msra.mxu0 %v3590
      %v3592 = vand.u32 %v3056, 4294901760
      %3593 = vmatprep.subr.mxu0 %v3592
      %v3594 = vand.u32 %v3055, 4294901760
      %3595 = vmatpush1.msra.mxu0 %v3594
      %v3596 = vand.u32 %v3058, 4294901760
      %3597 = vmatprep.subr.mxu0 %v3596
      %v3598 = vand.u32 %v3057, 4294901760
      %3599 = vmatpush1.msra.mxu0 %v3598
      %v3600 = vand.u32 %v3060, 4294901760
      %3601 = vmatprep.subr.mxu0 %v3600
      %v3602 = vand.u32 %v3059, 4294901760
      %3603 = vmatpush1.msra.mxu0 %v3602
      %3604 = vmatprep.subr.mxu0 0.0
      %3605 = vmatpush1.msra.mxu0 0.0
      %3606 = vmatprep.subr.mxu0 0.0
      %3607 = vmatpush1.msra.mxu0 0.0
      %3608 = vmatprep.subr.mxu0 0.0
      %3609 = vmatpush1.msra.mxu0 0.0
      %3610 = vmatprep.subr.mxu0 0.0
      %3611 = vmatpush1.msra.mxu0 0.0
      %3612 = vmatprep.subr.mxu0 0.0
      %3613 = vmatpush1.msra.mxu0 0.0
      %3614 = vmatprep.subr.mxu0 0.0
      %3615 = vmatpush1.msra.mxu0 0.0
      %3616 = vmatprep.subr.mxu0 0.0
      %3617 = vmatpush1.msra.mxu0 0.0
      %3618 = vmatprep.subr.mxu0 0.0
      %3619 = vmatpush1.msra.mxu0 0.0
      %3620 = vmatprep.subr.mxu0 0.0
      %3621 = vmatpush1.msra.mxu0 0.0
      %3622 = vmatprep.subr.mxu0 0.0
      %3623 = vmatpush1.msra.mxu0 0.0
      %3624 = vmatprep.subr.mxu0 0.0
      %3625 = vmatpush1.msra.mxu0 0.0
      %3626 = vmatprep.subr.mxu0 0.0
      %3627 = vmatpush1.msra.mxu0 0.0
      %3628 = vmatprep.subr.mxu0 0.0
      %3629 = vmatpush1.msra.mxu0 0.0
      %3630 = vmatprep.subr.mxu0 0.0
      %3631 = vmatpush1.msra.mxu0 0.0
      %3632 = vmatprep.subr.mxu0 0.0
      %3633 = vmatpush1.msra.mxu0 0.0
      %3634 = vmatprep.subr.mxu0 0.0
      %3635 = vmatpush1.msra.mxu0 0.0
      %3636 = vmatprep.subr.mxu0 0.0
      %3637 = vmatpush1.msra.mxu0 0.0
      %3638 = vmatprep.subr.mxu0 0.0
      %3639 = vmatpush1.msra.mxu0 0.0
      %3640 = vmatprep.subr.mxu0 0.0
      %3641 = vmatpush1.msra.mxu0 0.0
      %3642 = vmatprep.subr.mxu0 0.0
      %3643 = vmatpush1.msra.mxu0 0.0
      %3644 = vmatprep.subr.mxu0 0.0
      %3645 = vmatpush1.msra.mxu0 0.0
      %3646 = vmatprep.subr.mxu0 0.0
      %3647 = vmatpush1.msra.mxu0 0.0
      %3648 = vmatprep.subr.mxu0 0.0
      %3649 = vmatpush1.msra.mxu0 0.0
      %3650 = vmatprep.subr.mxu0 0.0
      %3651 = vmatpush1.msra.mxu0 0.0
      %3652 = vmatprep.subr.mxu0 0.0
      %3653 = vmatpush1.msra.mxu0 0.0
      %3654 = vmatprep.subr.mxu0 0.0
      %3655 = vmatpush1.msra.mxu0 0.0
      %3656 = vmatprep.subr.mxu0 0.0
      %3657 = vmatpush1.msra.mxu0 0.0
      %3658 = vmatprep.subr.mxu0 0.0
      %3659 = vmatpush1.msra.mxu0 0.0
      %3660 = vmatprep.mubr.f32.mxu0 0.0
      %v3661 = vand.u32 %v3078, 4294901760
      %3662 = vmatmul.mubr.f32.gmra.mrb[0].mxu0 %v3661
      %v3663 = vpop.f32.mrb[0].mxu0
      %v3664 = vadd.f32 %v3577, %v3663
      %v3665 = vpop.f32.mrb[0].mxu0
      %v3666 = vadd.f32 %v3579, %v3665
      %3667 = vmatprep.mubr.f32.mxu0 0.0
      %v3668 = vand.u32 %v3081, 4294901760
      %3669 = vmatmul.mubr.f32.gmra.mrb[0].mxu0 %v3668
      %v3670 = vpop.f32.mrb[0].mxu0
      %v3671 = vadd.f32 %v3584, %v3670
      %v3672 = vpop.f32.mrb[0].mxu0
      %v3673 = vadd.f32 %v3586, %v3672
      %3674 = vdwg.mxu0
      %v3675 = vand.u32 2147483647, %v3664
      %v3676 = vand.u32 2147483647, %v3666
      %v3677 = vand.u32 2147483647, %v3671
      %v3678 = vand.u32 2147483647, %v3673
      %v3679 = vrcp.pop %v3675
      %v3680 = vrcp.pop %v3676
      %v3681 = vrcp.pop %v3677
      %v3682 = vrcp.pop %v3678
      %vm3683 = vcmp.gt.f32.partialorder %v3675, 1.0
      %vm3684 = vcmp.gt.f32.partialorder %v3676, 1.0
      %vm3685 = vcmp.gt.f32.partialorder %v3677, 1.0
      %vm3686 = vcmp.gt.f32.partialorder %v3678, 1.0
      %v3687 = vsel %vm3683, %v3679, %v3675
      %v3688 = vsel %vm3684, %v3680, %v3676
      %v3689 = vsel %vm3685, %v3681, %v3677
      %v3690 = vsel %vm3686, %v3682, %v3678
      %v3691 = vmul.f32 %v3687, %v3687
      %v3692 = vmul.f32 %v3688, %v3688
      %v3693 = vmul.f32 %v3689, %v3689
      %v3694 = vmul.f32 %v3690, %v3690
      %v3695 = vmul.f32 %v3691, -0.0117212
      %v3696 = vmul.f32 %v3692, -0.0117212
      %v3697 = vmul.f32 %v3693, -0.0117212
      %v3698 = vmul.f32 %v3694, -0.0117212
      %v3699 = vadd.f32 %v3695, 0.05265332
      %v3700 = vadd.f32 %v3696, 0.05265332
      %v3701 = vadd.f32 %v3697, 0.05265332
      %v3702 = vadd.f32 %v3698, 0.05265332
      %v3703 = vmul.f32 %v3699, %v3691
      %v3704 = vmul.f32 %v3700, %v3692
      %v3705 = vmul.f32 %v3701, %v3693
      %v3706 = vmul.f32 %v3702, %v3694
      %v3707 = vadd.f32 %v3703, -0.11643287
      %v3708 = vadd.f32 %v3704, -0.11643287
      %v3709 = vadd.f32 %v3705, -0.11643287
      %v3710 = vadd.f32 %v3706, -0.11643287
      %v3711 = vmul.f32 %v3707, %v3691
      %v3712 = vmul.f32 %v3708, %v3692
      %v3713 = vmul.f32 %v3709, %v3693
      %v3714 = vmul.f32 %v3710, %v3694
      %v3715 = vadd.f32 %v3711, 0.19354346
      %v3716 = vadd.f32 %v3712, 0.19354346
      %v3717 = vadd.f32 %v3713, 0.19354346
      %v3718 = vadd.f32 %v3714, 0.19354346
      %v3719 = vmul.f32 %v3715, %v3691
      %v3720 = vmul.f32 %v3716, %v3692
      %v3721 = vmul.f32 %v3717, %v3693
      %v3722 = vmul.f32 %v3718, %v3694
      %v3723 = vadd.f32 %v3719, -0.33262348
      %v3724 = vadd.f32 %v3720, -0.33262348
      %v3725 = vadd.f32 %v3721, -0.33262348
      %v3726 = vadd.f32 %v3722, -0.33262348
      %v3727 = vmul.f32 %v3723, %v3691
      %v3728 = vmul.f32 %v3724, %v3692
      %v3729 = vmul.f32 %v3725, %v3693
      %v3730 = vmul.f32 %v3726, %v3694
      %v3731 = vadd.f32 %v3727, 0.99997723
      %v3732 = vadd.f32 %v3728, 0.99997723
      %v3733 = vadd.f32 %v3729, 0.99997723
      %v3734 = vadd.f32 %v3730, 0.99997723
      %v3735 = vmul.f32 %v3731, %v3687
      %v3736 = vmul.f32 %v3732, %v3688
      %v3737 = vmul.f32 %v3733, %v3689
      %v3738 = vmul.f32 %v3734, %v3690
      %v3739 = vsub.f32 1.5707964, %v3735
      %v3740 = vsub.f32 1.5707964, %v3736
      %v3741 = vsub.f32 1.5707964, %v3737
      %v3742 = vsub.f32 1.5707964, %v3738
      %v3743 = vsel %vm3683, %v3739, %v3735
      %v3744 = vsel %vm3684, %v3740, %v3736
      %v3745 = vsel %vm3685, %v3741, %v3737
      %v3746 = vsel %vm3686, %v3742, %v3738
      %vm3747 = vcmp.lt.f32.partialorder %v3664, 0.0
      %vm3748 = vcmp.lt.f32.partialorder %v3666, 0.0
      %vm3749 = vcmp.lt.f32.partialorder %v3671, 0.0
      %vm3750 = vcmp.lt.f32.partialorder %v3673, 0.0
      %v3751 = vsub.f32 0.0, %v3743
      %v3752 = vsub.f32 0.0, %v3744
      %v3753 = vsub.f32 0.0, %v3745
      %v3754 = vsub.f32 0.0, %v3746
      %v3755 = vsel %vm3747, %v3751, %v3743
      %v3756 = vsel %vm3748, %v3752, %v3744
      %v3757 = vsel %vm3749, %v3753, %v3745
      %v3758 = vsel %vm3750, %v3754, %v3746
      %v3759 = vmul.f32 %v3755, %v3755
      %v3760 = vmul.f32 %v3756, %v3756
      %v3761 = vmul.f32 %v3757, %v3757
      %v3762 = vmul.f32 %v3758, %v3758
      %s3763 = scalar_lea.vmem %s3, 64
      %v3764 = vld [vmem:[%s3763] sm:$0xff]
      %v3765 = vld [vmem:[%s3763 + $0x8] sm:$0xff]
      %s3766 = scalar_lea.vmem %s4, 64
      %v3767 = vld [vmem:[%s3766] sm:$0xff]
      %v3768 = vld [vmem:[%s3766 + $0x8] sm:$0xff]
      %3770 = vset.pattern.permute.xlu0 0
      %3771 = vperm.xlu0 %3770, %v3767
      %v3772 = vpop.permute.xlu0 %3771
      %3775 = vset.pattern.permute.xlu0 0
      %3776 = vperm.xlu0 %3775, %v3768
      %v3777 = vpop.permute.xlu0 %3776
      %v3780 = vsel %vm970, %v3764, 0
      %v3783 = vsel %vm970, %v3765, 0
      %v3785 = vand.u32 %v3756, 4294901760
      %3786 = vmatprep.subr.mxu0 %v3785
      %v3787 = vand.u32 %v3755, 4294901760
      %3788 = vmatpush1.msra.mxu0 %v3787
      %v3789 = vand.u32 %v3758, 4294901760
      %3790 = vmatprep.subr.mxu0 %v3789
      %v3791 = vand.u32 %v3757, 4294901760
      %3792 = vmatpush1.msra.mxu0 %v3791
      %v3793 = vand.u32 %v3760, 4294901760
      %3794 = vmatprep.subr.mxu0 %v3793
      %v3795 = vand.u32 %v3759, 4294901760
      %3796 = vmatpush1.msra.mxu0 %v3795
      %v3797 = vand.u32 %v3762, 4294901760
      %3798 = vmatprep.subr.mxu0 %v3797
      %v3799 = vand.u32 %v3761, 4294901760
      %3800 = vmatpush1.msra.mxu0 %v3799
      %3801 = vmatprep.subr.mxu0 0.0
      %3802 = vmatpush1.msra.mxu0 0.0
      %3803 = vmatprep.subr.mxu0 0.0
      %3804 = vmatpush1.msra.mxu0 0.0
      %3805 = vmatprep.subr.mxu0 0.0
      %3806 = vmatpush1.msra.mxu0 0.0
      %3807 = vmatprep.subr.mxu0 0.0
      %3808 = vmatpush1.msra.mxu0 0.0
      %3809 = vmatprep.subr.mxu0 0.0
      %3810 = vmatpush1.msra.mxu0 0.0
      %3811 = vmatprep.subr.mxu0 0.0
      %3812 = vmatpush1.msra.mxu0 0.0
      %3813 = vmatprep.subr.mxu0 0.0
      %3814 = vmatpush1.msra.mxu0 0.0
      %3815 = vmatprep.subr.mxu0 0.0
      %3816 = vmatpush1.msra.mxu0 0.0
      %3817 = vmatprep.subr.mxu0 0.0
      %3818 = vmatpush1.msra.mxu0 0.0
      %3819 = vmatprep.subr.mxu0 0.0
      %3820 = vmatpush1.msra.mxu0 0.0
      %3821 = vmatprep.subr.mxu0 0.0
      %3822 = vmatpush1.msra.mxu0 0.0
      %3823 = vmatprep.subr.mxu0 0.0
      %3824 = vmatpush1.msra.mxu0 0.0
      %3825 = vmatprep.subr.mxu0 0.0
      %3826 = vmatpush1.msra.mxu0 0.0
      %3827 = vmatprep.subr.mxu0 0.0
      %3828 = vmatpush1.msra.mxu0 0.0
      %3829 = vmatprep.subr.mxu0 0.0
      %3830 = vmatpush1.msra.mxu0 0.0
      %3831 = vmatprep.subr.mxu0 0.0
      %3832 = vmatpush1.msra.mxu0 0.0
      %3833 = vmatprep.subr.mxu0 0.0
      %3834 = vmatpush1.msra.mxu0 0.0
      %3835 = vmatprep.subr.mxu0 0.0
      %3836 = vmatpush1.msra.mxu0 0.0
      %3837 = vmatprep.subr.mxu0 0.0
      %3838 = vmatpush1.msra.mxu0 0.0
      %3839 = vmatprep.subr.mxu0 0.0
      %3840 = vmatpush1.msra.mxu0 0.0
      %3841 = vmatprep.subr.mxu0 0.0
      %3842 = vmatpush1.msra.mxu0 0.0
      %3843 = vmatprep.subr.mxu0 0.0
      %3844 = vmatpush1.msra.mxu0 0.0
      %3845 = vmatprep.subr.mxu0 0.0
      %3846 = vmatpush1.msra.mxu0 0.0
      %3847 = vmatprep.subr.mxu0 0.0
      %3848 = vmatpush1.msra.mxu0 0.0
      %3849 = vmatprep.subr.mxu0 0.0
      %3850 = vmatpush1.msra.mxu0 0.0
      %3851 = vmatprep.subr.mxu0 0.0
      %3852 = vmatpush1.msra.mxu0 0.0
      %3853 = vmatprep.subr.mxu0 0.0
      %3854 = vmatpush1.msra.mxu0 0.0
      %3855 = vmatprep.subr.mxu0 0.0
      %3856 = vmatpush1.msra.mxu0 0.0
      %3857 = vmatprep.mubr.f32.mxu0 0.0
      %v3858 = vand.u32 %v3780, 4294901760
      %v3859 = vsub.f32 %v3780, %v3858
      %v3860 = vand.u32 %v3859, 4294901760
      %v3861 = vsub.f32 %v3859, %v3860
      %v3862 = vand.u32 %v3861, 4294901760
      %3863 = vmatmul.mubr.f32.gmra.mrb[0].mxu0 %v3862
      %v3864 = vpop.f32.mrb[0].mxu0
      %v3865 = vadd.f32 %v3772, %v3864
      %v3866 = vpop.f32.mrb[0].mxu0
      %v3867 = vadd.f32 %v3772, %v3866
      %3868 = vmatprep.mubr.f32.mxu0 0.0
      %v3869 = vand.u32 %v3783, 4294901760
      %v3870 = vsub.f32 %v3783, %v3869
      %v3871 = vand.u32 %v3870, 4294901760
      %v3872 = vsub.f32 %v3870, %v3871
      %v3873 = vand.u32 %v3872, 4294901760
      %3874 = vmatmul.mubr.f32.gmra.mrb[0].mxu0 %v3873
      %v3875 = vpop.f32.mrb[0].mxu0
      %v3876 = vadd.f32 %v3777, %v3875
      %v3877 = vpop.f32.mrb[0].mxu0
      %v3878 = vadd.f32 %v3777, %v3877
      %3879 = vdwg.mxu0
      %v3880 = vand.u32 %v3756, 4294901760
      %v3881 = vsub.f32 %v3756, %v3880
      %v3882 = vand.u32 %v3881, 4294901760
      %v3883 = vsub.f32 %v3881, %v3882
      %v3884 = vand.u32 %v3883, 4294901760
      %3885 = vmatprep.subr.mxu0 %v3884
      %v3886 = vand.u32 %v3755, 4294901760
      %v3887 = vsub.f32 %v3755, %v3886
      %v3888 = vand.u32 %v3887, 4294901760
      %v3889 = vsub.f32 %v3887, %v3888
      %v3890 = vand.u32 %v3889, 4294901760
      %3891 = vmatpush1.msra.mxu0 %v3890
      %v3892 = vand.u32 %v3758, 4294901760
      %v3893 = vsub.f32 %v3758, %v3892
      %v3894 = vand.u32 %v3893, 4294901760
      %v3895 = vsub.f32 %v3893, %v3894
      %v3896 = vand.u32 %v3895, 4294901760
      %3897 = vmatprep.subr.mxu0 %v3896
      %v3898 = vand.u32 %v3757, 4294901760
      %v3899 = vsub.f32 %v3757, %v3898
      %v3900 = vand.u32 %v3899, 4294901760
      %v3901 = vsub.f32 %v3899, %v3900
      %v3902 = vand.u32 %v3901, 4294901760
      %3903 = vmatpush1.msra.mxu0 %v3902
      %v3904 = vand.u32 %v3760, 4294901760
      %v3905 = vsub.f32 %v3760, %v3904
      %v3906 = vand.u32 %v3905, 4294901760
      %v3907 = vsub.f32 %v3905, %v3906
      %v3908 = vand.u32 %v3907, 4294901760
      %3909 = vmatprep.subr.mxu0 %v3908
      %v3910 = vand.u32 %v3759, 4294901760
      %v3911 = vsub.f32 %v3759, %v3910
      %v3912 = vand.u32 %v3911, 4294901760
      %v3913 = vsub.f32 %v3911, %v3912
      %v3914 = vand.u32 %v3913, 4294901760
      %3915 = vmatpush1.msra.mxu0 %v3914
      %v3916 = vand.u32 %v3762, 4294901760
      %v3917 = vsub.f32 %v3762, %v3916
      %v3918 = vand.u32 %v3917, 4294901760
      %v3919 = vsub.f32 %v3917, %v3918
      %v3920 = vand.u32 %v3919, 4294901760
      %3921 = vmatprep.subr.mxu0 %v3920
      %v3922 = vand.u32 %v3761, 4294901760
      %v3923 = vsub.f32 %v3761, %v3922
      %v3924 = vand.u32 %v3923, 4294901760
      %v3925 = vsub.f32 %v3923, %v3924
      %v3926 = vand.u32 %v3925, 4294901760
      %3927 = vmatpush1.msra.mxu0 %v3926
      %3928 = vmatprep.subr.mxu0 0.0
      %3929 = vmatpush1.msra.mxu0 0.0
      %3930 = vmatprep.subr.mxu0 0.0
      %3931 = vmatpush1.msra.mxu0 0.0
      %3932 = vmatprep.subr.mxu0 0.0
      %3933 = vmatpush1.msra.mxu0 0.0
      %3934 = vmatprep.subr.mxu0 0.0
      %3935 = vmatpush1.msra.mxu0 0.0
      %3936 = vmatprep.subr.mxu0 0.0
      %3937 = vmatpush1.msra.mxu0 0.0
      %3938 = vmatprep.subr.mxu0 0.0
      %3939 = vmatpush1.msra.mxu0 0.0
      %3940 = vmatprep.subr.mxu0 0.0
      %3941 = vmatpush1.msra.mxu0 0.0
      %3942 = vmatprep.subr.mxu0 0.0
      %3943 = vmatpush1.msra.mxu0 0.0
      %3944 = vmatprep.subr.mxu0 0.0
      %3945 = vmatpush1.msra.mxu0 0.0
      %3946 = vmatprep.subr.mxu0 0.0
      %3947 = vmatpush1.msra.mxu0 0.0
      %3948 = vmatprep.subr.mxu0 0.0
      %3949 = vmatpush1.msra.mxu0 0.0
      %3950 = vmatprep.subr.mxu0 0.0
      %3951 = vmatpush1.msra.mxu0 0.0
      %3952 = vmatprep.subr.mxu0 0.0
      %3953 = vmatpush1.msra.mxu0 0.0
      %3954 = vmatprep.subr.mxu0 0.0
      %3955 = vmatpush1.msra.mxu0 0.0
      %3956 = vmatprep.subr.mxu0 0.0
      %3957 = vmatpush1.msra.mxu0 0.0
      %3958 = vmatprep.subr.mxu0 0.0
      %3959 = vmatpush1.msra.mxu0 0.0
      %3960 = vmatprep.subr.mxu0 0.0
      %3961 = vmatpush1.msra.mxu0 0.0
      %3962 = vmatprep.subr.mxu0 0.0
      %3963 = vmatpush1.msra.mxu0 0.0
      %3964 = vmatprep.subr.mxu0 0.0
      %3965 = vmatpush1.msra.mxu0 0.0
      %3966 = vmatprep.subr.mxu0 0.0
      %3967 = vmatpush1.msra.mxu0 0.0
      %3968 = vmatprep.subr.mxu0 0.0
      %3969 = vmatpush1.msra.mxu0 0.0
      %3970 = vmatprep.subr.mxu0 0.0
      %3971 = vmatpush1.msra.mxu0 0.0
      %3972 = vmatprep.subr.mxu0 0.0
      %3973 = vmatpush1.msra.mxu0 0.0
      %3974 = vmatprep.subr.mxu0 0.0
      %3975 = vmatpush1.msra.mxu0 0.0
      %3976 = vmatprep.subr.mxu0 0.0
      %3977 = vmatpush1.msra.mxu0 0.0
      %3978 = vmatprep.subr.mxu0 0.0
      %3979 = vmatpush1.msra.mxu0 0.0
      %3980 = vmatprep.subr.mxu0 0.0
      %3981 = vmatpush1.msra.mxu0 0.0
      %3982 = vmatprep.subr.mxu0 0.0
      %3983 = vmatpush1.msra.mxu0 0.0
      %3984 = vmatprep.mubr.f32.mxu0 0.0
      %v3985 = vand.u32 %v3780, 4294901760
      %3986 = vmatmul.mubr.f32.gmra.mrb[0].mxu0 %v3985
      %v3987 = vpop.f32.mrb[0].mxu0
      %v3988 = vadd.f32 %v3865, %v3987
      %v3989 = vpop.f32.mrb[0].mxu0
      %v3990 = vadd.f32 %v3867, %v3989
      %3991 = vmatprep.mubr.f32.mxu0 0.0
      %v3992 = vand.u32 %v3783, 4294901760
      %3993 = vmatmul.mubr.f32.gmra.mrb[0].mxu0 %v3992
      %v3994 = vpop.f32.mrb[0].mxu0
      %v3995 = vadd.f32 %v3876, %v3994
      %v3996 = vpop.f32.mrb[0].mxu0
      %v3997 = vadd.f32 %v3878, %v3996
      %3998 = vdwg.mxu0
      %v3999 = vand.u32 %v3756, 4294901760
      %v4000 = vsub.f32 %v3756, %v3999
      %4001 = vmatprep.subr.mxu0 %v4000
      %v4002 = vand.u32 %v3755, 4294901760
      %v4003 = vsub.f32 %v3755, %v4002
      %4004 = vmatpush1.msra.mxu0 %v4003
      %v4005 = vand.u32 %v3758, 4294901760
      %v4006 = vsub.f32 %v3758, %v4005
      %4007 = vmatprep.subr.mxu0 %v4006
      %v4008 = vand.u32 %v3757, 4294901760
      %v4009 = vsub.f32 %v3757, %v4008
      %4010 = vmatpush1.msra.mxu0 %v4009
      %v4011 = vand.u32 %v3760, 4294901760
      %v4012 = vsub.f32 %v3760, %v4011
      %4013 = vmatprep.subr.mxu0 %v4012
      %v4014 = vand.u32 %v3759, 4294901760
      %v4015 = vsub.f32 %v3759, %v4014
      %4016 = vmatpush1.msra.mxu0 %v4015
      %v4017 = vand.u32 %v3762, 4294901760
      %v4018 = vsub.f32 %v3762, %v4017
      %4019 = vmatprep.subr.mxu0 %v4018
      %v4020 = vand.u32 %v3761, 4294901760
      %v4021 = vsub.f32 %v3761, %v4020
      %4022 = vmatpush1.msra.mxu0 %v4021
      %4023 = vmatprep.subr.mxu0 0.0
      %4024 = vmatpush1.msra.mxu0 0.0
      %4025 = vmatprep.subr.mxu0 0.0
      %4026 = vmatpush1.msra.mxu0 0.0
      %4027 = vmatprep.subr.mxu0 0.0
      %4028 = vmatpush1.msra.mxu0 0.0
      %4029 = vmatprep.subr.mxu0 0.0
      %4030 = vmatpush1.msra.mxu0 0.0
      %4031 = vmatprep.subr.mxu0 0.0
      %4032 = vmatpush1.msra.mxu0 0.0
      %4033 = vmatprep.subr.mxu0 0.0
      %4034 = vmatpush1.msra.mxu0 0.0
      %4035 = vmatprep.subr.mxu0 0.0
      %4036 = vmatpush1.msra.mxu0 0.0
      %4037 = vmatprep.subr.mxu0 0.0
      %4038 = vmatpush1.msra.mxu0 0.0
      %4039 = vmatprep.subr.mxu0 0.0
      %4040 = vmatpush1.msra.mxu0 0.0
      %4041 = vmatprep.subr.mxu0 0.0
      %4042 = vmatpush1.msra.mxu0 0.0
      %4043 = vmatprep.subr.mxu0 0.0
      %4044 = vmatpush1.msra.mxu0 0.0
      %4045 = vmatprep.subr.mxu0 0.0
      %4046 = vmatpush1.msra.mxu0 0.0
      %4047 = vmatprep.subr.mxu0 0.0
      %4048 = vmatpush1.msra.mxu0 0.0
      %4049 = vmatprep.subr.mxu0 0.0
      %4050 = vmatpush1.msra.mxu0 0.0
      %4051 = vmatprep.subr.mxu0 0.0
      %4052 = vmatpush1.msra.mxu0 0.0
      %4053 = vmatprep.subr.mxu0 0.0
      %4054 = vmatpush1.msra.mxu0 0.0
      %4055 = vmatprep.subr.mxu0 0.0
      %4056 = vmatpush1.msra.mxu0 0.0
      %4057 = vmatprep.subr.mxu0 0.0
      %4058 = vmatpush1.msra.mxu0 0.0
      %4059 = vmatprep.subr.mxu0 0.0
      %4060 = vmatpush1.msra.mxu0 0.0
      %4061 = vmatprep.subr.mxu0 0.0
      %4062 = vmatpush1.msra.mxu0 0.0
      %4063 = vmatprep.subr.mxu0 0.0
      %4064 = vmatpush1.msra.mxu0 0.0
      %4065 = vmatprep.subr.mxu0 0.0
      %4066 = vmatpush1.msra.mxu0 0.0
      %4067 = vmatprep.subr.mxu0 0.0
      %4068 = vmatpush1.msra.mxu0 0.0
      %4069 = vmatprep.subr.mxu0 0.0
      %4070 = vmatpush1.msra.mxu0 0.0
      %4071 = vmatprep.subr.mxu0 0.0
      %4072 = vmatpush1.msra.mxu0 0.0
      %4073 = vmatprep.subr.mxu0 0.0
      %4074 = vmatpush1.msra.mxu0 0.0
      %4075 = vmatprep.subr.mxu0 0.0
      %4076 = vmatpush1.msra.mxu0 0.0
      %4077 = vmatprep.subr.mxu0 0.0
      %4078 = vmatpush1.msra.mxu0 0.0
      %4079 = vmatprep.mubr.f32.mxu0 0.0
      %v4080 = vand.u32 %v3780, 4294901760
      %v4081 = vsub.f32 %v3780, %v4080
      %4082 = vmatmul.mubr.f32.gmra.mrb[0].mxu0 %v4081
      %v4083 = vpop.f32.mrb[0].mxu0
      %v4084 = vadd.f32 %v3988, %v4083
      %v4085 = vpop.f32.mrb[0].mxu0
      %v4086 = vadd.f32 %v3990, %v4085
      %4087 = vmatprep.mubr.f32.mxu0 0.0
      %v4088 = vand.u32 %v3783, 4294901760
      %v4089 = vsub.f32 %v3783, %v4088
      %4090 = vmatmul.mubr.f32.gmra.mrb[0].mxu0 %v4089
      %v4091 = vpop.f32.mrb[0].mxu0
      %v4092 = vadd.f32 %v3995, %v4091
      %v4093 = vpop.f32.mrb[0].mxu0
      %v4094 = vadd.f32 %v3997, %v4093
      %4095 = vdwg.mxu0
      %v4096 = vand.u32 %v3756, 4294901760
      %4097 = vmatprep.subr.mxu0 %v4096
      %v4098 = vand.u32 %v3755, 4294901760
      %4099 = vmatpush1.msra.mxu0 %v4098
      %v4100 = vand.u32 %v3758, 4294901760
      %4101 = vmatprep.subr.mxu0 %v4100
      %v4102 = vand.u32 %v3757, 4294901760
      %4103 = vmatpush1.msra.mxu0 %v4102
      %v4104 = vand.u32 %v3760, 4294901760
      %4105 = vmatprep.subr.mxu0 %v4104
      %v4106 = vand.u32 %v3759, 4294901760
      %4107 = vmatpush1.msra.mxu0 %v4106
      %v4108 = vand.u32 %v3762, 4294901760
      %4109 = vmatprep.subr.mxu0 %v4108
      %v4110 = vand.u32 %v3761, 4294901760
      %4111 = vmatpush1.msra.mxu0 %v4110
      %4112 = vmatprep.subr.mxu0 0.0
      %4113 = vmatpush1.msra.mxu0 0.0
      %4114 = vmatprep.subr.mxu0 0.0
      %4115 = vmatpush1.msra.mxu0 0.0
      %4116 = vmatprep.subr.mxu0 0.0
      %4117 = vmatpush1.msra.mxu0 0.0
      %4118 = vmatprep.subr.mxu0 0.0
      %4119 = vmatpush1.msra.mxu0 0.0
      %4120 = vmatprep.subr.mxu0 0.0
      %4121 = vmatpush1.msra.mxu0 0.0
      %4122 = vmatprep.subr.mxu0 0.0
      %4123 = vmatpush1.msra.mxu0 0.0
      %4124 = vmatprep.subr.mxu0 0.0
      %4125 = vmatpush1.msra.mxu0 0.0
      %4126 = vmatprep.subr.mxu0 0.0
      %4127 = vmatpush1.msra.mxu0 0.0
      %4128 = vmatprep.subr.mxu0 0.0
      %4129 = vmatpush1.msra.mxu0 0.0
      %4130 = vmatprep.subr.mxu0 0.0
      %4131 = vmatpush1.msra.mxu0 0.0
      %4132 = vmatprep.subr.mxu0 0.0
      %4133 = vmatpush1.msra.mxu0 0.0
      %4134 = vmatprep.subr.mxu0 0.0
      %4135 = vmatpush1.msra.mxu0 0.0
      %4136 = vmatprep.subr.mxu0 0.0
      %4137 = vmatpush1.msra.mxu0 0.0
      %4138 = vmatprep.subr.mxu0 0.0
      %4139 = vmatpush1.msra.mxu0 0.0
      %4140 = vmatprep.subr.mxu0 0.0
      %4141 = vmatpush1.msra.mxu0 0.0
      %4142 = vmatprep.subr.mxu0 0.0
      %4143 = vmatpush1.msra.mxu0 0.0
      %4144 = vmatprep.subr.mxu0 0.0
      %4145 = vmatpush1.msra.mxu0 0.0
      %4146 = vmatprep.subr.mxu0 0.0
      %4147 = vmatpush1.msra.mxu0 0.0
      %4148 = vmatprep.subr.mxu0 0.0
      %4149 = vmatpush1.msra.mxu0 0.0
      %4150 = vmatprep.subr.mxu0 0.0
      %4151 = vmatpush1.msra.mxu0 0.0
      %4152 = vmatprep.subr.mxu0 0.0
      %4153 = vmatpush1.msra.mxu0 0.0
      %4154 = vmatprep.subr.mxu0 0.0
      %4155 = vmatpush1.msra.mxu0 0.0
      %4156 = vmatprep.subr.mxu0 0.0
      %4157 = vmatpush1.msra.mxu0 0.0
      %4158 = vmatprep.subr.mxu0 0.0
      %4159 = vmatpush1.msra.mxu0 0.0
      %4160 = vmatprep.subr.mxu0 0.0
      %4161 = vmatpush1.msra.mxu0 0.0
      %4162 = vmatprep.subr.mxu0 0.0
      %4163 = vmatpush1.msra.mxu0 0.0
      %4164 = vmatprep.subr.mxu0 0.0
      %4165 = vmatpush1.msra.mxu0 0.0
      %4166 = vmatprep.subr.mxu0 0.0
      %4167 = vmatpush1.msra.mxu0 0.0
      %4168 = vmatprep.mubr.f32.mxu0 0.0
      %v4169 = vand.u32 %v3780, 4294901760
      %v4170 = vsub.f32 %v3780, %v4169
      %v4171 = vand.u32 %v4170, 4294901760
      %4172 = vmatmul.mubr.f32.gmra.mrb[0].mxu0 %v4171
      %v4173 = vpop.f32.mrb[0].mxu0
      %v4174 = vadd.f32 %v4084, %v4173
      %v4175 = vpop.f32.mrb[0].mxu0
      %v4176 = vadd.f32 %v4086, %v4175
      %4177 = vmatprep.mubr.f32.mxu0 0.0
      %v4178 = vand.u32 %v3783, 4294901760
      %v4179 = vsub.f32 %v3783, %v4178
      %v4180 = vand.u32 %v4179, 4294901760
      %4181 = vmatmul.mubr.f32.gmra.mrb[0].mxu0 %v4180
      %v4182 = vpop.f32.mrb[0].mxu0
      %v4183 = vadd.f32 %v4092, %v4182
      %v4184 = vpop.f32.mrb[0].mxu0
      %v4185 = vadd.f32 %v4094, %v4184
      %4186 = vdwg.mxu0
      %v4187 = vand.u32 %v3756, 4294901760
      %v4188 = vsub.f32 %v3756, %v4187
      %v4189 = vand.u32 %v4188, 4294901760
      %4190 = vmatprep.subr.mxu0 %v4189
      %v4191 = vand.u32 %v3755, 4294901760
      %v4192 = vsub.f32 %v3755, %v4191
      %v4193 = vand.u32 %v4192, 4294901760
      %4194 = vmatpush1.msra.mxu0 %v4193
      %v4195 = vand.u32 %v3758, 4294901760
      %v4196 = vsub.f32 %v3758, %v4195
      %v4197 = vand.u32 %v4196, 4294901760
      %4198 = vmatprep.subr.mxu0 %v4197
      %v4199 = vand.u32 %v3757, 4294901760
      %v4200 = vsub.f32 %v3757, %v4199
      %v4201 = vand.u32 %v4200, 4294901760
      %4202 = vmatpush1.msra.mxu0 %v4201
      %v4203 = vand.u32 %v3760, 4294901760
      %v4204 = vsub.f32 %v3760, %v4203
      %v4205 = vand.u32 %v4204, 4294901760
      %4206 = vmatprep.subr.mxu0 %v4205
      %v4207 = vand.u32 %v3759, 4294901760
      %v4208 = vsub.f32 %v3759, %v4207
      %v4209 = vand.u32 %v4208, 4294901760
      %4210 = vmatpush1.msra.mxu0 %v4209
      %v4211 = vand.u32 %v3762, 4294901760
      %v4212 = vsub.f32 %v3762, %v4211
      %v4213 = vand.u32 %v4212, 4294901760
      %4214 = vmatprep.subr.mxu0 %v4213
      %v4215 = vand.u32 %v3761, 4294901760
      %v4216 = vsub.f32 %v3761, %v4215
      %v4217 = vand.u32 %v4216, 4294901760
      %4218 = vmatpush1.msra.mxu0 %v4217
      %4219 = vmatprep.subr.mxu0 0.0
      %4220 = vmatpush1.msra.mxu0 0.0
      %4221 = vmatprep.subr.mxu0 0.0
      %4222 = vmatpush1.msra.mxu0 0.0
      %4223 = vmatprep.subr.mxu0 0.0
      %4224 = vmatpush1.msra.mxu0 0.0
      %4225 = vmatprep.subr.mxu0 0.0
      %4226 = vmatpush1.msra.mxu0 0.0
      %4227 = vmatprep.subr.mxu0 0.0
      %4228 = vmatpush1.msra.mxu0 0.0
      %4229 = vmatprep.subr.mxu0 0.0
      %4230 = vmatpush1.msra.mxu0 0.0
      %4231 = vmatprep.subr.mxu0 0.0
      %4232 = vmatpush1.msra.mxu0 0.0
      %4233 = vmatprep.subr.mxu0 0.0
      %4234 = vmatpush1.msra.mxu0 0.0
      %4235 = vmatprep.subr.mxu0 0.0
      %4236 = vmatpush1.msra.mxu0 0.0
      %4237 = vmatprep.subr.mxu0 0.0
      %4238 = vmatpush1.msra.mxu0 0.0
      %4239 = vmatprep.subr.mxu0 0.0
      %4240 = vmatpush1.msra.mxu0 0.0
      %4241 = vmatprep.subr.mxu0 0.0
      %4242 = vmatpush1.msra.mxu0 0.0
      %4243 = vmatprep.subr.mxu0 0.0
      %4244 = vmatpush1.msra.mxu0 0.0
      %4245 = vmatprep.subr.mxu0 0.0
      %4246 = vmatpush1.msra.mxu0 0.0
      %4247 = vmatprep.subr.mxu0 0.0
      %4248 = vmatpush1.msra.mxu0 0.0
      %4249 = vmatprep.subr.mxu0 0.0
      %4250 = vmatpush1.msra.mxu0 0.0
      %4251 = vmatprep.subr.mxu0 0.0
      %4252 = vmatpush1.msra.mxu0 0.0
      %4253 = vmatprep.subr.mxu0 0.0
      %4254 = vmatpush1.msra.mxu0 0.0
      %4255 = vmatprep.subr.mxu0 0.0
      %4256 = vmatpush1.msra.mxu0 0.0
      %4257 = vmatprep.subr.mxu0 0.0
      %4258 = vmatpush1.msra.mxu0 0.0
      %4259 = vmatprep.subr.mxu0 0.0
      %4260 = vmatpush1.msra.mxu0 0.0
      %4261 = vmatprep.subr.mxu0 0.0
      %4262 = vmatpush1.msra.mxu0 0.0
      %4263 = vmatprep.subr.mxu0 0.0
      %4264 = vmatpush1.msra.mxu0 0.0
      %4265 = vmatprep.subr.mxu0 0.0
      %4266 = vmatpush1.msra.mxu0 0.0
      %4267 = vmatprep.subr.mxu0 0.0
      %4268 = vmatpush1.msra.mxu0 0.0
      %4269 = vmatprep.subr.mxu0 0.0
      %4270 = vmatpush1.msra.mxu0 0.0
      %4271 = vmatprep.subr.mxu0 0.0
      %4272 = vmatpush1.msra.mxu0 0.0
      %4273 = vmatprep.subr.mxu0 0.0
      %4274 = vmatpush1.msra.mxu0 0.0
      %4275 = vmatprep.mubr.f32.mxu0 0.0
      %v4276 = vand.u32 %v3780, 4294901760
      %4277 = vmatmul.mubr.f32.gmra.mrb[0].mxu0 %v4276
      %v4278 = vpop.f32.mrb[0].mxu0
      %v4279 = vadd.f32 %v4174, %v4278
      %v4280 = vpop.f32.mrb[0].mxu0
      %v4281 = vadd.f32 %v4176, %v4280
      %4282 = vmatprep.mubr.f32.mxu0 0.0
      %v4283 = vand.u32 %v3783, 4294901760
      %4284 = vmatmul.mubr.f32.gmra.mrb[0].mxu0 %v4283
      %v4285 = vpop.f32.mrb[0].mxu0
      %v4286 = vadd.f32 %v4183, %v4285
      %v4287 = vpop.f32.mrb[0].mxu0
      %v4288 = vadd.f32 %v4185, %v4287
      %4289 = vdwg.mxu0
      %v4290 = vand.u32 %v3756, 4294901760
      %4291 = vmatprep.subr.mxu0 %v4290
      %v4292 = vand.u32 %v3755, 4294901760
      %4293 = vmatpush1.msra.mxu0 %v4292
      %v4294 = vand.u32 %v3758, 4294901760
      %4295 = vmatprep.subr.mxu0 %v4294
      %v4296 = vand.u32 %v3757, 4294901760
      %4297 = vmatpush1.msra.mxu0 %v4296
      %v4298 = vand.u32 %v3760, 4294901760
      %4299 = vmatprep.subr.mxu0 %v4298
      %v4300 = vand.u32 %v3759, 4294901760
      %4301 = vmatpush1.msra.mxu0 %v4300
      %v4302 = vand.u32 %v3762, 4294901760
      %4303 = vmatprep.subr.mxu0 %v4302
      %v4304 = vand.u32 %v3761, 4294901760
      %4305 = vmatpush1.msra.mxu0 %v4304
      %4306 = vmatprep.subr.mxu0 0.0
      %4307 = vmatpush1.msra.mxu0 0.0
      %4308 = vmatprep.subr.mxu0 0.0
      %4309 = vmatpush1.msra.mxu0 0.0
      %4310 = vmatprep.subr.mxu0 0.0
      %4311 = vmatpush1.msra.mxu0 0.0
      %4312 = vmatprep.subr.mxu0 0.0
      %4313 = vmatpush1.msra.mxu0 0.0
      %4314 = vmatprep.subr.mxu0 0.0
      %4315 = vmatpush1.msra.mxu0 0.0
      %4316 = vmatprep.subr.mxu0 0.0
      %4317 = vmatpush1.msra.mxu0 0.0
      %4318 = vmatprep.subr.mxu0 0.0
      %4319 = vmatpush1.msra.mxu0 0.0
      %4320 = vmatprep.subr.mxu0 0.0
      %4321 = vmatpush1.msra.mxu0 0.0
      %4322 = vmatprep.subr.mxu0 0.0
      %4323 = vmatpush1.msra.mxu0 0.0
      %4324 = vmatprep.subr.mxu0 0.0
      %4325 = vmatpush1.msra.mxu0 0.0
      %4326 = vmatprep.subr.mxu0 0.0
      %4327 = vmatpush1.msra.mxu0 0.0
      %4328 = vmatprep.subr.mxu0 0.0
      %4329 = vmatpush1.msra.mxu0 0.0
      %4330 = vmatprep.subr.mxu0 0.0
      %4331 = vmatpush1.msra.mxu0 0.0
      %4332 = vmatprep.subr.mxu0 0.0
      %4333 = vmatpush1.msra.mxu0 0.0
      %4334 = vmatprep.subr.mxu0 0.0
      %4335 = vmatpush1.msra.mxu0 0.0
      %4336 = vmatprep.subr.mxu0 0.0
      %4337 = vmatpush1.msra.mxu0 0.0
      %4338 = vmatprep.subr.mxu0 0.0
      %4339 = vmatpush1.msra.mxu0 0.0
      %4340 = vmatprep.subr.mxu0 0.0
      %4341 = vmatpush1.msra.mxu0 0.0
      %4342 = vmatprep.subr.mxu0 0.0
      %4343 = vmatpush1.msra.mxu0 0.0
      %4344 = vmatprep.subr.mxu0 0.0
      %4345 = vmatpush1.msra.mxu0 0.0
      %4346 = vmatprep.subr.mxu0 0.0
      %4347 = vmatpush1.msra.mxu0 0.0
      %4348 = vmatprep.subr.mxu0 0.0
      %4349 = vmatpush1.msra.mxu0 0.0
      %4350 = vmatprep.subr.mxu0 0.0
      %4351 = vmatpush1.msra.mxu0 0.0
      %4352 = vmatprep.subr.mxu0 0.0
      %4353 = vmatpush1.msra.mxu0 0.0
      %4354 = vmatprep.subr.mxu0 0.0
      %4355 = vmatpush1.msra.mxu0 0.0
      %4356 = vmatprep.subr.mxu0 0.0
      %4357 = vmatpush1.msra.mxu0 0.0
      %4358 = vmatprep.subr.mxu0 0.0
      %4359 = vmatpush1.msra.mxu0 0.0
      %4360 = vmatprep.subr.mxu0 0.0
      %4361 = vmatpush1.msra.mxu0 0.0
      %4362 = vmatprep.mubr.f32.mxu0 0.0
      %v4363 = vand.u32 %v3780, 4294901760
      %4364 = vmatmul.mubr.f32.gmra.mrb[0].mxu0 %v4363
      %v4365 = vpop.f32.mrb[0].mxu0
      %v4366 = vadd.f32 %v4279, %v4365
      %v4367 = vpop.f32.mrb[0].mxu0
      %v4368 = vadd.f32 %v4281, %v4367
      %4369 = vmatprep.mubr.f32.mxu0 0.0
      %v4370 = vand.u32 %v3783, 4294901760
      %4371 = vmatmul.mubr.f32.gmra.mrb[0].mxu0 %v4370
      %v4372 = vpop.f32.mrb[0].mxu0
      %v4373 = vadd.f32 %v4286, %v4372
      %v4374 = vpop.f32.mrb[0].mxu0
      %v4375 = vadd.f32 %v4288, %v4374
      %4376 = vdwg.mxu0
      %v4377 = vand.u32 2147483647, %v4366
      %v4378 = vand.u32 2147483647, %v4368
      %v4379 = vand.u32 2147483647, %v4373
      %v4380 = vand.u32 2147483647, %v4375
      %v4381 = vrcp.pop %v4377
      %v4382 = vrcp.pop %v4378
      %v4383 = vrcp.pop %v4379
      %v4384 = vrcp.pop %v4380
      %vm4385 = vcmp.gt.f32.partialorder %v4377, 1.0
      %vm4386 = vcmp.gt.f32.partialorder %v4378, 1.0
      %vm4387 = vcmp.gt.f32.partialorder %v4379, 1.0
      %vm4388 = vcmp.gt.f32.partialorder %v4380, 1.0
      %v4389 = vsel %vm4385, %v4381, %v4377
      %v4390 = vsel %vm4386, %v4382, %v4378
      %v4391 = vsel %vm4387, %v4383, %v4379
      %v4392 = vsel %vm4388, %v4384, %v4380
      %v4393 = vmul.f32 %v4389, %v4389
      %v4394 = vmul.f32 %v4390, %v4390
      %v4395 = vmul.f32 %v4391, %v4391
      %v4396 = vmul.f32 %v4392, %v4392
      %v4397 = vmul.f32 %v4393, -0.0117212
      %v4398 = vmul.f32 %v4394, -0.0117212
      %v4399 = vmul.f32 %v4395, -0.0117212
      %v4400 = vmul.f32 %v4396, -0.0117212
      %v4401 = vadd.f32 %v4397, 0.05265332
      %v4402 = vadd.f32 %v4398, 0.05265332
      %v4403 = vadd.f32 %v4399, 0.05265332
      %v4404 = vadd.f32 %v4400, 0.05265332
      %v4405 = vmul.f32 %v4401, %v4393
      %v4406 = vmul.f32 %v4402, %v4394
      %v4407 = vmul.f32 %v4403, %v4395
      %v4408 = vmul.f32 %v4404, %v4396
      %v4409 = vadd.f32 %v4405, -0.11643287
      %v4410 = vadd.f32 %v4406, -0.11643287
      %v4411 = vadd.f32 %v4407, -0.11643287
      %v4412 = vadd.f32 %v4408, -0.11643287
      %v4413 = vmul.f32 %v4409, %v4393
      %v4414 = vmul.f32 %v4410, %v4394
      %v4415 = vmul.f32 %v4411, %v4395
      %v4416 = vmul.f32 %v4412, %v4396
      %v4417 = vadd.f32 %v4413, 0.19354346
      %v4418 = vadd.f32 %v4414, 0.19354346
      %v4419 = vadd.f32 %v4415, 0.19354346
      %v4420 = vadd.f32 %v4416, 0.19354346
      %v4421 = vmul.f32 %v4417, %v4393
      %v4422 = vmul.f32 %v4418, %v4394
      %v4423 = vmul.f32 %v4419, %v4395
      %v4424 = vmul.f32 %v4420, %v4396
      %v4425 = vadd.f32 %v4421, -0.33262348
      %v4426 = vadd.f32 %v4422, -0.33262348
      %v4427 = vadd.f32 %v4423, -0.33262348
      %v4428 = vadd.f32 %v4424, -0.33262348
      %v4429 = vmul.f32 %v4425, %v4393
      %v4430 = vmul.f32 %v4426, %v4394
      %v4431 = vmul.f32 %v4427, %v4395
      %v4432 = vmul.f32 %v4428, %v4396
      %v4433 = vadd.f32 %v4429, 0.99997723
      %v4434 = vadd.f32 %v4430, 0.99997723
      %v4435 = vadd.f32 %v4431, 0.99997723
      %v4436 = vadd.f32 %v4432, 0.99997723
      %v4437 = vmul.f32 %v4433, %v4389
      %v4438 = vmul.f32 %v4434, %v4390
      %v4439 = vmul.f32 %v4435, %v4391
      %v4440 = vmul.f32 %v4436, %v4392
      %v4441 = vsub.f32 1.5707964, %v4437
      %v4442 = vsub.f32 1.5707964, %v4438
      %v4443 = vsub.f32 1.5707964, %v4439
      %v4444 = vsub.f32 1.5707964, %v4440
      %v4445 = vsel %vm4385, %v4441, %v4437
      %v4446 = vsel %vm4386, %v4442, %v4438
      %v4447 = vsel %vm4387, %v4443, %v4439
      %v4448 = vsel %vm4388, %v4444, %v4440
      %vm4449 = vcmp.lt.f32.partialorder %v4366, 0.0
      %vm4450 = vcmp.lt.f32.partialorder %v4368, 0.0
      %vm4451 = vcmp.lt.f32.partialorder %v4373, 0.0
      %vm4452 = vcmp.lt.f32.partialorder %v4375, 0.0
      %v4453 = vsub.f32 0.0, %v4445
      %v4454 = vsub.f32 0.0, %v4446
      %v4455 = vsub.f32 0.0, %v4447
      %v4456 = vsub.f32 0.0, %v4448
      %v4457 = vsel %vm4449, %v4453, %v4445
      %v4458 = vsel %vm4450, %v4454, %v4446
      %v4459 = vsel %vm4451, %v4455, %v4447
      %v4460 = vsel %vm4452, %v4456, %v4448
      %v4461 = vmul.f32 %v4457, %v4457
      %v4462 = vmul.f32 %v4458, %v4458
      %v4463 = vmul.f32 %v4459, %v4459
      %v4464 = vmul.f32 %v4460, %v4460
      %s4465 = scalar_lea.vmem %s3, 80
      %v4466 = vld [vmem:[%s4465] sm:$0xff]
      %v4467 = vld [vmem:[%s4465 + $0x8] sm:$0xff]
      %s4468 = scalar_lea.vmem %s4, 80
      %v4469 = vld [vmem:[%s4468] sm:$0xff]
      %v4470 = vld [vmem:[%s4468 + $0x8] sm:$0xff]
      %4472 = vset.pattern.permute.xlu0 0
      %4473 = vperm.xlu0 %4472, %v4469
      %v4474 = vpop.permute.xlu0 %4473
      %4477 = vset.pattern.permute.xlu0 0
      %4478 = vperm.xlu0 %4477, %v4470
      %v4479 = vpop.permute.xlu0 %4478
      %v4482 = vsel %vm970, %v4466, 0
      %v4485 = vsel %vm970, %v4467, 0
      %v4487 = vand.u32 %v4458, 4294901760
      %4488 = vmatprep.subr.mxu0 %v4487
      %v4489 = vand.u32 %v4457, 4294901760
      %4490 = vmatpush1.msra.mxu0 %v4489
      %v4491 = vand.u32 %v4460, 4294901760
      %4492 = vmatprep.subr.mxu0 %v4491
      %v4493 = vand.u32 %v4459, 4294901760
      %4494 = vmatpush1.msra.mxu0 %v4493
      %v4495 = vand.u32 %v4462, 4294901760
      %4496 = vmatprep.subr.mxu0 %v4495
      %v4497 = vand.u32 %v4461, 4294901760
      %4498 = vmatpush1.msra.mxu0 %v4497
      %v4499 = vand.u32 %v4464, 4294901760
      %4500 = vmatprep.subr.mxu0 %v4499
      %v4501 = vand.u32 %v4463, 4294901760
      %4502 = vmatpush1.msra.mxu0 %v4501
      %4503 = vmatprep.subr.mxu0 0.0
      %4504 = vmatpush1.msra.mxu0 0.0
      %4505 = vmatprep.subr.mxu0 0.0
      %4506 = vmatpush1.msra.mxu0 0.0
      %4507 = vmatprep.subr.mxu0 0.0
      %4508 = vmatpush1.msra.mxu0 0.0
      %4509 = vmatprep.subr.mxu0 0.0
      %4510 = vmatpush1.msra.mxu0 0.0
      %4511 = vmatprep.subr.mxu0 0.0
      %4512 = vmatpush1.msra.mxu0 0.0
      %4513 = vmatprep.subr.mxu0 0.0
      %4514 = vmatpush1.msra.mxu0 0.0
      %4515 = vmatprep.subr.mxu0 0.0
      %4516 = vmatpush1.msra.mxu0 0.0
      %4517 = vmatprep.subr.mxu0 0.0
      %4518 = vmatpush1.msra.mxu0 0.0
      %4519 = vmatprep.subr.mxu0 0.0
      %4520 = vmatpush1.msra.mxu0 0.0
      %4521 = vmatprep.subr.mxu0 0.0
      %4522 = vmatpush1.msra.mxu0 0.0
      %4523 = vmatprep.subr.mxu0 0.0
      %4524 = vmatpush1.msra.mxu0 0.0
      %4525 = vmatprep.subr.mxu0 0.0
      %4526 = vmatpush1.msra.mxu0 0.0
      %4527 = vmatprep.subr.mxu0 0.0
      %4528 = vmatpush1.msra.mxu0 0.0
      %4529 = vmatprep.subr.mxu0 0.0
      %4530 = vmatpush1.msra.mxu0 0.0
      %4531 = vmatprep.subr.mxu0 0.0
      %4532 = vmatpush1.msra.mxu0 0.0
      %4533 = vmatprep.subr.mxu0 0.0
      %4534 = vmatpush1.msra.mxu0 0.0
      %4535 = vmatprep.subr.mxu0 0.0
      %4536 = vmatpush1.msra.mxu0 0.0
      %4537 = vmatprep.subr.mxu0 0.0
      %4538 = vmatpush1.msra.mxu0 0.0
      %4539 = vmatprep.subr.mxu0 0.0
      %4540 = vmatpush1.msra.mxu0 0.0
      %4541 = vmatprep.subr.mxu0 0.0
      %4542 = vmatpush1.msra.mxu0 0.0
      %4543 = vmatprep.subr.mxu0 0.0
      %4544 = vmatpush1.msra.mxu0 0.0
      %4545 = vmatprep.subr.mxu0 0.0
      %4546 = vmatpush1.msra.mxu0 0.0
      %4547 = vmatprep.subr.mxu0 0.0
      %4548 = vmatpush1.msra.mxu0 0.0
      %4549 = vmatprep.subr.mxu0 0.0
      %4550 = vmatpush1.msra.mxu0 0.0
      %4551 = vmatprep.subr.mxu0 0.0
      %4552 = vmatpush1.msra.mxu0 0.0
      %4553 = vmatprep.subr.mxu0 0.0
      %4554 = vmatpush1.msra.mxu0 0.0
      %4555 = vmatprep.subr.mxu0 0.0
      %4556 = vmatpush1.msra.mxu0 0.0
      %4557 = vmatprep.subr.mxu0 0.0
      %4558 = vmatpush1.msra.mxu0 0.0
      %4559 = vmatprep.mubr.f32.mxu0 0.0
      %v4560 = vand.u32 %v4482, 4294901760
      %v4561 = vsub.f32 %v4482, %v4560
      %v4562 = vand.u32 %v4561, 4294901760
      %v4563 = vsub.f32 %v4561, %v4562
      %v4564 = vand.u32 %v4563, 4294901760
      %4565 = vmatmul.mubr.f32.gmra.mrb[0].mxu0 %v4564
      %v4566 = vpop.f32.mrb[0].mxu0
      %v4567 = vadd.f32 %v4474, %v4566
      %v4568 = vpop.f32.mrb[0].mxu0
      %v4569 = vadd.f32 %v4474, %v4568
      %4570 = vmatprep.mubr.f32.mxu0 0.0
      %v4571 = vand.u32 %v4485, 4294901760
      %v4572 = vsub.f32 %v4485, %v4571
      %v4573 = vand.u32 %v4572, 4294901760
      %v4574 = vsub.f32 %v4572, %v4573
      %v4575 = vand.u32 %v4574, 4294901760
      %4576 = vmatmul.mubr.f32.gmra.mrb[0].mxu0 %v4575
      %v4577 = vpop.f32.mrb[0].mxu0
      %v4578 = vadd.f32 %v4479, %v4577
      %v4579 = vpop.f32.mrb[0].mxu0
      %v4580 = vadd.f32 %v4479, %v4579
      %4581 = vdwg.mxu0
      %v4582 = vand.u32 %v4458, 4294901760
      %v4583 = vsub.f32 %v4458, %v4582
      %v4584 = vand.u32 %v4583, 4294901760
      %v4585 = vsub.f32 %v4583, %v4584
      %v4586 = vand.u32 %v4585, 4294901760
      %4587 = vmatprep.subr.mxu0 %v4586
      %v4588 = vand.u32 %v4457, 4294901760
      %v4589 = vsub.f32 %v4457, %v4588
      %v4590 = vand.u32 %v4589, 4294901760
      %v4591 = vsub.f32 %v4589, %v4590
      %v4592 = vand.u32 %v4591, 4294901760
      %4593 = vmatpush1.msra.mxu0 %v4592
      %v4594 = vand.u32 %v4460, 4294901760
      %v4595 = vsub.f32 %v4460, %v4594
      %v4596 = vand.u32 %v4595, 4294901760
      %v4597 = vsub.f32 %v4595, %v4596
      %v4598 = vand.u32 %v4597, 4294901760
      %4599 = vmatprep.subr.mxu0 %v4598
      %v4600 = vand.u32 %v4459, 4294901760
      %v4601 = vsub.f32 %v4459, %v4600
      %v4602 = vand.u32 %v4601, 4294901760
      %v4603 = vsub.f32 %v4601, %v4602
      %v4604 = vand.u32 %v4603, 4294901760
      %4605 = vmatpush1.msra.mxu0 %v4604
      %v4606 = vand.u32 %v4462, 4294901760
      %v4607 = vsub.f32 %v4462, %v4606
      %v4608 = vand.u32 %v4607, 4294901760
      %v4609 = vsub.f32 %v4607, %v4608
      %v4610 = vand.u32 %v4609, 4294901760
      %4611 = vmatprep.subr.mxu0 %v4610
      %v4612 = vand.u32 %v4461, 4294901760
      %v4613 = vsub.f32 %v4461, %v4612
      %v4614 = vand.u32 %v4613, 4294901760
      %v4615 = vsub.f32 %v4613, %v4614
      %v4616 = vand.u32 %v4615, 4294901760
      %4617 = vmatpush1.msra.mxu0 %v4616
      %v4618 = vand.u32 %v4464, 4294901760
      %v4619 = vsub.f32 %v4464, %v4618
      %v4620 = vand.u32 %v4619, 4294901760
      %v4621 = vsub.f32 %v4619, %v4620
      %v4622 = vand.u32 %v4621, 4294901760
      %4623 = vmatprep.subr.mxu0 %v4622
      %v4624 = vand.u32 %v4463, 4294901760
      %v4625 = vsub.f32 %v4463, %v4624
      %v4626 = vand.u32 %v4625, 4294901760
      %v4627 = vsub.f32 %v4625, %v4626
      %v4628 = vand.u32 %v4627, 4294901760
      %4629 = vmatpush1.msra.mxu0 %v4628
      %4630 = vmatprep.subr.mxu0 0.0
      %4631 = vmatpush1.msra.mxu0 0.0
      %4632 = vmatprep.subr.mxu0 0.0
      %4633 = vmatpush1.msra.mxu0 0.0
      %4634 = vmatprep.subr.mxu0 0.0
      %4635 = vmatpush1.msra.mxu0 0.0
      %4636 = vmatprep.subr.mxu0 0.0
      %4637 = vmatpush1.msra.mxu0 0.0
      %4638 = vmatprep.subr.mxu0 0.0
      %4639 = vmatpush1.msra.mxu0 0.0
      %4640 = vmatprep.subr.mxu0 0.0
      %4641 = vmatpush1.msra.mxu0 0.0
      %4642 = vmatprep.subr.mxu0 0.0
      %4643 = vmatpush1.msra.mxu0 0.0
      %4644 = vmatprep.subr.mxu0 0.0
      %4645 = vmatpush1.msra.mxu0 0.0
      %4646 = vmatprep.subr.mxu0 0.0
      %4647 = vmatpush1.msra.mxu0 0.0
      %4648 = vmatprep.subr.mxu0 0.0
      %4649 = vmatpush1.msra.mxu0 0.0
      %4650 = vmatprep.subr.mxu0 0.0
      %4651 = vmatpush1.msra.mxu0 0.0
      %4652 = vmatprep.subr.mxu0 0.0
      %4653 = vmatpush1.msra.mxu0 0.0
      %4654 = vmatprep.subr.mxu0 0.0
      %4655 = vmatpush1.msra.mxu0 0.0
      %4656 = vmatprep.subr.mxu0 0.0
      %4657 = vmatpush1.msra.mxu0 0.0
      %4658 = vmatprep.subr.mxu0 0.0
      %4659 = vmatpush1.msra.mxu0 0.0
      %4660 = vmatprep.subr.mxu0 0.0
      %4661 = vmatpush1.msra.mxu0 0.0
      %4662 = vmatprep.subr.mxu0 0.0
      %4663 = vmatpush1.msra.mxu0 0.0
      %4664 = vmatprep.subr.mxu0 0.0
      %4665 = vmatpush1.msra.mxu0 0.0
      %4666 = vmatprep.subr.mxu0 0.0
      %4667 = vmatpush1.msra.mxu0 0.0
      %4668 = vmatprep.subr.mxu0 0.0
      %4669 = vmatpush1.msra.mxu0 0.0
      %4670 = vmatprep.subr.mxu0 0.0
      %4671 = vmatpush1.msra.mxu0 0.0
      %4672 = vmatprep.subr.mxu0 0.0
      %4673 = vmatpush1.msra.mxu0 0.0
      %4674 = vmatprep.subr.mxu0 0.0
      %4675 = vmatpush1.msra.mxu0 0.0
      %4676 = vmatprep.subr.mxu0 0.0
      %4677 = vmatpush1.msra.mxu0 0.0
      %4678 = vmatprep.subr.mxu0 0.0
      %4679 = vmatpush1.msra.mxu0 0.0
      %4680 = vmatprep.subr.mxu0 0.0
      %4681 = vmatpush1.msra.mxu0 0.0
      %4682 = vmatprep.subr.mxu0 0.0
      %4683 = vmatpush1.msra.mxu0 0.0
      %4684 = vmatprep.subr.mxu0 0.0
      %4685 = vmatpush1.msra.mxu0 0.0
      %4686 = vmatprep.mubr.f32.mxu0 0.0
      %v4687 = vand.u32 %v4482, 4294901760
      %4688 = vmatmul.mubr.f32.gmra.mrb[0].mxu0 %v4687
      %v4689 = vpop.f32.mrb[0].mxu0
      %v4690 = vadd.f32 %v4567, %v4689
      %v4691 = vpop.f32.mrb[0].mxu0
      %v4692 = vadd.f32 %v4569, %v4691
      %4693 = vmatprep.mubr.f32.mxu0 0.0
      %v4694 = vand.u32 %v4485, 4294901760
      %4695 = vmatmul.mubr.f32.gmra.mrb[0].mxu0 %v4694
      %v4696 = vpop.f32.mrb[0].mxu0
      %v4697 = vadd.f32 %v4578, %v4696
      %v4698 = vpop.f32.mrb[0].mxu0
      %v4699 = vadd.f32 %v4580, %v4698
      %4700 = vdwg.mxu0
      %v4701 = vand.u32 %v4458, 4294901760
      %v4702 = vsub.f32 %v4458, %v4701
      %4703 = vmatprep.subr.mxu0 %v4702
      %v4704 = vand.u32 %v4457, 4294901760
      %v4705 = vsub.f32 %v4457, %v4704
      %4706 = vmatpush1.msra.mxu0 %v4705
      %v4707 = vand.u32 %v4460, 4294901760
      %v4708 = vsub.f32 %v4460, %v4707
      %4709 = vmatprep.subr.mxu0 %v4708
      %v4710 = vand.u32 %v4459, 4294901760
      %v4711 = vsub.f32 %v4459, %v4710
      %4712 = vmatpush1.msra.mxu0 %v4711
      %v4713 = vand.u32 %v4462, 4294901760
      %v4714 = vsub.f32 %v4462, %v4713
      %4715 = vmatprep.subr.mxu0 %v4714
      %v4716 = vand.u32 %v4461, 4294901760
      %v4717 = vsub.f32 %v4461, %v4716
      %4718 = vmatpush1.msra.mxu0 %v4717
      %v4719 = vand.u32 %v4464, 4294901760
      %v4720 = vsub.f32 %v4464, %v4719
      %4721 = vmatprep.subr.mxu0 %v4720
      %v4722 = vand.u32 %v4463, 4294901760
      %v4723 = vsub.f32 %v4463, %v4722
      %4724 = vmatpush1.msra.mxu0 %v4723
      %4725 = vmatprep.subr.mxu0 0.0
      %4726 = vmatpush1.msra.mxu0 0.0
      %4727 = vmatprep.subr.mxu0 0.0
      %4728 = vmatpush1.msra.mxu0 0.0
      %4729 = vmatprep.subr.mxu0 0.0
      %4730 = vmatpush1.msra.mxu0 0.0
      %4731 = vmatprep.subr.mxu0 0.0
      %4732 = vmatpush1.msra.mxu0 0.0
      %4733 = vmatprep.subr.mxu0 0.0
      %4734 = vmatpush1.msra.mxu0 0.0
      %4735 = vmatprep.subr.mxu0 0.0
      %4736 = vmatpush1.msra.mxu0 0.0
      %4737 = vmatprep.subr.mxu0 0.0
      %4738 = vmatpush1.msra.mxu0 0.0
      %4739 = vmatprep.subr.mxu0 0.0
      %4740 = vmatpush1.msra.mxu0 0.0
      %4741 = vmatprep.subr.mxu0 0.0
      %4742 = vmatpush1.msra.mxu0 0.0
      %4743 = vmatprep.subr.mxu0 0.0
      %4744 = vmatpush1.msra.mxu0 0.0
      %4745 = vmatprep.subr.mxu0 0.0
      %4746 = vmatpush1.msra.mxu0 0.0
      %4747 = vmatprep.subr.mxu0 0.0
      %4748 = vmatpush1.msra.mxu0 0.0
      %4749 = vmatprep.subr.mxu0 0.0
      %4750 = vmatpush1.msra.mxu0 0.0
      %4751 = vmatprep.subr.mxu0 0.0
      %4752 = vmatpush1.msra.mxu0 0.0
      %4753 = vmatprep.subr.mxu0 0.0
      %4754 = vmatpush1.msra.mxu0 0.0
      %4755 = vmatprep.subr.mxu0 0.0
      %4756 = vmatpush1.msra.mxu0 0.0
      %4757 = vmatprep.subr.mxu0 0.0
      %4758 = vmatpush1.msra.mxu0 0.0
      %4759 = vmatprep.subr.mxu0 0.0
      %4760 = vmatpush1.msra.mxu0 0.0
      %4761 = vmatprep.subr.mxu0 0.0
      %4762 = vmatpush1.msra.mxu0 0.0
      %4763 = vmatprep.subr.mxu0 0.0
      %4764 = vmatpush1.msra.mxu0 0.0
      %4765 = vmatprep.subr.mxu0 0.0
      %4766 = vmatpush1.msra.mxu0 0.0
      %4767 = vmatprep.subr.mxu0 0.0
      %4768 = vmatpush1.msra.mxu0 0.0
      %4769 = vmatprep.subr.mxu0 0.0
      %4770 = vmatpush1.msra.mxu0 0.0
      %4771 = vmatprep.subr.mxu0 0.0
      %4772 = vmatpush1.msra.mxu0 0.0
      %4773 = vmatprep.subr.mxu0 0.0
      %4774 = vmatpush1.msra.mxu0 0.0
      %4775 = vmatprep.subr.mxu0 0.0
      %4776 = vmatpush1.msra.mxu0 0.0
      %4777 = vmatprep.subr.mxu0 0.0
      %4778 = vmatpush1.msra.mxu0 0.0
      %4779 = vmatprep.subr.mxu0 0.0
      %4780 = vmatpush1.msra.mxu0 0.0
      %4781 = vmatprep.mubr.f32.mxu0 0.0
      %v4782 = vand.u32 %v4482, 4294901760
      %v4783 = vsub.f32 %v4482, %v4782
      %4784 = vmatmul.mubr.f32.gmra.mrb[0].mxu0 %v4783
      %v4785 = vpop.f32.mrb[0].mxu0
      %v4786 = vadd.f32 %v4690, %v4785
      %v4787 = vpop.f32.mrb[0].mxu0
      %v4788 = vadd.f32 %v4692, %v4787
      %4789 = vmatprep.mubr.f32.mxu0 0.0
      %v4790 = vand.u32 %v4485, 4294901760
      %v4791 = vsub.f32 %v4485, %v4790
      %4792 = vmatmul.mubr.f32.gmra.mrb[0].mxu0 %v4791
      %v4793 = vpop.f32.mrb[0].mxu0
      %v4794 = vadd.f32 %v4697, %v4793
      %v4795 = vpop.f32.mrb[0].mxu0
      %v4796 = vadd.f32 %v4699, %v4795
      %4797 = vdwg.mxu0
      %v4798 = vand.u32 %v4458, 4294901760
      %4799 = vmatprep.subr.mxu0 %v4798
      %v4800 = vand.u32 %v4457, 4294901760
      %4801 = vmatpush1.msra.mxu0 %v4800
      %v4802 = vand.u32 %v4460, 4294901760
      %4803 = vmatprep.subr.mxu0 %v4802
      %v4804 = vand.u32 %v4459, 4294901760
      %4805 = vmatpush1.msra.mxu0 %v4804
      %v4806 = vand.u32 %v4462, 4294901760
      %4807 = vmatprep.subr.mxu0 %v4806
      %v4808 = vand.u32 %v4461, 4294901760
      %4809 = vmatpush1.msra.mxu0 %v4808
      %v4810 = vand.u32 %v4464, 4294901760
      %4811 = vmatprep.subr.mxu0 %v4810
      %v4812 = vand.u32 %v4463, 4294901760
      %4813 = vmatpush1.msra.mxu0 %v4812
      %4814 = vmatprep.subr.mxu0 0.0
      %4815 = vmatpush1.msra.mxu0 0.0
      %4816 = vmatprep.subr.mxu0 0.0
      %4817 = vmatpush1.msra.mxu0 0.0
      %4818 = vmatprep.subr.mxu0 0.0
      %4819 = vmatpush1.msra.mxu0 0.0
      %4820 = vmatprep.subr.mxu0 0.0
      %4821 = vmatpush1.msra.mxu0 0.0
      %4822 = vmatprep.subr.mxu0 0.0
      %4823 = vmatpush1.msra.mxu0 0.0
      %4824 = vmatprep.subr.mxu0 0.0
      %4825 = vmatpush1.msra.mxu0 0.0
      %4826 = vmatprep.subr.mxu0 0.0
      %4827 = vmatpush1.msra.mxu0 0.0
      %4828 = vmatprep.subr.mxu0 0.0
      %4829 = vmatpush1.msra.mxu0 0.0
      %4830 = vmatprep.subr.mxu0 0.0
      %4831 = vmatpush1.msra.mxu0 0.0
      %4832 = vmatprep.subr.mxu0 0.0
      %4833 = vmatpush1.msra.mxu0 0.0
      %4834 = vmatprep.subr.mxu0 0.0
      %4835 = vmatpush1.msra.mxu0 0.0
      %4836 = vmatprep.subr.mxu0 0.0
      %4837 = vmatpush1.msra.mxu0 0.0
      %4838 = vmatprep.subr.mxu0 0.0
      %4839 = vmatpush1.msra.mxu0 0.0
      %4840 = vmatprep.subr.mxu0 0.0
      %4841 = vmatpush1.msra.mxu0 0.0
      %4842 = vmatprep.subr.mxu0 0.0
      %4843 = vmatpush1.msra.mxu0 0.0
      %4844 = vmatprep.subr.mxu0 0.0
      %4845 = vmatpush1.msra.mxu0 0.0
      %4846 = vmatprep.subr.mxu0 0.0
      %4847 = vmatpush1.msra.mxu0 0.0
      %4848 = vmatprep.subr.mxu0 0.0
      %4849 = vmatpush1.msra.mxu0 0.0
      %4850 = vmatprep.subr.mxu0 0.0
      %4851 = vmatpush1.msra.mxu0 0.0
      %4852 = vmatprep.subr.mxu0 0.0
      %4853 = vmatpush1.msra.mxu0 0.0
      %4854 = vmatprep.subr.mxu0 0.0
      %4855 = vmatpush1.msra.mxu0 0.0
      %4856 = vmatprep.subr.mxu0 0.0
      %4857 = vmatpush1.msra.mxu0 0.0
      %4858 = vmatprep.subr.mxu0 0.0
      %4859 = vmatpush1.msra.mxu0 0.0
      %4860 = vmatprep.subr.mxu0 0.0
      %4861 = vmatpush1.msra.mxu0 0.0
      %4862 = vmatprep.subr.mxu0 0.0
      %4863 = vmatpush1.msra.mxu0 0.0
      %4864 = vmatprep.subr.mxu0 0.0
      %4865 = vmatpush1.msra.mxu0 0.0
      %4866 = vmatprep.subr.mxu0 0.0
      %4867 = vmatpush1.msra.mxu0 0.0
      %4868 = vmatprep.subr.mxu0 0.0
      %4869 = vmatpush1.msra.mxu0 0.0
      %4870 = vmatprep.mubr.f32.mxu0 0.0
      %v4871 = vand.u32 %v4482, 4294901760
      %v4872 = vsub.f32 %v4482, %v4871
      %v4873 = vand.u32 %v4872, 4294901760
      %4874 = vmatmul.mubr.f32.gmra.mrb[0].mxu0 %v4873
      %v4875 = vpop.f32.mrb[0].mxu0
      %v4876 = vadd.f32 %v4786, %v4875
      %v4877 = vpop.f32.mrb[0].mxu0
      %v4878 = vadd.f32 %v4788, %v4877
      %4879 = vmatprep.mubr.f32.mxu0 0.0
      %v4880 = vand.u32 %v4485, 4294901760
      %v4881 = vsub.f32 %v4485, %v4880
      %v4882 = vand.u32 %v4881, 4294901760
      %4883 = vmatmul.mubr.f32.gmra.mrb[0].mxu0 %v4882
      %v4884 = vpop.f32.mrb[0].mxu0
      %v4885 = vadd.f32 %v4794, %v4884
      %v4886 = vpop.f32.mrb[0].mxu0
      %v4887 = vadd.f32 %v4796, %v4886
      %4888 = vdwg.mxu0
      %v4889 = vand.u32 %v4458, 4294901760
      %v4890 = vsub.f32 %v4458, %v4889
      %v4891 = vand.u32 %v4890, 4294901760
      %4892 = vmatprep.subr.mxu0 %v4891
      %v4893 = vand.u32 %v4457, 4294901760
      %v4894 = vsub.f32 %v4457, %v4893
      %v4895 = vand.u32 %v4894, 4294901760
      %4896 = vmatpush1.msra.mxu0 %v4895
      %v4897 = vand.u32 %v4460, 4294901760
      %v4898 = vsub.f32 %v4460, %v4897
      %v4899 = vand.u32 %v4898, 4294901760
      %4900 = vmatprep.subr.mxu0 %v4899
      %v4901 = vand.u32 %v4459, 4294901760
      %v4902 = vsub.f32 %v4459, %v4901
      %v4903 = vand.u32 %v4902, 4294901760
      %4904 = vmatpush1.msra.mxu0 %v4903
      %v4905 = vand.u32 %v4462, 4294901760
      %v4906 = vsub.f32 %v4462, %v4905
      %v4907 = vand.u32 %v4906, 4294901760
      %4908 = vmatprep.subr.mxu0 %v4907
      %v4909 = vand.u32 %v4461, 4294901760
      %v4910 = vsub.f32 %v4461, %v4909
      %v4911 = vand.u32 %v4910, 4294901760
      %4912 = vmatpush1.msra.mxu0 %v4911
      %v4913 = vand.u32 %v4464, 4294901760
      %v4914 = vsub.f32 %v4464, %v4913
      %v4915 = vand.u32 %v4914, 4294901760
      %4916 = vmatprep.subr.mxu0 %v4915
      %v4917 = vand.u32 %v4463, 4294901760
      %v4918 = vsub.f32 %v4463, %v4917
      %v4919 = vand.u32 %v4918, 4294901760
      %4920 = vmatpush1.msra.mxu0 %v4919
      %4921 = vmatprep.subr.mxu0 0.0
      %4922 = vmatpush1.msra.mxu0 0.0
      %4923 = vmatprep.subr.mxu0 0.0
      %4924 = vmatpush1.msra.mxu0 0.0
      %4925 = vmatprep.subr.mxu0 0.0
      %4926 = vmatpush1.msra.mxu0 0.0
      %4927 = vmatprep.subr.mxu0 0.0
      %4928 = vmatpush1.msra.mxu0 0.0
      %4929 = vmatprep.subr.mxu0 0.0
      %4930 = vmatpush1.msra.mxu0 0.0
      %4931 = vmatprep.subr.mxu0 0.0
      %4932 = vmatpush1.msra.mxu0 0.0
      %4933 = vmatprep.subr.mxu0 0.0
      %4934 = vmatpush1.msra.mxu0 0.0
      %4935 = vmatprep.subr.mxu0 0.0
      %4936 = vmatpush1.msra.mxu0 0.0
      %4937 = vmatprep.subr.mxu0 0.0
      %4938 = vmatpush1.msra.mxu0 0.0
      %4939 = vmatprep.subr.mxu0 0.0
      %4940 = vmatpush1.msra.mxu0 0.0
      %4941 = vmatprep.subr.mxu0 0.0
      %4942 = vmatpush1.msra.mxu0 0.0
      %4943 = vmatprep.subr.mxu0 0.0
      %4944 = vmatpush1.msra.mxu0 0.0
      %4945 = vmatprep.subr.mxu0 0.0
      %4946 = vmatpush1.msra.mxu0 0.0
      %4947 = vmatprep.subr.mxu0 0.0
      %4948 = vmatpush1.msra.mxu0 0.0
      %4949 = vmatprep.subr.mxu0 0.0
      %4950 = vmatpush1.msra.mxu0 0.0
      %4951 = vmatprep.subr.mxu0 0.0
      %4952 = vmatpush1.msra.mxu0 0.0
      %4953 = vmatprep.subr.mxu0 0.0
      %4954 = vmatpush1.msra.mxu0 0.0
      %4955 = vmatprep.subr.mxu0 0.0
      %4956 = vmatpush1.msra.mxu0 0.0
      %4957 = vmatprep.subr.mxu0 0.0
      %4958 = vmatpush1.msra.mxu0 0.0
      %4959 = vmatprep.subr.mxu0 0.0
      %4960 = vmatpush1.msra.mxu0 0.0
      %4961 = vmatprep.subr.mxu0 0.0
      %4962 = vmatpush1.msra.mxu0 0.0
      %4963 = vmatprep.subr.mxu0 0.0
      %4964 = vmatpush1.msra.mxu0 0.0
      %4965 = vmatprep.subr.mxu0 0.0
      %4966 = vmatpush1.msra.mxu0 0.0
      %4967 = vmatprep.subr.mxu0 0.0
      %4968 = vmatpush1.msra.mxu0 0.0
      %4969 = vmatprep.subr.mxu0 0.0
      %4970 = vmatpush1.msra.mxu0 0.0
      %4971 = vmatprep.subr.mxu0 0.0
      %4972 = vmatpush1.msra.mxu0 0.0
      %4973 = vmatprep.subr.mxu0 0.0
      %4974 = vmatpush1.msra.mxu0 0.0
      %4975 = vmatprep.subr.mxu0 0.0
      %4976 = vmatpush1.msra.mxu0 0.0
      %4977 = vmatprep.mubr.f32.mxu0 0.0
      %v4978 = vand.u32 %v4482, 4294901760
      %4979 = vmatmul.mubr.f32.gmra.mrb[0].mxu0 %v4978
      %v4980 = vpop.f32.mrb[0].mxu0
      %v4981 = vadd.f32 %v4876, %v4980
      %v4982 = vpop.f32.mrb[0].mxu0
      %v4983 = vadd.f32 %v4878, %v4982
      %4984 = vmatprep.mubr.f32.mxu0 0.0
      %v4985 = vand.u32 %v4485, 4294901760
      %4986 = vmatmul.mubr.f32.gmra.mrb[0].mxu0 %v4985
      %v4987 = vpop.f32.mrb[0].mxu0
      %v4988 = vadd.f32 %v4885, %v4987
      %v4989 = vpop.f32.mrb[0].mxu0
      %v4990 = vadd.f32 %v4887, %v4989
      %4991 = vdwg.mxu0
      %v4992 = vand.u32 %v4458, 4294901760
      %4993 = vmatprep.subr.mxu0 %v4992
      %v4994 = vand.u32 %v4457, 4294901760
      %4995 = vmatpush1.msra.mxu0 %v4994
      %v4996 = vand.u32 %v4460, 4294901760
      %4997 = vmatprep.subr.mxu0 %v4996
      %v4998 = vand.u32 %v4459, 4294901760
      %4999 = vmatpush1.msra.mxu0 %v4998
      %v5000 = vand.u32 %v4462, 4294901760
      %5001 = vmatprep.subr.mxu0 %v5000
      %v5002 = vand.u32 %v4461, 4294901760
      %5003 = vmatpush1.msra.mxu0 %v5002
      %v5004 = vand.u32 %v4464, 4294901760
      %5005 = vmatprep.subr.mxu0 %v5004
      %v5006 = vand.u32 %v4463, 4294901760
      %5007 = vmatpush1.msra.mxu0 %v5006
      %5008 = vmatprep.subr.mxu0 0.0
      %5009 = vmatpush1.msra.mxu0 0.0
      %5010 = vmatprep.subr.mxu0 0.0
      %5011 = vmatpush1.msra.mxu0 0.0
      %5012 = vmatprep.subr.mxu0 0.0
      %5013 = vmatpush1.msra.mxu0 0.0
      %5014 = vmatprep.subr.mxu0 0.0
      %5015 = vmatpush1.msra.mxu0 0.0
      %5016 = vmatprep.subr.mxu0 0.0
      %5017 = vmatpush1.msra.mxu0 0.0
      %5018 = vmatprep.subr.mxu0 0.0
      %5019 = vmatpush1.msra.mxu0 0.0
      %5020 = vmatprep.subr.mxu0 0.0
      %5021 = vmatpush1.msra.mxu0 0.0
      %5022 = vmatprep.subr.mxu0 0.0
      %5023 = vmatpush1.msra.mxu0 0.0
      %5024 = vmatprep.subr.mxu0 0.0
      %5025 = vmatpush1.msra.mxu0 0.0
      %5026 = vmatprep.subr.mxu0 0.0
      %5027 = vmatpush1.msra.mxu0 0.0
      %5028 = vmatprep.subr.mxu0 0.0
      %5029 = vmatpush1.msra.mxu0 0.0
      %5030 = vmatprep.subr.mxu0 0.0
      %5031 = vmatpush1.msra.mxu0 0.0
      %5032 = vmatprep.subr.mxu0 0.0
      %5033 = vmatpush1.msra.mxu0 0.0
      %5034 = vmatprep.subr.mxu0 0.0
      %5035 = vmatpush1.msra.mxu0 0.0
      %5036 = vmatprep.subr.mxu0 0.0
      %5037 = vmatpush1.msra.mxu0 0.0
      %5038 = vmatprep.subr.mxu0 0.0
      %5039 = vmatpush1.msra.mxu0 0.0
      %5040 = vmatprep.subr.mxu0 0.0
      %5041 = vmatpush1.msra.mxu0 0.0
      %5042 = vmatprep.subr.mxu0 0.0
      %5043 = vmatpush1.msra.mxu0 0.0
      %5044 = vmatprep.subr.mxu0 0.0
      %5045 = vmatpush1.msra.mxu0 0.0
      %5046 = vmatprep.subr.mxu0 0.0
      %5047 = vmatpush1.msra.mxu0 0.0
      %5048 = vmatprep.subr.mxu0 0.0
      %5049 = vmatpush1.msra.mxu0 0.0
      %5050 = vmatprep.subr.mxu0 0.0
      %5051 = vmatpush1.msra.mxu0 0.0
      %5052 = vmatprep.subr.mxu0 0.0
      %5053 = vmatpush1.msra.mxu0 0.0
      %5054 = vmatprep.subr.mxu0 0.0
      %5055 = vmatpush1.msra.mxu0 0.0
      %5056 = vmatprep.subr.mxu0 0.0
      %5057 = vmatpush1.msra.mxu0 0.0
      %5058 = vmatprep.subr.mxu0 0.0
      %5059 = vmatpush1.msra.mxu0 0.0
      %5060 = vmatprep.subr.mxu0 0.0
      %5061 = vmatpush1.msra.mxu0 0.0
      %5062 = vmatprep.subr.mxu0 0.0
      %5063 = vmatpush1.msra.mxu0 0.0
      %5064 = vmatprep.mubr.f32.mxu0 0.0
      %v5065 = vand.u32 %v4482, 4294901760
      %5066 = vmatmul.mubr.f32.gmra.mrb[0].mxu0 %v5065
      %v5067 = vpop.f32.mrb[0].mxu0
      %v5068 = vadd.f32 %v4981, %v5067
      %v5069 = vpop.f32.mrb[0].mxu0
      %v5070 = vadd.f32 %v4983, %v5069
      %5071 = vmatprep.mubr.f32.mxu0 0.0
      %v5072 = vand.u32 %v4485, 4294901760
      %5073 = vmatmul.mubr.f32.gmra.mrb[0].mxu0 %v5072
      %v5074 = vpop.f32.mrb[0].mxu0
      %v5075 = vadd.f32 %v4988, %v5074
      %v5076 = vpop.f32.mrb[0].mxu0
      %v5077 = vadd.f32 %v4990, %v5076
      %5078 = vdwg.mxu0
      %v5079 = vand.u32 2147483647, %v5068
      %v5080 = vand.u32 2147483647, %v5070
      %v5081 = vand.u32 2147483647, %v5075
      %v5082 = vand.u32 2147483647, %v5077
      %v5083 = vrcp.pop %v5079
      %v5084 = vrcp.pop %v5080
      %v5085 = vrcp.pop %v5081
      %v5086 = vrcp.pop %v5082
      %vm5087 = vcmp.gt.f32.partialorder %v5079, 1.0
      %vm5088 = vcmp.gt.f32.partialorder %v5080, 1.0
      %vm5089 = vcmp.gt.f32.partialorder %v5081, 1.0
      %vm5090 = vcmp.gt.f32.partialorder %v5082, 1.0
      %v5091 = vsel %vm5087, %v5083, %v5079
      %v5092 = vsel %vm5088, %v5084, %v5080
      %v5093 = vsel %vm5089, %v5085, %v5081
      %v5094 = vsel %vm5090, %v5086, %v5082
      %v5095 = vmul.f32 %v5091, %v5091
      %v5096 = vmul.f32 %v5092, %v5092
      %v5097 = vmul.f32 %v5093, %v5093
      %v5098 = vmul.f32 %v5094, %v5094
      %v5099 = vmul.f32 %v5095, -0.0117212
      %v5100 = vmul.f32 %v5096, -0.0117212
      %v5101 = vmul.f32 %v5097, -0.0117212
      %v5102 = vmul.f32 %v5098, -0.0117212
      %v5103 = vadd.f32 %v5099, 0.05265332
      %v5104 = vadd.f32 %v5100, 0.05265332
      %v5105 = vadd.f32 %v5101, 0.05265332
      %v5106 = vadd.f32 %v5102, 0.05265332
      %v5107 = vmul.f32 %v5103, %v5095
      %v5108 = vmul.f32 %v5104, %v5096
      %v5109 = vmul.f32 %v5105, %v5097
      %v5110 = vmul.f32 %v5106, %v5098
      %v5111 = vadd.f32 %v5107, -0.11643287
      %v5112 = vadd.f32 %v5108, -0.11643287
      %v5113 = vadd.f32 %v5109, -0.11643287
      %v5114 = vadd.f32 %v5110, -0.11643287
      %v5115 = vmul.f32 %v5111, %v5095
      %v5116 = vmul.f32 %v5112, %v5096
      %v5117 = vmul.f32 %v5113, %v5097
      %v5118 = vmul.f32 %v5114, %v5098
      %v5119 = vadd.f32 %v5115, 0.19354346
      %v5120 = vadd.f32 %v5116, 0.19354346
      %v5121 = vadd.f32 %v5117, 0.19354346
      %v5122 = vadd.f32 %v5118, 0.19354346
      %v5123 = vmul.f32 %v5119, %v5095
      %v5124 = vmul.f32 %v5120, %v5096
      %v5125 = vmul.f32 %v5121, %v5097
      %v5126 = vmul.f32 %v5122, %v5098
      %v5127 = vadd.f32 %v5123, -0.33262348
      %v5128 = vadd.f32 %v5124, -0.33262348
      %v5129 = vadd.f32 %v5125, -0.33262348
      %v5130 = vadd.f32 %v5126, -0.33262348
      %v5131 = vmul.f32 %v5127, %v5095
      %v5132 = vmul.f32 %v5128, %v5096
      %v5133 = vmul.f32 %v5129, %v5097
      %v5134 = vmul.f32 %v5130, %v5098
      %v5135 = vadd.f32 %v5131, 0.99997723
      %v5136 = vadd.f32 %v5132, 0.99997723
      %v5137 = vadd.f32 %v5133, 0.99997723
      %v5138 = vadd.f32 %v5134, 0.99997723
      %v5139 = vmul.f32 %v5135, %v5091
      %v5140 = vmul.f32 %v5136, %v5092
      %v5141 = vmul.f32 %v5137, %v5093
      %v5142 = vmul.f32 %v5138, %v5094
      %v5143 = vsub.f32 1.5707964, %v5139
      %v5144 = vsub.f32 1.5707964, %v5140
      %v5145 = vsub.f32 1.5707964, %v5141
      %v5146 = vsub.f32 1.5707964, %v5142
      %v5147 = vsel %vm5087, %v5143, %v5139
      %v5148 = vsel %vm5088, %v5144, %v5140
      %v5149 = vsel %vm5089, %v5145, %v5141
      %v5150 = vsel %vm5090, %v5146, %v5142
      %vm5151 = vcmp.lt.f32.partialorder %v5068, 0.0
      %vm5152 = vcmp.lt.f32.partialorder %v5070, 0.0
      %vm5153 = vcmp.lt.f32.partialorder %v5075, 0.0
      %vm5154 = vcmp.lt.f32.partialorder %v5077, 0.0
      %v5155 = vsub.f32 0.0, %v5147
      %v5156 = vsub.f32 0.0, %v5148
      %v5157 = vsub.f32 0.0, %v5149
      %v5158 = vsub.f32 0.0, %v5150
      %v5159 = vsel %vm5151, %v5155, %v5147
      %v5160 = vsel %vm5152, %v5156, %v5148
      %v5161 = vsel %vm5153, %v5157, %v5149
      %v5162 = vsel %vm5154, %v5158, %v5150
      %v5163 = vmul.f32 %v5159, %v5159
      %v5164 = vmul.f32 %v5160, %v5160
      %v5165 = vmul.f32 %v5161, %v5161
      %v5166 = vmul.f32 %v5162, %v5162
      %s5167 = scalar_lea.vmem %s3, 96
      %v5168 = vld [vmem:[%s5167] sm:$0xff]
      %v5169 = vld [vmem:[%s5167 + $0x8] sm:$0xff]
      %s5170 = scalar_lea.vmem %s4, 96
      %v5171 = vld [vmem:[%s5170] sm:$0xff]
      %v5172 = vld [vmem:[%s5170 + $0x8] sm:$0xff]
      %5174 = vset.pattern.permute.xlu0 0
      %5175 = vperm.xlu0 %5174, %v5171
      %v5176 = vpop.permute.xlu0 %5175
      %5179 = vset.pattern.permute.xlu0 0
      %5180 = vperm.xlu0 %5179, %v5172
      %v5181 = vpop.permute.xlu0 %5180
      %v5184 = vsel %vm970, %v5168, 0
      %v5187 = vsel %vm970, %v5169, 0
      %v5189 = vand.u32 %v5160, 4294901760
      %5190 = vmatprep.subr.mxu0 %v5189
      %v5191 = vand.u32 %v5159, 4294901760
      %5192 = vmatpush1.msra.mxu0 %v5191
      %v5193 = vand.u32 %v5162, 4294901760
      %5194 = vmatprep.subr.mxu0 %v5193
      %v5195 = vand.u32 %v5161, 4294901760
      %5196 = vmatpush1.msra.mxu0 %v5195
      %v5197 = vand.u32 %v5164, 4294901760
      %5198 = vmatprep.subr.mxu0 %v5197
      %v5199 = vand.u32 %v5163, 4294901760
      %5200 = vmatpush1.msra.mxu0 %v5199
      %v5201 = vand.u32 %v5166, 4294901760
      %5202 = vmatprep.subr.mxu0 %v5201
      %v5203 = vand.u32 %v5165, 4294901760
      %5204 = vmatpush1.msra.mxu0 %v5203
      %5205 = vmatprep.subr.mxu0 0.0
      %5206 = vmatpush1.msra.mxu0 0.0
      %5207 = vmatprep.subr.mxu0 0.0
      %5208 = vmatpush1.msra.mxu0 0.0
      %5209 = vmatprep.subr.mxu0 0.0
      %5210 = vmatpush1.msra.mxu0 0.0
      %5211 = vmatprep.subr.mxu0 0.0
      %5212 = vmatpush1.msra.mxu0 0.0
      %5213 = vmatprep.subr.mxu0 0.0
      %5214 = vmatpush1.msra.mxu0 0.0
      %5215 = vmatprep.subr.mxu0 0.0
      %5216 = vmatpush1.msra.mxu0 0.0
      %5217 = vmatprep.subr.mxu0 0.0
      %5218 = vmatpush1.msra.mxu0 0.0
      %5219 = vmatprep.subr.mxu0 0.0
      %5220 = vmatpush1.msra.mxu0 0.0
      %5221 = vmatprep.subr.mxu0 0.0
      %5222 = vmatpush1.msra.mxu0 0.0
      %5223 = vmatprep.subr.mxu0 0.0
      %5224 = vmatpush1.msra.mxu0 0.0
      %5225 = vmatprep.subr.mxu0 0.0
      %5226 = vmatpush1.msra.mxu0 0.0
      %5227 = vmatprep.subr.mxu0 0.0
      %5228 = vmatpush1.msra.mxu0 0.0
      %5229 = vmatprep.subr.mxu0 0.0
      %5230 = vmatpush1.msra.mxu0 0.0
      %5231 = vmatprep.subr.mxu0 0.0
      %5232 = vmatpush1.msra.mxu0 0.0
      %5233 = vmatprep.subr.mxu0 0.0
      %5234 = vmatpush1.msra.mxu0 0.0
      %5235 = vmatprep.subr.mxu0 0.0
      %5236 = vmatpush1.msra.mxu0 0.0
      %5237 = vmatprep.subr.mxu0 0.0
      %5238 = vmatpush1.msra.mxu0 0.0
      %5239 = vmatprep.subr.mxu0 0.0
      %5240 = vmatpush1.msra.mxu0 0.0
      %5241 = vmatprep.subr.mxu0 0.0
      %5242 = vmatpush1.msra.mxu0 0.0
      %5243 = vmatprep.subr.mxu0 0.0
      %5244 = vmatpush1.msra.mxu0 0.0
      %5245 = vmatprep.subr.mxu0 0.0
      %5246 = vmatpush1.msra.mxu0 0.0
      %5247 = vmatprep.subr.mxu0 0.0
      %5248 = vmatpush1.msra.mxu0 0.0
      %5249 = vmatprep.subr.mxu0 0.0
      %5250 = vmatpush1.msra.mxu0 0.0
      %5251 = vmatprep.subr.mxu0 0.0
      %5252 = vmatpush1.msra.mxu0 0.0
      %5253 = vmatprep.subr.mxu0 0.0
      %5254 = vmatpush1.msra.mxu0 0.0
      %5255 = vmatprep.subr.mxu0 0.0
      %5256 = vmatpush1.msra.mxu0 0.0
      %5257 = vmatprep.subr.mxu0 0.0
      %5258 = vmatpush1.msra.mxu0 0.0
      %5259 = vmatprep.subr.mxu0 0.0
      %5260 = vmatpush1.msra.mxu0 0.0
      %5261 = vmatprep.mubr.f32.mxu0 0.0
      %v5262 = vand.u32 %v5184, 4294901760
      %v5263 = vsub.f32 %v5184, %v5262
      %v5264 = vand.u32 %v5263, 4294901760
      %v5265 = vsub.f32 %v5263, %v5264
      %v5266 = vand.u32 %v5265, 4294901760
      %5267 = vmatmul.mubr.f32.gmra.mrb[0].mxu0 %v5266
      %v5268 = vpop.f32.mrb[0].mxu0
      %v5269 = vadd.f32 %v5176, %v5268
      %v5270 = vpop.f32.mrb[0].mxu0
      %v5271 = vadd.f32 %v5176, %v5270
      %5272 = vmatprep.mubr.f32.mxu0 0.0
      %v5273 = vand.u32 %v5187, 4294901760
      %v5274 = vsub.f32 %v5187, %v5273
      %v5275 = vand.u32 %v5274, 4294901760
      %v5276 = vsub.f32 %v5274, %v5275
      %v5277 = vand.u32 %v5276, 4294901760
      %5278 = vmatmul.mubr.f32.gmra.mrb[0].mxu0 %v5277
      %v5279 = vpop.f32.mrb[0].mxu0
      %v5280 = vadd.f32 %v5181, %v5279
      %v5281 = vpop.f32.mrb[0].mxu0
      %v5282 = vadd.f32 %v5181, %v5281
      %5283 = vdwg.mxu0
      %v5284 = vand.u32 %v5160, 4294901760
      %v5285 = vsub.f32 %v5160, %v5284
      %v5286 = vand.u32 %v5285, 4294901760
      %v5287 = vsub.f32 %v5285, %v5286
      %v5288 = vand.u32 %v5287, 4294901760
      %5289 = vmatprep.subr.mxu0 %v5288
      %v5290 = vand.u32 %v5159, 4294901760
      %v5291 = vsub.f32 %v5159, %v5290
      %v5292 = vand.u32 %v5291, 4294901760
      %v5293 = vsub.f32 %v5291, %v5292
      %v5294 = vand.u32 %v5293, 4294901760
      %5295 = vmatpush1.msra.mxu0 %v5294
      %v5296 = vand.u32 %v5162, 4294901760
      %v5297 = vsub.f32 %v5162, %v5296
      %v5298 = vand.u32 %v5297, 4294901760
      %v5299 = vsub.f32 %v5297, %v5298
      %v5300 = vand.u32 %v5299, 4294901760
      %5301 = vmatprep.subr.mxu0 %v5300
      %v5302 = vand.u32 %v5161, 4294901760
      %v5303 = vsub.f32 %v5161, %v5302
      %v5304 = vand.u32 %v5303, 4294901760
      %v5305 = vsub.f32 %v5303, %v5304
      %v5306 = vand.u32 %v5305, 4294901760
      %5307 = vmatpush1.msra.mxu0 %v5306
      %v5308 = vand.u32 %v5164, 4294901760
      %v5309 = vsub.f32 %v5164, %v5308
      %v5310 = vand.u32 %v5309, 4294901760
      %v5311 = vsub.f32 %v5309, %v5310
      %v5312 = vand.u32 %v5311, 4294901760
      %5313 = vmatprep.subr.mxu0 %v5312
      %v5314 = vand.u32 %v5163, 4294901760
      %v5315 = vsub.f32 %v5163, %v5314
      %v5316 = vand.u32 %v5315, 4294901760
      %v5317 = vsub.f32 %v5315, %v5316
      %v5318 = vand.u32 %v5317, 4294901760
      %5319 = vmatpush1.msra.mxu0 %v5318
      %v5320 = vand.u32 %v5166, 4294901760
      %v5321 = vsub.f32 %v5166, %v5320
      %v5322 = vand.u32 %v5321, 4294901760
      %v5323 = vsub.f32 %v5321, %v5322
      %v5324 = vand.u32 %v5323, 4294901760
      %5325 = vmatprep.subr.mxu0 %v5324
      %v5326 = vand.u32 %v5165, 4294901760
      %v5327 = vsub.f32 %v5165, %v5326
      %v5328 = vand.u32 %v5327, 4294901760
      %v5329 = vsub.f32 %v5327, %v5328
      %v5330 = vand.u32 %v5329, 4294901760
      %5331 = vmatpush1.msra.mxu0 %v5330
      %5332 = vmatprep.subr.mxu0 0.0
      %5333 = vmatpush1.msra.mxu0 0.0
      %5334 = vmatprep.subr.mxu0 0.0
      %5335 = vmatpush1.msra.mxu0 0.0
      %5336 = vmatprep.subr.mxu0 0.0
      %5337 = vmatpush1.msra.mxu0 0.0
      %5338 = vmatprep.subr.mxu0 0.0
      %5339 = vmatpush1.msra.mxu0 0.0
      %5340 = vmatprep.subr.mxu0 0.0
      %5341 = vmatpush1.msra.mxu0 0.0
      %5342 = vmatprep.subr.mxu0 0.0
      %5343 = vmatpush1.msra.mxu0 0.0
      %5344 = vmatprep.subr.mxu0 0.0
      %5345 = vmatpush1.msra.mxu0 0.0
      %5346 = vmatprep.subr.mxu0 0.0
      %5347 = vmatpush1.msra.mxu0 0.0
      %5348 = vmatprep.subr.mxu0 0.0
      %5349 = vmatpush1.msra.mxu0 0.0
      %5350 = vmatprep.subr.mxu0 0.0
      %5351 = vmatpush1.msra.mxu0 0.0
      %5352 = vmatprep.subr.mxu0 0.0
      %5353 = vmatpush1.msra.mxu0 0.0
      %5354 = vmatprep.subr.mxu0 0.0
      %5355 = vmatpush1.msra.mxu0 0.0
      %5356 = vmatprep.subr.mxu0 0.0
      %5357 = vmatpush1.msra.mxu0 0.0
      %5358 = vmatprep.subr.mxu0 0.0
      %5359 = vmatpush1.msra.mxu0 0.0
      %5360 = vmatprep.subr.mxu0 0.0
      %5361 = vmatpush1.msra.mxu0 0.0
      %5362 = vmatprep.subr.mxu0 0.0
      %5363 = vmatpush1.msra.mxu0 0.0
      %5364 = vmatprep.subr.mxu0 0.0
      %5365 = vmatpush1.msra.mxu0 0.0
      %5366 = vmatprep.subr.mxu0 0.0
      %5367 = vmatpush1.msra.mxu0 0.0
      %5368 = vmatprep.subr.mxu0 0.0
      %5369 = vmatpush1.msra.mxu0 0.0
      %5370 = vmatprep.subr.mxu0 0.0
      %5371 = vmatpush1.msra.mxu0 0.0
      %5372 = vmatprep.subr.mxu0 0.0
      %5373 = vmatpush1.msra.mxu0 0.0
      %5374 = vmatprep.subr.mxu0 0.0
      %5375 = vmatpush1.msra.mxu0 0.0
      %5376 = vmatprep.subr.mxu0 0.0
      %5377 = vmatpush1.msra.mxu0 0.0
      %5378 = vmatprep.subr.mxu0 0.0
      %5379 = vmatpush1.msra.mxu0 0.0
      %5380 = vmatprep.subr.mxu0 0.0
      %5381 = vmatpush1.msra.mxu0 0.0
      %5382 = vmatprep.subr.mxu0 0.0
      %5383 = vmatpush1.msra.mxu0 0.0
      %5384 = vmatprep.subr.mxu0 0.0
      %5385 = vmatpush1.msra.mxu0 0.0
      %5386 = vmatprep.subr.mxu0 0.0
      %5387 = vmatpush1.msra.mxu0 0.0
      %5388 = vmatprep.mubr.f32.mxu0 0.0
      %v5389 = vand.u32 %v5184, 4294901760
      %5390 = vmatmul.mubr.f32.gmra.mrb[0].mxu0 %v5389
      %v5391 = vpop.f32.mrb[0].mxu0
      %v5392 = vadd.f32 %v5269, %v5391
      %v5393 = vpop.f32.mrb[0].mxu0
      %v5394 = vadd.f32 %v5271, %v5393
      %5395 = vmatprep.mubr.f32.mxu0 0.0
      %v5396 = vand.u32 %v5187, 4294901760
      %5397 = vmatmul.mubr.f32.gmra.mrb[0].mxu0 %v5396
      %v5398 = vpop.f32.mrb[0].mxu0
      %v5399 = vadd.f32 %v5280, %v5398
      %v5400 = vpop.f32.mrb[0].mxu0
      %v5401 = vadd.f32 %v5282, %v5400
      %5402 = vdwg.mxu0
      %v5403 = vand.u32 %v5160, 4294901760
      %v5404 = vsub.f32 %v5160, %v5403
      %5405 = vmatprep.subr.mxu0 %v5404
      %v5406 = vand.u32 %v5159, 4294901760
      %v5407 = vsub.f32 %v5159, %v5406
      %5408 = vmatpush1.msra.mxu0 %v5407
      %v5409 = vand.u32 %v5162, 4294901760
      %v5410 = vsub.f32 %v5162, %v5409
      %5411 = vmatprep.subr.mxu0 %v5410
      %v5412 = vand.u32 %v5161, 4294901760
      %v5413 = vsub.f32 %v5161, %v5412
      %5414 = vmatpush1.msra.mxu0 %v5413
      %v5415 = vand.u32 %v5164, 4294901760
      %v5416 = vsub.f32 %v5164, %v5415
      %5417 = vmatprep.subr.mxu0 %v5416
      %v5418 = vand.u32 %v5163, 4294901760
      %v5419 = vsub.f32 %v5163, %v5418
      %5420 = vmatpush1.msra.mxu0 %v5419
      %v5421 = vand.u32 %v5166, 4294901760
      %v5422 = vsub.f32 %v5166, %v5421
      %5423 = vmatprep.subr.mxu0 %v5422
      %v5424 = vand.u32 %v5165, 4294901760
      %v5425 = vsub.f32 %v5165, %v5424
      %5426 = vmatpush1.msra.mxu0 %v5425
      %5427 = vmatprep.subr.mxu0 0.0
      %5428 = vmatpush1.msra.mxu0 0.0
      %5429 = vmatprep.subr.mxu0 0.0
      %5430 = vmatpush1.msra.mxu0 0.0
      %5431 = vmatprep.subr.mxu0 0.0
      %5432 = vmatpush1.msra.mxu0 0.0
      %5433 = vmatprep.subr.mxu0 0.0
      %5434 = vmatpush1.msra.mxu0 0.0
      %5435 = vmatprep.subr.mxu0 0.0
      %5436 = vmatpush1.msra.mxu0 0.0
      %5437 = vmatprep.subr.mxu0 0.0
      %5438 = vmatpush1.msra.mxu0 0.0
      %5439 = vmatprep.subr.mxu0 0.0
      %5440 = vmatpush1.msra.mxu0 0.0
      %5441 = vmatprep.subr.mxu0 0.0
      %5442 = vmatpush1.msra.mxu0 0.0
      %5443 = vmatprep.subr.mxu0 0.0
      %5444 = vmatpush1.msra.mxu0 0.0
      %5445 = vmatprep.subr.mxu0 0.0
      %5446 = vmatpush1.msra.mxu0 0.0
      %5447 = vmatprep.subr.mxu0 0.0
      %5448 = vmatpush1.msra.mxu0 0.0
      %5449 = vmatprep.subr.mxu0 0.0
      %5450 = vmatpush1.msra.mxu0 0.0
      %5451 = vmatprep.subr.mxu0 0.0
      %5452 = vmatpush1.msra.mxu0 0.0
      %5453 = vmatprep.subr.mxu0 0.0
      %5454 = vmatpush1.msra.mxu0 0.0
      %5455 = vmatprep.subr.mxu0 0.0
      %5456 = vmatpush1.msra.mxu0 0.0
      %5457 = vmatprep.subr.mxu0 0.0
      %5458 = vmatpush1.msra.mxu0 0.0
      %5459 = vmatprep.subr.mxu0 0.0
      %5460 = vmatpush1.msra.mxu0 0.0
      %5461 = vmatprep.subr.mxu0 0.0
      %5462 = vmatpush1.msra.mxu0 0.0
      %5463 = vmatprep.subr.mxu0 0.0
      %5464 = vmatpush1.msra.mxu0 0.0
      %5465 = vmatprep.subr.mxu0 0.0
      %5466 = vmatpush1.msra.mxu0 0.0
      %5467 = vmatprep.subr.mxu0 0.0
      %5468 = vmatpush1.msra.mxu0 0.0
      %5469 = vmatprep.subr.mxu0 0.0
      %5470 = vmatpush1.msra.mxu0 0.0
      %5471 = vmatprep.subr.mxu0 0.0
      %5472 = vmatpush1.msra.mxu0 0.0
      %5473 = vmatprep.subr.mxu0 0.0
      %5474 = vmatpush1.msra.mxu0 0.0
      %5475 = vmatprep.subr.mxu0 0.0
      %5476 = vmatpush1.msra.mxu0 0.0
      %5477 = vmatprep.subr.mxu0 0.0
      %5478 = vmatpush1.msra.mxu0 0.0
      %5479 = vmatprep.subr.mxu0 0.0
      %5480 = vmatpush1.msra.mxu0 0.0
      %5481 = vmatprep.subr.mxu0 0.0
      %5482 = vmatpush1.msra.mxu0 0.0
      %5483 = vmatprep.mubr.f32.mxu0 0.0
      %v5484 = vand.u32 %v5184, 4294901760
      %v5485 = vsub.f32 %v5184, %v5484
      %5486 = vmatmul.mubr.f32.gmra.mrb[0].mxu0 %v5485
      %v5487 = vpop.f32.mrb[0].mxu0
      %v5488 = vadd.f32 %v5392, %v5487
      %v5489 = vpop.f32.mrb[0].mxu0
      %v5490 = vadd.f32 %v5394, %v5489
      %5491 = vmatprep.mubr.f32.mxu0 0.0
      %v5492 = vand.u32 %v5187, 4294901760
      %v5493 = vsub.f32 %v5187, %v5492
      %5494 = vmatmul.mubr.f32.gmra.mrb[0].mxu0 %v5493
      %v5495 = vpop.f32.mrb[0].mxu0
      %v5496 = vadd.f32 %v5399, %v5495
      %v5497 = vpop.f32.mrb[0].mxu0
      %v5498 = vadd.f32 %v5401, %v5497
      %5499 = vdwg.mxu0
      %v5500 = vand.u32 %v5160, 4294901760
      %5501 = vmatprep.subr.mxu0 %v5500
      %v5502 = vand.u32 %v5159, 4294901760
      %5503 = vmatpush1.msra.mxu0 %v5502
      %v5504 = vand.u32 %v5162, 4294901760
      %5505 = vmatprep.subr.mxu0 %v5504
      %v5506 = vand.u32 %v5161, 4294901760
      %5507 = vmatpush1.msra.mxu0 %v5506
      %v5508 = vand.u32 %v5164, 4294901760
      %5509 = vmatprep.subr.mxu0 %v5508
      %v5510 = vand.u32 %v5163, 4294901760
      %5511 = vmatpush1.msra.mxu0 %v5510
      %v5512 = vand.u32 %v5166, 4294901760
      %5513 = vmatprep.subr.mxu0 %v5512
      %v5514 = vand.u32 %v5165, 4294901760
      %5515 = vmatpush1.msra.mxu0 %v5514
      %5516 = vmatprep.subr.mxu0 0.0
      %5517 = vmatpush1.msra.mxu0 0.0
      %5518 = vmatprep.subr.mxu0 0.0
      %5519 = vmatpush1.msra.mxu0 0.0
      %5520 = vmatprep.subr.mxu0 0.0
      %5521 = vmatpush1.msra.mxu0 0.0
      %5522 = vmatprep.subr.mxu0 0.0
      %5523 = vmatpush1.msra.mxu0 0.0
      %5524 = vmatprep.subr.mxu0 0.0
      %5525 = vmatpush1.msra.mxu0 0.0
      %5526 = vmatprep.subr.mxu0 0.0
      %5527 = vmatpush1.msra.mxu0 0.0
      %5528 = vmatprep.subr.mxu0 0.0
      %5529 = vmatpush1.msra.mxu0 0.0
      %5530 = vmatprep.subr.mxu0 0.0
      %5531 = vmatpush1.msra.mxu0 0.0
      %5532 = vmatprep.subr.mxu0 0.0
      %5533 = vmatpush1.msra.mxu0 0.0
      %5534 = vmatprep.subr.mxu0 0.0
      %5535 = vmatpush1.msra.mxu0 0.0
      %5536 = vmatprep.subr.mxu0 0.0
      %5537 = vmatpush1.msra.mxu0 0.0
      %5538 = vmatprep.subr.mxu0 0.0
      %5539 = vmatpush1.msra.mxu0 0.0
      %5540 = vmatprep.subr.mxu0 0.0
      %5541 = vmatpush1.msra.mxu0 0.0
      %5542 = vmatprep.subr.mxu0 0.0
      %5543 = vmatpush1.msra.mxu0 0.0
      %5544 = vmatprep.subr.mxu0 0.0
      %5545 = vmatpush1.msra.mxu0 0.0
      %5546 = vmatprep.subr.mxu0 0.0
      %5547 = vmatpush1.msra.mxu0 0.0
      %5548 = vmatprep.subr.mxu0 0.0
      %5549 = vmatpush1.msra.mxu0 0.0
      %5550 = vmatprep.subr.mxu0 0.0
      %5551 = vmatpush1.msra.mxu0 0.0
      %5552 = vmatprep.subr.mxu0 0.0
      %5553 = vmatpush1.msra.mxu0 0.0
      %5554 = vmatprep.subr.mxu0 0.0
      %5555 = vmatpush1.msra.mxu0 0.0
      %5556 = vmatprep.subr.mxu0 0.0
      %5557 = vmatpush1.msra.mxu0 0.0
      %5558 = vmatprep.subr.mxu0 0.0
      %5559 = vmatpush1.msra.mxu0 0.0
      %5560 = vmatprep.subr.mxu0 0.0
      %5561 = vmatpush1.msra.mxu0 0.0
      %5562 = vmatprep.subr.mxu0 0.0
      %5563 = vmatpush1.msra.mxu0 0.0
      %5564 = vmatprep.subr.mxu0 0.0
      %5565 = vmatpush1.msra.mxu0 0.0
      %5566 = vmatprep.subr.mxu0 0.0
      %5567 = vmatpush1.msra.mxu0 0.0
      %5568 = vmatprep.subr.mxu0 0.0
      %5569 = vmatpush1.msra.mxu0 0.0
      %5570 = vmatprep.subr.mxu0 0.0
      %5571 = vmatpush1.msra.mxu0 0.0
      %5572 = vmatprep.mubr.f32.mxu0 0.0
      %v5573 = vand.u32 %v5184, 4294901760
      %v5574 = vsub.f32 %v5184, %v5573
      %v5575 = vand.u32 %v5574, 4294901760
      %5576 = vmatmul.mubr.f32.gmra.mrb[0].mxu0 %v5575
      %v5577 = vpop.f32.mrb[0].mxu0
      %v5578 = vadd.f32 %v5488, %v5577
      %v5579 = vpop.f32.mrb[0].mxu0
      %v5580 = vadd.f32 %v5490, %v5579
      %5581 = vmatprep.mubr.f32.mxu0 0.0
      %v5582 = vand.u32 %v5187, 4294901760
      %v5583 = vsub.f32 %v5187, %v5582
      %v5584 = vand.u32 %v5583, 4294901760
      %5585 = vmatmul.mubr.f32.gmra.mrb[0].mxu0 %v5584
      %v5586 = vpop.f32.mrb[0].mxu0
      %v5587 = vadd.f32 %v5496, %v5586
      %v5588 = vpop.f32.mrb[0].mxu0
      %v5589 = vadd.f32 %v5498, %v5588
      %5590 = vdwg.mxu0
      %v5591 = vand.u32 %v5160, 4294901760
      %v5592 = vsub.f32 %v5160, %v5591
      %v5593 = vand.u32 %v5592, 4294901760
      %5594 = vmatprep.subr.mxu0 %v5593
      %v5595 = vand.u32 %v5159, 4294901760
      %v5596 = vsub.f32 %v5159, %v5595
      %v5597 = vand.u32 %v5596, 4294901760
      %5598 = vmatpush1.msra.mxu0 %v5597
      %v5599 = vand.u32 %v5162, 4294901760
      %v5600 = vsub.f32 %v5162, %v5599
      %v5601 = vand.u32 %v5600, 4294901760
      %5602 = vmatprep.subr.mxu0 %v5601
      %v5603 = vand.u32 %v5161, 4294901760
      %v5604 = vsub.f32 %v5161, %v5603
      %v5605 = vand.u32 %v5604, 4294901760
      %5606 = vmatpush1.msra.mxu0 %v5605
      %v5607 = vand.u32 %v5164, 4294901760
      %v5608 = vsub.f32 %v5164, %v5607
      %v5609 = vand.u32 %v5608, 4294901760
      %5610 = vmatprep.subr.mxu0 %v5609
      %v5611 = vand.u32 %v5163, 4294901760
      %v5612 = vsub.f32 %v5163, %v5611
      %v5613 = vand.u32 %v5612, 4294901760
      %5614 = vmatpush1.msra.mxu0 %v5613
      %v5615 = vand.u32 %v5166, 4294901760
      %v5616 = vsub.f32 %v5166, %v5615
      %v5617 = vand.u32 %v5616, 4294901760
      %5618 = vmatprep.subr.mxu0 %v5617
      %v5619 = vand.u32 %v5165, 4294901760
      %v5620 = vsub.f32 %v5165, %v5619
      %v5621 = vand.u32 %v5620, 4294901760
      %5622 = vmatpush1.msra.mxu0 %v5621
      %5623 = vmatprep.subr.mxu0 0.0
      %5624 = vmatpush1.msra.mxu0 0.0
      %5625 = vmatprep.subr.mxu0 0.0
      %5626 = vmatpush1.msra.mxu0 0.0
      %5627 = vmatprep.subr.mxu0 0.0
      %5628 = vmatpush1.msra.mxu0 0.0
      %5629 = vmatprep.subr.mxu0 0.0
      %5630 = vmatpush1.msra.mxu0 0.0
      %5631 = vmatprep.subr.mxu0 0.0
      %5632 = vmatpush1.msra.mxu0 0.0
      %5633 = vmatprep.subr.mxu0 0.0
      %5634 = vmatpush1.msra.mxu0 0.0
      %5635 = vmatprep.subr.mxu0 0.0
      %5636 = vmatpush1.msra.mxu0 0.0
      %5637 = vmatprep.subr.mxu0 0.0
      %5638 = vmatpush1.msra.mxu0 0.0
      %5639 = vmatprep.subr.mxu0 0.0
      %5640 = vmatpush1.msra.mxu0 0.0
      %5641 = vmatprep.subr.mxu0 0.0
      %5642 = vmatpush1.msra.mxu0 0.0
      %5643 = vmatprep.subr.mxu0 0.0
      %5644 = vmatpush1.msra.mxu0 0.0
      %5645 = vmatprep.subr.mxu0 0.0
      %5646 = vmatpush1.msra.mxu0 0.0
      %5647 = vmatprep.subr.mxu0 0.0
      %5648 = vmatpush1.msra.mxu0 0.0
      %5649 = vmatprep.subr.mxu0 0.0
      %5650 = vmatpush1.msra.mxu0 0.0
      %5651 = vmatprep.subr.mxu0 0.0
      %5652 = vmatpush1.msra.mxu0 0.0
      %5653 = vmatprep.subr.mxu0 0.0
      %5654 = vmatpush1.msra.mxu0 0.0
      %5655 = vmatprep.subr.mxu0 0.0
      %5656 = vmatpush1.msra.mxu0 0.0
      %5657 = vmatprep.subr.mxu0 0.0
      %5658 = vmatpush1.msra.mxu0 0.0
      %5659 = vmatprep.subr.mxu0 0.0
      %5660 = vmatpush1.msra.mxu0 0.0
      %5661 = vmatprep.subr.mxu0 0.0
      %5662 = vmatpush1.msra.mxu0 0.0
      %5663 = vmatprep.subr.mxu0 0.0
      %5664 = vmatpush1.msra.mxu0 0.0
      %5665 = vmatprep.subr.mxu0 0.0
      %5666 = vmatpush1.msra.mxu0 0.0
      %5667 = vmatprep.subr.mxu0 0.0
      %5668 = vmatpush1.msra.mxu0 0.0
      %5669 = vmatprep.subr.mxu0 0.0
      %5670 = vmatpush1.msra.mxu0 0.0
      %5671 = vmatprep.subr.mxu0 0.0
      %5672 = vmatpush1.msra.mxu0 0.0
      %5673 = vmatprep.subr.mxu0 0.0
      %5674 = vmatpush1.msra.mxu0 0.0
      %5675 = vmatprep.subr.mxu0 0.0
      %5676 = vmatpush1.msra.mxu0 0.0
      %5677 = vmatprep.subr.mxu0 0.0
      %5678 = vmatpush1.msra.mxu0 0.0
      %5679 = vmatprep.mubr.f32.mxu0 0.0
      %v5680 = vand.u32 %v5184, 4294901760
      %5681 = vmatmul.mubr.f32.gmra.mrb[0].mxu0 %v5680
      %v5682 = vpop.f32.mrb[0].mxu0
      %v5683 = vadd.f32 %v5578, %v5682
      %v5684 = vpop.f32.mrb[0].mxu0
      %v5685 = vadd.f32 %v5580, %v5684
      %5686 = vmatprep.mubr.f32.mxu0 0.0
      %v5687 = vand.u32 %v5187, 4294901760
      %5688 = vmatmul.mubr.f32.gmra.mrb[0].mxu0 %v5687
      %v5689 = vpop.f32.mrb[0].mxu0
      %v5690 = vadd.f32 %v5587, %v5689
      %v5691 = vpop.f32.mrb[0].mxu0
      %v5692 = vadd.f32 %v5589, %v5691
      %5693 = vdwg.mxu0
      %v5694 = vand.u32 %v5160, 4294901760
      %5695 = vmatprep.subr.mxu0 %v5694
      %v5696 = vand.u32 %v5159, 4294901760
      %5697 = vmatpush1.msra.mxu0 %v5696
      %v5698 = vand.u32 %v5162, 4294901760
      %5699 = vmatprep.subr.mxu0 %v5698
      %v5700 = vand.u32 %v5161, 4294901760
      %5701 = vmatpush1.msra.mxu0 %v5700
      %v5702 = vand.u32 %v5164, 4294901760
      %5703 = vmatprep.subr.mxu0 %v5702
      %v5704 = vand.u32 %v5163, 4294901760
      %5705 = vmatpush1.msra.mxu0 %v5704
      %v5706 = vand.u32 %v5166, 4294901760
      %5707 = vmatprep.subr.mxu0 %v5706
      %v5708 = vand.u32 %v5165, 4294901760
      %5709 = vmatpush1.msra.mxu0 %v5708
      %5710 = vmatprep.subr.mxu0 0.0
      %5711 = vmatpush1.msra.mxu0 0.0
      %5712 = vmatprep.subr.mxu0 0.0
      %5713 = vmatpush1.msra.mxu0 0.0
      %5714 = vmatprep.subr.mxu0 0.0
      %5715 = vmatpush1.msra.mxu0 0.0
      %5716 = vmatprep.subr.mxu0 0.0
      %5717 = vmatpush1.msra.mxu0 0.0
      %5718 = vmatprep.subr.mxu0 0.0
      %5719 = vmatpush1.msra.mxu0 0.0
      %5720 = vmatprep.subr.mxu0 0.0
      %5721 = vmatpush1.msra.mxu0 0.0
      %5722 = vmatprep.subr.mxu0 0.0
      %5723 = vmatpush1.msra.mxu0 0.0
      %5724 = vmatprep.subr.mxu0 0.0
      %5725 = vmatpush1.msra.mxu0 0.0
      %5726 = vmatprep.subr.mxu0 0.0
      %5727 = vmatpush1.msra.mxu0 0.0
      %5728 = vmatprep.subr.mxu0 0.0
      %5729 = vmatpush1.msra.mxu0 0.0
      %5730 = vmatprep.subr.mxu0 0.0
      %5731 = vmatpush1.msra.mxu0 0.0
      %5732 = vmatprep.subr.mxu0 0.0
      %5733 = vmatpush1.msra.mxu0 0.0
      %5734 = vmatprep.subr.mxu0 0.0
      %5735 = vmatpush1.msra.mxu0 0.0
      %5736 = vmatprep.subr.mxu0 0.0
      %5737 = vmatpush1.msra.mxu0 0.0
      %5738 = vmatprep.subr.mxu0 0.0
      %5739 = vmatpush1.msra.mxu0 0.0
      %5740 = vmatprep.subr.mxu0 0.0
      %5741 = vmatpush1.msra.mxu0 0.0
      %5742 = vmatprep.subr.mxu0 0.0
      %5743 = vmatpush1.msra.mxu0 0.0
      %5744 = vmatprep.subr.mxu0 0.0
      %5745 = vmatpush1.msra.mxu0 0.0
      %5746 = vmatprep.subr.mxu0 0.0
      %5747 = vmatpush1.msra.mxu0 0.0
      %5748 = vmatprep.subr.mxu0 0.0
      %5749 = vmatpush1.msra.mxu0 0.0
      %5750 = vmatprep.subr.mxu0 0.0
      %5751 = vmatpush1.msra.mxu0 0.0
      %5752 = vmatprep.subr.mxu0 0.0
      %5753 = vmatpush1.msra.mxu0 0.0
      %5754 = vmatprep.subr.mxu0 0.0
      %5755 = vmatpush1.msra.mxu0 0.0
      %5756 = vmatprep.subr.mxu0 0.0
      %5757 = vmatpush1.msra.mxu0 0.0
      %5758 = vmatprep.subr.mxu0 0.0
      %5759 = vmatpush1.msra.mxu0 0.0
      %5760 = vmatprep.subr.mxu0 0.0
      %5761 = vmatpush1.msra.mxu0 0.0
      %5762 = vmatprep.subr.mxu0 0.0
      %5763 = vmatpush1.msra.mxu0 0.0
      %5764 = vmatprep.subr.mxu0 0.0
      %5765 = vmatpush1.msra.mxu0 0.0
      %5766 = vmatprep.mubr.f32.mxu0 0.0
      %v5767 = vand.u32 %v5184, 4294901760
      %5768 = vmatmul.mubr.f32.gmra.mrb[0].mxu0 %v5767
      %v5769 = vpop.f32.mrb[0].mxu0
      %v5770 = vadd.f32 %v5683, %v5769
      %v5771 = vpop.f32.mrb[0].mxu0
      %v5772 = vadd.f32 %v5685, %v5771
      %5773 = vmatprep.mubr.f32.mxu0 0.0
      %v5774 = vand.u32 %v5187, 4294901760
      %5775 = vmatmul.mubr.f32.gmra.mrb[0].mxu0 %v5774
      %v5776 = vpop.f32.mrb[0].mxu0
      %v5777 = vadd.f32 %v5690, %v5776
      %v5778 = vpop.f32.mrb[0].mxu0
      %v5779 = vadd.f32 %v5692, %v5778
      %5780 = vdwg.mxu0
      %v5781 = vand.u32 2147483647, %v5770
      %v5782 = vand.u32 2147483647, %v5772
      %v5783 = vand.u32 2147483647, %v5777
      %v5784 = vand.u32 2147483647, %v5779
      %v5785 = vrcp.pop %v5781
      %v5786 = vrcp.pop %v5782
      %v5787 = vrcp.pop %v5783
      %v5788 = vrcp.pop %v5784
      %vm5789 = vcmp.gt.f32.partialorder %v5781, 1.0
      %vm5790 = vcmp.gt.f32.partialorder %v5782, 1.0
      %vm5791 = vcmp.gt.f32.partialorder %v5783, 1.0
      %vm5792 = vcmp.gt.f32.partialorder %v5784, 1.0
      %v5793 = vsel %vm5789, %v5785, %v5781
      %v5794 = vsel %vm5790, %v5786, %v5782
      %v5795 = vsel %vm5791, %v5787, %v5783
      %v5796 = vsel %vm5792, %v5788, %v5784
      %v5797 = vmul.f32 %v5793, %v5793
      %v5798 = vmul.f32 %v5794, %v5794
      %v5799 = vmul.f32 %v5795, %v5795
      %v5800 = vmul.f32 %v5796, %v5796
      %v5801 = vmul.f32 %v5797, -0.0117212
      %v5802 = vmul.f32 %v5798, -0.0117212
      %v5803 = vmul.f32 %v5799, -0.0117212
      %v5804 = vmul.f32 %v5800, -0.0117212
      %v5805 = vadd.f32 %v5801, 0.05265332
      %v5806 = vadd.f32 %v5802, 0.05265332
      %v5807 = vadd.f32 %v5803, 0.05265332
      %v5808 = vadd.f32 %v5804, 0.05265332
      %v5809 = vmul.f32 %v5805, %v5797
      %v5810 = vmul.f32 %v5806, %v5798
      %v5811 = vmul.f32 %v5807, %v5799
      %v5812 = vmul.f32 %v5808, %v5800
      %v5813 = vadd.f32 %v5809, -0.11643287
      %v5814 = vadd.f32 %v5810, -0.11643287
      %v5815 = vadd.f32 %v5811, -0.11643287
      %v5816 = vadd.f32 %v5812, -0.11643287
      %v5817 = vmul.f32 %v5813, %v5797
      %v5818 = vmul.f32 %v5814, %v5798
      %v5819 = vmul.f32 %v5815, %v5799
      %v5820 = vmul.f32 %v5816, %v5800
      %v5821 = vadd.f32 %v5817, 0.19354346
      %v5822 = vadd.f32 %v5818, 0.19354346
      %v5823 = vadd.f32 %v5819, 0.19354346
      %v5824 = vadd.f32 %v5820, 0.19354346
      %v5825 = vmul.f32 %v5821, %v5797
      %v5826 = vmul.f32 %v5822, %v5798
      %v5827 = vmul.f32 %v5823, %v5799
      %v5828 = vmul.f32 %v5824, %v5800
      %v5829 = vadd.f32 %v5825, -0.33262348
      %v5830 = vadd.f32 %v5826, -0.33262348
      %v5831 = vadd.f32 %v5827, -0.33262348
      %v5832 = vadd.f32 %v5828, -0.33262348
      %v5833 = vmul.f32 %v5829, %v5797
      %v5834 = vmul.f32 %v5830, %v5798
      %v5835 = vmul.f32 %v5831, %v5799
      %v5836 = vmul.f32 %v5832, %v5800
      %v5837 = vadd.f32 %v5833, 0.99997723
      %v5838 = vadd.f32 %v5834, 0.99997723
      %v5839 = vadd.f32 %v5835, 0.99997723
      %v5840 = vadd.f32 %v5836, 0.99997723
      %v5841 = vmul.f32 %v5837, %v5793
      %v5842 = vmul.f32 %v5838, %v5794
      %v5843 = vmul.f32 %v5839, %v5795
      %v5844 = vmul.f32 %v5840, %v5796
      %v5845 = vsub.f32 1.5707964, %v5841
      %v5846 = vsub.f32 1.5707964, %v5842
      %v5847 = vsub.f32 1.5707964, %v5843
      %v5848 = vsub.f32 1.5707964, %v5844
      %v5849 = vsel %vm5789, %v5845, %v5841
      %v5850 = vsel %vm5790, %v5846, %v5842
      %v5851 = vsel %vm5791, %v5847, %v5843
      %v5852 = vsel %vm5792, %v5848, %v5844
      %vm5853 = vcmp.lt.f32.partialorder %v5770, 0.0
      %vm5854 = vcmp.lt.f32.partialorder %v5772, 0.0
      %vm5855 = vcmp.lt.f32.partialorder %v5777, 0.0
      %vm5856 = vcmp.lt.f32.partialorder %v5779, 0.0
      %v5857 = vsub.f32 0.0, %v5849
      %v5858 = vsub.f32 0.0, %v5850
      %v5859 = vsub.f32 0.0, %v5851
      %v5860 = vsub.f32 0.0, %v5852
      %v5861 = vsel %vm5853, %v5857, %v5849
      %v5862 = vsel %vm5854, %v5858, %v5850
      %v5863 = vsel %vm5855, %v5859, %v5851
      %v5864 = vsel %vm5856, %v5860, %v5852
      %v5865 = vmul.f32 %v5861, %v5861
      %v5866 = vmul.f32 %v5862, %v5862
      %v5867 = vmul.f32 %v5863, %v5863
      %v5868 = vmul.f32 %v5864, %v5864
      %s5869 = scalar_lea.vmem %s3, 112
      %v5870 = vld [vmem:[%s5869] sm:$0xff]
      %v5871 = vld [vmem:[%s5869 + $0x8] sm:$0xff]
      %s5872 = scalar_lea.vmem %s4, 112
      %v5873 = vld [vmem:[%s5872] sm:$0xff]
      %v5874 = vld [vmem:[%s5872 + $0x8] sm:$0xff]
      %5876 = vset.pattern.permute.xlu0 0
      %5877 = vperm.xlu0 %5876, %v5873
      %v5878 = vpop.permute.xlu0 %5877
      %5881 = vset.pattern.permute.xlu0 0
      %5882 = vperm.xlu0 %5881, %v5874
      %v5883 = vpop.permute.xlu0 %5882
      %v5886 = vsel %vm970, %v5870, 0
      %v5889 = vsel %vm970, %v5871, 0
      %v5891 = vand.u32 %v5862, 4294901760
      %5892 = vmatprep.subr.mxu0 %v5891
      %v5893 = vand.u32 %v5861, 4294901760
      %5894 = vmatpush1.msra.mxu0 %v5893
      %v5895 = vand.u32 %v5864, 4294901760
      %5896 = vmatprep.subr.mxu0 %v5895
      %v5897 = vand.u32 %v5863, 4294901760
      %5898 = vmatpush1.msra.mxu0 %v5897
      %v5899 = vand.u32 %v5866, 4294901760
      %5900 = vmatprep.subr.mxu0 %v5899
      %v5901 = vand.u32 %v5865, 4294901760
      %5902 = vmatpush1.msra.mxu0 %v5901
      %v5903 = vand.u32 %v5868, 4294901760
      %5904 = vmatprep.subr.mxu0 %v5903
      %v5905 = vand.u32 %v5867, 4294901760
      %5906 = vmatpush1.msra.mxu0 %v5905
      %5907 = vmatprep.subr.mxu0 0.0
      %5908 = vmatpush1.msra.mxu0 0.0
      %5909 = vmatprep.subr.mxu0 0.0
      %5910 = vmatpush1.msra.mxu0 0.0
      %5911 = vmatprep.subr.mxu0 0.0
      %5912 = vmatpush1.msra.mxu0 0.0
      %5913 = vmatprep.subr.mxu0 0.0
      %5914 = vmatpush1.msra.mxu0 0.0
      %5915 = vmatprep.subr.mxu0 0.0
      %5916 = vmatpush1.msra.mxu0 0.0
      %5917 = vmatprep.subr.mxu0 0.0
      %5918 = vmatpush1.msra.mxu0 0.0
      %5919 = vmatprep.subr.mxu0 0.0
      %5920 = vmatpush1.msra.mxu0 0.0
      %5921 = vmatprep.subr.mxu0 0.0
      %5922 = vmatpush1.msra.mxu0 0.0
      %5923 = vmatprep.subr.mxu0 0.0
      %5924 = vmatpush1.msra.mxu0 0.0
      %5925 = vmatprep.subr.mxu0 0.0
      %5926 = vmatpush1.msra.mxu0 0.0
      %5927 = vmatprep.subr.mxu0 0.0
      %5928 = vmatpush1.msra.mxu0 0.0
      %5929 = vmatprep.subr.mxu0 0.0
      %5930 = vmatpush1.msra.mxu0 0.0
      %5931 = vmatprep.subr.mxu0 0.0
      %5932 = vmatpush1.msra.mxu0 0.0
      %5933 = vmatprep.subr.mxu0 0.0
      %5934 = vmatpush1.msra.mxu0 0.0
      %5935 = vmatprep.subr.mxu0 0.0
      %5936 = vmatpush1.msra.mxu0 0.0
      %5937 = vmatprep.subr.mxu0 0.0
      %5938 = vmatpush1.msra.mxu0 0.0
      %5939 = vmatprep.subr.mxu0 0.0
      %5940 = vmatpush1.msra.mxu0 0.0
      %5941 = vmatprep.subr.mxu0 0.0
      %5942 = vmatpush1.msra.mxu0 0.0
      %5943 = vmatprep.subr.mxu0 0.0
      %5944 = vmatpush1.msra.mxu0 0.0
      %5945 = vmatprep.subr.mxu0 0.0
      %5946 = vmatpush1.msra.mxu0 0.0
      %5947 = vmatprep.subr.mxu0 0.0
      %5948 = vmatpush1.msra.mxu0 0.0
      %5949 = vmatprep.subr.mxu0 0.0
      %5950 = vmatpush1.msra.mxu0 0.0
      %5951 = vmatprep.subr.mxu0 0.0
      %5952 = vmatpush1.msra.mxu0 0.0
      %5953 = vmatprep.subr.mxu0 0.0
      %5954 = vmatpush1.msra.mxu0 0.0
      %5955 = vmatprep.subr.mxu0 0.0
      %5956 = vmatpush1.msra.mxu0 0.0
      %5957 = vmatprep.subr.mxu0 0.0
      %5958 = vmatpush1.msra.mxu0 0.0
      %5959 = vmatprep.subr.mxu0 0.0
      %5960 = vmatpush1.msra.mxu0 0.0
      %5961 = vmatprep.subr.mxu0 0.0
      %5962 = vmatpush1.msra.mxu0 0.0
      %5963 = vmatprep.mubr.f32.mxu0 0.0
      %v5964 = vand.u32 %v5886, 4294901760
      %v5965 = vsub.f32 %v5886, %v5964
      %v5966 = vand.u32 %v5965, 4294901760
      %v5967 = vsub.f32 %v5965, %v5966
      %v5968 = vand.u32 %v5967, 4294901760
      %5969 = vmatmul.mubr.f32.gmra.mrb[0].mxu0 %v5968
      %v5970 = vpop.f32.mrb[0].mxu0
      %v5971 = vadd.f32 %v5878, %v5970
      %v5972 = vpop.f32.mrb[0].mxu0
      %v5973 = vadd.f32 %v5878, %v5972
      %5974 = vmatprep.mubr.f32.mxu0 0.0
      %v5975 = vand.u32 %v5889, 4294901760
      %v5976 = vsub.f32 %v5889, %v5975
      %v5977 = vand.u32 %v5976, 4294901760
      %v5978 = vsub.f32 %v5976, %v5977
      %v5979 = vand.u32 %v5978, 4294901760
      %5980 = vmatmul.mubr.f32.gmra.mrb[0].mxu0 %v5979
      %v5981 = vpop.f32.mrb[0].mxu0
      %v5982 = vadd.f32 %v5883, %v5981
      %v5983 = vpop.f32.mrb[0].mxu0
      %v5984 = vadd.f32 %v5883, %v5983
      %5985 = vdwg.mxu0
      %v5986 = vand.u32 %v5862, 4294901760
      %v5987 = vsub.f32 %v5862, %v5986
      %v5988 = vand.u32 %v5987, 4294901760
      %v5989 = vsub.f32 %v5987, %v5988
      %v5990 = vand.u32 %v5989, 4294901760
      %5991 = vmatprep.subr.mxu0 %v5990
      %v5992 = vand.u32 %v5861, 4294901760
      %v5993 = vsub.f32 %v5861, %v5992
      %v5994 = vand.u32 %v5993, 4294901760
      %v5995 = vsub.f32 %v5993, %v5994
      %v5996 = vand.u32 %v5995, 4294901760
      %5997 = vmatpush1.msra.mxu0 %v5996
      %v5998 = vand.u32 %v5864, 4294901760
      %v5999 = vsub.f32 %v5864, %v5998
      %v6000 = vand.u32 %v5999, 4294901760
      %v6001 = vsub.f32 %v5999, %v6000
      %v6002 = vand.u32 %v6001, 4294901760
      %6003 = vmatprep.subr.mxu0 %v6002
      %v6004 = vand.u32 %v5863, 4294901760
      %v6005 = vsub.f32 %v5863, %v6004
      %v6006 = vand.u32 %v6005, 4294901760
      %v6007 = vsub.f32 %v6005, %v6006
      %v6008 = vand.u32 %v6007, 4294901760
      %6009 = vmatpush1.msra.mxu0 %v6008
      %v6010 = vand.u32 %v5866, 4294901760
      %v6011 = vsub.f32 %v5866, %v6010
      %v6012 = vand.u32 %v6011, 4294901760
      %v6013 = vsub.f32 %v6011, %v6012
      %v6014 = vand.u32 %v6013, 4294901760
      %6015 = vmatprep.subr.mxu0 %v6014
      %v6016 = vand.u32 %v5865, 4294901760
      %v6017 = vsub.f32 %v5865, %v6016
      %v6018 = vand.u32 %v6017, 4294901760
      %v6019 = vsub.f32 %v6017, %v6018
      %v6020 = vand.u32 %v6019, 4294901760
      %6021 = vmatpush1.msra.mxu0 %v6020
      %v6022 = vand.u32 %v5868, 4294901760
      %v6023 = vsub.f32 %v5868, %v6022
      %v6024 = vand.u32 %v6023, 4294901760
      %v6025 = vsub.f32 %v6023, %v6024
      %v6026 = vand.u32 %v6025, 4294901760
      %6027 = vmatprep.subr.mxu0 %v6026
      %v6028 = vand.u32 %v5867, 4294901760
      %v6029 = vsub.f32 %v5867, %v6028
      %v6030 = vand.u32 %v6029, 4294901760
      %v6031 = vsub.f32 %v6029, %v6030
      %v6032 = vand.u32 %v6031, 4294901760
      %6033 = vmatpush1.msra.mxu0 %v6032
      %6034 = vmatprep.subr.mxu0 0.0
      %6035 = vmatpush1.msra.mxu0 0.0
      %6036 = vmatprep.subr.mxu0 0.0
      %6037 = vmatpush1.msra.mxu0 0.0
      %6038 = vmatprep.subr.mxu0 0.0
      %6039 = vmatpush1.msra.mxu0 0.0
      %6040 = vmatprep.subr.mxu0 0.0
      %6041 = vmatpush1.msra.mxu0 0.0
      %6042 = vmatprep.subr.mxu0 0.0
      %6043 = vmatpush1.msra.mxu0 0.0
      %6044 = vmatprep.subr.mxu0 0.0
      %6045 = vmatpush1.msra.mxu0 0.0
      %6046 = vmatprep.subr.mxu0 0.0
      %6047 = vmatpush1.msra.mxu0 0.0
      %6048 = vmatprep.subr.mxu0 0.0
      %6049 = vmatpush1.msra.mxu0 0.0
      %6050 = vmatprep.subr.mxu0 0.0
      %6051 = vmatpush1.msra.mxu0 0.0
      %6052 = vmatprep.subr.mxu0 0.0
      %6053 = vmatpush1.msra.mxu0 0.0
      %6054 = vmatprep.subr.mxu0 0.0
      %6055 = vmatpush1.msra.mxu0 0.0
      %6056 = vmatprep.subr.mxu0 0.0
      %6057 = vmatpush1.msra.mxu0 0.0
      %6058 = vmatprep.subr.mxu0 0.0
      %6059 = vmatpush1.msra.mxu0 0.0
      %6060 = vmatprep.subr.mxu0 0.0
      %6061 = vmatpush1.msra.mxu0 0.0
      %6062 = vmatprep.subr.mxu0 0.0
      %6063 = vmatpush1.msra.mxu0 0.0
      %6064 = vmatprep.subr.mxu0 0.0
      %6065 = vmatpush1.msra.mxu0 0.0
      %6066 = vmatprep.subr.mxu0 0.0
      %6067 = vmatpush1.msra.mxu0 0.0
      %6068 = vmatprep.subr.mxu0 0.0
      %6069 = vmatpush1.msra.mxu0 0.0
      %6070 = vmatprep.subr.mxu0 0.0
      %6071 = vmatpush1.msra.mxu0 0.0
      %6072 = vmatprep.subr.mxu0 0.0
      %6073 = vmatpush1.msra.mxu0 0.0
      %6074 = vmatprep.subr.mxu0 0.0
      %6075 = vmatpush1.msra.mxu0 0.0
      %6076 = vmatprep.subr.mxu0 0.0
      %6077 = vmatpush1.msra.mxu0 0.0
      %6078 = vmatprep.subr.mxu0 0.0
      %6079 = vmatpush1.msra.mxu0 0.0
      %6080 = vmatprep.subr.mxu0 0.0
      %6081 = vmatpush1.msra.mxu0 0.0
      %6082 = vmatprep.subr.mxu0 0.0
      %6083 = vmatpush1.msra.mxu0 0.0
      %6084 = vmatprep.subr.mxu0 0.0
      %6085 = vmatpush1.msra.mxu0 0.0
      %6086 = vmatprep.subr.mxu0 0.0
      %6087 = vmatpush1.msra.mxu0 0.0
      %6088 = vmatprep.subr.mxu0 0.0
      %6089 = vmatpush1.msra.mxu0 0.0
      %6090 = vmatprep.mubr.f32.mxu0 0.0
      %v6091 = vand.u32 %v5886, 4294901760
      %6092 = vmatmul.mubr.f32.gmra.mrb[0].mxu0 %v6091
      %v6093 = vpop.f32.mrb[0].mxu0
      %v6094 = vadd.f32 %v5971, %v6093
      %v6095 = vpop.f32.mrb[0].mxu0
      %v6096 = vadd.f32 %v5973, %v6095
      %6097 = vmatprep.mubr.f32.mxu0 0.0
      %v6098 = vand.u32 %v5889, 4294901760
      %6099 = vmatmul.mubr.f32.gmra.mrb[0].mxu0 %v6098
      %v6100 = vpop.f32.mrb[0].mxu0
      %v6101 = vadd.f32 %v5982, %v6100
      %v6102 = vpop.f32.mrb[0].mxu0
      %v6103 = vadd.f32 %v5984, %v6102
      %6104 = vdwg.mxu0
      %v6105 = vand.u32 %v5862, 4294901760
      %v6106 = vsub.f32 %v5862, %v6105
      %6107 = vmatprep.subr.mxu0 %v6106
      %v6108 = vand.u32 %v5861, 4294901760
      %v6109 = vsub.f32 %v5861, %v6108
      %6110 = vmatpush1.msra.mxu0 %v6109
      %v6111 = vand.u32 %v5864, 4294901760
      %v6112 = vsub.f32 %v5864, %v6111
      %6113 = vmatprep.subr.mxu0 %v6112
      %v6114 = vand.u32 %v5863, 4294901760
      %v6115 = vsub.f32 %v5863, %v6114
      %6116 = vmatpush1.msra.mxu0 %v6115
      %v6117 = vand.u32 %v5866, 4294901760
      %v6118 = vsub.f32 %v5866, %v6117
      %6119 = vmatprep.subr.mxu0 %v6118
      %v6120 = vand.u32 %v5865, 4294901760
      %v6121 = vsub.f32 %v5865, %v6120
      %6122 = vmatpush1.msra.mxu0 %v6121
      %v6123 = vand.u32 %v5868, 4294901760
      %v6124 = vsub.f32 %v5868, %v6123
      %6125 = vmatprep.subr.mxu0 %v6124
      %v6126 = vand.u32 %v5867, 4294901760
      %v6127 = vsub.f32 %v5867, %v6126
      %6128 = vmatpush1.msra.mxu0 %v6127
      %6129 = vmatprep.subr.mxu0 0.0
      %6130 = vmatpush1.msra.mxu0 0.0
      %6131 = vmatprep.subr.mxu0 0.0
      %6132 = vmatpush1.msra.mxu0 0.0
      %6133 = vmatprep.subr.mxu0 0.0
      %6134 = vmatpush1.msra.mxu0 0.0
      %6135 = vmatprep.subr.mxu0 0.0
      %6136 = vmatpush1.msra.mxu0 0.0
      %6137 = vmatprep.subr.mxu0 0.0
      %6138 = vmatpush1.msra.mxu0 0.0
      %6139 = vmatprep.subr.mxu0 0.0
      %6140 = vmatpush1.msra.mxu0 0.0
      %6141 = vmatprep.subr.mxu0 0.0
      %6142 = vmatpush1.msra.mxu0 0.0
      %6143 = vmatprep.subr.mxu0 0.0
      %6144 = vmatpush1.msra.mxu0 0.0
      %6145 = vmatprep.subr.mxu0 0.0
      %6146 = vmatpush1.msra.mxu0 0.0
      %6147 = vmatprep.subr.mxu0 0.0
      %6148 = vmatpush1.msra.mxu0 0.0
      %6149 = vmatprep.subr.mxu0 0.0
      %6150 = vmatpush1.msra.mxu0 0.0
      %6151 = vmatprep.subr.mxu0 0.0
      %6152 = vmatpush1.msra.mxu0 0.0
      %6153 = vmatprep.subr.mxu0 0.0
      %6154 = vmatpush1.msra.mxu0 0.0
      %6155 = vmatprep.subr.mxu0 0.0
      %6156 = vmatpush1.msra.mxu0 0.0
      %6157 = vmatprep.subr.mxu0 0.0
      %6158 = vmatpush1.msra.mxu0 0.0
      %6159 = vmatprep.subr.mxu0 0.0
      %6160 = vmatpush1.msra.mxu0 0.0
      %6161 = vmatprep.subr.mxu0 0.0
      %6162 = vmatpush1.msra.mxu0 0.0
      %6163 = vmatprep.subr.mxu0 0.0
      %6164 = vmatpush1.msra.mxu0 0.0
      %6165 = vmatprep.subr.mxu0 0.0
      %6166 = vmatpush1.msra.mxu0 0.0
      %6167 = vmatprep.subr.mxu0 0.0
      %6168 = vmatpush1.msra.mxu0 0.0
      %6169 = vmatprep.subr.mxu0 0.0
      %6170 = vmatpush1.msra.mxu0 0.0
      %6171 = vmatprep.subr.mxu0 0.0
      %6172 = vmatpush1.msra.mxu0 0.0
      %6173 = vmatprep.subr.mxu0 0.0
      %6174 = vmatpush1.msra.mxu0 0.0
      %6175 = vmatprep.subr.mxu0 0.0
      %6176 = vmatpush1.msra.mxu0 0.0
      %6177 = vmatprep.subr.mxu0 0.0
      %6178 = vmatpush1.msra.mxu0 0.0
      %6179 = vmatprep.subr.mxu0 0.0
      %6180 = vmatpush1.msra.mxu0 0.0
      %6181 = vmatprep.subr.mxu0 0.0
      %6182 = vmatpush1.msra.mxu0 0.0
      %6183 = vmatprep.subr.mxu0 0.0
      %6184 = vmatpush1.msra.mxu0 0.0
      %6185 = vmatprep.mubr.f32.mxu0 0.0
      %v6186 = vand.u32 %v5886, 4294901760
      %v6187 = vsub.f32 %v5886, %v6186
      %6188 = vmatmul.mubr.f32.gmra.mrb[0].mxu0 %v6187
      %v6189 = vpop.f32.mrb[0].mxu0
      %v6190 = vadd.f32 %v6094, %v6189
      %v6191 = vpop.f32.mrb[0].mxu0
      %v6192 = vadd.f32 %v6096, %v6191
      %6193 = vmatprep.mubr.f32.mxu0 0.0
      %v6194 = vand.u32 %v5889, 4294901760
      %v6195 = vsub.f32 %v5889, %v6194
      %6196 = vmatmul.mubr.f32.gmra.mrb[0].mxu0 %v6195
      %v6197 = vpop.f32.mrb[0].mxu0
      %v6198 = vadd.f32 %v6101, %v6197
      %v6199 = vpop.f32.mrb[0].mxu0
      %v6200 = vadd.f32 %v6103, %v6199
      %6201 = vdwg.mxu0
      %v6202 = vand.u32 %v5862, 4294901760
      %6203 = vmatprep.subr.mxu0 %v6202
      %v6204 = vand.u32 %v5861, 4294901760
      %6205 = vmatpush1.msra.mxu0 %v6204
      %v6206 = vand.u32 %v5864, 4294901760
      %6207 = vmatprep.subr.mxu0 %v6206
      %v6208 = vand.u32 %v5863, 4294901760
      %6209 = vmatpush1.msra.mxu0 %v6208
      %v6210 = vand.u32 %v5866, 4294901760
      %6211 = vmatprep.subr.mxu0 %v6210
      %v6212 = vand.u32 %v5865, 4294901760
      %6213 = vmatpush1.msra.mxu0 %v6212
      %v6214 = vand.u32 %v5868, 4294901760
      %6215 = vmatprep.subr.mxu0 %v6214
      %v6216 = vand.u32 %v5867, 4294901760
      %6217 = vmatpush1.msra.mxu0 %v6216
      %6218 = vmatprep.subr.mxu0 0.0
      %6219 = vmatpush1.msra.mxu0 0.0
      %6220 = vmatprep.subr.mxu0 0.0
      %6221 = vmatpush1.msra.mxu0 0.0
      %6222 = vmatprep.subr.mxu0 0.0
      %6223 = vmatpush1.msra.mxu0 0.0
      %6224 = vmatprep.subr.mxu0 0.0
      %6225 = vmatpush1.msra.mxu0 0.0
      %6226 = vmatprep.subr.mxu0 0.0
      %6227 = vmatpush1.msra.mxu0 0.0
      %6228 = vmatprep.subr.mxu0 0.0
      %6229 = vmatpush1.msra.mxu0 0.0
      %6230 = vmatprep.subr.mxu0 0.0
      %6231 = vmatpush1.msra.mxu0 0.0
      %6232 = vmatprep.subr.mxu0 0.0
      %6233 = vmatpush1.msra.mxu0 0.0
      %6234 = vmatprep.subr.mxu0 0.0
      %6235 = vmatpush1.msra.mxu0 0.0
      %6236 = vmatprep.subr.mxu0 0.0
      %6237 = vmatpush1.msra.mxu0 0.0
      %6238 = vmatprep.subr.mxu0 0.0
      %6239 = vmatpush1.msra.mxu0 0.0
      %6240 = vmatprep.subr.mxu0 0.0
      %6241 = vmatpush1.msra.mxu0 0.0
      %6242 = vmatprep.subr.mxu0 0.0
      %6243 = vmatpush1.msra.mxu0 0.0
      %6244 = vmatprep.subr.mxu0 0.0
      %6245 = vmatpush1.msra.mxu0 0.0
      %6246 = vmatprep.subr.mxu0 0.0
      %6247 = vmatpush1.msra.mxu0 0.0
      %6248 = vmatprep.subr.mxu0 0.0
      %6249 = vmatpush1.msra.mxu0 0.0
      %6250 = vmatprep.subr.mxu0 0.0
      %6251 = vmatpush1.msra.mxu0 0.0
      %6252 = vmatprep.subr.mxu0 0.0
      %6253 = vmatpush1.msra.mxu0 0.0
      %6254 = vmatprep.subr.mxu0 0.0
      %6255 = vmatpush1.msra.mxu0 0.0
      %6256 = vmatprep.subr.mxu0 0.0
      %6257 = vmatpush1.msra.mxu0 0.0
      %6258 = vmatprep.subr.mxu0 0.0
      %6259 = vmatpush1.msra.mxu0 0.0
      %6260 = vmatprep.subr.mxu0 0.0
      %6261 = vmatpush1.msra.mxu0 0.0
      %6262 = vmatprep.subr.mxu0 0.0
      %6263 = vmatpush1.msra.mxu0 0.0
      %6264 = vmatprep.subr.mxu0 0.0
      %6265 = vmatpush1.msra.mxu0 0.0
      %6266 = vmatprep.subr.mxu0 0.0
      %6267 = vmatpush1.msra.mxu0 0.0
      %6268 = vmatprep.subr.mxu0 0.0
      %6269 = vmatpush1.msra.mxu0 0.0
      %6270 = vmatprep.subr.mxu0 0.0
      %6271 = vmatpush1.msra.mxu0 0.0
      %6272 = vmatprep.subr.mxu0 0.0
      %6273 = vmatpush1.msra.mxu0 0.0
      %6274 = vmatprep.mubr.f32.mxu0 0.0
      %v6275 = vand.u32 %v5886, 4294901760
      %v6276 = vsub.f32 %v5886, %v6275
      %v6277 = vand.u32 %v6276, 4294901760
      %6278 = vmatmul.mubr.f32.gmra.mrb[0].mxu0 %v6277
      %v6279 = vpop.f32.mrb[0].mxu0
      %v6280 = vadd.f32 %v6190, %v6279
      %v6281 = vpop.f32.mrb[0].mxu0
      %v6282 = vadd.f32 %v6192, %v6281
      %6283 = vmatprep.mubr.f32.mxu0 0.0
      %v6284 = vand.u32 %v5889, 4294901760
      %v6285 = vsub.f32 %v5889, %v6284
      %v6286 = vand.u32 %v6285, 4294901760
      %6287 = vmatmul.mubr.f32.gmra.mrb[0].mxu0 %v6286
      %v6288 = vpop.f32.mrb[0].mxu0
      %v6289 = vadd.f32 %v6198, %v6288
      %v6290 = vpop.f32.mrb[0].mxu0
      %v6291 = vadd.f32 %v6200, %v6290
      %6292 = vdwg.mxu0
      %v6293 = vand.u32 %v5862, 4294901760
      %v6294 = vsub.f32 %v5862, %v6293
      %v6295 = vand.u32 %v6294, 4294901760
      %6296 = vmatprep.subr.mxu0 %v6295
      %v6297 = vand.u32 %v5861, 4294901760
      %v6298 = vsub.f32 %v5861, %v6297
      %v6299 = vand.u32 %v6298, 4294901760
      %6300 = vmatpush1.msra.mxu0 %v6299
      %v6301 = vand.u32 %v5864, 4294901760
      %v6302 = vsub.f32 %v5864, %v6301
      %v6303 = vand.u32 %v6302, 4294901760
      %6304 = vmatprep.subr.mxu0 %v6303
      %v6305 = vand.u32 %v5863, 4294901760
      %v6306 = vsub.f32 %v5863, %v6305
      %v6307 = vand.u32 %v6306, 4294901760
      %6308 = vmatpush1.msra.mxu0 %v6307
      %v6309 = vand.u32 %v5866, 4294901760
      %v6310 = vsub.f32 %v5866, %v6309
      %v6311 = vand.u32 %v6310, 4294901760
      %6312 = vmatprep.subr.mxu0 %v6311
      %v6313 = vand.u32 %v5865, 4294901760
      %v6314 = vsub.f32 %v5865, %v6313
      %v6315 = vand.u32 %v6314, 4294901760
      %6316 = vmatpush1.msra.mxu0 %v6315
      %v6317 = vand.u32 %v5868, 4294901760
      %v6318 = vsub.f32 %v5868, %v6317
      %v6319 = vand.u32 %v6318, 4294901760
      %6320 = vmatprep.subr.mxu0 %v6319
      %v6321 = vand.u32 %v5867, 4294901760
      %v6322 = vsub.f32 %v5867, %v6321
      %v6323 = vand.u32 %v6322, 4294901760
      %6324 = vmatpush1.msra.mxu0 %v6323
      %6325 = vmatprep.subr.mxu0 0.0
      %6326 = vmatpush1.msra.mxu0 0.0
      %6327 = vmatprep.subr.mxu0 0.0
      %6328 = vmatpush1.msra.mxu0 0.0
      %6329 = vmatprep.subr.mxu0 0.0
      %6330 = vmatpush1.msra.mxu0 0.0
      %6331 = vmatprep.subr.mxu0 0.0
      %6332 = vmatpush1.msra.mxu0 0.0
      %6333 = vmatprep.subr.mxu0 0.0
      %6334 = vmatpush1.msra.mxu0 0.0
      %6335 = vmatprep.subr.mxu0 0.0
      %6336 = vmatpush1.msra.mxu0 0.0
      %6337 = vmatprep.subr.mxu0 0.0
      %6338 = vmatpush1.msra.mxu0 0.0
      %6339 = vmatprep.subr.mxu0 0.0
      %6340 = vmatpush1.msra.mxu0 0.0
      %6341 = vmatprep.subr.mxu0 0.0
      %6342 = vmatpush1.msra.mxu0 0.0
      %6343 = vmatprep.subr.mxu0 0.0
      %6344 = vmatpush1.msra.mxu0 0.0
      %6345 = vmatprep.subr.mxu0 0.0
      %6346 = vmatpush1.msra.mxu0 0.0
      %6347 = vmatprep.subr.mxu0 0.0
      %6348 = vmatpush1.msra.mxu0 0.0
      %6349 = vmatprep.subr.mxu0 0.0
      %6350 = vmatpush1.msra.mxu0 0.0
      %6351 = vmatprep.subr.mxu0 0.0
      %6352 = vmatpush1.msra.mxu0 0.0
      %6353 = vmatprep.subr.mxu0 0.0
      %6354 = vmatpush1.msra.mxu0 0.0
      %6355 = vmatprep.subr.mxu0 0.0
      %6356 = vmatpush1.msra.mxu0 0.0
      %6357 = vmatprep.subr.mxu0 0.0
      %6358 = vmatpush1.msra.mxu0 0.0
      %6359 = vmatprep.subr.mxu0 0.0
      %6360 = vmatpush1.msra.mxu0 0.0
      %6361 = vmatprep.subr.mxu0 0.0
      %6362 = vmatpush1.msra.mxu0 0.0
      %6363 = vmatprep.subr.mxu0 0.0
      %6364 = vmatpush1.msra.mxu0 0.0
      %6365 = vmatprep.subr.mxu0 0.0
      %6366 = vmatpush1.msra.mxu0 0.0
      %6367 = vmatprep.subr.mxu0 0.0
      %6368 = vmatpush1.msra.mxu0 0.0
      %6369 = vmatprep.subr.mxu0 0.0
      %6370 = vmatpush1.msra.mxu0 0.0
      %6371 = vmatprep.subr.mxu0 0.0
      %6372 = vmatpush1.msra.mxu0 0.0
      %6373 = vmatprep.subr.mxu0 0.0
      %6374 = vmatpush1.msra.mxu0 0.0
      %6375 = vmatprep.subr.mxu0 0.0
      %6376 = vmatpush1.msra.mxu0 0.0
      %6377 = vmatprep.subr.mxu0 0.0
      %6378 = vmatpush1.msra.mxu0 0.0
      %6379 = vmatprep.subr.mxu0 0.0
      %6380 = vmatpush1.msra.mxu0 0.0
      %6381 = vmatprep.mubr.f32.mxu0 0.0
      %v6382 = vand.u32 %v5886, 4294901760
      %6383 = vmatmul.mubr.f32.gmra.mrb[0].mxu0 %v6382
      %v6384 = vpop.f32.mrb[0].mxu0
      %v6385 = vadd.f32 %v6280, %v6384
      %v6386 = vpop.f32.mrb[0].mxu0
      %v6387 = vadd.f32 %v6282, %v6386
      %6388 = vmatprep.mubr.f32.mxu0 0.0
      %v6389 = vand.u32 %v5889, 4294901760
      %6390 = vmatmul.mubr.f32.gmra.mrb[0].mxu0 %v6389
      %v6391 = vpop.f32.mrb[0].mxu0
      %v6392 = vadd.f32 %v6289, %v6391
      %v6393 = vpop.f32.mrb[0].mxu0
      %v6394 = vadd.f32 %v6291, %v6393
      %6395 = vdwg.mxu0
      %v6396 = vand.u32 %v5862, 4294901760
      %6397 = vmatprep.subr.mxu0 %v6396
      %v6398 = vand.u32 %v5861, 4294901760
      %6399 = vmatpush1.msra.mxu0 %v6398
      %v6400 = vand.u32 %v5864, 4294901760
      %6401 = vmatprep.subr.mxu0 %v6400
      %v6402 = vand.u32 %v5863, 4294901760
      %6403 = vmatpush1.msra.mxu0 %v6402
      %v6404 = vand.u32 %v5866, 4294901760
      %6405 = vmatprep.subr.mxu0 %v6404
      %v6406 = vand.u32 %v5865, 4294901760
      %6407 = vmatpush1.msra.mxu0 %v6406
      %v6408 = vand.u32 %v5868, 4294901760
      %6409 = vmatprep.subr.mxu0 %v6408
      %v6410 = vand.u32 %v5867, 4294901760
      %6411 = vmatpush1.msra.mxu0 %v6410
      %6412 = vmatprep.subr.mxu0 0.0
      %6413 = vmatpush1.msra.mxu0 0.0
      %6414 = vmatprep.subr.mxu0 0.0
      %6415 = vmatpush1.msra.mxu0 0.0
      %6416 = vmatprep.subr.mxu0 0.0
      %6417 = vmatpush1.msra.mxu0 0.0
      %6418 = vmatprep.subr.mxu0 0.0
      %6419 = vmatpush1.msra.mxu0 0.0
      %6420 = vmatprep.subr.mxu0 0.0
      %6421 = vmatpush1.msra.mxu0 0.0
      %6422 = vmatprep.subr.mxu0 0.0
      %6423 = vmatpush1.msra.mxu0 0.0
      %6424 = vmatprep.subr.mxu0 0.0
      %6425 = vmatpush1.msra.mxu0 0.0
      %6426 = vmatprep.subr.mxu0 0.0
      %6427 = vmatpush1.msra.mxu0 0.0
      %6428 = vmatprep.subr.mxu0 0.0
      %6429 = vmatpush1.msra.mxu0 0.0
      %6430 = vmatprep.subr.mxu0 0.0
      %6431 = vmatpush1.msra.mxu0 0.0
      %6432 = vmatprep.subr.mxu0 0.0
      %6433 = vmatpush1.msra.mxu0 0.0
      %6434 = vmatprep.subr.mxu0 0.0
      %6435 = vmatpush1.msra.mxu0 0.0
      %6436 = vmatprep.subr.mxu0 0.0
      %6437 = vmatpush1.msra.mxu0 0.0
      %6438 = vmatprep.subr.mxu0 0.0
      %6439 = vmatpush1.msra.mxu0 0.0
      %6440 = vmatprep.subr.mxu0 0.0
      %6441 = vmatpush1.msra.mxu0 0.0
      %6442 = vmatprep.subr.mxu0 0.0
      %6443 = vmatpush1.msra.mxu0 0.0
      %6444 = vmatprep.subr.mxu0 0.0
      %6445 = vmatpush1.msra.mxu0 0.0
      %6446 = vmatprep.subr.mxu0 0.0
      %6447 = vmatpush1.msra.mxu0 0.0
      %6448 = vmatprep.subr.mxu0 0.0
      %6449 = vmatpush1.msra.mxu0 0.0
      %6450 = vmatprep.subr.mxu0 0.0
      %6451 = vmatpush1.msra.mxu0 0.0
      %6452 = vmatprep.subr.mxu0 0.0
      %6453 = vmatpush1.msra.mxu0 0.0
      %6454 = vmatprep.subr.mxu0 0.0
      %6455 = vmatpush1.msra.mxu0 0.0
      %6456 = vmatprep.subr.mxu0 0.0
      %6457 = vmatpush1.msra.mxu0 0.0
      %6458 = vmatprep.subr.mxu0 0.0
      %6459 = vmatpush1.msra.mxu0 0.0
      %6460 = vmatprep.subr.mxu0 0.0
      %6461 = vmatpush1.msra.mxu0 0.0
      %6462 = vmatprep.subr.mxu0 0.0
      %6463 = vmatpush1.msra.mxu0 0.0
      %6464 = vmatprep.subr.mxu0 0.0
      %6465 = vmatpush1.msra.mxu0 0.0
      %6466 = vmatprep.subr.mxu0 0.0
      %6467 = vmatpush1.msra.mxu0 0.0
      %6468 = vmatprep.mubr.f32.mxu0 0.0
      %v6469 = vand.u32 %v5886, 4294901760
      %6470 = vmatmul.mubr.f32.gmra.mrb[0].mxu0 %v6469
      %v6471 = vpop.f32.mrb[0].mxu0
      %v6472 = vadd.f32 %v6385, %v6471
      %v6473 = vpop.f32.mrb[0].mxu0
      %v6474 = vadd.f32 %v6387, %v6473
      %6475 = vmatprep.mubr.f32.mxu0 0.0
      %v6476 = vand.u32 %v5889, 4294901760
      %6477 = vmatmul.mubr.f32.gmra.mrb[0].mxu0 %v6476
      %v6478 = vpop.f32.mrb[0].mxu0
      %v6479 = vadd.f32 %v6392, %v6478
      %v6480 = vpop.f32.mrb[0].mxu0
      %v6481 = vadd.f32 %v6394, %v6480
      %6482 = vdwg.mxu0
      %v6483 = vand.u32 2147483647, %v6472
      %v6484 = vand.u32 2147483647, %v6474
      %v6485 = vand.u32 2147483647, %v6479
      %v6486 = vand.u32 2147483647, %v6481
      %v6487 = vrcp.pop %v6483
      %v6488 = vrcp.pop %v6484
      %v6489 = vrcp.pop %v6485
      %v6490 = vrcp.pop %v6486
      %vm6491 = vcmp.gt.f32.partialorder %v6483, 1.0
      %vm6492 = vcmp.gt.f32.partialorder %v6484, 1.0
      %vm6493 = vcmp.gt.f32.partialorder %v6485, 1.0
      %vm6494 = vcmp.gt.f32.partialorder %v6486, 1.0
      %v6495 = vsel %vm6491, %v6487, %v6483
      %v6496 = vsel %vm6492, %v6488, %v6484
      %v6497 = vsel %vm6493, %v6489, %v6485
      %v6498 = vsel %vm6494, %v6490, %v6486
      %v6499 = vmul.f32 %v6495, %v6495
      %v6500 = vmul.f32 %v6496, %v6496
      %v6501 = vmul.f32 %v6497, %v6497
      %v6502 = vmul.f32 %v6498, %v6498
      %v6503 = vmul.f32 %v6499, -0.0117212
      %v6504 = vmul.f32 %v6500, -0.0117212
      %v6505 = vmul.f32 %v6501, -0.0117212
      %v6506 = vmul.f32 %v6502, -0.0117212
      %v6507 = vadd.f32 %v6503, 0.05265332
      %v6508 = vadd.f32 %v6504, 0.05265332
      %v6509 = vadd.f32 %v6505, 0.05265332
      %v6510 = vadd.f32 %v6506, 0.05265332
      %v6511 = vmul.f32 %v6507, %v6499
      %v6512 = vmul.f32 %v6508, %v6500
      %v6513 = vmul.f32 %v6509, %v6501
      %v6514 = vmul.f32 %v6510, %v6502
      %v6515 = vadd.f32 %v6511, -0.11643287
      %v6516 = vadd.f32 %v6512, -0.11643287
      %v6517 = vadd.f32 %v6513, -0.11643287
      %v6518 = vadd.f32 %v6514, -0.11643287
      %v6519 = vmul.f32 %v6515, %v6499
      %v6520 = vmul.f32 %v6516, %v6500
      %v6521 = vmul.f32 %v6517, %v6501
      %v6522 = vmul.f32 %v6518, %v6502
      %v6523 = vadd.f32 %v6519, 0.19354346
      %v6524 = vadd.f32 %v6520, 0.19354346
      %v6525 = vadd.f32 %v6521, 0.19354346
      %v6526 = vadd.f32 %v6522, 0.19354346
      %v6527 = vmul.f32 %v6523, %v6499
      %v6528 = vmul.f32 %v6524, %v6500
      %v6529 = vmul.f32 %v6525, %v6501
      %v6530 = vmul.f32 %v6526, %v6502
      %v6531 = vadd.f32 %v6527, -0.33262348
      %v6532 = vadd.f32 %v6528, -0.33262348
      %v6533 = vadd.f32 %v6529, -0.33262348
      %v6534 = vadd.f32 %v6530, -0.33262348
      %v6535 = vmul.f32 %v6531, %v6499
      %v6536 = vmul.f32 %v6532, %v6500
      %v6537 = vmul.f32 %v6533, %v6501
      %v6538 = vmul.f32 %v6534, %v6502
      %v6539 = vadd.f32 %v6535, 0.99997723
      %v6540 = vadd.f32 %v6536, 0.99997723
      %v6541 = vadd.f32 %v6537, 0.99997723
      %v6542 = vadd.f32 %v6538, 0.99997723
      %v6543 = vmul.f32 %v6539, %v6495
      %v6544 = vmul.f32 %v6540, %v6496
      %v6545 = vmul.f32 %v6541, %v6497
      %v6546 = vmul.f32 %v6542, %v6498
      %v6547 = vsub.f32 1.5707964, %v6543
      %v6548 = vsub.f32 1.5707964, %v6544
      %v6549 = vsub.f32 1.5707964, %v6545
      %v6550 = vsub.f32 1.5707964, %v6546
      %v6551 = vsel %vm6491, %v6547, %v6543
      %v6552 = vsel %vm6492, %v6548, %v6544
      %v6553 = vsel %vm6493, %v6549, %v6545
      %v6554 = vsel %vm6494, %v6550, %v6546
      %vm6555 = vcmp.lt.f32.partialorder %v6472, 0.0
      %vm6556 = vcmp.lt.f32.partialorder %v6474, 0.0
      %vm6557 = vcmp.lt.f32.partialorder %v6479, 0.0
      %vm6558 = vcmp.lt.f32.partialorder %v6481, 0.0
      %v6559 = vsub.f32 0.0, %v6551
      %v6560 = vsub.f32 0.0, %v6552
      %v6561 = vsub.f32 0.0, %v6553
      %v6562 = vsub.f32 0.0, %v6554
      %v6563 = vsel %vm6555, %v6559, %v6551
      %v6564 = vsel %vm6556, %v6560, %v6552
      %v6565 = vsel %vm6557, %v6561, %v6553
      %v6566 = vsel %vm6558, %v6562, %v6554
      %v6567 = vmul.f32 %v6563, %v6563
      %v6568 = vmul.f32 %v6564, %v6564
      %v6569 = vmul.f32 %v6565, %v6565
      %v6570 = vmul.f32 %v6566, %v6566
      %v6571 = vld [vmem:[%s5] sm:$0x7]
      %v6572 = vld [vmem:[%s6] sm:$0x7]
      %6574 = vset.pattern.permute.xlu0 0
      %6575 = vperm.xlu0 %6574, %v6572
      %v6576 = vpop.permute.xlu0 %6575
      %v6579 = vsel %vm970, %v6571, 0
      %v6581 = vand.u32 %v6564, 4294901760
      %6582 = vmatprep.subr.mxu0 %v6581
      %v6583 = vand.u32 %v6563, 4294901760
      %6584 = vmatpush1.msra.mxu0 %v6583
      %v6585 = vand.u32 %v6566, 4294901760
      %6586 = vmatprep.subr.mxu0 %v6585
      %v6587 = vand.u32 %v6565, 4294901760
      %6588 = vmatpush1.msra.mxu0 %v6587
      %v6589 = vand.u32 %v6568, 4294901760
      %6590 = vmatprep.subr.mxu0 %v6589
      %v6591 = vand.u32 %v6567, 4294901760
      %6592 = vmatpush1.msra.mxu0 %v6591
      %v6593 = vand.u32 %v6570, 4294901760
      %6594 = vmatprep.subr.mxu0 %v6593
      %v6595 = vand.u32 %v6569, 4294901760
      %6596 = vmatpush1.msra.mxu0 %v6595
      %6597 = vmatprep.subr.mxu0 0.0
      %6598 = vmatpush1.msra.mxu0 0.0
      %6599 = vmatprep.subr.mxu0 0.0
      %6600 = vmatpush1.msra.mxu0 0.0
      %6601 = vmatprep.subr.mxu0 0.0
      %6602 = vmatpush1.msra.mxu0 0.0
      %6603 = vmatprep.subr.mxu0 0.0
      %6604 = vmatpush1.msra.mxu0 0.0
      %6605 = vmatprep.subr.mxu0 0.0
      %6606 = vmatpush1.msra.mxu0 0.0
      %6607 = vmatprep.subr.mxu0 0.0
      %6608 = vmatpush1.msra.mxu0 0.0
      %6609 = vmatprep.subr.mxu0 0.0
      %6610 = vmatpush1.msra.mxu0 0.0
      %6611 = vmatprep.subr.mxu0 0.0
      %6612 = vmatpush1.msra.mxu0 0.0
      %6613 = vmatprep.subr.mxu0 0.0
      %6614 = vmatpush1.msra.mxu0 0.0
      %6615 = vmatprep.subr.mxu0 0.0
      %6616 = vmatpush1.msra.mxu0 0.0
      %6617 = vmatprep.subr.mxu0 0.0
      %6618 = vmatpush1.msra.mxu0 0.0
      %6619 = vmatprep.subr.mxu0 0.0
      %6620 = vmatpush1.msra.mxu0 0.0
      %6621 = vmatprep.subr.mxu0 0.0
      %6622 = vmatpush1.msra.mxu0 0.0
      %6623 = vmatprep.subr.mxu0 0.0
      %6624 = vmatpush1.msra.mxu0 0.0
      %6625 = vmatprep.subr.mxu0 0.0
      %6626 = vmatpush1.msra.mxu0 0.0
      %6627 = vmatprep.subr.mxu0 0.0
      %6628 = vmatpush1.msra.mxu0 0.0
      %6629 = vmatprep.subr.mxu0 0.0
      %6630 = vmatpush1.msra.mxu0 0.0
      %6631 = vmatprep.subr.mxu0 0.0
      %6632 = vmatpush1.msra.mxu0 0.0
      %6633 = vmatprep.subr.mxu0 0.0
      %6634 = vmatpush1.msra.mxu0 0.0
      %6635 = vmatprep.subr.mxu0 0.0
      %6636 = vmatpush1.msra.mxu0 0.0
      %6637 = vmatprep.subr.mxu0 0.0
      %6638 = vmatpush1.msra.mxu0 0.0
      %6639 = vmatprep.subr.mxu0 0.0
      %6640 = vmatpush1.msra.mxu0 0.0
      %6641 = vmatprep.subr.mxu0 0.0
      %6642 = vmatpush1.msra.mxu0 0.0
      %6643 = vmatprep.subr.mxu0 0.0
      %6644 = vmatpush1.msra.mxu0 0.0
      %6645 = vmatprep.subr.mxu0 0.0
      %6646 = vmatpush1.msra.mxu0 0.0
      %6647 = vmatprep.subr.mxu0 0.0
      %6648 = vmatpush1.msra.mxu0 0.0
      %6649 = vmatprep.subr.mxu0 0.0
      %6650 = vmatpush1.msra.mxu0 0.0
      %6651 = vmatprep.subr.mxu0 0.0
      %6652 = vmatpush1.msra.mxu0 0.0
      %6653 = vmatprep.mubr.f32.mxu0 0.0
      %v6654 = vand.u32 %v6579, 4294901760
      %v6655 = vsub.f32 %v6579, %v6654
      %v6656 = vand.u32 %v6655, 4294901760
      %v6657 = vsub.f32 %v6655, %v6656
      %v6658 = vand.u32 %v6657, 4294901760
      %6659 = vmatmul.mubr.f32.gmra.mrb[0].mxu0 %v6658
      %v6660 = vpop.f32.mrb[0].mxu0
      %v6661 = vadd.f32 %v6576, %v6660
      %v6662 = vpop.f32.mrb[0].mxu0
      %v6663 = vadd.f32 %v6576, %v6662
      %6664 = vdwg.mxu0
      %v6665 = vand.u32 %v6564, 4294901760
      %v6666 = vsub.f32 %v6564, %v6665
      %v6667 = vand.u32 %v6666, 4294901760
      %v6668 = vsub.f32 %v6666, %v6667
      %v6669 = vand.u32 %v6668, 4294901760
      %6670 = vmatprep.subr.mxu0 %v6669
      %v6671 = vand.u32 %v6563, 4294901760
      %v6672 = vsub.f32 %v6563, %v6671
      %v6673 = vand.u32 %v6672, 4294901760
      %v6674 = vsub.f32 %v6672, %v6673
      %v6675 = vand.u32 %v6674, 4294901760
      %6676 = vmatpush1.msra.mxu0 %v6675
      %v6677 = vand.u32 %v6566, 4294901760
      %v6678 = vsub.f32 %v6566, %v6677
      %v6679 = vand.u32 %v6678, 4294901760
      %v6680 = vsub.f32 %v6678, %v6679
      %v6681 = vand.u32 %v6680, 4294901760
      %6682 = vmatprep.subr.mxu0 %v6681
      %v6683 = vand.u32 %v6565, 4294901760
      %v6684 = vsub.f32 %v6565, %v6683
      %v6685 = vand.u32 %v6684, 4294901760
      %v6686 = vsub.f32 %v6684, %v6685
      %v6687 = vand.u32 %v6686, 4294901760
      %6688 = vmatpush1.msra.mxu0 %v6687
      %v6689 = vand.u32 %v6568, 4294901760
      %v6690 = vsub.f32 %v6568, %v6689
      %v6691 = vand.u32 %v6690, 4294901760
      %v6692 = vsub.f32 %v6690, %v6691
      %v6693 = vand.u32 %v6692, 4294901760
      %6694 = vmatprep.subr.mxu0 %v6693
      %v6695 = vand.u32 %v6567, 4294901760
      %v6696 = vsub.f32 %v6567, %v6695
      %v6697 = vand.u32 %v6696, 4294901760
      %v6698 = vsub.f32 %v6696, %v6697
      %v6699 = vand.u32 %v6698, 4294901760
      %6700 = vmatpush1.msra.mxu0 %v6699
      %v6701 = vand.u32 %v6570, 4294901760
      %v6702 = vsub.f32 %v6570, %v6701
      %v6703 = vand.u32 %v6702, 4294901760
      %v6704 = vsub.f32 %v6702, %v6703
      %v6705 = vand.u32 %v6704, 4294901760
      %6706 = vmatprep.subr.mxu0 %v6705
      %v6707 = vand.u32 %v6569, 4294901760
      %v6708 = vsub.f32 %v6569, %v6707
      %v6709 = vand.u32 %v6708, 4294901760
      %v6710 = vsub.f32 %v6708, %v6709
      %v6711 = vand.u32 %v6710, 4294901760
      %6712 = vmatpush1.msra.mxu0 %v6711
      %6713 = vmatprep.subr.mxu0 0.0
      %6714 = vmatpush1.msra.mxu0 0.0
      %6715 = vmatprep.subr.mxu0 0.0
      %6716 = vmatpush1.msra.mxu0 0.0
      %6717 = vmatprep.subr.mxu0 0.0
      %6718 = vmatpush1.msra.mxu0 0.0
      %6719 = vmatprep.subr.mxu0 0.0
      %6720 = vmatpush1.msra.mxu0 0.0
      %6721 = vmatprep.subr.mxu0 0.0
      %6722 = vmatpush1.msra.mxu0 0.0
      %6723 = vmatprep.subr.mxu0 0.0
      %6724 = vmatpush1.msra.mxu0 0.0
      %6725 = vmatprep.subr.mxu0 0.0
      %6726 = vmatpush1.msra.mxu0 0.0
      %6727 = vmatprep.subr.mxu0 0.0
      %6728 = vmatpush1.msra.mxu0 0.0
      %6729 = vmatprep.subr.mxu0 0.0
      %6730 = vmatpush1.msra.mxu0 0.0
      %6731 = vmatprep.subr.mxu0 0.0
      %6732 = vmatpush1.msra.mxu0 0.0
      %6733 = vmatprep.subr.mxu0 0.0
      %6734 = vmatpush1.msra.mxu0 0.0
      %6735 = vmatprep.subr.mxu0 0.0
      %6736 = vmatpush1.msra.mxu0 0.0
      %6737 = vmatprep.subr.mxu0 0.0
      %6738 = vmatpush1.msra.mxu0 0.0
      %6739 = vmatprep.subr.mxu0 0.0
      %6740 = vmatpush1.msra.mxu0 0.0
      %6741 = vmatprep.subr.mxu0 0.0
      %6742 = vmatpush1.msra.mxu0 0.0
      %6743 = vmatprep.subr.mxu0 0.0
      %6744 = vmatpush1.msra.mxu0 0.0
      %6745 = vmatprep.subr.mxu0 0.0
      %6746 = vmatpush1.msra.mxu0 0.0
      %6747 = vmatprep.subr.mxu0 0.0
      %6748 = vmatpush1.msra.mxu0 0.0
      %6749 = vmatprep.subr.mxu0 0.0
      %6750 = vmatpush1.msra.mxu0 0.0
      %6751 = vmatprep.subr.mxu0 0.0
      %6752 = vmatpush1.msra.mxu0 0.0
      %6753 = vmatprep.subr.mxu0 0.0
      %6754 = vmatpush1.msra.mxu0 0.0
      %6755 = vmatprep.subr.mxu0 0.0
      %6756 = vmatpush1.msra.mxu0 0.0
      %6757 = vmatprep.subr.mxu0 0.0
      %6758 = vmatpush1.msra.mxu0 0.0
      %6759 = vmatprep.subr.mxu0 0.0
      %6760 = vmatpush1.msra.mxu0 0.0
      %6761 = vmatprep.subr.mxu0 0.0
      %6762 = vmatpush1.msra.mxu0 0.0
      %6763 = vmatprep.subr.mxu0 0.0
      %6764 = vmatpush1.msra.mxu0 0.0
      %6765 = vmatprep.subr.mxu0 0.0
      %6766 = vmatpush1.msra.mxu0 0.0
      %6767 = vmatprep.subr.mxu0 0.0
      %6768 = vmatpush1.msra.mxu0 0.0
      %6769 = vmatprep.mubr.f32.mxu0 0.0
      %v6770 = vand.u32 %v6579, 4294901760
      %6771 = vmatmul.mubr.f32.gmra.mrb[0].mxu0 %v6770
      %v6772 = vpop.f32.mrb[0].mxu0
      %v6773 = vadd.f32 %v6661, %v6772
      %v6774 = vpop.f32.mrb[0].mxu0
      %v6775 = vadd.f32 %v6663, %v6774
      %6776 = vdwg.mxu0
      %v6777 = vand.u32 %v6564, 4294901760
      %v6778 = vsub.f32 %v6564, %v6777
      %6779 = vmatprep.subr.mxu0 %v6778
      %v6780 = vand.u32 %v6563, 4294901760
      %v6781 = vsub.f32 %v6563, %v6780
      %6782 = vmatpush1.msra.mxu0 %v6781
      %v6783 = vand.u32 %v6566, 4294901760
      %v6784 = vsub.f32 %v6566, %v6783
      %6785 = vmatprep.subr.mxu0 %v6784
      %v6786 = vand.u32 %v6565, 4294901760
      %v6787 = vsub.f32 %v6565, %v6786
      %6788 = vmatpush1.msra.mxu0 %v6787
      %v6789 = vand.u32 %v6568, 4294901760
      %v6790 = vsub.f32 %v6568, %v6789
      %6791 = vmatprep.subr.mxu0 %v6790
      %v6792 = vand.u32 %v6567, 4294901760
      %v6793 = vsub.f32 %v6567, %v6792
      %6794 = vmatpush1.msra.mxu0 %v6793
      %v6795 = vand.u32 %v6570, 4294901760
      %v6796 = vsub.f32 %v6570, %v6795
      %6797 = vmatprep.subr.mxu0 %v6796
      %v6798 = vand.u32 %v6569, 4294901760
      %v6799 = vsub.f32 %v6569, %v6798
      %6800 = vmatpush1.msra.mxu0 %v6799
      %6801 = vmatprep.subr.mxu0 0.0
      %6802 = vmatpush1.msra.mxu0 0.0
      %6803 = vmatprep.subr.mxu0 0.0
      %6804 = vmatpush1.msra.mxu0 0.0
      %6805 = vmatprep.subr.mxu0 0.0
      %6806 = vmatpush1.msra.mxu0 0.0
      %6807 = vmatprep.subr.mxu0 0.0
      %6808 = vmatpush1.msra.mxu0 0.0
      %6809 = vmatprep.subr.mxu0 0.0
      %6810 = vmatpush1.msra.mxu0 0.0
      %6811 = vmatprep.subr.mxu0 0.0
      %6812 = vmatpush1.msra.mxu0 0.0
      %6813 = vmatprep.subr.mxu0 0.0
      %6814 = vmatpush1.msra.mxu0 0.0
      %6815 = vmatprep.subr.mxu0 0.0
      %6816 = vmatpush1.msra.mxu0 0.0
      %6817 = vmatprep.subr.mxu0 0.0
      %6818 = vmatpush1.msra.mxu0 0.0
      %6819 = vmatprep.subr.mxu0 0.0
      %6820 = vmatpush1.msra.mxu0 0.0
      %6821 = vmatprep.subr.mxu0 0.0
      %6822 = vmatpush1.msra.mxu0 0.0
      %6823 = vmatprep.subr.mxu0 0.0
      %6824 = vmatpush1.msra.mxu0 0.0
      %6825 = vmatprep.subr.mxu0 0.0
      %6826 = vmatpush1.msra.mxu0 0.0
      %6827 = vmatprep.subr.mxu0 0.0
      %6828 = vmatpush1.msra.mxu0 0.0
      %6829 = vmatprep.subr.mxu0 0.0
      %6830 = vmatpush1.msra.mxu0 0.0
      %6831 = vmatprep.subr.mxu0 0.0
      %6832 = vmatpush1.msra.mxu0 0.0
      %6833 = vmatprep.subr.mxu0 0.0
      %6834 = vmatpush1.msra.mxu0 0.0
      %6835 = vmatprep.subr.mxu0 0.0
      %6836 = vmatpush1.msra.mxu0 0.0
      %6837 = vmatprep.subr.mxu0 0.0
      %6838 = vmatpush1.msra.mxu0 0.0
      %6839 = vmatprep.subr.mxu0 0.0
      %6840 = vmatpush1.msra.mxu0 0.0
      %6841 = vmatprep.subr.mxu0 0.0
      %6842 = vmatpush1.msra.mxu0 0.0
      %6843 = vmatprep.subr.mxu0 0.0
      %6844 = vmatpush1.msra.mxu0 0.0
      %6845 = vmatprep.subr.mxu0 0.0
      %6846 = vmatpush1.msra.mxu0 0.0
      %6847 = vmatprep.subr.mxu0 0.0
      %6848 = vmatpush1.msra.mxu0 0.0
      %6849 = vmatprep.subr.mxu0 0.0
      %6850 = vmatpush1.msra.mxu0 0.0
      %6851 = vmatprep.subr.mxu0 0.0
      %6852 = vmatpush1.msra.mxu0 0.0
      %6853 = vmatprep.subr.mxu0 0.0
      %6854 = vmatpush1.msra.mxu0 0.0
      %6855 = vmatprep.subr.mxu0 0.0
      %6856 = vmatpush1.msra.mxu0 0.0
      %6857 = vmatprep.mubr.f32.mxu0 0.0
      %v6858 = vand.u32 %v6579, 4294901760
      %v6859 = vsub.f32 %v6579, %v6858
      %6860 = vmatmul.mubr.f32.gmra.mrb[0].mxu0 %v6859
      %v6861 = vpop.f32.mrb[0].mxu0
      %v6862 = vadd.f32 %v6773, %v6861
      %v6863 = vpop.f32.mrb[0].mxu0
      %v6864 = vadd.f32 %v6775, %v6863
      %6865 = vdwg.mxu0
      %v6866 = vand.u32 %v6564, 4294901760
      %6867 = vmatprep.subr.mxu0 %v6866
      %v6868 = vand.u32 %v6563, 4294901760
      %6869 = vmatpush1.msra.mxu0 %v6868
      %v6870 = vand.u32 %v6566, 4294901760
      %6871 = vmatprep.subr.mxu0 %v6870
      %v6872 = vand.u32 %v6565, 4294901760
      %6873 = vmatpush1.msra.mxu0 %v6872
      %v6874 = vand.u32 %v6568, 4294901760
      %6875 = vmatprep.subr.mxu0 %v6874
      %v6876 = vand.u32 %v6567, 4294901760
      %6877 = vmatpush1.msra.mxu0 %v6876
      %v6878 = vand.u32 %v6570, 4294901760
      %6879 = vmatprep.subr.mxu0 %v6878
      %v6880 = vand.u32 %v6569, 4294901760
      %6881 = vmatpush1.msra.mxu0 %v6880
      %6882 = vmatprep.subr.mxu0 0.0
      %6883 = vmatpush1.msra.mxu0 0.0
      %6884 = vmatprep.subr.mxu0 0.0
      %6885 = vmatpush1.msra.mxu0 0.0
      %6886 = vmatprep.subr.mxu0 0.0
      %6887 = vmatpush1.msra.mxu0 0.0
      %6888 = vmatprep.subr.mxu0 0.0
      %6889 = vmatpush1.msra.mxu0 0.0
      %6890 = vmatprep.subr.mxu0 0.0
      %6891 = vmatpush1.msra.mxu0 0.0
      %6892 = vmatprep.subr.mxu0 0.0
      %6893 = vmatpush1.msra.mxu0 0.0
      %6894 = vmatprep.subr.mxu0 0.0
      %6895 = vmatpush1.msra.mxu0 0.0
      %6896 = vmatprep.subr.mxu0 0.0
      %6897 = vmatpush1.msra.mxu0 0.0
      %6898 = vmatprep.subr.mxu0 0.0
      %6899 = vmatpush1.msra.mxu0 0.0
      %6900 = vmatprep.subr.mxu0 0.0
      %6901 = vmatpush1.msra.mxu0 0.0
      %6902 = vmatprep.subr.mxu0 0.0
      %6903 = vmatpush1.msra.mxu0 0.0
      %6904 = vmatprep.subr.mxu0 0.0
      %6905 = vmatpush1.msra.mxu0 0.0
      %6906 = vmatprep.subr.mxu0 0.0
      %6907 = vmatpush1.msra.mxu0 0.0
      %6908 = vmatprep.subr.mxu0 0.0
      %6909 = vmatpush1.msra.mxu0 0.0
      %6910 = vmatprep.subr.mxu0 0.0
      %6911 = vmatpush1.msra.mxu0 0.0
      %6912 = vmatprep.subr.mxu0 0.0
      %6913 = vmatpush1.msra.mxu0 0.0
      %6914 = vmatprep.subr.mxu0 0.0
      %6915 = vmatpush1.msra.mxu0 0.0
      %6916 = vmatprep.subr.mxu0 0.0
      %6917 = vmatpush1.msra.mxu0 0.0
      %6918 = vmatprep.subr.mxu0 0.0
      %6919 = vmatpush1.msra.mxu0 0.0
      %6920 = vmatprep.subr.mxu0 0.0
      %6921 = vmatpush1.msra.mxu0 0.0
      %6922 = vmatprep.subr.mxu0 0.0
      %6923 = vmatpush1.msra.mxu0 0.0
      %6924 = vmatprep.subr.mxu0 0.0
      %6925 = vmatpush1.msra.mxu0 0.0
      %6926 = vmatprep.subr.mxu0 0.0
      %6927 = vmatpush1.msra.mxu0 0.0
      %6928 = vmatprep.subr.mxu0 0.0
      %6929 = vmatpush1.msra.mxu0 0.0
      %6930 = vmatprep.subr.mxu0 0.0
      %6931 = vmatpush1.msra.mxu0 0.0
      %6932 = vmatprep.subr.mxu0 0.0
      %6933 = vmatpush1.msra.mxu0 0.0
      %6934 = vmatprep.subr.mxu0 0.0
      %6935 = vmatpush1.msra.mxu0 0.0
      %6936 = vmatprep.subr.mxu0 0.0
      %6937 = vmatpush1.msra.mxu0 0.0
      %6938 = vmatprep.mubr.f32.mxu0 0.0
      %v6939 = vand.u32 %v6579, 4294901760
      %v6940 = vsub.f32 %v6579, %v6939
      %v6941 = vand.u32 %v6940, 4294901760
      %6942 = vmatmul.mubr.f32.gmra.mrb[0].mxu0 %v6941
      %v6943 = vpop.f32.mrb[0].mxu0
      %v6944 = vadd.f32 %v6862, %v6943
      %v6945 = vpop.f32.mrb[0].mxu0
      %v6946 = vadd.f32 %v6864, %v6945
      %6947 = vdwg.mxu0
      %v6948 = vand.u32 %v6564, 4294901760
      %v6949 = vsub.f32 %v6564, %v6948
      %v6950 = vand.u32 %v6949, 4294901760
      %6951 = vmatprep.subr.mxu0 %v6950
      %v6952 = vand.u32 %v6563, 4294901760
      %v6953 = vsub.f32 %v6563, %v6952
      %v6954 = vand.u32 %v6953, 4294901760
      %6955 = vmatpush1.msra.mxu0 %v6954
      %v6956 = vand.u32 %v6566, 4294901760
      %v6957 = vsub.f32 %v6566, %v6956
      %v6958 = vand.u32 %v6957, 4294901760
      %6959 = vmatprep.subr.mxu0 %v6958
      %v6960 = vand.u32 %v6565, 4294901760
      %v6961 = vsub.f32 %v6565, %v6960
      %v6962 = vand.u32 %v6961, 4294901760
      %6963 = vmatpush1.msra.mxu0 %v6962
      %v6964 = vand.u32 %v6568, 4294901760
      %v6965 = vsub.f32 %v6568, %v6964
      %v6966 = vand.u32 %v6965, 4294901760
      %6967 = vmatprep.subr.mxu0 %v6966
      %v6968 = vand.u32 %v6567, 4294901760
      %v6969 = vsub.f32 %v6567, %v6968
      %v6970 = vand.u32 %v6969, 4294901760
      %6971 = vmatpush1.msra.mxu0 %v6970
      %v6972 = vand.u32 %v6570, 4294901760
      %v6973 = vsub.f32 %v6570, %v6972
      %v6974 = vand.u32 %v6973, 4294901760
      %6975 = vmatprep.subr.mxu0 %v6974
      %v6976 = vand.u32 %v6569, 4294901760
      %v6977 = vsub.f32 %v6569, %v6976
      %v6978 = vand.u32 %v6977, 4294901760
      %6979 = vmatpush1.msra.mxu0 %v6978
      %6980 = vmatprep.subr.mxu0 0.0
      %6981 = vmatpush1.msra.mxu0 0.0
      %6982 = vmatprep.subr.mxu0 0.0
      %6983 = vmatpush1.msra.mxu0 0.0
      %6984 = vmatprep.subr.mxu0 0.0
      %6985 = vmatpush1.msra.mxu0 0.0
      %6986 = vmatprep.subr.mxu0 0.0
      %6987 = vmatpush1.msra.mxu0 0.0
      %6988 = vmatprep.subr.mxu0 0.0
      %6989 = vmatpush1.msra.mxu0 0.0
      %6990 = vmatprep.subr.mxu0 0.0
      %6991 = vmatpush1.msra.mxu0 0.0
      %6992 = vmatprep.subr.mxu0 0.0
      %6993 = vmatpush1.msra.mxu0 0.0
      %6994 = vmatprep.subr.mxu0 0.0
      %6995 = vmatpush1.msra.mxu0 0.0
      %6996 = vmatprep.subr.mxu0 0.0
      %6997 = vmatpush1.msra.mxu0 0.0
      %6998 = vmatprep.subr.mxu0 0.0
      %6999 = vmatpush1.msra.mxu0 0.0
      %7000 = vmatprep.subr.mxu0 0.0
      %7001 = vmatpush1.msra.mxu0 0.0
      %7002 = vmatprep.subr.mxu0 0.0
      %7003 = vmatpush1.msra.mxu0 0.0
      %7004 = vmatprep.subr.mxu0 0.0
      %7005 = vmatpush1.msra.mxu0 0.0
      %7006 = vmatprep.subr.mxu0 0.0
      %7007 = vmatpush1.msra.mxu0 0.0
      %7008 = vmatprep.subr.mxu0 0.0
      %7009 = vmatpush1.msra.mxu0 0.0
      %7010 = vmatprep.subr.mxu0 0.0
      %7011 = vmatpush1.msra.mxu0 0.0
      %7012 = vmatprep.subr.mxu0 0.0
      %7013 = vmatpush1.msra.mxu0 0.0
      %7014 = vmatprep.subr.mxu0 0.0
      %7015 = vmatpush1.msra.mxu0 0.0
      %7016 = vmatprep.subr.mxu0 0.0
      %7017 = vmatpush1.msra.mxu0 0.0
      %7018 = vmatprep.subr.mxu0 0.0
      %7019 = vmatpush1.msra.mxu0 0.0
      %7020 = vmatprep.subr.mxu0 0.0
      %7021 = vmatpush1.msra.mxu0 0.0
      %7022 = vmatprep.subr.mxu0 0.0
      %7023 = vmatpush1.msra.mxu0 0.0
      %7024 = vmatprep.subr.mxu0 0.0
      %7025 = vmatpush1.msra.mxu0 0.0
      %7026 = vmatprep.subr.mxu0 0.0
      %7027 = vmatpush1.msra.mxu0 0.0
      %7028 = vmatprep.subr.mxu0 0.0
      %7029 = vmatpush1.msra.mxu0 0.0
      %7030 = vmatprep.subr.mxu0 0.0
      %7031 = vmatpush1.msra.mxu0 0.0
      %7032 = vmatprep.subr.mxu0 0.0
      %7033 = vmatpush1.msra.mxu0 0.0
      %7034 = vmatprep.subr.mxu0 0.0
      %7035 = vmatpush1.msra.mxu0 0.0
      %7036 = vmatprep.mubr.f32.mxu0 0.0
      %v7037 = vand.u32 %v6579, 4294901760
      %7038 = vmatmul.mubr.f32.gmra.mrb[0].mxu0 %v7037
      %v7039 = vpop.f32.mrb[0].mxu0
      %v7040 = vadd.f32 %v6944, %v7039
      %v7041 = vpop.f32.mrb[0].mxu0
      %v7042 = vadd.f32 %v6946, %v7041
      %7043 = vdwg.mxu0
      %v7044 = vand.u32 %v6564, 4294901760
      %7045 = vmatprep.subr.mxu0 %v7044
      %v7046 = vand.u32 %v6563, 4294901760
      %7047 = vmatpush1.msra.mxu0 %v7046
      %v7048 = vand.u32 %v6566, 4294901760
      %7049 = vmatprep.subr.mxu0 %v7048
      %v7050 = vand.u32 %v6565, 4294901760
      %7051 = vmatpush1.msra.mxu0 %v7050
      %v7052 = vand.u32 %v6568, 4294901760
      %7053 = vmatprep.subr.mxu0 %v7052
      %v7054 = vand.u32 %v6567, 4294901760
      %7055 = vmatpush1.msra.mxu0 %v7054
      %v7056 = vand.u32 %v6570, 4294901760
      %7057 = vmatprep.subr.mxu0 %v7056
      %v7058 = vand.u32 %v6569, 4294901760
      %7059 = vmatpush1.msra.mxu0 %v7058
      %7060 = vmatprep.subr.mxu0 0.0
      %7061 = vmatpush1.msra.mxu0 0.0
      %7062 = vmatprep.subr.mxu0 0.0
      %7063 = vmatpush1.msra.mxu0 0.0
      %7064 = vmatprep.subr.mxu0 0.0
      %7065 = vmatpush1.msra.mxu0 0.0
      %7066 = vmatprep.subr.mxu0 0.0
      %7067 = vmatpush1.msra.mxu0 0.0
      %7068 = vmatprep.subr.mxu0 0.0
      %7069 = vmatpush1.msra.mxu0 0.0
      %7070 = vmatprep.subr.mxu0 0.0
      %7071 = vmatpush1.msra.mxu0 0.0
      %7072 = vmatprep.subr.mxu0 0.0
      %7073 = vmatpush1.msra.mxu0 0.0
      %7074 = vmatprep.subr.mxu0 0.0
      %7075 = vmatpush1.msra.mxu0 0.0
      %7076 = vmatprep.subr.mxu0 0.0
      %7077 = vmatpush1.msra.mxu0 0.0
      %7078 = vmatprep.subr.mxu0 0.0
      %7079 = vmatpush1.msra.mxu0 0.0
      %7080 = vmatprep.subr.mxu0 0.0
      %7081 = vmatpush1.msra.mxu0 0.0
      %7082 = vmatprep.subr.mxu0 0.0
      %7083 = vmatpush1.msra.mxu0 0.0
      %7084 = vmatprep.subr.mxu0 0.0
      %7085 = vmatpush1.msra.mxu0 0.0
      %7086 = vmatprep.subr.mxu0 0.0
      %7087 = vmatpush1.msra.mxu0 0.0
      %7088 = vmatprep.subr.mxu0 0.0
      %7089 = vmatpush1.msra.mxu0 0.0
      %7090 = vmatprep.subr.mxu0 0.0
      %7091 = vmatpush1.msra.mxu0 0.0
      %7092 = vmatprep.subr.mxu0 0.0
      %7093 = vmatpush1.msra.mxu0 0.0
      %7094 = vmatprep.subr.mxu0 0.0
      %7095 = vmatpush1.msra.mxu0 0.0
      %7096 = vmatprep.subr.mxu0 0.0
      %7097 = vmatpush1.msra.mxu0 0.0
      %7098 = vmatprep.subr.mxu0 0.0
      %7099 = vmatpush1.msra.mxu0 0.0
      %7100 = vmatprep.subr.mxu0 0.0
      %7101 = vmatpush1.msra.mxu0 0.0
      %7102 = vmatprep.subr.mxu0 0.0
      %7103 = vmatpush1.msra.mxu0 0.0
      %7104 = vmatprep.subr.mxu0 0.0
      %7105 = vmatpush1.msra.mxu0 0.0
      %7106 = vmatprep.subr.mxu0 0.0
      %7107 = vmatpush1.msra.mxu0 0.0
      %7108 = vmatprep.subr.mxu0 0.0
      %7109 = vmatpush1.msra.mxu0 0.0
      %7110 = vmatprep.subr.mxu0 0.0
      %7111 = vmatpush1.msra.mxu0 0.0
      %7112 = vmatprep.subr.mxu0 0.0
      %7113 = vmatpush1.msra.mxu0 0.0
      %7114 = vmatprep.subr.mxu0 0.0
      %7115 = vmatpush1.msra.mxu0 0.0
      %7116 = vmatprep.mubr.f32.mxu0 0.0
      %v7117 = vand.u32 %v6579, 4294901760
      %7118 = vmatmul.mubr.f32.gmra.mrb[0].mxu0 %v7117
      %v7119 = vpop.f32.mrb[0].mxu0
      %v7120 = vadd.f32 %v7040, %v7119
      %v7121 = vpop.f32.mrb[0].mxu0
      %v7122 = vadd.f32 %v7042, %v7121
      %7123 = vdwg.mxu0
      %v7124 = vxor.u32 %v7120, 2147483648
      %v7125 = vxor.u32 %v7122, 2147483648
      %v7126 = vmul.f32 %v7124, 1.442695
      %v7127 = vpow.pop %v7126
      %v7128 = vmul.f32 %v7125, 1.442695
      %v7129 = vpow.pop %v7128
      %v7130 = vadd.f32 %v7127, 1.0
      %v7131 = vadd.f32 %v7129, 1.0
      %v7132 = vrcp.pop %v7130
      %v7133 = vmul.f32 1.0, %v7132
      %v7134 = vrcp.pop %v7131
      %v7135 = vmul.f32 1.0, %v7134
      %v7138 = vcombine.low %v7133, %v7135
      %7140 = vst [vmem:[%s316] sm:$0x77] %v7138
      %s7141 = smul.u32 2, %s23
      %p7142 = scmp.lt.s32.totalorder %s22, 1
      %s7143 = scalar_select %p7142, %s22, 1
      %p7144 = scmp.lt.s32.totalorder %s7141, 1
      %s7145 = scalar_select %p7144, %s7141, 1
      %s7146 = smul.addr %s7143, 2
      %s7147 = sadd.s32 %s7145, %s7146
      %s7148 = smul.addr %s7147, 4
      %s7149 = scalar_lea.vmem %s7, %s7148
      // Predicated region
      $region49: #{tpu_custom_call.1} parent=47 // pred_check
        %p7150 = pneg %p204
      $region50: #{tpu_custom_call.1} parent=47 // pred_check_branch
        %7152 = sbr.rel (%p7150) target = $region52
      $region51: #{tpu_custom_call.1} parent=47 // pred_region
        %s7153 = smul.u32 2, %s23
      $region52: #{tpu_custom_call.1} parent=47 // pred_fallthru
        _
    $region48: #{tpu_custom_call.1} parent=5 // pred_fallthru
      _
    %p7154 = scmp.le.s32.totalorder 2, %s13
    // Predicated region
    $region53: #{tpu_custom_call.1} parent=5 // pred_check
      %p7155 = pneg %p7154
    $region54: #{tpu_custom_call.1} parent=5 // pred_check_branch
      %7157 = sbr.rel (%p7155) target = $region56
    $region55: #{tpu_custom_call.1} parent=5 // pred_region
      %s7158 = ssub.s32 %s13, 2
      // Predicated region
      $region57: #{tpu_custom_call.1} parent=55 // pred_check
        %p7159 = pneg %p210
      $region58: #{tpu_custom_call.1} parent=55 // pred_check_branch
        %7161 = sbr.rel (%p7159) target = $region60
      $region59: #{tpu_custom_call.1} parent=55 // pred_region
        %s7162 = smul.u32 2, %s25
        %p7163 = scmp.lt.s32.totalorder %s24, 1
        %s7164 = scalar_select %p7163, %s24, 1
        %p7165 = scmp.lt.s32.totalorder %s7162, 1
        %s7166 = scalar_select %p7165, %s7162, 1
        %s7167 = smul.addr %s7164, 2
        %s7168 = sadd.s32 %s7166, %s7167
        %s7169 = smul.addr %s7168, 4
        %s7170 = scalar_lea.vmem %s7, %s7169
      $region60: #{tpu_custom_call.1} parent=55 // pred_fallthru
        _
    $region56: #{tpu_custom_call.1} parent=5 // pred_fallthru
      _
  $region6: #{tpu_custom_call.1} parent=0 // loop_footer
    %s17 = sadd.s32 1, %s13
  $region7: #{tpu_custom_call.1} parent=0 // loop_footer_branch
    %12 = sbr.rel target = $region3
  $region8: #{tpu_custom_call.1} parent=0 // loop_exit
    _

</llo_original>
